<compile_context>
chip_gen: v5e
topology: v5e:2x2
jax: 0.10.0
libtpu: 0.0.40
codegen_flags: <defaults>
</compile_context>

<pallas_src>
import numpy as np
import jax
import jax.numpy as jnp
from jax import lax
from jax.experimental import pallas as pl
from jax.experimental.pallas import tpu as pltpu


# ----------------------------------------------------------------------------
# Synthetic config (small shapes)
# ----------------------------------------------------------------------------
CFG = dict(
    encoder_conv_dim=8,
    encoder_image_size=16,
    encoder_kernel_size=[3, 3, 3, 3],
    encoder_stride=[2, 1, 1, 1],
    encoder_domain_layers=2,
    encoder_conv_output_dim=32,   # output_dim
    predict_output_dim=8,         # gym.spaces.flatdim(source_state_space)
    mlp_hid_dims=[256, 256],
    in_channels=3,
)


def _round8(n):
    return max(8, ((n + 7) // 8) * 8)


def _conv_meta(cfg):
    """Static per-layer conv geometry (pure Python ints, derived from CFG)."""
    ks, st = cfg["encoder_kernel_size"], cfg["encoder_stride"]
    h = w = cfg["encoder_image_size"]
    layers = []
    for k, s in zip(ks, st):
        oh = (h - k) // s + 1
        ow = (w - k) // s + 1
        layers.append(dict(
            k=k, s=s, h=h, w=w, oh=oh, ow=ow,
            p=oh * ow, ppad=_round8(oh * ow),
            # number of columns of this layer's gather matrix = size of the
            # (padded) input spatial block it reads from.
            in_cols=(h * w) if not layers else layers[-1]["ppad"],
        ))
        h, w = oh, ow
    return layers


def _build_gather(m):
    """0/1 matrix (K*K*Ppad, in_cols): row t*Ppad+p picks input spatial q for
    output position p and kernel tap t.  Rows p >= P and columns q >= H*W are
    zero, so padded rows/cols never contaminate real outputs."""
    k, s, w_in = m["k"], m["s"], m["w"]
    oh, ow, ppad, in_cols = m["oh"], m["ow"], m["ppad"], m["in_cols"]
    g = np.zeros((k * k * ppad, in_cols), np.float32)
    for kh in range(k):
        for kw in range(k):
            t = kh * k + kw
            for i in range(oh):
                for j in range(ow):
                    p = i * ow + j
                    q = (i * s + kh) * w_in + (j * s + kw)
                    g[t * ppad + p, q] = 1.0
    return g


# ----------------------------------------------------------------------------
# Fused forward kernel: conv stack (in-kernel im2col) + fc + optional MLP.
# Activation layout in VMEM scratch: rows = (batch_block, spatial), lanes =
# channels; each batch block is padded to a multiple of 8 rows.
# ----------------------------------------------------------------------------
def _fused_forward(x3d, conv_params, g_mats, sel, fcw_eff, fc_b, mlp_params,
                   meta, predict):
    B = x3d.shape[0]
    conv_dim = conv_params[0][0].shape[2]
    out_dim = fcw_eff.shape[2]
    n_conv = len(conv_params)
    ppads = [m["ppad"] for m in meta]
    taps = [m["k"] * m["k"] for m in meta]
    p_last = meta[-1]["p"]
    n_mlp = len(mlp_params)

    def kernel(*refs):
        it = iter(refs)
        x_ref = next(it)
        g_refs = [next(it) for _ in range(n_conv)]
        cw_refs = [(next(it), next(it)) for _ in range(n_conv)]
        sel_ref = next(it)
        fcw_ref = next(it)
        fcb_ref = next(it)
        mlp_refs = [(next(it), next(it)) for _ in range(n_mlp)]
        feat_ref = next(it)
        pred_ref = next(it) if predict else None
        act_refs = [next(it) for _ in range(n_conv)]

        # ---- conv stack: per tap, gather-matmul (im2col) + weight matmul ----
        for li in range(n_conv):
            g_ref = g_refs[li]
            w_ref, b_ref = cw_refs[li]
            bias = b_ref[...]                              # (1, conv_dim)
            pp = ppads[li]
            for b in range(B):
                if li == 0:
                    # raw input block is (Cin, H*W); contract its lane dim so
                    # no explicit NCHW->NHWC transpose is ever materialized.
                    rhs = x_ref[b]                         # (Cin, H*W)
                else:
                    pin = ppads[li - 1]
                    rhs = act_refs[li - 1][pl.ds(b * pin, pin), :]  # (pin, cd)
                acc = None
                for ti in range(taps[li]):
                    g_t = g_ref[pl.ds(ti * pp, pp), :]     # (pp, in_cols)
                    if li == 0:
                        y = lax.dot_general(
                            g_t, rhs,
                            dimension_numbers=(((1,), (1,)), ((), ())),
                            preferred_element_type=jnp.float32)   # (pp, Cin)
                    else:
                        y = jnp.dot(g_t, rhs,
                                    preferred_element_type=jnp.float32)
                    contrib = jnp.dot(y, w_ref[ti],
                                      preferred_element_type=jnp.float32)
                    acc = contrib if acc is None else acc + contrib
                act_refs[li][pl.ds(b * pp, pp), :] = jnp.maximum(acc + bias, 0.0)

        # ---- flatten (torch NCHW order folded into fcw_eff) + fc ----
        a_last = act_refs[-1][...]                         # (B*ppad_last, cd)
        feat = None
        for p in range(p_last):
            rows = jnp.dot(sel_ref[p], a_last,
                           preferred_element_type=jnp.float32)        # (B, cd)
            part = jnp.dot(rows, fcw_ref[p],
                           preferred_element_type=jnp.float32)        # (B, out)
            feat = part if feat is None else feat + part
        feat = feat + fcb_ref[...]
        feat_ref[...] = feat

        # ---- predict MLP: Linear -> ReLU -> Linear -> ReLU -> Linear ----
        if predict:
            h = feat
            for i, (wr, br) in enumerate(mlp_refs):
                h = jnp.dot(h, wr[...],
                            preferred_element_type=jnp.float32) + br[...]
                if i < n_mlp - 1:
                    h = jnp.maximum(h, 0.0)
            pred_ref[...] = h

    inputs = [x3d] + list(g_mats)
    for w, bb in conv_params:
        inputs += [w, bb]
    inputs += [sel, fcw_eff, fc_b]
    for w, bb in mlp_params:
        inputs += [w, bb]

    vmem = pltpu.MemorySpace.VMEM
    if predict:
        out_shape = (
            jax.ShapeDtypeStruct((B, out_dim), jnp.float32),
            jax.ShapeDtypeStruct((B, mlp_params[-1][0].shape[1]), jnp.float32),
        )
        out_specs = (pl.BlockSpec(memory_space=vmem),
                     pl.BlockSpec(memory_space=vmem))
    else:
        out_shape = jax.ShapeDtypeStruct((B, out_dim), jnp.float32)
        out_specs = pl.BlockSpec(memory_space=vmem)

    return pl.pallas_call(
        kernel,
        out_shape=out_shape,
        in_specs=[pl.BlockSpec(memory_space=vmem)] * len(inputs),
        out_specs=out_specs,
        scratch_shapes=[pltpu.VMEM((B * pp, conv_dim), jnp.float32)
                        for pp in ppads],
    )(*inputs)


# ----------------------------------------------------------------------------
# Parameter init (synthetic weights; kernel-friendly layouts, constants folded)
# ----------------------------------------------------------------------------
def _dense_init(key, fan_in, shape):
    return jax.random.normal(key, shape, dtype=jnp.float32) / np.sqrt(fan_in)


def init_params(key):
    cfg = CFG
    meta = _conv_meta(cfg)
    cd = cfg["encoder_conv_dim"]
    dl = cfg["encoder_domain_layers"]
    keys = iter(jax.random.split(key, 64))

    cins = []
    cin = cfg["in_channels"]
    for _ in meta:
        cins.append(cin)
        cin = cd

    def make_conv(cin_l, k, fold_scale):
        wt = _dense_init(next(keys), cin_l * k * k, (cd, cin_l, k, k))  # OIHW
        if fold_scale:
            wt = wt / 255.0          # fold the domain encoder's /255 scaling
        # (K*K, Cin, Cout), tap-major layout used by the kernel
        w_eff = jnp.transpose(wt, (2, 3, 1, 0)).reshape(k * k, cin_l, cd)
        b = jnp.zeros((1, cd), jnp.float32)
        return (w_eff, b)

    params = {"domain": {}, "shared_convs": []}
    for dom in ("source", "target"):
        params["domain"][dom] = [
            make_conv(cins[li], meta[li]["k"], fold_scale=(li == 0))
            for li in range(dl)
        ]
    for li in range(dl, len(meta)):
        params["shared_convs"].append(
            make_conv(cins[li], meta[li]["k"], fold_scale=False))

    # precomputed 0/1 gather (im2col) matrices, one per conv layer
    params["gather"] = [jnp.asarray(_build_gather(m)) for m in meta]

    # fc: fold torch.flatten(NCHW) row ordering (c-major) into the weight
    p4 = meta[-1]["p"]
    flat_dim = cd * p4
    out_dim = cfg["encoder_conv_output_dim"]
    fc_w_flat = _dense_init(next(keys), flat_dim, (flat_dim, out_dim))
    params["fc_w_eff"] = jnp.transpose(
        fc_w_flat.reshape(cd, p4, out_dim), (1, 0, 2))          # (P, C, out)
    params["fc_b"] = jnp.zeros((1, out_dim), jnp.float32)

    dims = [out_dim] + cfg["mlp_hid_dims"] + [cfg["predict_output_dim"]]
    params["mlp"] = [
        (_dense_init(next(keys), di, (di, do)), jnp.zeros((1, do), jnp.float32))
        for di, do in zip(dims[:-1], dims[1:])
    ]
    return params


# ----------------------------------------------------------------------------
# GOT_Model.forward equivalent (single fused pallas_call)
# ----------------------------------------------------------------------------
def got_forward(params, ob_nchw, domain="source", predict_state=False):
    cfg = CFG
    meta = _conv_meta(cfg)
    B, C, H, W = ob_nchw.shape
    # pure bitcast reshape (no transpose, no /255 -- both folded away)
    x3d = ob_nchw.astype(jnp.float32).reshape(B, C, H * W)

    conv_params = list(params["domain"][domain]) + list(params["shared_convs"])

    # flatten row-gather matrix (depends on the static batch size)
    p4, pp4 = meta[-1]["p"], meta[-1]["ppad"]
    sel_np = np.zeros((p4, B, B * pp4), np.float32)
    for p in range(p4):
        for b in range(B):
            sel_np[p, b, b * pp4 + p] = 1.0
    sel = jnp.asarray(sel_np)

    mlp_params = params["mlp"] if predict_state else []
    res = _fused_forward(x3d, conv_params, params["gather"], sel,
                         params["fc_w_eff"], params["fc_b"], mlp_params,
                         meta, predict_state)
    if predict_state:
        feat, pred = res
        return feat, pred
    return res


# ----------------------------------------------------------------------------
# Pure-JAX reference (XLA ops) used only for the correctness self-check
# ----------------------------------------------------------------------------
def reference_forward(params, ob_nchw, domain="source", predict_state=False):
    cfg = CFG
    meta = _conv_meta(cfg)
    cd = cfg["encoder_conv_dim"]
    x = ob_nchw.astype(jnp.float32)   # NOTE: /255 already folded into conv-1 w
    conv_params = list(params["domain"][domain]) + list(params["shared_convs"])
    for (w_eff, b), m in zip(conv_params, meta):
        k, s = m["k"], m["s"]
        cin = w_eff.shape[1]
        wt = jnp.transpose(w_eff.reshape(k, k, cin, cd), (3, 2, 0, 1))  # OIHW
        x = lax.conv_general_dilated(
            x, wt, window_strides=(s, s), padding="VALID",
            dimension_numbers=("NCHW", "OIHW", "NCHW"))
        x = jnp.maximum(x + b.reshape(1, cd, 1, 1), 0.0)
    flat = x.reshape(x.shape[0], -1)                   # torch NCHW flatten
    p4 = meta[-1]["p"]
    out_dim = cfg["encoder_conv_output_dim"]
    fc_w_flat = jnp.transpose(params["fc_w_eff"], (1, 0, 2)).reshape(
        cd * p4, out_dim)
    feat = flat @ fc_w_flat + params["fc_b"]
    if not predict_state:
        return feat
    h = feat
    n = len(params["mlp"])
    for i, (w, b) in enumerate(params["mlp"]):
        h = h @ w + b
        if i < n - 1:
            h = jnp.maximum(h, 0.0)
    return feat, h


if __name__ == "__main__":
    key = jax.random.PRNGKey(0)
    pkey, dkey = jax.random.split(key)
    params = init_params(pkey)

    # ob: batch=2, channels=3, 16x16 image (NCHW, raw pixel scale 0..255)
    ob = jax.random.uniform(
        dkey, (2, CFG["in_channels"], CFG["encoder_image_size"],
               CFG["encoder_image_size"]), dtype=jnp.float32) * 255.0

    fwd = jax.jit(got_forward, static_argnames=("domain", "predict_state"))

    feat, pred = fwd(params, ob, domain="source", predict_state=True)
    feat = jax.block_until_ready(feat)
    pred = jax.block_until_ready(pred)

    assert feat.shape == (2, CFG["encoder_conv_output_dim"]), feat.shape
    assert pred.shape == (2, CFG["predict_output_dim"]), pred.shape
    assert bool(jnp.all(jnp.isfinite(feat))) and bool(jnp.all(jnp.isfinite(pred)))

    # correctness self-check against a pure-XLA reference
    ref_feat, ref_pred = reference_forward(params, ob, "source", True)
    np.testing.assert_allclose(np.asarray(feat), np.asarray(ref_feat),
                               rtol=5e-2, atol=5e-2)
    np.testing.assert_allclose(np.asarray(pred), np.asarray(ref_pred),
                               rtol=5e-2, atol=5e-2)

    # feature-only path (predict_state=False) also exercised
    feat_only = jax.block_until_ready(
        fwd(params, ob, domain="target", predict_state=False))
    assert feat_only.shape == (2, CFG["encoder_conv_output_dim"])

    print("KERNEL_OK")
</pallas_src>

<mosaic_0001>
module attributes {stable_mosaic.version = 11 : i64} {
  func.func @kernel(%arg0: memref<2x3x256xf32, #tpu.memory_space<vmem>>, %arg1: memref<504x256xf32, #tpu.memory_space<vmem>>, %arg2: memref<288x56xf32, #tpu.memory_space<vmem>>, %arg3: memref<144x32xf32, #tpu.memory_space<vmem>>, %arg4: memref<72x16xf32, #tpu.memory_space<vmem>>, %arg5: memref<9x3x8xf32, #tpu.memory_space<vmem>>, %arg6: memref<1x8xf32, #tpu.memory_space<vmem>>, %arg7: memref<9x8x8xf32, #tpu.memory_space<vmem>>, %arg8: memref<1x8xf32, #tpu.memory_space<vmem>>, %arg9: memref<9x8x8xf32, #tpu.memory_space<vmem>>, %arg10: memref<1x8xf32, #tpu.memory_space<vmem>>, %arg11: memref<9x8x8xf32, #tpu.memory_space<vmem>>, %arg12: memref<1x8xf32, #tpu.memory_space<vmem>>, %arg13: memref<1x2x16xf32, #tpu.memory_space<vmem>>, %arg14: memref<1x8x32xf32, #tpu.memory_space<vmem>>, %arg15: memref<1x32xf32, #tpu.memory_space<vmem>>, %arg16: memref<32x256xf32, #tpu.memory_space<vmem>>, %arg17: memref<1x256xf32, #tpu.memory_space<vmem>>, %arg18: memref<256x256xf32, #tpu.memory_space<vmem>>, %arg19: memref<1x256xf32, #tpu.memory_space<vmem>>, %arg20: memref<256x8xf32, #tpu.memory_space<vmem>>, %arg21: memref<1x8xf32, #tpu.memory_space<vmem>>, %arg22: memref<2x32xf32, #tpu.memory_space<vmem>>, %arg23: memref<2x8xf32, #tpu.memory_space<vmem>>, %arg24: memref<112x8xf32, #tpu.memory_space<vmem>>, %arg25: memref<64x8xf32, #tpu.memory_space<vmem>>, %arg26: memref<32x8xf32, #tpu.memory_space<vmem>>, %arg27: memref<16x8xf32, #tpu.memory_space<vmem>>) attributes {dimension_semantics = [], scalar_prefetch = 0 : i64, scratch_operands = 4 : i64, tpu.core_type = #tpu.core_type<tc>} {
    %c0 = arith.constant 0 : index
    %c0_0 = arith.constant 0 : index
    %0 = vector.load %arg6[%c0, %c0_0] : memref<1x8xf32, #tpu.memory_space<vmem>>, vector<1x8xf32>
    %c0_1 = arith.constant 0 : index
    %c0_2 = arith.constant 0 : index
    %c0_3 = arith.constant 0 : index
    %1 = vector.load %arg0[%c0_1, %c0_2, %c0_3] : memref<2x3x256xf32, #tpu.memory_space<vmem>>, vector<1x3x256xf32>
    %2 = vector.shape_cast %1 : vector<1x3x256xf32> to vector<3x256xf32>
    %c0_4 = arith.constant 0 : index
    %c0_5 = arith.constant 0 : index
    %3 = vector.load %arg1[%c0_4, %c0_5] : memref<504x256xf32, #tpu.memory_space<vmem>>, vector<56x256xf32>
    %cst = arith.constant dense<0.000000e+00> : vector<56x3xf32>
    %4 = tpu.matmul %3, %2, %cst {dimension_numbers = #tpu.dot_dimension_numbers<[1], [1], [0], [0], [0, 0, 1, 0], [], []>} : vector<56x256xf32>, vector<3x256xf32>, vector<56x3xf32> -> vector<56x3xf32>
    %c0_6 = arith.constant 0 : index
    %c0_7 = arith.constant 0 : index
    %c0_8 = arith.constant 0 : index
    %5 = vector.load %arg5[%c0_6, %c0_7, %c0_8] : memref<9x3x8xf32, #tpu.memory_space<vmem>>, vector<1x3x8xf32>
    %6 = vector.shape_cast %5 : vector<1x3x8xf32> to vector<3x8xf32>
    %cst_9 = arith.constant dense<0.000000e+00> : vector<56x8xf32>
    %7 = tpu.matmul %4, %6, %cst_9 {dimension_numbers = #tpu.dot_dimension_numbers<[1], [0], [0], [1], [0, 0, 1, 1], [], []>} : vector<56x3xf32>, vector<3x8xf32>, vector<56x8xf32> -> vector<56x8xf32>
    %c56 = arith.constant 56 : index
    %c0_10 = arith.constant 0 : index
    %8 = vector.load %arg1[%c56, %c0_10] : memref<504x256xf32, #tpu.memory_space<vmem>>, vector<56x256xf32>
    %cst_11 = arith.constant dense<0.000000e+00> : vector<56x3xf32>
    %9 = tpu.matmul %8, %2, %cst_11 {dimension_numbers = #tpu.dot_dimension_numbers<[1], [1], [0], [0], [0, 0, 1, 0], [], []>} : vector<56x256xf32>, vector<3x256xf32>, vector<56x3xf32> -> vector<56x3xf32>
    %c1 = arith.constant 1 : index
    %c0_12 = arith.constant 0 : index
    %c0_13 = arith.constant 0 : index
    %10 = vector.load %arg5[%c1, %c0_12, %c0_13] : memref<9x3x8xf32, #tpu.memory_space<vmem>>, vector<1x3x8xf32>
    %11 = vector.shape_cast %10 : vector<1x3x8xf32> to vector<3x8xf32>
    %cst_14 = arith.constant dense<0.000000e+00> : vector<56x8xf32>
    %12 = tpu.matmul %9, %11, %cst_14 {dimension_numbers = #tpu.dot_dimension_numbers<[1], [0], [0], [1], [0, 0, 1, 1], [], []>} : vector<56x3xf32>, vector<3x8xf32>, vector<56x8xf32> -> vector<56x8xf32>
    %13 = arith.addf %7, %12 : vector<56x8xf32>
    %c112 = arith.constant 112 : index
    %c0_15 = arith.constant 0 : index
    %14 = vector.load %arg1[%c112, %c0_15] : memref<504x256xf32, #tpu.memory_space<vmem>>, vector<56x256xf32>
    %cst_16 = arith.constant dense<0.000000e+00> : vector<56x3xf32>
    %15 = tpu.matmul %14, %2, %cst_16 {dimension_numbers = #tpu.dot_dimension_numbers<[1], [1], [0], [0], [0, 0, 1, 0], [], []>} : vector<56x256xf32>, vector<3x256xf32>, vector<56x3xf32> -> vector<56x3xf32>
    %c2 = arith.constant 2 : index
    %c0_17 = arith.constant 0 : index
    %c0_18 = arith.constant 0 : index
    %16 = vector.load %arg5[%c2, %c0_17, %c0_18] : memref<9x3x8xf32, #tpu.memory_space<vmem>>, vector<1x3x8xf32>
    %17 = vector.shape_cast %16 : vector<1x3x8xf32> to vector<3x8xf32>
    %cst_19 = arith.constant dense<0.000000e+00> : vector<56x8xf32>
    %18 = tpu.matmul %15, %17, %cst_19 {dimension_numbers = #tpu.dot_dimension_numbers<[1], [0], [0], [1], [0, 0, 1, 1], [], []>} : vector<56x3xf32>, vector<3x8xf32>, vector<56x8xf32> -> vector<56x8xf32>
    %19 = arith.addf %13, %18 : vector<56x8xf32>
    %c168 = arith.constant 168 : index
    %c0_20 = arith.constant 0 : index
    %20 = vector.load %arg1[%c168, %c0_20] : memref<504x256xf32, #tpu.memory_space<vmem>>, vector<56x256xf32>
    %cst_21 = arith.constant dense<0.000000e+00> : vector<56x3xf32>
    %21 = tpu.matmul %20, %2, %cst_21 {dimension_numbers = #tpu.dot_dimension_numbers<[1], [1], [0], [0], [0, 0, 1, 0], [], []>} : vector<56x256xf32>, vector<3x256xf32>, vector<56x3xf32> -> vector<56x3xf32>
    %c3 = arith.constant 3 : index
    %c0_22 = arith.constant 0 : index
    %c0_23 = arith.constant 0 : index
    %22 = vector.load %arg5[%c3, %c0_22, %c0_23] : memref<9x3x8xf32, #tpu.memory_space<vmem>>, vector<1x3x8xf32>
    %23 = vector.shape_cast %22 : vector<1x3x8xf32> to vector<3x8xf32>
    %cst_24 = arith.constant dense<0.000000e+00> : vector<56x8xf32>
    %24 = tpu.matmul %21, %23, %cst_24 {dimension_numbers = #tpu.dot_dimension_numbers<[1], [0], [0], [1], [0, 0, 1, 1], [], []>} : vector<56x3xf32>, vector<3x8xf32>, vector<56x8xf32> -> vector<56x8xf32>
    %25 = arith.addf %19, %24 : vector<56x8xf32>
    %c224 = arith.constant 224 : index
    %c0_25 = arith.constant 0 : index
    %26 = vector.load %arg1[%c224, %c0_25] : memref<504x256xf32, #tpu.memory_space<vmem>>, vector<56x256xf32>
    %cst_26 = arith.constant dense<0.000000e+00> : vector<56x3xf32>
    %27 = tpu.matmul %26, %2, %cst_26 {dimension_numbers = #tpu.dot_dimension_numbers<[1], [1], [0], [0], [0, 0, 1, 0], [], []>} : vector<56x256xf32>, vector<3x256xf32>, vector<56x3xf32> -> vector<56x3xf32>
    %c4 = arith.constant 4 : index
    %c0_27 = arith.constant 0 : index
    %c0_28 = arith.constant 0 : index
    %28 = vector.load %arg5[%c4, %c0_27, %c0_28] : memref<9x3x8xf32, #tpu.memory_space<vmem>>, vector<1x3x8xf32>
    %29 = vector.shape_cast %28 : vector<1x3x8xf32> to vector<3x8xf32>
    %cst_29 = arith.constant dense<0.000000e+00> : vector<56x8xf32>
    %30 = tpu.matmul %27, %29, %cst_29 {dimension_numbers = #tpu.dot_dimension_numbers<[1], [0], [0], [1], [0, 0, 1, 1], [], []>} : vector<56x3xf32>, vector<3x8xf32>, vector<56x8xf32> -> vector<56x8xf32>
    %31 = arith.addf %25, %30 : vector<56x8xf32>
    %c280 = arith.constant 280 : index
    %c0_30 = arith.constant 0 : index
    %32 = vector.load %arg1[%c280, %c0_30] : memref<504x256xf32, #tpu.memory_space<vmem>>, vector<56x256xf32>
    %cst_31 = arith.constant dense<0.000000e+00> : vector<56x3xf32>
    %33 = tpu.matmul %32, %2, %cst_31 {dimension_numbers = #tpu.dot_dimension_numbers<[1], [1], [0], [0], [0, 0, 1, 0], [], []>} : vector<56x256xf32>, vector<3x256xf32>, vector<56x3xf32> -> vector<56x3xf32>
    %c5 = arith.constant 5 : index
    %c0_32 = arith.constant 0 : index
    %c0_33 = arith.constant 0 : index
    %34 = vector.load %arg5[%c5, %c0_32, %c0_33] : memref<9x3x8xf32, #tpu.memory_space<vmem>>, vector<1x3x8xf32>
    %35 = vector.shape_cast %34 : vector<1x3x8xf32> to vector<3x8xf32>
    %cst_34 = arith.constant dense<0.000000e+00> : vector<56x8xf32>
    %36 = tpu.matmul %33, %35, %cst_34 {dimension_numbers = #tpu.dot_dimension_numbers<[1], [0], [0], [1], [0, 0, 1, 1], [], []>} : vector<56x3xf32>, vector<3x8xf32>, vector<56x8xf32> -> vector<56x8xf32>
    %37 = arith.addf %31, %36 : vector<56x8xf32>
    %c336 = arith.constant 336 : index
    %c0_35 = arith.constant 0 : index
    %38 = vector.load %arg1[%c336, %c0_35] : memref<504x256xf32, #tpu.memory_space<vmem>>, vector<56x256xf32>
    %cst_36 = arith.constant dense<0.000000e+00> : vector<56x3xf32>
    %39 = tpu.matmul %38, %2, %cst_36 {dimension_numbers = #tpu.dot_dimension_numbers<[1], [1], [0], [0], [0, 0, 1, 0], [], []>} : vector<56x256xf32>, vector<3x256xf32>, vector<56x3xf32> -> vector<56x3xf32>
    %c6 = arith.constant 6 : index
    %c0_37 = arith.constant 0 : index
    %c0_38 = arith.constant 0 : index
    %40 = vector.load %arg5[%c6, %c0_37, %c0_38] : memref<9x3x8xf32, #tpu.memory_space<vmem>>, vector<1x3x8xf32>
    %41 = vector.shape_cast %40 : vector<1x3x8xf32> to vector<3x8xf32>
    %cst_39 = arith.constant dense<0.000000e+00> : vector<56x8xf32>
    %42 = tpu.matmul %39, %41, %cst_39 {dimension_numbers = #tpu.dot_dimension_numbers<[1], [0], [0], [1], [0, 0, 1, 1], [], []>} : vector<56x3xf32>, vector<3x8xf32>, vector<56x8xf32> -> vector<56x8xf32>
    %43 = arith.addf %37, %42 : vector<56x8xf32>
    %c392 = arith.constant 392 : index
    %c0_40 = arith.constant 0 : index
    %44 = vector.load %arg1[%c392, %c0_40] : memref<504x256xf32, #tpu.memory_space<vmem>>, vector<56x256xf32>
    %cst_41 = arith.constant dense<0.000000e+00> : vector<56x3xf32>
    %45 = tpu.matmul %44, %2, %cst_41 {dimension_numbers = #tpu.dot_dimension_numbers<[1], [1], [0], [0], [0, 0, 1, 0], [], []>} : vector<56x256xf32>, vector<3x256xf32>, vector<56x3xf32> -> vector<56x3xf32>
    %c7 = arith.constant 7 : index
    %c0_42 = arith.constant 0 : index
    %c0_43 = arith.constant 0 : index
    %46 = vector.load %arg5[%c7, %c0_42, %c0_43] : memref<9x3x8xf32, #tpu.memory_space<vmem>>, vector<1x3x8xf32>
    %47 = vector.shape_cast %46 : vector<1x3x8xf32> to vector<3x8xf32>
    %cst_44 = arith.constant dense<0.000000e+00> : vector<56x8xf32>
    %48 = tpu.matmul %45, %47, %cst_44 {dimension_numbers = #tpu.dot_dimension_numbers<[1], [0], [0], [1], [0, 0, 1, 1], [], []>} : vector<56x3xf32>, vector<3x8xf32>, vector<56x8xf32> -> vector<56x8xf32>
    %49 = arith.addf %43, %48 : vector<56x8xf32>
    %c448 = arith.constant 448 : index
    %c0_45 = arith.constant 0 : index
    %50 = vector.load %arg1[%c448, %c0_45] : memref<504x256xf32, #tpu.memory_space<vmem>>, vector<56x256xf32>
    %cst_46 = arith.constant dense<0.000000e+00> : vector<56x3xf32>
    %51 = tpu.matmul %50, %2, %cst_46 {dimension_numbers = #tpu.dot_dimension_numbers<[1], [1], [0], [0], [0, 0, 1, 0], [], []>} : vector<56x256xf32>, vector<3x256xf32>, vector<56x3xf32> -> vector<56x3xf32>
    %c8 = arith.constant 8 : index
    %c0_47 = arith.constant 0 : index
    %c0_48 = arith.constant 0 : index
    %52 = vector.load %arg5[%c8, %c0_47, %c0_48] : memref<9x3x8xf32, #tpu.memory_space<vmem>>, vector<1x3x8xf32>
    %53 = vector.shape_cast %52 : vector<1x3x8xf32> to vector<3x8xf32>
    %cst_49 = arith.constant dense<0.000000e+00> : vector<56x8xf32>
    %54 = tpu.matmul %51, %53, %cst_49 {dimension_numbers = #tpu.dot_dimension_numbers<[1], [0], [0], [1], [0, 0, 1, 1], [], []>} : vector<56x3xf32>, vector<3x8xf32>, vector<56x8xf32> -> vector<56x8xf32>
    %55 = arith.addf %49, %54 : vector<56x8xf32>
    %56 = vector.broadcast %0 : vector<1x8xf32> to vector<56x8xf32>
    %57 = arith.addf %55, %56 : vector<56x8xf32>
    %cst_50 = arith.constant 0.000000e+00 : f32
    %58 = vector.broadcast %cst_50 : f32 to vector<56x8xf32>
    %59 = arith.maximumf %57, %58 : vector<56x8xf32>
    %c0_51 = arith.constant 0 : index
    %c0_52 = arith.constant 0 : index
    %60 = vector.load %arg24[%c0_51, %c0_52] : memref<112x8xf32, #tpu.memory_space<vmem>>, vector<56x8xf32>
    tpu.vector_store %arg24[%c0_51, %c0_52], %59 {strides = array<i32>} : memref<112x8xf32, #tpu.memory_space<vmem>>, vector<56x8xf32>,
    %c1_53 = arith.constant 1 : index
    %c0_54 = arith.constant 0 : index
    %c0_55 = arith.constant 0 : index
    %61 = vector.load %arg0[%c1_53, %c0_54, %c0_55] : memref<2x3x256xf32, #tpu.memory_space<vmem>>, vector<1x3x256xf32>
    %62 = vector.shape_cast %61 : vector<1x3x256xf32> to vector<3x256xf32>
    %c0_56 = arith.constant 0 : index
    %c0_57 = arith.constant 0 : index
    %63 = vector.load %arg1[%c0_56, %c0_57] : memref<504x256xf32, #tpu.memory_space<vmem>>, vector<56x256xf32>
    %cst_58 = arith.constant dense<0.000000e+00> : vector<56x3xf32>
    %64 = tpu.matmul %63, %62, %cst_58 {dimension_numbers = #tpu.dot_dimension_numbers<[1], [1], [0], [0], [0, 0, 1, 0], [], []>} : vector<56x256xf32>, vector<3x256xf32>, vector<56x3xf32> -> vector<56x3xf32>
    %c0_59 = arith.constant 0 : index
    %c0_60 = arith.constant 0 : index
    %c0_61 = arith.constant 0 : index
    %65 = vector.load %arg5[%c0_59, %c0_60, %c0_61] : memref<9x3x8xf32, #tpu.memory_space<vmem>>, vector<1x3x8xf32>
    %66 = vector.shape_cast %65 : vector<1x3x8xf32> to vector<3x8xf32>
    %cst_62 = arith.constant dense<0.000000e+00> : vector<56x8xf32>
    %67 = tpu.matmul %64, %66, %cst_62 {dimension_numbers = #tpu.dot_dimension_numbers<[1], [0], [0], [1], [0, 0, 1, 1], [], []>} : vector<56x3xf32>, vector<3x8xf32>, vector<56x8xf32> -> vector<56x8xf32>
    %c56_63 = arith.constant 56 : index
    %c0_64 = arith.constant 0 : index
    %68 = vector.load %arg1[%c56_63, %c0_64] : memref<504x256xf32, #tpu.memory_space<vmem>>, vector<56x256xf32>
    %cst_65 = arith.constant dense<0.000000e+00> : vector<56x3xf32>
    %69 = tpu.matmul %68, %62, %cst_65 {dimension_numbers = #tpu.dot_dimension_numbers<[1], [1], [0], [0], [0, 0, 1, 0], [], []>} : vector<56x256xf32>, vector<3x256xf32>, vector<56x3xf32> -> vector<56x3xf32>
    %c1_66 = arith.constant 1 : index
    %c0_67 = arith.constant 0 : index
    %c0_68 = arith.constant 0 : index
    %70 = vector.load %arg5[%c1_66, %c0_67, %c0_68] : memref<9x3x8xf32, #tpu.memory_space<vmem>>, vector<1x3x8xf32>
    %71 = vector.shape_cast %70 : vector<1x3x8xf32> to vector<3x8xf32>
    %cst_69 = arith.constant dense<0.000000e+00> : vector<56x8xf32>
    %72 = tpu.matmul %69, %71, %cst_69 {dimension_numbers = #tpu.dot_dimension_numbers<[1], [0], [0], [1], [0, 0, 1, 1], [], []>} : vector<56x3xf32>, vector<3x8xf32>, vector<56x8xf32> -> vector<56x8xf32>
    %73 = arith.addf %67, %72 : vector<56x8xf32>
    %c112_70 = arith.constant 112 : index
    %c0_71 = arith.constant 0 : index
    %74 = vector.load %arg1[%c112_70, %c0_71] : memref<504x256xf32, #tpu.memory_space<vmem>>, vector<56x256xf32>
    %cst_72 = arith.constant dense<0.000000e+00> : vector<56x3xf32>
    %75 = tpu.matmul %74, %62, %cst_72 {dimension_numbers = #tpu.dot_dimension_numbers<[1], [1], [0], [0], [0, 0, 1, 0], [], []>} : vector<56x256xf32>, vector<3x256xf32>, vector<56x3xf32> -> vector<56x3xf32>
    %c2_73 = arith.constant 2 : index
    %c0_74 = arith.constant 0 : index
    %c0_75 = arith.constant 0 : index
    %76 = vector.load %arg5[%c2_73, %c0_74, %c0_75] : memref<9x3x8xf32, #tpu.memory_space<vmem>>, vector<1x3x8xf32>
    %77 = vector.shape_cast %76 : vector<1x3x8xf32> to vector<3x8xf32>
    %cst_76 = arith.constant dense<0.000000e+00> : vector<56x8xf32>
    %78 = tpu.matmul %75, %77, %cst_76 {dimension_numbers = #tpu.dot_dimension_numbers<[1], [0], [0], [1], [0, 0, 1, 1], [], []>} : vector<56x3xf32>, vector<3x8xf32>, vector<56x8xf32> -> vector<56x8xf32>
    %79 = arith.addf %73, %78 : vector<56x8xf32>
    %c168_77 = arith.constant 168 : index
    %c0_78 = arith.constant 0 : index
    %80 = vector.load %arg1[%c168_77, %c0_78] : memref<504x256xf32, #tpu.memory_space<vmem>>, vector<56x256xf32>
    %cst_79 = arith.constant dense<0.000000e+00> : vector<56x3xf32>
    %81 = tpu.matmul %80, %62, %cst_79 {dimension_numbers = #tpu.dot_dimension_numbers<[1], [1], [0], [0], [0, 0, 1, 0], [], []>} : vector<56x256xf32>, vector<3x256xf32>, vector<56x3xf32> -> vector<56x3xf32>
    %c3_80 = arith.constant 3 : index
    %c0_81 = arith.constant 0 : index
    %c0_82 = arith.constant 0 : index
    %82 = vector.load %arg5[%c3_80, %c0_81, %c0_82] : memref<9x3x8xf32, #tpu.memory_space<vmem>>, vector<1x3x8xf32>
    %83 = vector.shape_cast %82 : vector<1x3x8xf32> to vector<3x8xf32>
    %cst_83 = arith.constant dense<0.000000e+00> : vector<56x8xf32>
    %84 = tpu.matmul %81, %83, %cst_83 {dimension_numbers = #tpu.dot_dimension_numbers<[1], [0], [0], [1], [0, 0, 1, 1], [], []>} : vector<56x3xf32>, vector<3x8xf32>, vector<56x8xf32> -> vector<56x8xf32>
    %85 = arith.addf %79, %84 : vector<56x8xf32>
    %c224_84 = arith.constant 224 : index
    %c0_85 = arith.constant 0 : index
    %86 = vector.load %arg1[%c224_84, %c0_85] : memref<504x256xf32, #tpu.memory_space<vmem>>, vector<56x256xf32>
    %cst_86 = arith.constant dense<0.000000e+00> : vector<56x3xf32>
    %87 = tpu.matmul %86, %62, %cst_86 {dimension_numbers = #tpu.dot_dimension_numbers<[1], [1], [0], [0], [0, 0, 1, 0], [], []>} : vector<56x256xf32>, vector<3x256xf32>, vector<56x3xf32> -> vector<56x3xf32>
    %c4_87 = arith.constant 4 : index
    %c0_88 = arith.constant 0 : index
    %c0_89 = arith.constant 0 : index
    %88 = vector.load %arg5[%c4_87, %c0_88, %c0_89] : memref<9x3x8xf32, #tpu.memory_space<vmem>>, vector<1x3x8xf32>
    %89 = vector.shape_cast %88 : vector<1x3x8xf32> to vector<3x8xf32>
    %cst_90 = arith.constant dense<0.000000e+00> : vector<56x8xf32>
    %90 = tpu.matmul %87, %89, %cst_90 {dimension_numbers = #tpu.dot_dimension_numbers<[1], [0], [0], [1], [0, 0, 1, 1], [], []>} : vector<56x3xf32>, vector<3x8xf32>, vector<56x8xf32> -> vector<56x8xf32>
    %91 = arith.addf %85, %90 : vector<56x8xf32>
    %c280_91 = arith.constant 280 : index
    %c0_92 = arith.constant 0 : index
    %92 = vector.load %arg1[%c280_91, %c0_92] : memref<504x256xf32, #tpu.memory_space<vmem>>, vector<56x256xf32>
    %cst_93 = arith.constant dense<0.000000e+00> : vector<56x3xf32>
    %93 = tpu.matmul %92, %62, %cst_93 {dimension_numbers = #tpu.dot_dimension_numbers<[1], [1], [0], [0], [0, 0, 1, 0], [], []>} : vector<56x256xf32>, vector<3x256xf32>, vector<56x3xf32> -> vector<56x3xf32>
    %c5_94 = arith.constant 5 : index
    %c0_95 = arith.constant 0 : index
    %c0_96 = arith.constant 0 : index
    %94 = vector.load %arg5[%c5_94, %c0_95, %c0_96] : memref<9x3x8xf32, #tpu.memory_space<vmem>>, vector<1x3x8xf32>
    %95 = vector.shape_cast %94 : vector<1x3x8xf32> to vector<3x8xf32>
    %cst_97 = arith.constant dense<0.000000e+00> : vector<56x8xf32>
    %96 = tpu.matmul %93, %95, %cst_97 {dimension_numbers = #tpu.dot_dimension_numbers<[1], [0], [0], [1], [0, 0, 1, 1], [], []>} : vector<56x3xf32>, vector<3x8xf32>, vector<56x8xf32> -> vector<56x8xf32>
    %97 = arith.addf %91, %96 : vector<56x8xf32>
    %c336_98 = arith.constant 336 : index
    %c0_99 = arith.constant 0 : index
    %98 = vector.load %arg1[%c336_98, %c0_99] : memref<504x256xf32, #tpu.memory_space<vmem>>, vector<56x256xf32>
    %cst_100 = arith.constant dense<0.000000e+00> : vector<56x3xf32>
    %99 = tpu.matmul %98, %62, %cst_100 {dimension_numbers = #tpu.dot_dimension_numbers<[1], [1], [0], [0], [0, 0, 1, 0], [], []>} : vector<56x256xf32>, vector<3x256xf32>, vector<56x3xf32> -> vector<56x3xf32>
    %c6_101 = arith.constant 6 : index
    %c0_102 = arith.constant 0 : index
    %c0_103 = arith.constant 0 : index
    %100 = vector.load %arg5[%c6_101, %c0_102, %c0_103] : memref<9x3x8xf32, #tpu.memory_space<vmem>>, vector<1x3x8xf32>
    %101 = vector.shape_cast %100 : vector<1x3x8xf32> to vector<3x8xf32>
    %cst_104 = arith.constant dense<0.000000e+00> : vector<56x8xf32>
    %102 = tpu.matmul %99, %101, %cst_104 {dimension_numbers = #tpu.dot_dimension_numbers<[1], [0], [0], [1], [0, 0, 1, 1], [], []>} : vector<56x3xf32>, vector<3x8xf32>, vector<56x8xf32> -> vector<56x8xf32>
    %103 = arith.addf %97, %102 : vector<56x8xf32>
    %c392_105 = arith.constant 392 : index
    %c0_106 = arith.constant 0 : index
    %104 = vector.load %arg1[%c392_105, %c0_106] : memref<504x256xf32, #tpu.memory_space<vmem>>, vector<56x256xf32>
    %cst_107 = arith.constant dense<0.000000e+00> : vector<56x3xf32>
    %105 = tpu.matmul %104, %62, %cst_107 {dimension_numbers = #tpu.dot_dimension_numbers<[1], [1], [0], [0], [0, 0, 1, 0], [], []>} : vector<56x256xf32>, vector<3x256xf32>, vector<56x3xf32> -> vector<56x3xf32>
    %c7_108 = arith.constant 7 : index
    %c0_109 = arith.constant 0 : index
    %c0_110 = arith.constant 0 : index
    %106 = vector.load %arg5[%c7_108, %c0_109, %c0_110] : memref<9x3x8xf32, #tpu.memory_space<vmem>>, vector<1x3x8xf32>
    %107 = vector.shape_cast %106 : vector<1x3x8xf32> to vector<3x8xf32>
    %cst_111 = arith.constant dense<0.000000e+00> : vector<56x8xf32>
    %108 = tpu.matmul %105, %107, %cst_111 {dimension_numbers = #tpu.dot_dimension_numbers<[1], [0], [0], [1], [0, 0, 1, 1], [], []>} : vector<56x3xf32>, vector<3x8xf32>, vector<56x8xf32> -> vector<56x8xf32>
    %109 = arith.addf %103, %108 : vector<56x8xf32>
    %c448_112 = arith.constant 448 : index
    %c0_113 = arith.constant 0 : index
    %110 = vector.load %arg1[%c448_112, %c0_113] : memref<504x256xf32, #tpu.memory_space<vmem>>, vector<56x256xf32>
    %cst_114 = arith.constant dense<0.000000e+00> : vector<56x3xf32>
    %111 = tpu.matmul %110, %62, %cst_114 {dimension_numbers = #tpu.dot_dimension_numbers<[1], [1], [0], [0], [0, 0, 1, 0], [], []>} : vector<56x256xf32>, vector<3x256xf32>, vector<56x3xf32> -> vector<56x3xf32>
    %c8_115 = arith.constant 8 : index
    %c0_116 = arith.constant 0 : index
    %c0_117 = arith.constant 0 : index
    %112 = vector.load %arg5[%c8_115, %c0_116, %c0_117] : memref<9x3x8xf32, #tpu.memory_space<vmem>>, vector<1x3x8xf32>
    %113 = vector.shape_cast %112 : vector<1x3x8xf32> to vector<3x8xf32>
    %cst_118 = arith.constant dense<0.000000e+00> : vector<56x8xf32>
    %114 = tpu.matmul %111, %113, %cst_118 {dimension_numbers = #tpu.dot_dimension_numbers<[1], [0], [0], [1], [0, 0, 1, 1], [], []>} : vector<56x3xf32>, vector<3x8xf32>, vector<56x8xf32> -> vector<56x8xf32>
    %115 = arith.addf %109, %114 : vector<56x8xf32>
    %116 = vector.broadcast %0 : vector<1x8xf32> to vector<56x8xf32>
    %117 = arith.addf %115, %116 : vector<56x8xf32>
    %cst_119 = arith.constant 0.000000e+00 : f32
    %118 = vector.broadcast %cst_119 : f32 to vector<56x8xf32>
    %119 = arith.maximumf %117, %118 : vector<56x8xf32>
    %c56_120 = arith.constant 56 : index
    %c0_121 = arith.constant 0 : index
    %120 = vector.load %arg24[%c56_120, %c0_121] : memref<112x8xf32, #tpu.memory_space<vmem>>, vector<56x8xf32>
    tpu.vector_store %arg24[%c56_120, %c0_121], %119 {strides = array<i32>} : memref<112x8xf32, #tpu.memory_space<vmem>>, vector<56x8xf32>,
    %c0_122 = arith.constant 0 : index
    %c0_123 = arith.constant 0 : index
    %121 = vector.load %arg8[%c0_122, %c0_123] : memref<1x8xf32, #tpu.memory_space<vmem>>, vector<1x8xf32>
    %c0_124 = arith.constant 0 : index
    %c0_125 = arith.constant 0 : index
    %122 = vector.load %arg24[%c0_124, %c0_125] : memref<112x8xf32, #tpu.memory_space<vmem>>, vector<56x8xf32>
    %c0_126 = arith.constant 0 : index
    %c0_127 = arith.constant 0 : index
    %123 = vector.load %arg2[%c0_126, %c0_127] : memref<288x56xf32, #tpu.memory_space<vmem>>, vector<32x56xf32>
    %cst_128 = arith.constant dense<0.000000e+00> : vector<32x8xf32>
    %124 = tpu.matmul %123, %122, %cst_128 {dimension_numbers = #tpu.dot_dimension_numbers<[1], [0], [0], [1], [0, 0, 1, 1], [], []>} : vector<32x56xf32>, vector<56x8xf32>, vector<32x8xf32> -> vector<32x8xf32>
    %c0_129 = arith.constant 0 : index
    %c0_130 = arith.constant 0 : index
    %c0_131 = arith.constant 0 : index
    %125 = vector.load %arg7[%c0_129, %c0_130, %c0_131] : memref<9x8x8xf32, #tpu.memory_space<vmem>>, vector<1x8x8xf32>
    %126 = vector.shape_cast %125 : vector<1x8x8xf32> to vector<8x8xf32>
    %cst_132 = arith.constant dense<0.000000e+00> : vector<32x8xf32>
    %127 = tpu.matmul %124, %126, %cst_132 {dimension_numbers = #tpu.dot_dimension_numbers<[1], [0], [0], [1], [0, 0, 1, 1], [], []>} : vector<32x8xf32>, vector<8x8xf32>, vector<32x8xf32> -> vector<32x8xf32>
    %c32 = arith.constant 32 : index
    %c0_133 = arith.constant 0 : index
    %128 = vector.load %arg2[%c32, %c0_133] : memref<288x56xf32, #tpu.memory_space<vmem>>, vector<32x56xf32>
    %cst_134 = arith.constant dense<0.000000e+00> : vector<32x8xf32>
    %129 = tpu.matmul %128, %122, %cst_134 {dimension_numbers = #tpu.dot_dimension_numbers<[1], [0], [0], [1], [0, 0, 1, 1], [], []>} : vector<32x56xf32>, vector<56x8xf32>, vector<32x8xf32> -> vector<32x8xf32>
    %c1_135 = arith.constant 1 : index
    %c0_136 = arith.constant 0 : index
    %c0_137 = arith.constant 0 : index
    %130 = vector.load %arg7[%c1_135, %c0_136, %c0_137] : memref<9x8x8xf32, #tpu.memory_space<vmem>>, vector<1x8x8xf32>
    %131 = vector.shape_cast %130 : vector<1x8x8xf32> to vector<8x8xf32>
    %cst_138 = arith.constant dense<0.000000e+00> : vector<32x8xf32>
    %132 = tpu.matmul %129, %131, %cst_138 {dimension_numbers = #tpu.dot_dimension_numbers<[1], [0], [0], [1], [0, 0, 1, 1], [], []>} : vector<32x8xf32>, vector<8x8xf32>, vector<32x8xf32> -> vector<32x8xf32>
    %133 = arith.addf %127, %132 : vector<32x8xf32>
    %c64 = arith.constant 64 : index
    %c0_139 = arith.constant 0 : index
    %134 = vector.load %arg2[%c64, %c0_139] : memref<288x56xf32, #tpu.memory_space<vmem>>, vector<32x56xf32>
    %cst_140 = arith.constant dense<0.000000e+00> : vector<32x8xf32>
    %135 = tpu.matmul %134, %122, %cst_140 {dimension_numbers = #tpu.dot_dimension_numbers<[1], [0], [0], [1], [0, 0, 1, 1], [], []>} : vector<32x56xf32>, vector<56x8xf32>, vector<32x8xf32> -> vector<32x8xf32>
    %c2_141 = arith.constant 2 : index
    %c0_142 = arith.constant 0 : index
    %c0_143 = arith.constant 0 : index
    %136 = vector.load %arg7[%c2_141, %c0_142, %c0_143] : memref<9x8x8xf32, #tpu.memory_space<vmem>>, vector<1x8x8xf32>
    %137 = vector.shape_cast %136 : vector<1x8x8xf32> to vector<8x8xf32>
    %cst_144 = arith.constant dense<0.000000e+00> : vector<32x8xf32>
    %138 = tpu.matmul %135, %137, %cst_144 {dimension_numbers = #tpu.dot_dimension_numbers<[1], [0], [0], [1], [0, 0, 1, 1], [], []>} : vector<32x8xf32>, vector<8x8xf32>, vector<32x8xf32> -> vector<32x8xf32>
    %139 = arith.addf %133, %138 : vector<32x8xf32>
    %c96 = arith.constant 96 : index
    %c0_145 = arith.constant 0 : index
    %140 = vector.load %arg2[%c96, %c0_145] : memref<288x56xf32, #tpu.memory_space<vmem>>, vector<32x56xf32>
    %cst_146 = arith.constant dense<0.000000e+00> : vector<32x8xf32>
    %141 = tpu.matmul %140, %122, %cst_146 {dimension_numbers = #tpu.dot_dimension_numbers<[1], [0], [0], [1], [0, 0, 1, 1], [], []>} : vector<32x56xf32>, vector<56x8xf32>, vector<32x8xf32> -> vector<32x8xf32>
    %c3_147 = arith.constant 3 : index
    %c0_148 = arith.constant 0 : index
    %c0_149 = arith.constant 0 : index
    %142 = vector.load %arg7[%c3_147, %c0_148, %c0_149] : memref<9x8x8xf32, #tpu.memory_space<vmem>>, vector<1x8x8xf32>
    %143 = vector.shape_cast %142 : vector<1x8x8xf32> to vector<8x8xf32>
    %cst_150 = arith.constant dense<0.000000e+00> : vector<32x8xf32>
    %144 = tpu.matmul %141, %143, %cst_150 {dimension_numbers = #tpu.dot_dimension_numbers<[1], [0], [0], [1], [0, 0, 1, 1], [], []>} : vector<32x8xf32>, vector<8x8xf32>, vector<32x8xf32> -> vector<32x8xf32>
    %145 = arith.addf %139, %144 : vector<32x8xf32>
    %c128 = arith.constant 128 : index
    %c0_151 = arith.constant 0 : index
    %146 = vector.load %arg2[%c128, %c0_151] : memref<288x56xf32, #tpu.memory_space<vmem>>, vector<32x56xf32>
    %cst_152 = arith.constant dense<0.000000e+00> : vector<32x8xf32>
    %147 = tpu.matmul %146, %122, %cst_152 {dimension_numbers = #tpu.dot_dimension_numbers<[1], [0], [0], [1], [0, 0, 1, 1], [], []>} : vector<32x56xf32>, vector<56x8xf32>, vector<32x8xf32> -> vector<32x8xf32>
    %c4_153 = arith.constant 4 : index
    %c0_154 = arith.constant 0 : index
    %c0_155 = arith.constant 0 : index
    %148 = vector.load %arg7[%c4_153, %c0_154, %c0_155] : memref<9x8x8xf32, #tpu.memory_space<vmem>>, vector<1x8x8xf32>
    %149 = vector.shape_cast %148 : vector<1x8x8xf32> to vector<8x8xf32>
    %cst_156 = arith.constant dense<0.000000e+00> : vector<32x8xf32>
    %150 = tpu.matmul %147, %149, %cst_156 {dimension_numbers = #tpu.dot_dimension_numbers<[1], [0], [0], [1], [0, 0, 1, 1], [], []>} : vector<32x8xf32>, vector<8x8xf32>, vector<32x8xf32> -> vector<32x8xf32>
    %151 = arith.addf %145, %150 : vector<32x8xf32>
    %c160 = arith.constant 160 : index
    %c0_157 = arith.constant 0 : index
    %152 = vector.load %arg2[%c160, %c0_157] : memref<288x56xf32, #tpu.memory_space<vmem>>, vector<32x56xf32>
    %cst_158 = arith.constant dense<0.000000e+00> : vector<32x8xf32>
    %153 = tpu.matmul %152, %122, %cst_158 {dimension_numbers = #tpu.dot_dimension_numbers<[1], [0], [0], [1], [0, 0, 1, 1], [], []>} : vector<32x56xf32>, vector<56x8xf32>, vector<32x8xf32> -> vector<32x8xf32>
    %c5_159 = arith.constant 5 : index
    %c0_160 = arith.constant 0 : index
    %c0_161 = arith.constant 0 : index
    %154 = vector.load %arg7[%c5_159, %c0_160, %c0_161] : memref<9x8x8xf32, #tpu.memory_space<vmem>>, vector<1x8x8xf32>
    %155 = vector.shape_cast %154 : vector<1x8x8xf32> to vector<8x8xf32>
    %cst_162 = arith.constant dense<0.000000e+00> : vector<32x8xf32>
    %156 = tpu.matmul %153, %155, %cst_162 {dimension_numbers = #tpu.dot_dimension_numbers<[1], [0], [0], [1], [0, 0, 1, 1], [], []>} : vector<32x8xf32>, vector<8x8xf32>, vector<32x8xf32> -> vector<32x8xf32>
    %157 = arith.addf %151, %156 : vector<32x8xf32>
    %c192 = arith.constant 192 : index
    %c0_163 = arith.constant 0 : index
    %158 = vector.load %arg2[%c192, %c0_163] : memref<288x56xf32, #tpu.memory_space<vmem>>, vector<32x56xf32>
    %cst_164 = arith.constant dense<0.000000e+00> : vector<32x8xf32>
    %159 = tpu.matmul %158, %122, %cst_164 {dimension_numbers = #tpu.dot_dimension_numbers<[1], [0], [0], [1], [0, 0, 1, 1], [], []>} : vector<32x56xf32>, vector<56x8xf32>, vector<32x8xf32> -> vector<32x8xf32>
    %c6_165 = arith.constant 6 : index
    %c0_166 = arith.constant 0 : index
    %c0_167 = arith.constant 0 : index
    %160 = vector.load %arg7[%c6_165, %c0_166, %c0_167] : memref<9x8x8xf32, #tpu.memory_space<vmem>>, vector<1x8x8xf32>
    %161 = vector.shape_cast %160 : vector<1x8x8xf32> to vector<8x8xf32>
    %cst_168 = arith.constant dense<0.000000e+00> : vector<32x8xf32>
    %162 = tpu.matmul %159, %161, %cst_168 {dimension_numbers = #tpu.dot_dimension_numbers<[1], [0], [0], [1], [0, 0, 1, 1], [], []>} : vector<32x8xf32>, vector<8x8xf32>, vector<32x8xf32> -> vector<32x8xf32>
    %163 = arith.addf %157, %162 : vector<32x8xf32>
    %c224_169 = arith.constant 224 : index
    %c0_170 = arith.constant 0 : index
    %164 = vector.load %arg2[%c224_169, %c0_170] : memref<288x56xf32, #tpu.memory_space<vmem>>, vector<32x56xf32>
    %cst_171 = arith.constant dense<0.000000e+00> : vector<32x8xf32>
    %165 = tpu.matmul %164, %122, %cst_171 {dimension_numbers = #tpu.dot_dimension_numbers<[1], [0], [0], [1], [0, 0, 1, 1], [], []>} : vector<32x56xf32>, vector<56x8xf32>, vector<32x8xf32> -> vector<32x8xf32>
    %c7_172 = arith.constant 7 : index
    %c0_173 = arith.constant 0 : index
    %c0_174 = arith.constant 0 : index
    %166 = vector.load %arg7[%c7_172, %c0_173, %c0_174] : memref<9x8x8xf32, #tpu.memory_space<vmem>>, vector<1x8x8xf32>
    %167 = vector.shape_cast %166 : vector<1x8x8xf32> to vector<8x8xf32>
    %cst_175 = arith.constant dense<0.000000e+00> : vector<32x8xf32>
    %168 = tpu.matmul %165, %167, %cst_175 {dimension_numbers = #tpu.dot_dimension_numbers<[1], [0], [0], [1], [0, 0, 1, 1], [], []>} : vector<32x8xf32>, vector<8x8xf32>, vector<32x8xf32> -> vector<32x8xf32>
    %169 = arith.addf %163, %168 : vector<32x8xf32>
    %c256 = arith.constant 256 : index
    %c0_176 = arith.constant 0 : index
    %170 = vector.load %arg2[%c256, %c0_176] : memref<288x56xf32, #tpu.memory_space<vmem>>, vector<32x56xf32>
    %cst_177 = arith.constant dense<0.000000e+00> : vector<32x8xf32>
    %171 = tpu.matmul %170, %122, %cst_177 {dimension_numbers = #tpu.dot_dimension_numbers<[1], [0], [0], [1], [0, 0, 1, 1], [], []>} : vector<32x56xf32>, vector<56x8xf32>, vector<32x8xf32> -> vector<32x8xf32>
    %c8_178 = arith.constant 8 : index
    %c0_179 = arith.constant 0 : index
    %c0_180 = arith.constant 0 : index
    %172 = vector.load %arg7[%c8_178, %c0_179, %c0_180] : memref<9x8x8xf32, #tpu.memory_space<vmem>>, vector<1x8x8xf32>
    %173 = vector.shape_cast %172 : vector<1x8x8xf32> to vector<8x8xf32>
    %cst_181 = arith.constant dense<0.000000e+00> : vector<32x8xf32>
    %174 = tpu.matmul %171, %173, %cst_181 {dimension_numbers = #tpu.dot_dimension_numbers<[1], [0], [0], [1], [0, 0, 1, 1], [], []>} : vector<32x8xf32>, vector<8x8xf32>, vector<32x8xf32> -> vector<32x8xf32>
    %175 = arith.addf %169, %174 : vector<32x8xf32>
    %176 = vector.broadcast %121 : vector<1x8xf32> to vector<32x8xf32>
    %177 = arith.addf %175, %176 : vector<32x8xf32>
    %cst_182 = arith.constant 0.000000e+00 : f32
    %178 = vector.broadcast %cst_182 : f32 to vector<32x8xf32>
    %179 = arith.maximumf %177, %178 : vector<32x8xf32>
    %c0_183 = arith.constant 0 : index
    %c0_184 = arith.constant 0 : index
    %180 = vector.load %arg25[%c0_183, %c0_184] : memref<64x8xf32, #tpu.memory_space<vmem>>, vector<32x8xf32>
    tpu.vector_store %arg25[%c0_183, %c0_184], %179 {strides = array<i32>} : memref<64x8xf32, #tpu.memory_space<vmem>>, vector<32x8xf32>,
    %c56_185 = arith.constant 56 : index
    %c0_186 = arith.constant 0 : index
    %181 = vector.load %arg24[%c56_185, %c0_186] : memref<112x8xf32, #tpu.memory_space<vmem>>, vector<56x8xf32>
    %c0_187 = arith.constant 0 : index
    %c0_188 = arith.constant 0 : index
    %182 = vector.load %arg2[%c0_187, %c0_188] : memref<288x56xf32, #tpu.memory_space<vmem>>, vector<32x56xf32>
    %cst_189 = arith.constant dense<0.000000e+00> : vector<32x8xf32>
    %183 = tpu.matmul %182, %181, %cst_189 {dimension_numbers = #tpu.dot_dimension_numbers<[1], [0], [0], [1], [0, 0, 1, 1], [], []>} : vector<32x56xf32>, vector<56x8xf32>, vector<32x8xf32> -> vector<32x8xf32>
    %c0_190 = arith.constant 0 : index
    %c0_191 = arith.constant 0 : index
    %c0_192 = arith.constant 0 : index
    %184 = vector.load %arg7[%c0_190, %c0_191, %c0_192] : memref<9x8x8xf32, #tpu.memory_space<vmem>>, vector<1x8x8xf32>
    %185 = vector.shape_cast %184 : vector<1x8x8xf32> to vector<8x8xf32>
    %cst_193 = arith.constant dense<0.000000e+00> : vector<32x8xf32>
    %186 = tpu.matmul %183, %185, %cst_193 {dimension_numbers = #tpu.dot_dimension_numbers<[1], [0], [0], [1], [0, 0, 1, 1], [], []>} : vector<32x8xf32>, vector<8x8xf32>, vector<32x8xf32> -> vector<32x8xf32>
    %c32_194 = arith.constant 32 : index
    %c0_195 = arith.constant 0 : index
    %187 = vector.load %arg2[%c32_194, %c0_195] : memref<288x56xf32, #tpu.memory_space<vmem>>, vector<32x56xf32>
    %cst_196 = arith.constant dense<0.000000e+00> : vector<32x8xf32>
    %188 = tpu.matmul %187, %181, %cst_196 {dimension_numbers = #tpu.dot_dimension_numbers<[1], [0], [0], [1], [0, 0, 1, 1], [], []>} : vector<32x56xf32>, vector<56x8xf32>, vector<32x8xf32> -> vector<32x8xf32>
    %c1_197 = arith.constant 1 : index
    %c0_198 = arith.constant 0 : index
    %c0_199 = arith.constant 0 : index
    %189 = vector.load %arg7[%c1_197, %c0_198, %c0_199] : memref<9x8x8xf32, #tpu.memory_space<vmem>>, vector<1x8x8xf32>
    %190 = vector.shape_cast %189 : vector<1x8x8xf32> to vector<8x8xf32>
    %cst_200 = arith.constant dense<0.000000e+00> : vector<32x8xf32>
    %191 = tpu.matmul %188, %190, %cst_200 {dimension_numbers = #tpu.dot_dimension_numbers<[1], [0], [0], [1], [0, 0, 1, 1], [], []>} : vector<32x8xf32>, vector<8x8xf32>, vector<32x8xf32> -> vector<32x8xf32>
    %192 = arith.addf %186, %191 : vector<32x8xf32>
    %c64_201 = arith.constant 64 : index
    %c0_202 = arith.constant 0 : index
    %193 = vector.load %arg2[%c64_201, %c0_202] : memref<288x56xf32, #tpu.memory_space<vmem>>, vector<32x56xf32>
    %cst_203 = arith.constant dense<0.000000e+00> : vector<32x8xf32>
    %194 = tpu.matmul %193, %181, %cst_203 {dimension_numbers = #tpu.dot_dimension_numbers<[1], [0], [0], [1], [0, 0, 1, 1], [], []>} : vector<32x56xf32>, vector<56x8xf32>, vector<32x8xf32> -> vector<32x8xf32>
    %c2_204 = arith.constant 2 : index
    %c0_205 = arith.constant 0 : index
    %c0_206 = arith.constant 0 : index
    %195 = vector.load %arg7[%c2_204, %c0_205, %c0_206] : memref<9x8x8xf32, #tpu.memory_space<vmem>>, vector<1x8x8xf32>
    %196 = vector.shape_cast %195 : vector<1x8x8xf32> to vector<8x8xf32>
    %cst_207 = arith.constant dense<0.000000e+00> : vector<32x8xf32>
    %197 = tpu.matmul %194, %196, %cst_207 {dimension_numbers = #tpu.dot_dimension_numbers<[1], [0], [0], [1], [0, 0, 1, 1], [], []>} : vector<32x8xf32>, vector<8x8xf32>, vector<32x8xf32> -> vector<32x8xf32>
    %198 = arith.addf %192, %197 : vector<32x8xf32>
    %c96_208 = arith.constant 96 : index
    %c0_209 = arith.constant 0 : index
    %199 = vector.load %arg2[%c96_208, %c0_209] : memref<288x56xf32, #tpu.memory_space<vmem>>, vector<32x56xf32>
    %cst_210 = arith.constant dense<0.000000e+00> : vector<32x8xf32>
    %200 = tpu.matmul %199, %181, %cst_210 {dimension_numbers = #tpu.dot_dimension_numbers<[1], [0], [0], [1], [0, 0, 1, 1], [], []>} : vector<32x56xf32>, vector<56x8xf32>, vector<32x8xf32> -> vector<32x8xf32>
    %c3_211 = arith.constant 3 : index
    %c0_212 = arith.constant 0 : index
    %c0_213 = arith.constant 0 : index
    %201 = vector.load %arg7[%c3_211, %c0_212, %c0_213] : memref<9x8x8xf32, #tpu.memory_space<vmem>>, vector<1x8x8xf32>
    %202 = vector.shape_cast %201 : vector<1x8x8xf32> to vector<8x8xf32>
    %cst_214 = arith.constant dense<0.000000e+00> : vector<32x8xf32>
    %203 = tpu.matmul %200, %202, %cst_214 {dimension_numbers = #tpu.dot_dimension_numbers<[1], [0], [0], [1], [0, 0, 1, 1], [], []>} : vector<32x8xf32>, vector<8x8xf32>, vector<32x8xf32> -> vector<32x8xf32>
    %204 = arith.addf %198, %203 : vector<32x8xf32>
    %c128_215 = arith.constant 128 : index
    %c0_216 = arith.constant 0 : index
    %205 = vector.load %arg2[%c128_215, %c0_216] : memref<288x56xf32, #tpu.memory_space<vmem>>, vector<32x56xf32>
    %cst_217 = arith.constant dense<0.000000e+00> : vector<32x8xf32>
    %206 = tpu.matmul %205, %181, %cst_217 {dimension_numbers = #tpu.dot_dimension_numbers<[1], [0], [0], [1], [0, 0, 1, 1], [], []>} : vector<32x56xf32>, vector<56x8xf32>, vector<32x8xf32> -> vector<32x8xf32>
    %c4_218 = arith.constant 4 : index
    %c0_219 = arith.constant 0 : index
    %c0_220 = arith.constant 0 : index
    %207 = vector.load %arg7[%c4_218, %c0_219, %c0_220] : memref<9x8x8xf32, #tpu.memory_space<vmem>>, vector<1x8x8xf32>
    %208 = vector.shape_cast %207 : vector<1x8x8xf32> to vector<8x8xf32>
    %cst_221 = arith.constant dense<0.000000e+00> : vector<32x8xf32>
    %209 = tpu.matmul %206, %208, %cst_221 {dimension_numbers = #tpu.dot_dimension_numbers<[1], [0], [0], [1], [0, 0, 1, 1], [], []>} : vector<32x8xf32>, vector<8x8xf32>, vector<32x8xf32> -> vector<32x8xf32>
    %210 = arith.addf %204, %209 : vector<32x8xf32>
    %c160_222 = arith.constant 160 : index
    %c0_223 = arith.constant 0 : index
    %211 = vector.load %arg2[%c160_222, %c0_223] : memref<288x56xf32, #tpu.memory_space<vmem>>, vector<32x56xf32>
    %cst_224 = arith.constant dense<0.000000e+00> : vector<32x8xf32>
    %212 = tpu.matmul %211, %181, %cst_224 {dimension_numbers = #tpu.dot_dimension_numbers<[1], [0], [0], [1], [0, 0, 1, 1], [], []>} : vector<32x56xf32>, vector<56x8xf32>, vector<32x8xf32> -> vector<32x8xf32>
    %c5_225 = arith.constant 5 : index
    %c0_226 = arith.constant 0 : index
    %c0_227 = arith.constant 0 : index
    %213 = vector.load %arg7[%c5_225, %c0_226, %c0_227] : memref<9x8x8xf32, #tpu.memory_space<vmem>>, vector<1x8x8xf32>
    %214 = vector.shape_cast %213 : vector<1x8x8xf32> to vector<8x8xf32>
    %cst_228 = arith.constant dense<0.000000e+00> : vector<32x8xf32>
    %215 = tpu.matmul %212, %214, %cst_228 {dimension_numbers = #tpu.dot_dimension_numbers<[1], [0], [0], [1], [0, 0, 1, 1], [], []>} : vector<32x8xf32>, vector<8x8xf32>, vector<32x8xf32> -> vector<32x8xf32>
    %216 = arith.addf %210, %215 : vector<32x8xf32>
    %c192_229 = arith.constant 192 : index
    %c0_230 = arith.constant 0 : index
    %217 = vector.load %arg2[%c192_229, %c0_230] : memref<288x56xf32, #tpu.memory_space<vmem>>, vector<32x56xf32>
    %cst_231 = arith.constant dense<0.000000e+00> : vector<32x8xf32>
    %218 = tpu.matmul %217, %181, %cst_231 {dimension_numbers = #tpu.dot_dimension_numbers<[1], [0], [0], [1], [0, 0, 1, 1], [], []>} : vector<32x56xf32>, vector<56x8xf32>, vector<32x8xf32> -> vector<32x8xf32>
    %c6_232 = arith.constant 6 : index
    %c0_233 = arith.constant 0 : index
    %c0_234 = arith.constant 0 : index
    %219 = vector.load %arg7[%c6_232, %c0_233, %c0_234] : memref<9x8x8xf32, #tpu.memory_space<vmem>>, vector<1x8x8xf32>
    %220 = vector.shape_cast %219 : vector<1x8x8xf32> to vector<8x8xf32>
    %cst_235 = arith.constant dense<0.000000e+00> : vector<32x8xf32>
    %221 = tpu.matmul %218, %220, %cst_235 {dimension_numbers = #tpu.dot_dimension_numbers<[1], [0], [0], [1], [0, 0, 1, 1], [], []>} : vector<32x8xf32>, vector<8x8xf32>, vector<32x8xf32> -> vector<32x8xf32>
    %222 = arith.addf %216, %221 : vector<32x8xf32>
    %c224_236 = arith.constant 224 : index
    %c0_237 = arith.constant 0 : index
    %223 = vector.load %arg2[%c224_236, %c0_237] : memref<288x56xf32, #tpu.memory_space<vmem>>, vector<32x56xf32>
    %cst_238 = arith.constant dense<0.000000e+00> : vector<32x8xf32>
    %224 = tpu.matmul %223, %181, %cst_238 {dimension_numbers = #tpu.dot_dimension_numbers<[1], [0], [0], [1], [0, 0, 1, 1], [], []>} : vector<32x56xf32>, vector<56x8xf32>, vector<32x8xf32> -> vector<32x8xf32>
    %c7_239 = arith.constant 7 : index
    %c0_240 = arith.constant 0 : index
    %c0_241 = arith.constant 0 : index
    %225 = vector.load %arg7[%c7_239, %c0_240, %c0_241] : memref<9x8x8xf32, #tpu.memory_space<vmem>>, vector<1x8x8xf32>
    %226 = vector.shape_cast %225 : vector<1x8x8xf32> to vector<8x8xf32>
    %cst_242 = arith.constant dense<0.000000e+00> : vector<32x8xf32>
    %227 = tpu.matmul %224, %226, %cst_242 {dimension_numbers = #tpu.dot_dimension_numbers<[1], [0], [0], [1], [0, 0, 1, 1], [], []>} : vector<32x8xf32>, vector<8x8xf32>, vector<32x8xf32> -> vector<32x8xf32>
    %228 = arith.addf %222, %227 : vector<32x8xf32>
    %c256_243 = arith.constant 256 : index
    %c0_244 = arith.constant 0 : index
    %229 = vector.load %arg2[%c256_243, %c0_244] : memref<288x56xf32, #tpu.memory_space<vmem>>, vector<32x56xf32>
    %cst_245 = arith.constant dense<0.000000e+00> : vector<32x8xf32>
    %230 = tpu.matmul %229, %181, %cst_245 {dimension_numbers = #tpu.dot_dimension_numbers<[1], [0], [0], [1], [0, 0, 1, 1], [], []>} : vector<32x56xf32>, vector<56x8xf32>, vector<32x8xf32> -> vector<32x8xf32>
    %c8_246 = arith.constant 8 : index
    %c0_247 = arith.constant 0 : index
    %c0_248 = arith.constant 0 : index
    %231 = vector.load %arg7[%c8_246, %c0_247, %c0_248] : memref<9x8x8xf32, #tpu.memory_space<vmem>>, vector<1x8x8xf32>
    %232 = vector.shape_cast %231 : vector<1x8x8xf32> to vector<8x8xf32>
    %cst_249 = arith.constant dense<0.000000e+00> : vector<32x8xf32>
    %233 = tpu.matmul %230, %232, %cst_249 {dimension_numbers = #tpu.dot_dimension_numbers<[1], [0], [0], [1], [0, 0, 1, 1], [], []>} : vector<32x8xf32>, vector<8x8xf32>, vector<32x8xf32> -> vector<32x8xf32>
    %234 = arith.addf %228, %233 : vector<32x8xf32>
    %235 = vector.broadcast %121 : vector<1x8xf32> to vector<32x8xf32>
    %236 = arith.addf %234, %235 : vector<32x8xf32>
    %cst_250 = arith.constant 0.000000e+00 : f32
    %237 = vector.broadcast %cst_250 : f32 to vector<32x8xf32>
    %238 = arith.maximumf %236, %237 : vector<32x8xf32>
    %c32_251 = arith.constant 32 : index
    %c0_252 = arith.constant 0 : index
    %239 = vector.load %arg25[%c32_251, %c0_252] : memref<64x8xf32, #tpu.memory_space<vmem>>, vector<32x8xf32>
    tpu.vector_store %arg25[%c32_251, %c0_252], %238 {strides = array<i32>} : memref<64x8xf32, #tpu.memory_space<vmem>>, vector<32x8xf32>,
    %c0_253 = arith.constant 0 : index
    %c0_254 = arith.constant 0 : index
    %240 = vector.load %arg10[%c0_253, %c0_254] : memref<1x8xf32, #tpu.memory_space<vmem>>, vector<1x8xf32>
    %c0_255 = arith.constant 0 : index
    %c0_256 = arith.constant 0 : index
    %241 = vector.load %arg25[%c0_255, %c0_256] : memref<64x8xf32, #tpu.memory_space<vmem>>, vector<32x8xf32>
    %c0_257 = arith.constant 0 : index
    %c0_258 = arith.constant 0 : index
    %242 = vector.load %arg3[%c0_257, %c0_258] : memref<144x32xf32, #tpu.memory_space<vmem>>, vector<16x32xf32>
    %cst_259 = arith.constant dense<0.000000e+00> : vector<16x8xf32>
    %243 = tpu.matmul %242, %241, %cst_259 {dimension_numbers = #tpu.dot_dimension_numbers<[1], [0], [0], [1], [0, 0, 1, 1], [], []>} : vector<16x32xf32>, vector<32x8xf32>, vector<16x8xf32> -> vector<16x8xf32>
    %c0_260 = arith.constant 0 : index
    %c0_261 = arith.constant 0 : index
    %c0_262 = arith.constant 0 : index
    %244 = vector.load %arg9[%c0_260, %c0_261, %c0_262] : memref<9x8x8xf32, #tpu.memory_space<vmem>>, vector<1x8x8xf32>
    %245 = vector.shape_cast %244 : vector<1x8x8xf32> to vector<8x8xf32>
    %cst_263 = arith.constant dense<0.000000e+00> : vector<16x8xf32>
    %246 = tpu.matmul %243, %245, %cst_263 {dimension_numbers = #tpu.dot_dimension_numbers<[1], [0], [0], [1], [0, 0, 1, 1], [], []>} : vector<16x8xf32>, vector<8x8xf32>, vector<16x8xf32> -> vector<16x8xf32>
    %c16 = arith.constant 16 : index
    %c0_264 = arith.constant 0 : index
    %247 = vector.load %arg3[%c16, %c0_264] : memref<144x32xf32, #tpu.memory_space<vmem>>, vector<16x32xf32>
    %cst_265 = arith.constant dense<0.000000e+00> : vector<16x8xf32>
    %248 = tpu.matmul %247, %241, %cst_265 {dimension_numbers = #tpu.dot_dimension_numbers<[1], [0], [0], [1], [0, 0, 1, 1], [], []>} : vector<16x32xf32>, vector<32x8xf32>, vector<16x8xf32> -> vector<16x8xf32>
    %c1_266 = arith.constant 1 : index
    %c0_267 = arith.constant 0 : index
    %c0_268 = arith.constant 0 : index
    %249 = vector.load %arg9[%c1_266, %c0_267, %c0_268] : memref<9x8x8xf32, #tpu.memory_space<vmem>>, vector<1x8x8xf32>
    %250 = vector.shape_cast %249 : vector<1x8x8xf32> to vector<8x8xf32>
    %cst_269 = arith.constant dense<0.000000e+00> : vector<16x8xf32>
    %251 = tpu.matmul %248, %250, %cst_269 {dimension_numbers = #tpu.dot_dimension_numbers<[1], [0], [0], [1], [0, 0, 1, 1], [], []>} : vector<16x8xf32>, vector<8x8xf32>, vector<16x8xf32> -> vector<16x8xf32>
    %252 = arith.addf %246, %251 : vector<16x8xf32>
    %c32_270 = arith.constant 32 : index
    %c0_271 = arith.constant 0 : index
    %253 = vector.load %arg3[%c32_270, %c0_271] : memref<144x32xf32, #tpu.memory_space<vmem>>, vector<16x32xf32>
    %cst_272 = arith.constant dense<0.000000e+00> : vector<16x8xf32>
    %254 = tpu.matmul %253, %241, %cst_272 {dimension_numbers = #tpu.dot_dimension_numbers<[1], [0], [0], [1], [0, 0, 1, 1], [], []>} : vector<16x32xf32>, vector<32x8xf32>, vector<16x8xf32> -> vector<16x8xf32>
    %c2_273 = arith.constant 2 : index
    %c0_274 = arith.constant 0 : index
    %c0_275 = arith.constant 0 : index
    %255 = vector.load %arg9[%c2_273, %c0_274, %c0_275] : memref<9x8x8xf32, #tpu.memory_space<vmem>>, vector<1x8x8xf32>
    %256 = vector.shape_cast %255 : vector<1x8x8xf32> to vector<8x8xf32>
    %cst_276 = arith.constant dense<0.000000e+00> : vector<16x8xf32>
    %257 = tpu.matmul %254, %256, %cst_276 {dimension_numbers = #tpu.dot_dimension_numbers<[1], [0], [0], [1], [0, 0, 1, 1], [], []>} : vector<16x8xf32>, vector<8x8xf32>, vector<16x8xf32> -> vector<16x8xf32>
    %258 = arith.addf %252, %257 : vector<16x8xf32>
    %c48 = arith.constant 48 : index
    %c0_277 = arith.constant 0 : index
    %259 = vector.load %arg3[%c48, %c0_277] : memref<144x32xf32, #tpu.memory_space<vmem>>, vector<16x32xf32>
    %cst_278 = arith.constant dense<0.000000e+00> : vector<16x8xf32>
    %260 = tpu.matmul %259, %241, %cst_278 {dimension_numbers = #tpu.dot_dimension_numbers<[1], [0], [0], [1], [0, 0, 1, 1], [], []>} : vector<16x32xf32>, vector<32x8xf32>, vector<16x8xf32> -> vector<16x8xf32>
    %c3_279 = arith.constant 3 : index
    %c0_280 = arith.constant 0 : index
    %c0_281 = arith.constant 0 : index
    %261 = vector.load %arg9[%c3_279, %c0_280, %c0_281] : memref<9x8x8xf32, #tpu.memory_space<vmem>>, vector<1x8x8xf32>
    %262 = vector.shape_cast %261 : vector<1x8x8xf32> to vector<8x8xf32>
    %cst_282 = arith.constant dense<0.000000e+00> : vector<16x8xf32>
    %263 = tpu.matmul %260, %262, %cst_282 {dimension_numbers = #tpu.dot_dimension_numbers<[1], [0], [0], [1], [0, 0, 1, 1], [], []>} : vector<16x8xf32>, vector<8x8xf32>, vector<16x8xf32> -> vector<16x8xf32>
    %264 = arith.addf %258, %263 : vector<16x8xf32>
    %c64_283 = arith.constant 64 : index
    %c0_284 = arith.constant 0 : index
    %265 = vector.load %arg3[%c64_283, %c0_284] : memref<144x32xf32, #tpu.memory_space<vmem>>, vector<16x32xf32>
    %cst_285 = arith.constant dense<0.000000e+00> : vector<16x8xf32>
    %266 = tpu.matmul %265, %241, %cst_285 {dimension_numbers = #tpu.dot_dimension_numbers<[1], [0], [0], [1], [0, 0, 1, 1], [], []>} : vector<16x32xf32>, vector<32x8xf32>, vector<16x8xf32> -> vector<16x8xf32>
    %c4_286 = arith.constant 4 : index
    %c0_287 = arith.constant 0 : index
    %c0_288 = arith.constant 0 : index
    %267 = vector.load %arg9[%c4_286, %c0_287, %c0_288] : memref<9x8x8xf32, #tpu.memory_space<vmem>>, vector<1x8x8xf32>
    %268 = vector.shape_cast %267 : vector<1x8x8xf32> to vector<8x8xf32>
    %cst_289 = arith.constant dense<0.000000e+00> : vector<16x8xf32>
    %269 = tpu.matmul %266, %268, %cst_289 {dimension_numbers = #tpu.dot_dimension_numbers<[1], [0], [0], [1], [0, 0, 1, 1], [], []>} : vector<16x8xf32>, vector<8x8xf32>, vector<16x8xf32> -> vector<16x8xf32>
    %270 = arith.addf %264, %269 : vector<16x8xf32>
    %c80 = arith.constant 80 : index
    %c0_290 = arith.constant 0 : index
    %271 = vector.load %arg3[%c80, %c0_290] : memref<144x32xf32, #tpu.memory_space<vmem>>, vector<16x32xf32>
    %cst_291 = arith.constant dense<0.000000e+00> : vector<16x8xf32>
    %272 = tpu.matmul %271, %241, %cst_291 {dimension_numbers = #tpu.dot_dimension_numbers<[1], [0], [0], [1], [0, 0, 1, 1], [], []>} : vector<16x32xf32>, vector<32x8xf32>, vector<16x8xf32> -> vector<16x8xf32>
    %c5_292 = arith.constant 5 : index
    %c0_293 = arith.constant 0 : index
    %c0_294 = arith.constant 0 : index
    %273 = vector.load %arg9[%c5_292, %c0_293, %c0_294] : memref<9x8x8xf32, #tpu.memory_space<vmem>>, vector<1x8x8xf32>
    %274 = vector.shape_cast %273 : vector<1x8x8xf32> to vector<8x8xf32>
    %cst_295 = arith.constant dense<0.000000e+00> : vector<16x8xf32>
    %275 = tpu.matmul %272, %274, %cst_295 {dimension_numbers = #tpu.dot_dimension_numbers<[1], [0], [0], [1], [0, 0, 1, 1], [], []>} : vector<16x8xf32>, vector<8x8xf32>, vector<16x8xf32> -> vector<16x8xf32>
    %276 = arith.addf %270, %275 : vector<16x8xf32>
    %c96_296 = arith.constant 96 : index
    %c0_297 = arith.constant 0 : index
    %277 = vector.load %arg3[%c96_296, %c0_297] : memref<144x32xf32, #tpu.memory_space<vmem>>, vector<16x32xf32>
    %cst_298 = arith.constant dense<0.000000e+00> : vector<16x8xf32>
    %278 = tpu.matmul %277, %241, %cst_298 {dimension_numbers = #tpu.dot_dimension_numbers<[1], [0], [0], [1], [0, 0, 1, 1], [], []>} : vector<16x32xf32>, vector<32x8xf32>, vector<16x8xf32> -> vector<16x8xf32>
    %c6_299 = arith.constant 6 : index
    %c0_300 = arith.constant 0 : index
    %c0_301 = arith.constant 0 : index
    %279 = vector.load %arg9[%c6_299, %c0_300, %c0_301] : memref<9x8x8xf32, #tpu.memory_space<vmem>>, vector<1x8x8xf32>
    %280 = vector.shape_cast %279 : vector<1x8x8xf32> to vector<8x8xf32>
    %cst_302 = arith.constant dense<0.000000e+00> : vector<16x8xf32>
    %281 = tpu.matmul %278, %280, %cst_302 {dimension_numbers = #tpu.dot_dimension_numbers<[1], [0], [0], [1], [0, 0, 1, 1], [], []>} : vector<16x8xf32>, vector<8x8xf32>, vector<16x8xf32> -> vector<16x8xf32>
    %282 = arith.addf %276, %281 : vector<16x8xf32>
    %c112_303 = arith.constant 112 : index
    %c0_304 = arith.constant 0 : index
    %283 = vector.load %arg3[%c112_303, %c0_304] : memref<144x32xf32, #tpu.memory_space<vmem>>, vector<16x32xf32>
    %cst_305 = arith.constant dense<0.000000e+00> : vector<16x8xf32>
    %284 = tpu.matmul %283, %241, %cst_305 {dimension_numbers = #tpu.dot_dimension_numbers<[1], [0], [0], [1], [0, 0, 1, 1], [], []>} : vector<16x32xf32>, vector<32x8xf32>, vector<16x8xf32> -> vector<16x8xf32>
    %c7_306 = arith.constant 7 : index
    %c0_307 = arith.constant 0 : index
    %c0_308 = arith.constant 0 : index
    %285 = vector.load %arg9[%c7_306, %c0_307, %c0_308] : memref<9x8x8xf32, #tpu.memory_space<vmem>>, vector<1x8x8xf32>
    %286 = vector.shape_cast %285 : vector<1x8x8xf32> to vector<8x8xf32>
    %cst_309 = arith.constant dense<0.000000e+00> : vector<16x8xf32>
    %287 = tpu.matmul %284, %286, %cst_309 {dimension_numbers = #tpu.dot_dimension_numbers<[1], [0], [0], [1], [0, 0, 1, 1], [], []>} : vector<16x8xf32>, vector<8x8xf32>, vector<16x8xf32> -> vector<16x8xf32>
    %288 = arith.addf %282, %287 : vector<16x8xf32>
    %c128_310 = arith.constant 128 : index
    %c0_311 = arith.constant 0 : index
    %289 = vector.load %arg3[%c128_310, %c0_311] : memref<144x32xf32, #tpu.memory_space<vmem>>, vector<16x32xf32>
    %cst_312 = arith.constant dense<0.000000e+00> : vector<16x8xf32>
    %290 = tpu.matmul %289, %241, %cst_312 {dimension_numbers = #tpu.dot_dimension_numbers<[1], [0], [0], [1], [0, 0, 1, 1], [], []>} : vector<16x32xf32>, vector<32x8xf32>, vector<16x8xf32> -> vector<16x8xf32>
    %c8_313 = arith.constant 8 : index
    %c0_314 = arith.constant 0 : index
    %c0_315 = arith.constant 0 : index
    %291 = vector.load %arg9[%c8_313, %c0_314, %c0_315] : memref<9x8x8xf32, #tpu.memory_space<vmem>>, vector<1x8x8xf32>
    %292 = vector.shape_cast %291 : vector<1x8x8xf32> to vector<8x8xf32>
    %cst_316 = arith.constant dense<0.000000e+00> : vector<16x8xf32>
    %293 = tpu.matmul %290, %292, %cst_316 {dimension_numbers = #tpu.dot_dimension_numbers<[1], [0], [0], [1], [0, 0, 1, 1], [], []>} : vector<16x8xf32>, vector<8x8xf32>, vector<16x8xf32> -> vector<16x8xf32>
    %294 = arith.addf %288, %293 : vector<16x8xf32>
    %295 = vector.broadcast %240 : vector<1x8xf32> to vector<16x8xf32>
    %296 = arith.addf %294, %295 : vector<16x8xf32>
    %cst_317 = arith.constant 0.000000e+00 : f32
    %297 = vector.broadcast %cst_317 : f32 to vector<16x8xf32>
    %298 = arith.maximumf %296, %297 : vector<16x8xf32>
    %c0_318 = arith.constant 0 : index
    %c0_319 = arith.constant 0 : index
    %299 = vector.load %arg26[%c0_318, %c0_319] : memref<32x8xf32, #tpu.memory_space<vmem>>, vector<16x8xf32>
    tpu.vector_store %arg26[%c0_318, %c0_319], %298 {strides = array<i32>} : memref<32x8xf32, #tpu.memory_space<vmem>>, vector<16x8xf32>,
    %c32_320 = arith.constant 32 : index
    %c0_321 = arith.constant 0 : index
    %300 = vector.load %arg25[%c32_320, %c0_321] : memref<64x8xf32, #tpu.memory_space<vmem>>, vector<32x8xf32>
    %c0_322 = arith.constant 0 : index
    %c0_323 = arith.constant 0 : index
    %301 = vector.load %arg3[%c0_322, %c0_323] : memref<144x32xf32, #tpu.memory_space<vmem>>, vector<16x32xf32>
    %cst_324 = arith.constant dense<0.000000e+00> : vector<16x8xf32>
    %302 = tpu.matmul %301, %300, %cst_324 {dimension_numbers = #tpu.dot_dimension_numbers<[1], [0], [0], [1], [0, 0, 1, 1], [], []>} : vector<16x32xf32>, vector<32x8xf32>, vector<16x8xf32> -> vector<16x8xf32>
    %c0_325 = arith.constant 0 : index
    %c0_326 = arith.constant 0 : index
    %c0_327 = arith.constant 0 : index
    %303 = vector.load %arg9[%c0_325, %c0_326, %c0_327] : memref<9x8x8xf32, #tpu.memory_space<vmem>>, vector<1x8x8xf32>
    %304 = vector.shape_cast %303 : vector<1x8x8xf32> to vector<8x8xf32>
    %cst_328 = arith.constant dense<0.000000e+00> : vector<16x8xf32>
    %305 = tpu.matmul %302, %304, %cst_328 {dimension_numbers = #tpu.dot_dimension_numbers<[1], [0], [0], [1], [0, 0, 1, 1], [], []>} : vector<16x8xf32>, vector<8x8xf32>, vector<16x8xf32> -> vector<16x8xf32>
    %c16_329 = arith.constant 16 : index
    %c0_330 = arith.constant 0 : index
    %306 = vector.load %arg3[%c16_329, %c0_330] : memref<144x32xf32, #tpu.memory_space<vmem>>, vector<16x32xf32>
    %cst_331 = arith.constant dense<0.000000e+00> : vector<16x8xf32>
    %307 = tpu.matmul %306, %300, %cst_331 {dimension_numbers = #tpu.dot_dimension_numbers<[1], [0], [0], [1], [0, 0, 1, 1], [], []>} : vector<16x32xf32>, vector<32x8xf32>, vector<16x8xf32> -> vector<16x8xf32>
    %c1_332 = arith.constant 1 : index
    %c0_333 = arith.constant 0 : index
    %c0_334 = arith.constant 0 : index
    %308 = vector.load %arg9[%c1_332, %c0_333, %c0_334] : memref<9x8x8xf32, #tpu.memory_space<vmem>>, vector<1x8x8xf32>
    %309 = vector.shape_cast %308 : vector<1x8x8xf32> to vector<8x8xf32>
    %cst_335 = arith.constant dense<0.000000e+00> : vector<16x8xf32>
    %310 = tpu.matmul %307, %309, %cst_335 {dimension_numbers = #tpu.dot_dimension_numbers<[1], [0], [0], [1], [0, 0, 1, 1], [], []>} : vector<16x8xf32>, vector<8x8xf32>, vector<16x8xf32> -> vector<16x8xf32>
    %311 = arith.addf %305, %310 : vector<16x8xf32>
    %c32_336 = arith.constant 32 : index
    %c0_337 = arith.constant 0 : index
    %312 = vector.load %arg3[%c32_336, %c0_337] : memref<144x32xf32, #tpu.memory_space<vmem>>, vector<16x32xf32>
    %cst_338 = arith.constant dense<0.000000e+00> : vector<16x8xf32>
    %313 = tpu.matmul %312, %300, %cst_338 {dimension_numbers = #tpu.dot_dimension_numbers<[1], [0], [0], [1], [0, 0, 1, 1], [], []>} : vector<16x32xf32>, vector<32x8xf32>, vector<16x8xf32> -> vector<16x8xf32>
    %c2_339 = arith.constant 2 : index
    %c0_340 = arith.constant 0 : index
    %c0_341 = arith.constant 0 : index
    %314 = vector.load %arg9[%c2_339, %c0_340, %c0_341] : memref<9x8x8xf32, #tpu.memory_space<vmem>>, vector<1x8x8xf32>
    %315 = vector.shape_cast %314 : vector<1x8x8xf32> to vector<8x8xf32>
    %cst_342 = arith.constant dense<0.000000e+00> : vector<16x8xf32>
    %316 = tpu.matmul %313, %315, %cst_342 {dimension_numbers = #tpu.dot_dimension_numbers<[1], [0], [0], [1], [0, 0, 1, 1], [], []>} : vector<16x8xf32>, vector<8x8xf32>, vector<16x8xf32> -> vector<16x8xf32>
    %317 = arith.addf %311, %316 : vector<16x8xf32>
    %c48_343 = arith.constant 48 : index
    %c0_344 = arith.constant 0 : index
    %318 = vector.load %arg3[%c48_343, %c0_344] : memref<144x32xf32, #tpu.memory_space<vmem>>, vector<16x32xf32>
    %cst_345 = arith.constant dense<0.000000e+00> : vector<16x8xf32>
    %319 = tpu.matmul %318, %300, %cst_345 {dimension_numbers = #tpu.dot_dimension_numbers<[1], [0], [0], [1], [0, 0, 1, 1], [], []>} : vector<16x32xf32>, vector<32x8xf32>, vector<16x8xf32> -> vector<16x8xf32>
    %c3_346 = arith.constant 3 : index
    %c0_347 = arith.constant 0 : index
    %c0_348 = arith.constant 0 : index
    %320 = vector.load %arg9[%c3_346, %c0_347, %c0_348] : memref<9x8x8xf32, #tpu.memory_space<vmem>>, vector<1x8x8xf32>
    %321 = vector.shape_cast %320 : vector<1x8x8xf32> to vector<8x8xf32>
    %cst_349 = arith.constant dense<0.000000e+00> : vector<16x8xf32>
    %322 = tpu.matmul %319, %321, %cst_349 {dimension_numbers = #tpu.dot_dimension_numbers<[1], [0], [0], [1], [0, 0, 1, 1], [], []>} : vector<16x8xf32>, vector<8x8xf32>, vector<16x8xf32> -> vector<16x8xf32>
    %323 = arith.addf %317, %322 : vector<16x8xf32>
    %c64_350 = arith.constant 64 : index
    %c0_351 = arith.constant 0 : index
    %324 = vector.load %arg3[%c64_350, %c0_351] : memref<144x32xf32, #tpu.memory_space<vmem>>, vector<16x32xf32>
    %cst_352 = arith.constant dense<0.000000e+00> : vector<16x8xf32>
    %325 = tpu.matmul %324, %300, %cst_352 {dimension_numbers = #tpu.dot_dimension_numbers<[1], [0], [0], [1], [0, 0, 1, 1], [], []>} : vector<16x32xf32>, vector<32x8xf32>, vector<16x8xf32> -> vector<16x8xf32>
    %c4_353 = arith.constant 4 : index
    %c0_354 = arith.constant 0 : index
    %c0_355 = arith.constant 0 : index
    %326 = vector.load %arg9[%c4_353, %c0_354, %c0_355] : memref<9x8x8xf32, #tpu.memory_space<vmem>>, vector<1x8x8xf32>
    %327 = vector.shape_cast %326 : vector<1x8x8xf32> to vector<8x8xf32>
    %cst_356 = arith.constant dense<0.000000e+00> : vector<16x8xf32>
    %328 = tpu.matmul %325, %327, %cst_356 {dimension_numbers = #tpu.dot_dimension_numbers<[1], [0], [0], [1], [0, 0, 1, 1], [], []>} : vector<16x8xf32>, vector<8x8xf32>, vector<16x8xf32> -> vector<16x8xf32>
    %329 = arith.addf %323, %328 : vector<16x8xf32>
    %c80_357 = arith.constant 80 : index
    %c0_358 = arith.constant 0 : index
    %330 = vector.load %arg3[%c80_357, %c0_358] : memref<144x32xf32, #tpu.memory_space<vmem>>, vector<16x32xf32>
    %cst_359 = arith.constant dense<0.000000e+00> : vector<16x8xf32>
    %331 = tpu.matmul %330, %300, %cst_359 {dimension_numbers = #tpu.dot_dimension_numbers<[1], [0], [0], [1], [0, 0, 1, 1], [], []>} : vector<16x32xf32>, vector<32x8xf32>, vector<16x8xf32> -> vector<16x8xf32>
    %c5_360 = arith.constant 5 : index
    %c0_361 = arith.constant 0 : index
    %c0_362 = arith.constant 0 : index
    %332 = vector.load %arg9[%c5_360, %c0_361, %c0_362] : memref<9x8x8xf32, #tpu.memory_space<vmem>>, vector<1x8x8xf32>
    %333 = vector.shape_cast %332 : vector<1x8x8xf32> to vector<8x8xf32>
    %cst_363 = arith.constant dense<0.000000e+00> : vector<16x8xf32>
    %334 = tpu.matmul %331, %333, %cst_363 {dimension_numbers = #tpu.dot_dimension_numbers<[1], [0], [0], [1], [0, 0, 1, 1], [], []>} : vector<16x8xf32>, vector<8x8xf32>, vector<16x8xf32> -> vector<16x8xf32>
    %335 = arith.addf %329, %334 : vector<16x8xf32>
    %c96_364 = arith.constant 96 : index
    %c0_365 = arith.constant 0 : index
    %336 = vector.load %arg3[%c96_364, %c0_365] : memref<144x32xf32, #tpu.memory_space<vmem>>, vector<16x32xf32>
    %cst_366 = arith.constant dense<0.000000e+00> : vector<16x8xf32>
    %337 = tpu.matmul %336, %300, %cst_366 {dimension_numbers = #tpu.dot_dimension_numbers<[1], [0], [0], [1], [0, 0, 1, 1], [], []>} : vector<16x32xf32>, vector<32x8xf32>, vector<16x8xf32> -> vector<16x8xf32>
    %c6_367 = arith.constant 6 : index
    %c0_368 = arith.constant 0 : index
    %c0_369 = arith.constant 0 : index
    %338 = vector.load %arg9[%c6_367, %c0_368, %c0_369] : memref<9x8x8xf32, #tpu.memory_space<vmem>>, vector<1x8x8xf32>
    %339 = vector.shape_cast %338 : vector<1x8x8xf32> to vector<8x8xf32>
    %cst_370 = arith.constant dense<0.000000e+00> : vector<16x8xf32>
    %340 = tpu.matmul %337, %339, %cst_370 {dimension_numbers = #tpu.dot_dimension_numbers<[1], [0], [0], [1], [0, 0, 1, 1], [], []>} : vector<16x8xf32>, vector<8x8xf32>, vector<16x8xf32> -> vector<16x8xf32>
    %341 = arith.addf %335, %340 : vector<16x8xf32>
    %c112_371 = arith.constant 112 : index
    %c0_372 = arith.constant 0 : index
    %342 = vector.load %arg3[%c112_371, %c0_372] : memref<144x32xf32, #tpu.memory_space<vmem>>, vector<16x32xf32>
    %cst_373 = arith.constant dense<0.000000e+00> : vector<16x8xf32>
    %343 = tpu.matmul %342, %300, %cst_373 {dimension_numbers = #tpu.dot_dimension_numbers<[1], [0], [0], [1], [0, 0, 1, 1], [], []>} : vector<16x32xf32>, vector<32x8xf32>, vector<16x8xf32> -> vector<16x8xf32>
    %c7_374 = arith.constant 7 : index
    %c0_375 = arith.constant 0 : index
    %c0_376 = arith.constant 0 : index
    %344 = vector.load %arg9[%c7_374, %c0_375, %c0_376] : memref<9x8x8xf32, #tpu.memory_space<vmem>>, vector<1x8x8xf32>
    %345 = vector.shape_cast %344 : vector<1x8x8xf32> to vector<8x8xf32>
    %cst_377 = arith.constant dense<0.000000e+00> : vector<16x8xf32>
    %346 = tpu.matmul %343, %345, %cst_377 {dimension_numbers = #tpu.dot_dimension_numbers<[1], [0], [0], [1], [0, 0, 1, 1], [], []>} : vector<16x8xf32>, vector<8x8xf32>, vector<16x8xf32> -> vector<16x8xf32>
    %347 = arith.addf %341, %346 : vector<16x8xf32>
    %c128_378 = arith.constant 128 : index
    %c0_379 = arith.constant 0 : index
    %348 = vector.load %arg3[%c128_378, %c0_379] : memref<144x32xf32, #tpu.memory_space<vmem>>, vector<16x32xf32>
    %cst_380 = arith.constant dense<0.000000e+00> : vector<16x8xf32>
    %349 = tpu.matmul %348, %300, %cst_380 {dimension_numbers = #tpu.dot_dimension_numbers<[1], [0], [0], [1], [0, 0, 1, 1], [], []>} : vector<16x32xf32>, vector<32x8xf32>, vector<16x8xf32> -> vector<16x8xf32>
    %c8_381 = arith.constant 8 : index
    %c0_382 = arith.constant 0 : index
    %c0_383 = arith.constant 0 : index
    %350 = vector.load %arg9[%c8_381, %c0_382, %c0_383] : memref<9x8x8xf32, #tpu.memory_space<vmem>>, vector<1x8x8xf32>
    %351 = vector.shape_cast %350 : vector<1x8x8xf32> to vector<8x8xf32>
    %cst_384 = arith.constant dense<0.000000e+00> : vector<16x8xf32>
    %352 = tpu.matmul %349, %351, %cst_384 {dimension_numbers = #tpu.dot_dimension_numbers<[1], [0], [0], [1], [0, 0, 1, 1], [], []>} : vector<16x8xf32>, vector<8x8xf32>, vector<16x8xf32> -> vector<16x8xf32>
    %353 = arith.addf %347, %352 : vector<16x8xf32>
    %354 = vector.broadcast %240 : vector<1x8xf32> to vector<16x8xf32>
    %355 = arith.addf %353, %354 : vector<16x8xf32>
    %cst_385 = arith.constant 0.000000e+00 : f32
    %356 = vector.broadcast %cst_385 : f32 to vector<16x8xf32>
    %357 = arith.maximumf %355, %356 : vector<16x8xf32>
    %c16_386 = arith.constant 16 : index
    %c0_387 = arith.constant 0 : index
    %358 = vector.load %arg26[%c16_386, %c0_387] : memref<32x8xf32, #tpu.memory_space<vmem>>, vector<16x8xf32>
    tpu.vector_store %arg26[%c16_386, %c0_387], %357 {strides = array<i32>} : memref<32x8xf32, #tpu.memory_space<vmem>>, vector<16x8xf32>,
    %c0_388 = arith.constant 0 : index
    %c0_389 = arith.constant 0 : index
    %359 = vector.load %arg12[%c0_388, %c0_389] : memref<1x8xf32, #tpu.memory_space<vmem>>, vector<1x8xf32>
    %c0_390 = arith.constant 0 : index
    %c0_391 = arith.constant 0 : index
    %360 = vector.load %arg26[%c0_390, %c0_391] : memref<32x8xf32, #tpu.memory_space<vmem>>, vector<16x8xf32>
    %c0_392 = arith.constant 0 : index
    %c0_393 = arith.constant 0 : index
    %361 = vector.load %arg4[%c0_392, %c0_393] : memref<72x16xf32, #tpu.memory_space<vmem>>, vector<8x16xf32>
    %cst_394 = arith.constant dense<0.000000e+00> : vector<8x8xf32>
    %362 = tpu.matmul %361, %360, %cst_394 {dimension_numbers = #tpu.dot_dimension_numbers<[1], [0], [0], [1], [0, 0, 1, 1], [], []>} : vector<8x16xf32>, vector<16x8xf32>, vector<8x8xf32> -> vector<8x8xf32>
    %c0_395 = arith.constant 0 : index
    %c0_396 = arith.constant 0 : index
    %c0_397 = arith.constant 0 : index
    %363 = vector.load %arg11[%c0_395, %c0_396, %c0_397] : memref<9x8x8xf32, #tpu.memory_space<vmem>>, vector<1x8x8xf32>
    %364 = vector.shape_cast %363 : vector<1x8x8xf32> to vector<8x8xf32>
    %cst_398 = arith.constant dense<0.000000e+00> : vector<8x8xf32>
    %365 = tpu.matmul %362, %364, %cst_398 {dimension_numbers = #tpu.dot_dimension_numbers<[1], [0], [0], [1], [0, 0, 1, 1], [], []>} : vector<8x8xf32>, vector<8x8xf32>, vector<8x8xf32> -> vector<8x8xf32>
    %c8_399 = arith.constant 8 : index
    %c0_400 = arith.constant 0 : index
    %366 = vector.load %arg4[%c8_399, %c0_400] : memref<72x16xf32, #tpu.memory_space<vmem>>, vector<8x16xf32>
    %cst_401 = arith.constant dense<0.000000e+00> : vector<8x8xf32>
    %367 = tpu.matmul %366, %360, %cst_401 {dimension_numbers = #tpu.dot_dimension_numbers<[1], [0], [0], [1], [0, 0, 1, 1], [], []>} : vector<8x16xf32>, vector<16x8xf32>, vector<8x8xf32> -> vector<8x8xf32>
    %c1_402 = arith.constant 1 : index
    %c0_403 = arith.constant 0 : index
    %c0_404 = arith.constant 0 : index
    %368 = vector.load %arg11[%c1_402, %c0_403, %c0_404] : memref<9x8x8xf32, #tpu.memory_space<vmem>>, vector<1x8x8xf32>
    %369 = vector.shape_cast %368 : vector<1x8x8xf32> to vector<8x8xf32>
    %cst_405 = arith.constant dense<0.000000e+00> : vector<8x8xf32>
    %370 = tpu.matmul %367, %369, %cst_405 {dimension_numbers = #tpu.dot_dimension_numbers<[1], [0], [0], [1], [0, 0, 1, 1], [], []>} : vector<8x8xf32>, vector<8x8xf32>, vector<8x8xf32> -> vector<8x8xf32>
    %371 = arith.addf %365, %370 : vector<8x8xf32>
    %c16_406 = arith.constant 16 : index
    %c0_407 = arith.constant 0 : index
    %372 = vector.load %arg4[%c16_406, %c0_407] : memref<72x16xf32, #tpu.memory_space<vmem>>, vector<8x16xf32>
    %cst_408 = arith.constant dense<0.000000e+00> : vector<8x8xf32>
    %373 = tpu.matmul %372, %360, %cst_408 {dimension_numbers = #tpu.dot_dimension_numbers<[1], [0], [0], [1], [0, 0, 1, 1], [], []>} : vector<8x16xf32>, vector<16x8xf32>, vector<8x8xf32> -> vector<8x8xf32>
    %c2_409 = arith.constant 2 : index
    %c0_410 = arith.constant 0 : index
    %c0_411 = arith.constant 0 : index
    %374 = vector.load %arg11[%c2_409, %c0_410, %c0_411] : memref<9x8x8xf32, #tpu.memory_space<vmem>>, vector<1x8x8xf32>
    %375 = vector.shape_cast %374 : vector<1x8x8xf32> to vector<8x8xf32>
    %cst_412 = arith.constant dense<0.000000e+00> : vector<8x8xf32>
    %376 = tpu.matmul %373, %375, %cst_412 {dimension_numbers = #tpu.dot_dimension_numbers<[1], [0], [0], [1], [0, 0, 1, 1], [], []>} : vector<8x8xf32>, vector<8x8xf32>, vector<8x8xf32> -> vector<8x8xf32>
    %377 = arith.addf %371, %376 : vector<8x8xf32>
    %c24 = arith.constant 24 : index
    %c0_413 = arith.constant 0 : index
    %378 = vector.load %arg4[%c24, %c0_413] : memref<72x16xf32, #tpu.memory_space<vmem>>, vector<8x16xf32>
    %cst_414 = arith.constant dense<0.000000e+00> : vector<8x8xf32>
    %379 = tpu.matmul %378, %360, %cst_414 {dimension_numbers = #tpu.dot_dimension_numbers<[1], [0], [0], [1], [0, 0, 1, 1], [], []>} : vector<8x16xf32>, vector<16x8xf32>, vector<8x8xf32> -> vector<8x8xf32>
    %c3_415 = arith.constant 3 : index
    %c0_416 = arith.constant 0 : index
    %c0_417 = arith.constant 0 : index
    %380 = vector.load %arg11[%c3_415, %c0_416, %c0_417] : memref<9x8x8xf32, #tpu.memory_space<vmem>>, vector<1x8x8xf32>
    %381 = vector.shape_cast %380 : vector<1x8x8xf32> to vector<8x8xf32>
    %cst_418 = arith.constant dense<0.000000e+00> : vector<8x8xf32>
    %382 = tpu.matmul %379, %381, %cst_418 {dimension_numbers = #tpu.dot_dimension_numbers<[1], [0], [0], [1], [0, 0, 1, 1], [], []>} : vector<8x8xf32>, vector<8x8xf32>, vector<8x8xf32> -> vector<8x8xf32>
    %383 = arith.addf %377, %382 : vector<8x8xf32>
    %c32_419 = arith.constant 32 : index
    %c0_420 = arith.constant 0 : index
    %384 = vector.load %arg4[%c32_419, %c0_420] : memref<72x16xf32, #tpu.memory_space<vmem>>, vector<8x16xf32>
    %cst_421 = arith.constant dense<0.000000e+00> : vector<8x8xf32>
    %385 = tpu.matmul %384, %360, %cst_421 {dimension_numbers = #tpu.dot_dimension_numbers<[1], [0], [0], [1], [0, 0, 1, 1], [], []>} : vector<8x16xf32>, vector<16x8xf32>, vector<8x8xf32> -> vector<8x8xf32>
    %c4_422 = arith.constant 4 : index
    %c0_423 = arith.constant 0 : index
    %c0_424 = arith.constant 0 : index
    %386 = vector.load %arg11[%c4_422, %c0_423, %c0_424] : memref<9x8x8xf32, #tpu.memory_space<vmem>>, vector<1x8x8xf32>
    %387 = vector.shape_cast %386 : vector<1x8x8xf32> to vector<8x8xf32>
    %cst_425 = arith.constant dense<0.000000e+00> : vector<8x8xf32>
    %388 = tpu.matmul %385, %387, %cst_425 {dimension_numbers = #tpu.dot_dimension_numbers<[1], [0], [0], [1], [0, 0, 1, 1], [], []>} : vector<8x8xf32>, vector<8x8xf32>, vector<8x8xf32> -> vector<8x8xf32>
    %389 = arith.addf %383, %388 : vector<8x8xf32>
    %c40 = arith.constant 40 : index
    %c0_426 = arith.constant 0 : index
    %390 = vector.load %arg4[%c40, %c0_426] : memref<72x16xf32, #tpu.memory_space<vmem>>, vector<8x16xf32>
    %cst_427 = arith.constant dense<0.000000e+00> : vector<8x8xf32>
    %391 = tpu.matmul %390, %360, %cst_427 {dimension_numbers = #tpu.dot_dimension_numbers<[1], [0], [0], [1], [0, 0, 1, 1], [], []>} : vector<8x16xf32>, vector<16x8xf32>, vector<8x8xf32> -> vector<8x8xf32>
    %c5_428 = arith.constant 5 : index
    %c0_429 = arith.constant 0 : index
    %c0_430 = arith.constant 0 : index
    %392 = vector.load %arg11[%c5_428, %c0_429, %c0_430] : memref<9x8x8xf32, #tpu.memory_space<vmem>>, vector<1x8x8xf32>
    %393 = vector.shape_cast %392 : vector<1x8x8xf32> to vector<8x8xf32>
    %cst_431 = arith.constant dense<0.000000e+00> : vector<8x8xf32>
    %394 = tpu.matmul %391, %393, %cst_431 {dimension_numbers = #tpu.dot_dimension_numbers<[1], [0], [0], [1], [0, 0, 1, 1], [], []>} : vector<8x8xf32>, vector<8x8xf32>, vector<8x8xf32> -> vector<8x8xf32>
    %395 = arith.addf %389, %394 : vector<8x8xf32>
    %c48_432 = arith.constant 48 : index
    %c0_433 = arith.constant 0 : index
    %396 = vector.load %arg4[%c48_432, %c0_433] : memref<72x16xf32, #tpu.memory_space<vmem>>, vector<8x16xf32>
    %cst_434 = arith.constant dense<0.000000e+00> : vector<8x8xf32>
    %397 = tpu.matmul %396, %360, %cst_434 {dimension_numbers = #tpu.dot_dimension_numbers<[1], [0], [0], [1], [0, 0, 1, 1], [], []>} : vector<8x16xf32>, vector<16x8xf32>, vector<8x8xf32> -> vector<8x8xf32>
    %c6_435 = arith.constant 6 : index
    %c0_436 = arith.constant 0 : index
    %c0_437 = arith.constant 0 : index
    %398 = vector.load %arg11[%c6_435, %c0_436, %c0_437] : memref<9x8x8xf32, #tpu.memory_space<vmem>>, vector<1x8x8xf32>
    %399 = vector.shape_cast %398 : vector<1x8x8xf32> to vector<8x8xf32>
    %cst_438 = arith.constant dense<0.000000e+00> : vector<8x8xf32>
    %400 = tpu.matmul %397, %399, %cst_438 {dimension_numbers = #tpu.dot_dimension_numbers<[1], [0], [0], [1], [0, 0, 1, 1], [], []>} : vector<8x8xf32>, vector<8x8xf32>, vector<8x8xf32> -> vector<8x8xf32>
    %401 = arith.addf %395, %400 : vector<8x8xf32>
    %c56_439 = arith.constant 56 : index
    %c0_440 = arith.constant 0 : index
    %402 = vector.load %arg4[%c56_439, %c0_440] : memref<72x16xf32, #tpu.memory_space<vmem>>, vector<8x16xf32>
    %cst_441 = arith.constant dense<0.000000e+00> : vector<8x8xf32>
    %403 = tpu.matmul %402, %360, %cst_441 {dimension_numbers = #tpu.dot_dimension_numbers<[1], [0], [0], [1], [0, 0, 1, 1], [], []>} : vector<8x16xf32>, vector<16x8xf32>, vector<8x8xf32> -> vector<8x8xf32>
    %c7_442 = arith.constant 7 : index
    %c0_443 = arith.constant 0 : index
    %c0_444 = arith.constant 0 : index
    %404 = vector.load %arg11[%c7_442, %c0_443, %c0_444] : memref<9x8x8xf32, #tpu.memory_space<vmem>>, vector<1x8x8xf32>
    %405 = vector.shape_cast %404 : vector<1x8x8xf32> to vector<8x8xf32>
    %cst_445 = arith.constant dense<0.000000e+00> : vector<8x8xf32>
    %406 = tpu.matmul %403, %405, %cst_445 {dimension_numbers = #tpu.dot_dimension_numbers<[1], [0], [0], [1], [0, 0, 1, 1], [], []>} : vector<8x8xf32>, vector<8x8xf32>, vector<8x8xf32> -> vector<8x8xf32>
    %407 = arith.addf %401, %406 : vector<8x8xf32>
    %c64_446 = arith.constant 64 : index
    %c0_447 = arith.constant 0 : index
    %408 = vector.load %arg4[%c64_446, %c0_447] : memref<72x16xf32, #tpu.memory_space<vmem>>, vector<8x16xf32>
    %cst_448 = arith.constant dense<0.000000e+00> : vector<8x8xf32>
    %409 = tpu.matmul %408, %360, %cst_448 {dimension_numbers = #tpu.dot_dimension_numbers<[1], [0], [0], [1], [0, 0, 1, 1], [], []>} : vector<8x16xf32>, vector<16x8xf32>, vector<8x8xf32> -> vector<8x8xf32>
    %c8_449 = arith.constant 8 : index
    %c0_450 = arith.constant 0 : index
    %c0_451 = arith.constant 0 : index
    %410 = vector.load %arg11[%c8_449, %c0_450, %c0_451] : memref<9x8x8xf32, #tpu.memory_space<vmem>>, vector<1x8x8xf32>
    %411 = vector.shape_cast %410 : vector<1x8x8xf32> to vector<8x8xf32>
    %cst_452 = arith.constant dense<0.000000e+00> : vector<8x8xf32>
    %412 = tpu.matmul %409, %411, %cst_452 {dimension_numbers = #tpu.dot_dimension_numbers<[1], [0], [0], [1], [0, 0, 1, 1], [], []>} : vector<8x8xf32>, vector<8x8xf32>, vector<8x8xf32> -> vector<8x8xf32>
    %413 = arith.addf %407, %412 : vector<8x8xf32>
    %414 = vector.broadcast %359 : vector<1x8xf32> to vector<8x8xf32>
    %415 = arith.addf %413, %414 : vector<8x8xf32>
    %cst_453 = arith.constant 0.000000e+00 : f32
    %416 = vector.broadcast %cst_453 : f32 to vector<8x8xf32>
    %417 = arith.maximumf %415, %416 : vector<8x8xf32>
    %c0_454 = arith.constant 0 : index
    %c0_455 = arith.constant 0 : index
    %418 = vector.load %arg27[%c0_454, %c0_455] : memref<16x8xf32, #tpu.memory_space<vmem>>, vector<8x8xf32>
    tpu.vector_store %arg27[%c0_454, %c0_455], %417 {strides = array<i32>} : memref<16x8xf32, #tpu.memory_space<vmem>>, vector<8x8xf32>,
    %c16_456 = arith.constant 16 : index
    %c0_457 = arith.constant 0 : index
    %419 = vector.load %arg26[%c16_456, %c0_457] : memref<32x8xf32, #tpu.memory_space<vmem>>, vector<16x8xf32>
    %c0_458 = arith.constant 0 : index
    %c0_459 = arith.constant 0 : index
    %420 = vector.load %arg4[%c0_458, %c0_459] : memref<72x16xf32, #tpu.memory_space<vmem>>, vector<8x16xf32>
    %cst_460 = arith.constant dense<0.000000e+00> : vector<8x8xf32>
    %421 = tpu.matmul %420, %419, %cst_460 {dimension_numbers = #tpu.dot_dimension_numbers<[1], [0], [0], [1], [0, 0, 1, 1], [], []>} : vector<8x16xf32>, vector<16x8xf32>, vector<8x8xf32> -> vector<8x8xf32>
    %c0_461 = arith.constant 0 : index
    %c0_462 = arith.constant 0 : index
    %c0_463 = arith.constant 0 : index
    %422 = vector.load %arg11[%c0_461, %c0_462, %c0_463] : memref<9x8x8xf32, #tpu.memory_space<vmem>>, vector<1x8x8xf32>
    %423 = vector.shape_cast %422 : vector<1x8x8xf32> to vector<8x8xf32>
    %cst_464 = arith.constant dense<0.000000e+00> : vector<8x8xf32>
    %424 = tpu.matmul %421, %423, %cst_464 {dimension_numbers = #tpu.dot_dimension_numbers<[1], [0], [0], [1], [0, 0, 1, 1], [], []>} : vector<8x8xf32>, vector<8x8xf32>, vector<8x8xf32> -> vector<8x8xf32>
    %c8_465 = arith.constant 8 : index
    %c0_466 = arith.constant 0 : index
    %425 = vector.load %arg4[%c8_465, %c0_466] : memref<72x16xf32, #tpu.memory_space<vmem>>, vector<8x16xf32>
    %cst_467 = arith.constant dense<0.000000e+00> : vector<8x8xf32>
    %426 = tpu.matmul %425, %419, %cst_467 {dimension_numbers = #tpu.dot_dimension_numbers<[1], [0], [0], [1], [0, 0, 1, 1], [], []>} : vector<8x16xf32>, vector<16x8xf32>, vector<8x8xf32> -> vector<8x8xf32>
    %c1_468 = arith.constant 1 : index
    %c0_469 = arith.constant 0 : index
    %c0_470 = arith.constant 0 : index
    %427 = vector.load %arg11[%c1_468, %c0_469, %c0_470] : memref<9x8x8xf32, #tpu.memory_space<vmem>>, vector<1x8x8xf32>
    %428 = vector.shape_cast %427 : vector<1x8x8xf32> to vector<8x8xf32>
    %cst_471 = arith.constant dense<0.000000e+00> : vector<8x8xf32>
    %429 = tpu.matmul %426, %428, %cst_471 {dimension_numbers = #tpu.dot_dimension_numbers<[1], [0], [0], [1], [0, 0, 1, 1], [], []>} : vector<8x8xf32>, vector<8x8xf32>, vector<8x8xf32> -> vector<8x8xf32>
    %430 = arith.addf %424, %429 : vector<8x8xf32>
    %c16_472 = arith.constant 16 : index
    %c0_473 = arith.constant 0 : index
    %431 = vector.load %arg4[%c16_472, %c0_473] : memref<72x16xf32, #tpu.memory_space<vmem>>, vector<8x16xf32>
    %cst_474 = arith.constant dense<0.000000e+00> : vector<8x8xf32>
    %432 = tpu.matmul %431, %419, %cst_474 {dimension_numbers = #tpu.dot_dimension_numbers<[1], [0], [0], [1], [0, 0, 1, 1], [], []>} : vector<8x16xf32>, vector<16x8xf32>, vector<8x8xf32> -> vector<8x8xf32>
    %c2_475 = arith.constant 2 : index
    %c0_476 = arith.constant 0 : index
    %c0_477 = arith.constant 0 : index
    %433 = vector.load %arg11[%c2_475, %c0_476, %c0_477] : memref<9x8x8xf32, #tpu.memory_space<vmem>>, vector<1x8x8xf32>
    %434 = vector.shape_cast %433 : vector<1x8x8xf32> to vector<8x8xf32>
    %cst_478 = arith.constant dense<0.000000e+00> : vector<8x8xf32>
    %435 = tpu.matmul %432, %434, %cst_478 {dimension_numbers = #tpu.dot_dimension_numbers<[1], [0], [0], [1], [0, 0, 1, 1], [], []>} : vector<8x8xf32>, vector<8x8xf32>, vector<8x8xf32> -> vector<8x8xf32>
    %436 = arith.addf %430, %435 : vector<8x8xf32>
    %c24_479 = arith.constant 24 : index
    %c0_480 = arith.constant 0 : index
    %437 = vector.load %arg4[%c24_479, %c0_480] : memref<72x16xf32, #tpu.memory_space<vmem>>, vector<8x16xf32>
    %cst_481 = arith.constant dense<0.000000e+00> : vector<8x8xf32>
    %438 = tpu.matmul %437, %419, %cst_481 {dimension_numbers = #tpu.dot_dimension_numbers<[1], [0], [0], [1], [0, 0, 1, 1], [], []>} : vector<8x16xf32>, vector<16x8xf32>, vector<8x8xf32> -> vector<8x8xf32>
    %c3_482 = arith.constant 3 : index
    %c0_483 = arith.constant 0 : index
    %c0_484 = arith.constant 0 : index
    %439 = vector.load %arg11[%c3_482, %c0_483, %c0_484] : memref<9x8x8xf32, #tpu.memory_space<vmem>>, vector<1x8x8xf32>
    %440 = vector.shape_cast %439 : vector<1x8x8xf32> to vector<8x8xf32>
    %cst_485 = arith.constant dense<0.000000e+00> : vector<8x8xf32>
    %441 = tpu.matmul %438, %440, %cst_485 {dimension_numbers = #tpu.dot_dimension_numbers<[1], [0], [0], [1], [0, 0, 1, 1], [], []>} : vector<8x8xf32>, vector<8x8xf32>, vector<8x8xf32> -> vector<8x8xf32>
    %442 = arith.addf %436, %441 : vector<8x8xf32>
    %c32_486 = arith.constant 32 : index
    %c0_487 = arith.constant 0 : index
    %443 = vector.load %arg4[%c32_486, %c0_487] : memref<72x16xf32, #tpu.memory_space<vmem>>, vector<8x16xf32>
    %cst_488 = arith.constant dense<0.000000e+00> : vector<8x8xf32>
    %444 = tpu.matmul %443, %419, %cst_488 {dimension_numbers = #tpu.dot_dimension_numbers<[1], [0], [0], [1], [0, 0, 1, 1], [], []>} : vector<8x16xf32>, vector<16x8xf32>, vector<8x8xf32> -> vector<8x8xf32>
    %c4_489 = arith.constant 4 : index
    %c0_490 = arith.constant 0 : index
    %c0_491 = arith.constant 0 : index
    %445 = vector.load %arg11[%c4_489, %c0_490, %c0_491] : memref<9x8x8xf32, #tpu.memory_space<vmem>>, vector<1x8x8xf32>
    %446 = vector.shape_cast %445 : vector<1x8x8xf32> to vector<8x8xf32>
    %cst_492 = arith.constant dense<0.000000e+00> : vector<8x8xf32>
    %447 = tpu.matmul %444, %446, %cst_492 {dimension_numbers = #tpu.dot_dimension_numbers<[1], [0], [0], [1], [0, 0, 1, 1], [], []>} : vector<8x8xf32>, vector<8x8xf32>, vector<8x8xf32> -> vector<8x8xf32>
    %448 = arith.addf %442, %447 : vector<8x8xf32>
    %c40_493 = arith.constant 40 : index
    %c0_494 = arith.constant 0 : index
    %449 = vector.load %arg4[%c40_493, %c0_494] : memref<72x16xf32, #tpu.memory_space<vmem>>, vector<8x16xf32>
    %cst_495 = arith.constant dense<0.000000e+00> : vector<8x8xf32>
    %450 = tpu.matmul %449, %419, %cst_495 {dimension_numbers = #tpu.dot_dimension_numbers<[1], [0], [0], [1], [0, 0, 1, 1], [], []>} : vector<8x16xf32>, vector<16x8xf32>, vector<8x8xf32> -> vector<8x8xf32>
    %c5_496 = arith.constant 5 : index
    %c0_497 = arith.constant 0 : index
    %c0_498 = arith.constant 0 : index
    %451 = vector.load %arg11[%c5_496, %c0_497, %c0_498] : memref<9x8x8xf32, #tpu.memory_space<vmem>>, vector<1x8x8xf32>
    %452 = vector.shape_cast %451 : vector<1x8x8xf32> to vector<8x8xf32>
    %cst_499 = arith.constant dense<0.000000e+00> : vector<8x8xf32>
    %453 = tpu.matmul %450, %452, %cst_499 {dimension_numbers = #tpu.dot_dimension_numbers<[1], [0], [0], [1], [0, 0, 1, 1], [], []>} : vector<8x8xf32>, vector<8x8xf32>, vector<8x8xf32> -> vector<8x8xf32>
    %454 = arith.addf %448, %453 : vector<8x8xf32>
    %c48_500 = arith.constant 48 : index
    %c0_501 = arith.constant 0 : index
    %455 = vector.load %arg4[%c48_500, %c0_501] : memref<72x16xf32, #tpu.memory_space<vmem>>, vector<8x16xf32>
    %cst_502 = arith.constant dense<0.000000e+00> : vector<8x8xf32>
    %456 = tpu.matmul %455, %419, %cst_502 {dimension_numbers = #tpu.dot_dimension_numbers<[1], [0], [0], [1], [0, 0, 1, 1], [], []>} : vector<8x16xf32>, vector<16x8xf32>, vector<8x8xf32> -> vector<8x8xf32>
    %c6_503 = arith.constant 6 : index
    %c0_504 = arith.constant 0 : index
    %c0_505 = arith.constant 0 : index
    %457 = vector.load %arg11[%c6_503, %c0_504, %c0_505] : memref<9x8x8xf32, #tpu.memory_space<vmem>>, vector<1x8x8xf32>
    %458 = vector.shape_cast %457 : vector<1x8x8xf32> to vector<8x8xf32>
    %cst_506 = arith.constant dense<0.000000e+00> : vector<8x8xf32>
    %459 = tpu.matmul %456, %458, %cst_506 {dimension_numbers = #tpu.dot_dimension_numbers<[1], [0], [0], [1], [0, 0, 1, 1], [], []>} : vector<8x8xf32>, vector<8x8xf32>, vector<8x8xf32> -> vector<8x8xf32>
    %460 = arith.addf %454, %459 : vector<8x8xf32>
    %c56_507 = arith.constant 56 : index
    %c0_508 = arith.constant 0 : index
    %461 = vector.load %arg4[%c56_507, %c0_508] : memref<72x16xf32, #tpu.memory_space<vmem>>, vector<8x16xf32>
    %cst_509 = arith.constant dense<0.000000e+00> : vector<8x8xf32>
    %462 = tpu.matmul %461, %419, %cst_509 {dimension_numbers = #tpu.dot_dimension_numbers<[1], [0], [0], [1], [0, 0, 1, 1], [], []>} : vector<8x16xf32>, vector<16x8xf32>, vector<8x8xf32> -> vector<8x8xf32>
    %c7_510 = arith.constant 7 : index
    %c0_511 = arith.constant 0 : index
    %c0_512 = arith.constant 0 : index
    %463 = vector.load %arg11[%c7_510, %c0_511, %c0_512] : memref<9x8x8xf32, #tpu.memory_space<vmem>>, vector<1x8x8xf32>
    %464 = vector.shape_cast %463 : vector<1x8x8xf32> to vector<8x8xf32>
    %cst_513 = arith.constant dense<0.000000e+00> : vector<8x8xf32>
    %465 = tpu.matmul %462, %464, %cst_513 {dimension_numbers = #tpu.dot_dimension_numbers<[1], [0], [0], [1], [0, 0, 1, 1], [], []>} : vector<8x8xf32>, vector<8x8xf32>, vector<8x8xf32> -> vector<8x8xf32>
    %466 = arith.addf %460, %465 : vector<8x8xf32>
    %c64_514 = arith.constant 64 : index
    %c0_515 = arith.constant 0 : index
    %467 = vector.load %arg4[%c64_514, %c0_515] : memref<72x16xf32, #tpu.memory_space<vmem>>, vector<8x16xf32>
    %cst_516 = arith.constant dense<0.000000e+00> : vector<8x8xf32>
    %468 = tpu.matmul %467, %419, %cst_516 {dimension_numbers = #tpu.dot_dimension_numbers<[1], [0], [0], [1], [0, 0, 1, 1], [], []>} : vector<8x16xf32>, vector<16x8xf32>, vector<8x8xf32> -> vector<8x8xf32>
    %c8_517 = arith.constant 8 : index
    %c0_518 = arith.constant 0 : index
    %c0_519 = arith.constant 0 : index
    %469 = vector.load %arg11[%c8_517, %c0_518, %c0_519] : memref<9x8x8xf32, #tpu.memory_space<vmem>>, vector<1x8x8xf32>
    %470 = vector.shape_cast %469 : vector<1x8x8xf32> to vector<8x8xf32>
    %cst_520 = arith.constant dense<0.000000e+00> : vector<8x8xf32>
    %471 = tpu.matmul %468, %470, %cst_520 {dimension_numbers = #tpu.dot_dimension_numbers<[1], [0], [0], [1], [0, 0, 1, 1], [], []>} : vector<8x8xf32>, vector<8x8xf32>, vector<8x8xf32> -> vector<8x8xf32>
    %472 = arith.addf %466, %471 : vector<8x8xf32>
    %473 = vector.broadcast %359 : vector<1x8xf32> to vector<8x8xf32>
    %474 = arith.addf %472, %473 : vector<8x8xf32>
    %cst_521 = arith.constant 0.000000e+00 : f32
    %475 = vector.broadcast %cst_521 : f32 to vector<8x8xf32>
    %476 = arith.maximumf %474, %475 : vector<8x8xf32>
    %c8_522 = arith.constant 8 : index
    %c0_523 = arith.constant 0 : index
    %477 = vector.load %arg27[%c8_522, %c0_523] : memref<16x8xf32, #tpu.memory_space<vmem>>, vector<8x8xf32>
    tpu.vector_store %arg27[%c8_522, %c0_523], %476 {strides = array<i32>} : memref<16x8xf32, #tpu.memory_space<vmem>>, vector<8x8xf32>,
    %c0_524 = arith.constant 0 : index
    %c0_525 = arith.constant 0 : index
    %478 = vector.load %arg27[%c0_524, %c0_525] : memref<16x8xf32, #tpu.memory_space<vmem>>, vector<16x8xf32>
    %c0_526 = arith.constant 0 : index
    %c0_527 = arith.constant 0 : index
    %c0_528 = arith.constant 0 : index
    %479 = vector.load %arg13[%c0_526, %c0_527, %c0_528] : memref<1x2x16xf32, #tpu.memory_space<vmem>>, vector<1x2x16xf32>
    %480 = vector.shape_cast %479 : vector<1x2x16xf32> to vector<2x16xf32>
    %cst_529 = arith.constant dense<0.000000e+00> : vector<2x8xf32>
    %481 = tpu.matmul %480, %478, %cst_529 {dimension_numbers = #tpu.dot_dimension_numbers<[1], [0], [0], [1], [0, 0, 1, 1], [], []>} : vector<2x16xf32>, vector<16x8xf32>, vector<2x8xf32> -> vector<2x8xf32>
    %c0_530 = arith.constant 0 : index
    %c0_531 = arith.constant 0 : index
    %c0_532 = arith.constant 0 : index
    %482 = vector.load %arg14[%c0_530, %c0_531, %c0_532] : memref<1x8x32xf32, #tpu.memory_space<vmem>>, vector<1x8x32xf32>
    %483 = vector.shape_cast %482 : vector<1x8x32xf32> to vector<8x32xf32>
    %cst_533 = arith.constant dense<0.000000e+00> : vector<2x32xf32>
    %484 = tpu.matmul %481, %483, %cst_533 {dimension_numbers = #tpu.dot_dimension_numbers<[1], [0], [0], [1], [0, 0, 1, 1], [], []>} : vector<2x8xf32>, vector<8x32xf32>, vector<2x32xf32> -> vector<2x32xf32>
    %c0_534 = arith.constant 0 : index
    %c0_535 = arith.constant 0 : index
    %485 = vector.load %arg15[%c0_534, %c0_535] : memref<1x32xf32, #tpu.memory_space<vmem>>, vector<1x32xf32>
    %486 = vector.broadcast %485 : vector<1x32xf32> to vector<2x32xf32>
    %487 = arith.addf %484, %486 : vector<2x32xf32>
    %c0_536 = arith.constant 0 : index
    %c0_537 = arith.constant 0 : index
    %488 = vector.load %arg22[%c0_536, %c0_537] : memref<2x32xf32, #tpu.memory_space<vmem>>, vector<2x32xf32>
    tpu.vector_store %arg22[%c0_536, %c0_537], %487 {strides = array<i32>} : memref<2x32xf32, #tpu.memory_space<vmem>>, vector<2x32xf32>,
    %c0_538 = arith.constant 0 : index
    %c0_539 = arith.constant 0 : index
    %489 = vector.load %arg16[%c0_538, %c0_539] : memref<32x256xf32, #tpu.memory_space<vmem>>, vector<32x256xf32>
    %cst_540 = arith.constant dense<0.000000e+00> : vector<2x256xf32>
    %490 = tpu.matmul %487, %489, %cst_540 {dimension_numbers = #tpu.dot_dimension_numbers<[1], [0], [0], [1], [0, 0, 1, 1], [], []>} : vector<2x32xf32>, vector<32x256xf32>, vector<2x256xf32> -> vector<2x256xf32>
    %c0_541 = arith.constant 0 : index
    %c0_542 = arith.constant 0 : index
    %491 = vector.load %arg17[%c0_541, %c0_542] : memref<1x256xf32, #tpu.memory_space<vmem>>, vector<1x256xf32>
    %492 = vector.broadcast %491 : vector<1x256xf32> to vector<2x256xf32>
    %493 = arith.addf %490, %492 : vector<2x256xf32>
    %cst_543 = arith.constant 0.000000e+00 : f32
    %494 = vector.broadcast %cst_543 : f32 to vector<2x256xf32>
    %495 = arith.maximumf %493, %494 : vector<2x256xf32>
    %c0_544 = arith.constant 0 : index
    %c0_545 = arith.constant 0 : index
    %496 = vector.load %arg18[%c0_544, %c0_545] : memref<256x256xf32, #tpu.memory_space<vmem>>, vector<256x256xf32>
    %cst_546 = arith.constant dense<0.000000e+00> : vector<2x256xf32>
    %497 = tpu.matmul %495, %496, %cst_546 {dimension_numbers = #tpu.dot_dimension_numbers<[1], [0], [0], [1], [0, 0, 1, 1], [], []>} : vector<2x256xf32>, vector<256x256xf32>, vector<2x256xf32> -> vector<2x256xf32>
    %c0_547 = arith.constant 0 : index
    %c0_548 = arith.constant 0 : index
    %498 = vector.load %arg19[%c0_547, %c0_548] : memref<1x256xf32, #tpu.memory_space<vmem>>, vector<1x256xf32>
    %499 = vector.broadcast %498 : vector<1x256xf32> to vector<2x256xf32>
    %500 = arith.addf %497, %499 : vector<2x256xf32>
    %cst_549 = arith.constant 0.000000e+00 : f32
    %501 = vector.broadcast %cst_549 : f32 to vector<2x256xf32>
    %502 = arith.maximumf %500, %501 : vector<2x256xf32>
    %c0_550 = arith.constant 0 : index
    %c0_551 = arith.constant 0 : index
    %503 = vector.load %arg20[%c0_550, %c0_551] : memref<256x8xf32, #tpu.memory_space<vmem>>, vector<256x8xf32>
    %cst_552 = arith.constant dense<0.000000e+00> : vector<2x8xf32>
    %504 = tpu.matmul %502, %503, %cst_552 {dimension_numbers = #tpu.dot_dimension_numbers<[1], [0], [0], [1], [0, 0, 1, 1], [], []>} : vector<2x256xf32>, vector<256x8xf32>, vector<2x8xf32> -> vector<2x8xf32>
    %c0_553 = arith.constant 0 : index
    %c0_554 = arith.constant 0 : index
    %505 = vector.load %arg21[%c0_553, %c0_554] : memref<1x8xf32, #tpu.memory_space<vmem>>, vector<1x8xf32>
    %506 = vector.broadcast %505 : vector<1x8xf32> to vector<2x8xf32>
    %507 = arith.addf %504, %506 : vector<2x8xf32>
    %c0_555 = arith.constant 0 : index
    %c0_556 = arith.constant 0 : index
    %508 = vector.load %arg23[%c0_555, %c0_556] : memref<2x8xf32, #tpu.memory_space<vmem>>, vector<2x8xf32>
    tpu.vector_store %arg23[%c0_555, %c0_556], %507 {strides = array<i32>} : memref<2x8xf32, #tpu.memory_space<vmem>>, vector<2x8xf32>,
    return
  }
}

</mosaic_0001>

<llo_original>
// kernel: got_forward.1
$region0: #{got_forward.1}
  #allocation0 [shape = 'u32[]', space=smem, size = 0x4, offset = 0x4, fixed_abs, tag = 'smem constant byte address 0x4 - core index']
  #allocation1 [shape = 'u32[72,128]{1,0:T(1,128)}', space=vmem, size = 0x9000, scoped, tag = 'internal scratch']
  #allocation2 [shape = 'f32[112,8]{1,0:T(8,128)}', space=vmem, size = 0xe000, scoped, tag = 'scratch operand']
  #allocation3 [shape = 'f32[64,8]{1,0:T(8,128)}', space=vmem, size = 0x8000, scoped, tag = 'scratch operand']
  #allocation4 [shape = 'f32[32,8]{1,0:T(8,128)}', space=vmem, size = 0x4000, scoped, tag = 'scratch operand']
  #allocation5 [shape = 'f32[16,8]{1,0:T(8,128)}', space=vmem, size = 0x2000, scoped, tag = 'scratch operand']
  %s0 = inlined_call_operand.vmem [shape: f32[2,3,256], index: 0, kind: input, shape index: {}]
  %s1 = inlined_call_operand.hbm [shape: f32[504,256], index: 1, kind: input, shape index: {}]
  %s2 = inlined_call_operand.vmem [shape: f32[288,56], index: 2, kind: input, shape index: {}]
  %s3 = inlined_call_operand.vmem [shape: f32[144,32], index: 3, kind: input, shape index: {}]
  %s4 = inlined_call_operand.vmem [shape: f32[72,16], index: 4, kind: input, shape index: {}]
  %s5 = inlined_call_operand.vmem [shape: f32[9,3,8], index: 5, kind: input, shape index: {}]
  %s6 = inlined_call_operand.vmem [shape: f32[1,8], index: 6, kind: input, shape index: {}]
  %s7 = inlined_call_operand.vmem [shape: f32[9,8,8], index: 7, kind: input, shape index: {}]
  %s8 = inlined_call_operand.vmem [shape: f32[1,8], index: 8, kind: input, shape index: {}]
  %s9 = inlined_call_operand.vmem [shape: f32[9,8,8], index: 9, kind: input, shape index: {}]
  %s10 = inlined_call_operand.vmem [shape: f32[1,8], index: 10, kind: input, shape index: {}]
  %s11 = inlined_call_operand.vmem [shape: f32[9,8,8], index: 11, kind: input, shape index: {}]
  %s12 = inlined_call_operand.vmem [shape: f32[1,8], index: 12, kind: input, shape index: {}]
  %s13 = inlined_call_operand.vmem [shape: f32[1,2,16], index: 13, kind: input, shape index: {}]
  %s14 = inlined_call_operand.vmem [shape: f32[1,8,32], index: 14, kind: input, shape index: {}]
  %s15 = inlined_call_operand.vmem [shape: f32[1,32], index: 15, kind: input, shape index: {}]
  %s16 = inlined_call_operand.vmem [shape: f32[32,256], index: 16, kind: input, shape index: {}]
  %s17 = inlined_call_operand.vmem [shape: f32[1,256], index: 17, kind: input, shape index: {}]
  %s18 = inlined_call_operand.vmem [shape: f32[256,256], index: 18, kind: input, shape index: {}]
  %s19 = inlined_call_operand.vmem [shape: f32[1,256], index: 19, kind: input, shape index: {}]
  %s20 = inlined_call_operand.vmem [shape: f32[256,8], index: 20, kind: input, shape index: {}]
  %s21 = inlined_call_operand.vmem [shape: f32[1,8], index: 21, kind: input, shape index: {}]
  %s22 = inlined_call_operand.hbm [shape: f32[2,32], index: 22, kind: output, shape index: {0}]
  %s23 = inlined_call_operand.hbm [shape: f32[2,8], index: 23, kind: output, shape index: {1}]
  %24 = xla_tuple %s22, %s23
  %s25 = sld [smem:[#allocation0]]
  $region110: #{got_forward.1} parent=0
    _
  %s27 = ssub.s32 1, %s25
  %s28 = scalar_select 0, %s27, %s25
  $region1: #{got_forward.1} parent=0
    #allocation6 [shape = 'u8[516096]{0}', space=vmem, size = 0x7e000, scoped, tag = 'input window, operand 1, single buffered']
    #allocation7 [shape = 's32[1]{0}', space=sflag, size = 0x4, scoped, tag = 'scoped memory for got_forward.1']
    #allocation8 [shape = 's32[1]{0}', space=sflag, size = 0x4, scoped, tag = 'scoped memory for got_forward.1']
    #allocation9 [shape = 'u8[1024]{0}', space=vmem, size = 0x400, scoped, tag = 'output window, operand 0, single buffered']
    #allocation10 [shape = 'u8[1024]{0}', space=vmem, size = 0x400, scoped, tag = 'output window, operand 1, single buffered']
    #allocation11 [shape = 's32[1]{0}', space=sflag, size = 0x4, scoped, tag = 'scoped memory for got_forward.1']
    %29 = vsyncpa [#allocation7], 0
    %30 = vsyncpa [#allocation8], 0
    %31 = vsyncpa [#allocation11], 0
    // Predicated region
    $region2: #{got_forward.1} parent=1 // pred_check
      _
    $region3: #{got_forward.1} parent=1 // pred_check_branch
      %33 = sbr.rel (0) target = $region5
    $region4: #{got_forward.1} parent=1 // pred_region
      _
    $region5: #{got_forward.1} parent=1 // pred_fallthru
      _
    // Predicated region
    $region6: #{got_forward.1} parent=1 // pred_check
      _
    $region7: #{got_forward.1} parent=1 // pred_check_branch
      %35 = sbr.rel (0) target = $region9
    $region8: #{got_forward.1} parent=1 // pred_region
      %37 = vsyncadd [#allocation7], 0
      %s38 = sshll.u32 %s1, 4
      %s39 = int_to_ptr.hbm [resolvable:$true] %s38
      %s40 = sshll.u32 [#allocation6], 4
      %s41 = int_to_ptr.vmem [resolvable:$true] %s40
      %46 = dma.hbm_to_vmem [thread:$0]  %s39, 16128, %s41, [#allocation7], 256, 256, 16
    $region9: #{got_forward.1} parent=1 // pred_fallthru
      _
    // Predicated region
    $region10: #{got_forward.1} parent=1 // pred_check
      _
    $region11: #{got_forward.1} parent=1 // pred_check_branch
      %48 = sbr.rel (0) target = $region13
    $region12: #{got_forward.1} parent=1 // pred_region
      _
    $region13: #{got_forward.1} parent=1 // pred_fallthru
      _
    // Predicated region
    $region14: #{got_forward.1} parent=1 // pred_check
      _
    $region15: #{got_forward.1} parent=1 // pred_check_branch
      %50 = sbr.rel (0) target = $region17
    $region16: #{got_forward.1} parent=1 // pred_region
      _
    $region17: #{got_forward.1} parent=1 // pred_fallthru
      _
    // Predicated region
    $region18: #{got_forward.1} parent=1 // pred_check
      _
    $region19: #{got_forward.1} parent=1 // pred_check_branch
      %52 = sbr.rel (0) target = $region21
    $region20: #{got_forward.1} parent=1 // pred_region
      _
    $region21: #{got_forward.1} parent=1 // pred_fallthru
      _
    // Predicated region
    $region22: #{got_forward.1} parent=1 // pred_check
      _
    $region23: #{got_forward.1} parent=1 // pred_check_branch
      %54 = sbr.rel (0) target = $region25
    $region24: #{got_forward.1} parent=1 // pred_region
      _
    $region25: #{got_forward.1} parent=1 // pred_fallthru
      _
    // Predicated region
    $region26: #{got_forward.1} parent=1 // pred_check
      _
    $region27: #{got_forward.1} parent=1 // pred_check_branch
      %56 = sbr.rel (0) target = $region29
    $region28: #{got_forward.1} parent=1 // pred_region
      _
    $region29: #{got_forward.1} parent=1 // pred_fallthru
      _
    // Predicated region
    $region30: #{got_forward.1} parent=1 // pred_check
      _
    $region31: #{got_forward.1} parent=1 // pred_check_branch
      %58 = sbr.rel (0) target = $region33
    $region32: #{got_forward.1} parent=1 // pred_region
      _
    $region33: #{got_forward.1} parent=1 // pred_fallthru
      _
    // Predicated region
    $region34: #{got_forward.1} parent=1 // pred_check
      _
    $region35: #{got_forward.1} parent=1 // pred_check_branch
      %60 = sbr.rel (0) target = $region37
    $region36: #{got_forward.1} parent=1 // pred_region
      _
    $region37: #{got_forward.1} parent=1 // pred_fallthru
      _
    // Predicated region
    $region38: #{got_forward.1} parent=1 // pred_check
      _
    $region39: #{got_forward.1} parent=1 // pred_check_branch
      %62 = sbr.rel (0) target = $region41
    $region40: #{got_forward.1} parent=1 // pred_region
      _
    $region41: #{got_forward.1} parent=1 // pred_fallthru
      _
    // Predicated region
    $region42: #{got_forward.1} parent=1 // pred_check
      _
    $region43: #{got_forward.1} parent=1 // pred_check_branch
      %64 = sbr.rel (0) target = $region45
    $region44: #{got_forward.1} parent=1 // pred_region
      _
    $region45: #{got_forward.1} parent=1 // pred_fallthru
      _
    // Predicated region
    $region46: #{got_forward.1} parent=1 // pred_check
      _
    $region47: #{got_forward.1} parent=1 // pred_check_branch
      %66 = sbr.rel (0) target = $region49
    $region48: #{got_forward.1} parent=1 // pred_region
      _
    $region49: #{got_forward.1} parent=1 // pred_fallthru
      _
    // Predicated region
    $region50: #{got_forward.1} parent=1 // pred_check
      _
    $region51: #{got_forward.1} parent=1 // pred_check_branch
      %68 = sbr.rel (0) target = $region53
    $region52: #{got_forward.1} parent=1 // pred_region
      _
    $region53: #{got_forward.1} parent=1 // pred_fallthru
      _
    // Predicated region
    $region54: #{got_forward.1} parent=1 // pred_check
      _
    $region55: #{got_forward.1} parent=1 // pred_check_branch
      %70 = sbr.rel (0) target = $region57
    $region56: #{got_forward.1} parent=1 // pred_region
      _
    $region57: #{got_forward.1} parent=1 // pred_fallthru
      _
    // Predicated region
    $region58: #{got_forward.1} parent=1 // pred_check
      _
    $region59: #{got_forward.1} parent=1 // pred_check_branch
      %72 = sbr.rel (0) target = $region61
    $region60: #{got_forward.1} parent=1 // pred_region
      _
    $region61: #{got_forward.1} parent=1 // pred_fallthru
      _
    // Predicated region
    $region62: #{got_forward.1} parent=1 // pred_check
      _
    $region63: #{got_forward.1} parent=1 // pred_check_branch
      %74 = sbr.rel (0) target = $region65
    $region64: #{got_forward.1} parent=1 // pred_region
      _
    $region65: #{got_forward.1} parent=1 // pred_fallthru
      _
    // Predicated region
    $region66: #{got_forward.1} parent=1 // pred_check
      _
    $region67: #{got_forward.1} parent=1 // pred_check_branch
      %76 = sbr.rel (0) target = $region69
    $region68: #{got_forward.1} parent=1 // pred_region
      _
    $region69: #{got_forward.1} parent=1 // pred_fallthru
      _
    // Predicated region
    $region70: #{got_forward.1} parent=1 // pred_check
      _
    $region71: #{got_forward.1} parent=1 // pred_check_branch
      %78 = sbr.rel (0) target = $region73
    $region72: #{got_forward.1} parent=1 // pred_region
      _
    $region73: #{got_forward.1} parent=1 // pred_fallthru
      _
    // Predicated region
    $region74: #{got_forward.1} parent=1 // pred_check
      _
    $region75: #{got_forward.1} parent=1 // pred_check_branch
      %80 = sbr.rel (0) target = $region77
    $region76: #{got_forward.1} parent=1 // pred_region
      _
    $region77: #{got_forward.1} parent=1 // pred_fallthru
      _
    // Predicated region
    $region78: #{got_forward.1} parent=1 // pred_check
      _
    $region79: #{got_forward.1} parent=1 // pred_check_branch
      %82 = sbr.rel (0) target = $region81
    $region80: #{got_forward.1} parent=1 // pred_region
      _
    $region81: #{got_forward.1} parent=1 // pred_fallthru
      _
    // Predicated region
    $region82: #{got_forward.1} parent=1 // pred_check
      _
    $region83: #{got_forward.1} parent=1 // pred_check_branch
      %84 = sbr.rel (0) target = $region85
    $region84: #{got_forward.1} parent=1 // pred_region
      _
    $region85: #{got_forward.1} parent=1 // pred_fallthru
      _
    // Predicated region
    $region86: #{got_forward.1} parent=1 // pred_check
      _
    $region87: #{got_forward.1} parent=1 // pred_check_branch
      %86 = sbr.rel (0) target = $region89
    $region88: #{got_forward.1} parent=1 // pred_region
      _
    $region89: #{got_forward.1} parent=1 // pred_fallthru
      _
    // Predicated region
    $region90: #{got_forward.1} parent=1 // pred_check
      _
    $region91: #{got_forward.1} parent=1 // pred_check_branch
      %88 = sbr.rel (0) target = $region93
    $region92: #{got_forward.1} parent=1 // pred_region
      %90 = dma.done [#allocation7], 16128
    $region93: #{got_forward.1} parent=1 // pred_fallthru
      _
    %v91 = vld [vmem:[%s6] sm:$0x1]
    %v92 = vld [vmem:[%s0] sm:$0x77]
    %v93 = vld [vmem:[#allocation6] sm:$0xff]
    %v94 = vld [vmem:[#allocation6 + $0x8] sm:$0xff]
    %v95 = vld [vmem:[#allocation6 + $0x10] sm:$0xff]
    %v96 = vld [vmem:[#allocation6 + $0x18] sm:$0xff]
    %v97 = vld [vmem:[#allocation6 + $0x20] sm:$0xff]
    %v98 = vld [vmem:[#allocation6 + $0x28] sm:$0xff]
    %v99 = vld [vmem:[#allocation6 + $0x30] sm:$0xff]
    %v100 = vld [vmem:[#allocation6 + $0x38] sm:$0xff]
    %v101 = vld [vmem:[#allocation6 + $0x40] sm:$0xff]
    %v102 = vld [vmem:[#allocation6 + $0x48] sm:$0xff]
    %v103 = vld [vmem:[#allocation6 + $0x50] sm:$0xff]
    %v104 = vld [vmem:[#allocation6 + $0x58] sm:$0xff]
    %v105 = vld [vmem:[#allocation6 + $0x60] sm:$0xff]
    %v106 = vld [vmem:[#allocation6 + $0x68] sm:$0xff]
    %108 = vst [vmem:[#allocation1] ss:$2 sm:$0xff] %v92
    %v109 = vld.sshfl [vmem:[#allocation1] sm:$0xff pattern:$0x75316420]
    %v110 = vld.sshfl [vmem:[#allocation1 + $0x8] sm:$0xff pattern:$0x75316420]
    %113 = vmatpush.xpose.msra.mxu0 0.0
    %114 = vmatpush.xpose.msra.mxu0 0.0
    %115 = vmatpush.xpose.msra.mxu0 0.0
    %116 = vmatpush.xpose.msra.mxu0 0.0
    %117 = vmatpush.xpose.msra.mxu0 0.0
    %118 = vmatpush.xpose.msra.mxu0 0.0
    %119 = vmatpush.xpose.msra.mxu0 0.0
    %120 = vmatpush.xpose.msra.mxu0 0.0
    %121 = vmatpush.xpose.msra.mxu0 0.0
    %122 = vmatpush.xpose.msra.mxu0 0.0
    %123 = vmatpush.xpose.msra.mxu0 0.0
    %124 = vmatpush.xpose.msra.mxu0 0.0
    %125 = vmatpush.xpose.msra.mxu0 0.0
    %126 = vmatpush.xpose.msra.mxu0 0.0
    %127 = vmatpush.xpose.msra.mxu0 0.0
    %128 = vmatpush.xpose.msra.mxu0 %v109
    %129 = vmatmul.f32.gmra.mxu0 %v93
    %v130 = vpop.f32.mrf.mxu0
    %v131 = vadd.f32 0.0, %v130
    %132 = vmatmul.f32.gmra.mxu0 %v95
    %v133 = vpop.f32.mrf.mxu0
    %v134 = vadd.f32 0.0, %v133
    %135 = vmatmul.f32.gmra.mxu0 %v97
    %v136 = vpop.f32.mrf.mxu0
    %v137 = vadd.f32 0.0, %v136
    %138 = vmatmul.f32.gmra.mxu0 %v99
    %v139 = vpop.f32.mrf.mxu0
    %v140 = vadd.f32 0.0, %v139
    %141 = vmatmul.f32.gmra.mxu0 %v101
    %v142 = vpop.f32.mrf.mxu0
    %v143 = vadd.f32 0.0, %v142
    %144 = vmatmul.f32.gmra.mxu0 %v103
    %v145 = vpop.f32.mrf.mxu0
    %v146 = vadd.f32 0.0, %v145
    %147 = vmatmul.f32.gmra.mxu0 %v105
    %v148 = vpop.f32.mrf.mxu0
    %v149 = vadd.f32 0.0, %v148
    %150 = vdwg.mxu0
    %151 = vmatpush.xpose.msra.mxu0 0.0
    %152 = vmatpush.xpose.msra.mxu0 0.0
    %153 = vmatpush.xpose.msra.mxu0 0.0
    %154 = vmatpush.xpose.msra.mxu0 0.0
    %155 = vmatpush.xpose.msra.mxu0 0.0
    %156 = vmatpush.xpose.msra.mxu0 0.0
    %157 = vmatpush.xpose.msra.mxu0 0.0
    %158 = vmatpush.xpose.msra.mxu0 0.0
    %159 = vmatpush.xpose.msra.mxu0 0.0
    %160 = vmatpush.xpose.msra.mxu0 0.0
    %161 = vmatpush.xpose.msra.mxu0 0.0
    %162 = vmatpush.xpose.msra.mxu0 0.0
    %163 = vmatpush.xpose.msra.mxu0 0.0
    %164 = vmatpush.xpose.msra.mxu0 0.0
    %165 = vmatpush.xpose.msra.mxu0 0.0
    %166 = vmatpush.xpose.msra.mxu0 %v110
    %167 = vmatmul.f32.gmra.mxu0 %v94
    %v168 = vpop.f32.mrf.mxu0
    %v169 = vadd.f32 %v131, %v168
    %170 = vmatmul.f32.gmra.mxu0 %v96
    %v171 = vpop.f32.mrf.mxu0
    %v172 = vadd.f32 %v134, %v171
    %173 = vmatmul.f32.gmra.mxu0 %v98
    %v174 = vpop.f32.mrf.mxu0
    %v175 = vadd.f32 %v137, %v174
    %176 = vmatmul.f32.gmra.mxu0 %v100
    %v177 = vpop.f32.mrf.mxu0
    %v178 = vadd.f32 %v140, %v177
    %179 = vmatmul.f32.gmra.mxu0 %v102
    %v180 = vpop.f32.mrf.mxu0
    %v181 = vadd.f32 %v143, %v180
    %182 = vmatmul.f32.gmra.mxu0 %v104
    %v183 = vpop.f32.mrf.mxu0
    %v184 = vadd.f32 %v146, %v183
    %185 = vmatmul.f32.gmra.mxu0 %v106
    %v186 = vpop.f32.mrf.mxu0
    %v187 = vadd.f32 %v149, %v186
    %188 = vdwg.mxu0
    %v189 = vld [vmem:[%s5] sm:$0x7]
    %v190 = vld [vmem:[#allocation6 + $0x70] sm:$0xff]
    %v191 = vld [vmem:[#allocation6 + $0x78] sm:$0xff]
    %v192 = vld [vmem:[#allocation6 + $0x80] sm:$0xff]
    %v193 = vld [vmem:[#allocation6 + $0x88] sm:$0xff]
    %v194 = vld [vmem:[#allocation6 + $0x90] sm:$0xff]
    %v195 = vld [vmem:[#allocation6 + $0x98] sm:$0xff]
    %v196 = vld [vmem:[#allocation6 + $0xa0] sm:$0xff]
    %v197 = vld [vmem:[#allocation6 + $0xa8] sm:$0xff]
    %v198 = vld [vmem:[#allocation6 + $0xb0] sm:$0xff]
    %v199 = vld [vmem:[#allocation6 + $0xb8] sm:$0xff]
    %v200 = vld [vmem:[#allocation6 + $0xc0] sm:$0xff]
    %v201 = vld [vmem:[#allocation6 + $0xc8] sm:$0xff]
    %v202 = vld [vmem:[#allocation6 + $0xd0] sm:$0xff]
    %v203 = vld [vmem:[#allocation6 + $0xd8] sm:$0xff]
    %204 = vst [vmem:[#allocation1] ss:$2 sm:$0xff] %v92
    %v205 = vld.sshfl [vmem:[#allocation1] sm:$0xff pattern:$0x75316420]
    %v206 = vld.sshfl [vmem:[#allocation1 + $0x8] sm:$0xff pattern:$0x75316420]
    %209 = vmatpush.xpose.msra.mxu0 0.0
    %210 = vmatpush.xpose.msra.mxu0 0.0
    %211 = vmatpush.xpose.msra.mxu0 0.0
    %212 = vmatpush.xpose.msra.mxu0 0.0
    %213 = vmatpush.xpose.msra.mxu0 0.0
    %214 = vmatpush.xpose.msra.mxu0 0.0
    %215 = vmatpush.xpose.msra.mxu0 0.0
    %216 = vmatpush.xpose.msra.mxu0 0.0
    %217 = vmatpush.xpose.msra.mxu0 0.0
    %218 = vmatpush.xpose.msra.mxu0 0.0
    %219 = vmatpush.xpose.msra.mxu0 0.0
    %220 = vmatpush.xpose.msra.mxu0 0.0
    %221 = vmatpush.xpose.msra.mxu0 0.0
    %222 = vmatpush.xpose.msra.mxu0 0.0
    %223 = vmatpush.xpose.msra.mxu0 0.0
    %224 = vmatpush.xpose.msra.mxu0 %v205
    %225 = vmatmul.f32.gmra.mxu0 %v190
    %v226 = vpop.f32.mrf.mxu0
    %v227 = vadd.f32 0.0, %v226
    %228 = vmatmul.f32.gmra.mxu0 %v192
    %v229 = vpop.f32.mrf.mxu0
    %v230 = vadd.f32 0.0, %v229
    %231 = vmatmul.f32.gmra.mxu0 %v194
    %v232 = vpop.f32.mrf.mxu0
    %v233 = vadd.f32 0.0, %v232
    %234 = vmatmul.f32.gmra.mxu0 %v196
    %v235 = vpop.f32.mrf.mxu0
    %v236 = vadd.f32 0.0, %v235
    %237 = vmatmul.f32.gmra.mxu0 %v198
    %v238 = vpop.f32.mrf.mxu0
    %v239 = vadd.f32 0.0, %v238
    %240 = vmatmul.f32.gmra.mxu0 %v200
    %v241 = vpop.f32.mrf.mxu0
    %v242 = vadd.f32 0.0, %v241
    %243 = vmatmul.f32.gmra.mxu0 %v202
    %v244 = vpop.f32.mrf.mxu0
    %v245 = vadd.f32 0.0, %v244
    %246 = vdwg.mxu0
    %247 = vmatpush.xpose.msra.mxu0 0.0
    %248 = vmatpush.xpose.msra.mxu0 0.0
    %249 = vmatpush.xpose.msra.mxu0 0.0
    %250 = vmatpush.xpose.msra.mxu0 0.0
    %251 = vmatpush.xpose.msra.mxu0 0.0
    %252 = vmatpush.xpose.msra.mxu0 0.0
    %253 = vmatpush.xpose.msra.mxu0 0.0
    %254 = vmatpush.xpose.msra.mxu0 0.0
    %255 = vmatpush.xpose.msra.mxu0 0.0
    %256 = vmatpush.xpose.msra.mxu0 0.0
    %257 = vmatpush.xpose.msra.mxu0 0.0
    %258 = vmatpush.xpose.msra.mxu0 0.0
    %259 = vmatpush.xpose.msra.mxu0 0.0
    %260 = vmatpush.xpose.msra.mxu0 0.0
    %261 = vmatpush.xpose.msra.mxu0 0.0
    %262 = vmatpush.xpose.msra.mxu0 %v206
    %263 = vmatmul.f32.gmra.mxu0 %v191
    %v264 = vpop.f32.mrf.mxu0
    %v265 = vadd.f32 %v227, %v264
    %266 = vmatmul.f32.gmra.mxu0 %v193
    %v267 = vpop.f32.mrf.mxu0
    %v268 = vadd.f32 %v230, %v267
    %269 = vmatmul.f32.gmra.mxu0 %v195
    %v270 = vpop.f32.mrf.mxu0
    %v271 = vadd.f32 %v233, %v270
    %272 = vmatmul.f32.gmra.mxu0 %v197
    %v273 = vpop.f32.mrf.mxu0
    %v274 = vadd.f32 %v236, %v273
    %275 = vmatmul.f32.gmra.mxu0 %v199
    %v276 = vpop.f32.mrf.mxu0
    %v277 = vadd.f32 %v239, %v276
    %278 = vmatmul.f32.gmra.mxu0 %v201
    %v279 = vpop.f32.mrf.mxu0
    %v280 = vadd.f32 %v242, %v279
    %281 = vmatmul.f32.gmra.mxu0 %v203
    %v282 = vpop.f32.mrf.mxu0
    %v283 = vadd.f32 %v245, %v282
    %284 = vdwg.mxu0
    %s285 = scalar_lea.vmem %s5, 4
    %v286 = vld [vmem:[%s285] sm:$0x7]
    %vm287 = vcmask 23552
    %v289 = vsel %vm287, %v265, 0
    %v292 = vsel %vm287, %v268, 0
    %v295 = vsel %vm287, %v271, 0
    %v298 = vsel %vm287, %v274, 0
    %v301 = vsel %vm287, %v277, 0
    %v304 = vsel %vm287, %v280, 0
    %v307 = vsel %vm287, %v283, 0
    %vm309 = vcmask 1042432
    %v311 = vsel %vm309, %v286, 0
    %313 = vmatpush.msra.mxu0 0.0
    %314 = vmatpush.msra.mxu0 0.0
    %315 = vmatpush.msra.mxu0 0.0
    %316 = vmatpush.msra.mxu0 0.0
    %317 = vmatpush.msra.mxu0 0.0
    %318 = vmatpush.msra.mxu0 0.0
    %319 = vmatpush.msra.mxu0 0.0
    %320 = vmatpush.msra.mxu0 0.0
    %321 = vmatpush.msra.mxu0 0.0
    %322 = vmatpush.msra.mxu0 0.0
    %323 = vmatpush.msra.mxu0 0.0
    %324 = vmatpush.msra.mxu0 0.0
    %325 = vmatpush.msra.mxu0 0.0
    %326 = vmatpush.msra.mxu0 0.0
    %327 = vmatpush.msra.mxu0 0.0
    %328 = vmatpush.msra.mxu0 %v311
    %329 = vmatmul.f32.gmra.mxu0 %v289
    %v330 = vpop.f32.mrf.mxu0
    %v331 = vadd.f32 0.0, %v330
    %332 = vmatmul.f32.gmra.mxu0 %v292
    %v333 = vpop.f32.mrf.mxu0
    %v334 = vadd.f32 0.0, %v333
    %335 = vmatmul.f32.gmra.mxu0 %v295
    %v336 = vpop.f32.mrf.mxu0
    %v337 = vadd.f32 0.0, %v336
    %338 = vmatmul.f32.gmra.mxu0 %v298
    %v339 = vpop.f32.mrf.mxu0
    %v340 = vadd.f32 0.0, %v339
    %341 = vmatmul.f32.gmra.mxu0 %v301
    %v342 = vpop.f32.mrf.mxu0
    %v343 = vadd.f32 0.0, %v342
    %344 = vmatmul.f32.gmra.mxu0 %v304
    %v345 = vpop.f32.mrf.mxu0
    %v346 = vadd.f32 0.0, %v345
    %347 = vmatmul.f32.gmra.mxu0 %v307
    %v348 = vpop.f32.mrf.mxu0
    %v349 = vadd.f32 0.0, %v348
    %350 = vdwg.mxu0
    %v352 = vsel %vm287, %v169, 0
    %v355 = vsel %vm287, %v172, 0
    %v358 = vsel %vm287, %v175, 0
    %v361 = vsel %vm287, %v178, 0
    %v364 = vsel %vm287, %v181, 0
    %v367 = vsel %vm287, %v184, 0
    %v370 = vsel %vm287, %v187, 0
    %v373 = vsel %vm309, %v189, 0
    %375 = vmatpush.msra.mxu0 0.0
    %376 = vmatpush.msra.mxu0 0.0
    %377 = vmatpush.msra.mxu0 0.0
    %378 = vmatpush.msra.mxu0 0.0
    %379 = vmatpush.msra.mxu0 0.0
    %380 = vmatpush.msra.mxu0 0.0
    %381 = vmatpush.msra.mxu0 0.0
    %382 = vmatpush.msra.mxu0 0.0
    %383 = vmatpush.msra.mxu0 0.0
    %384 = vmatpush.msra.mxu0 0.0
    %385 = vmatpush.msra.mxu0 0.0
    %386 = vmatpush.msra.mxu0 0.0
    %387 = vmatpush.msra.mxu0 0.0
    %388 = vmatpush.msra.mxu0 0.0
    %389 = vmatpush.msra.mxu0 0.0
    %390 = vmatpush.msra.mxu0 %v373
    %391 = vmatmul.f32.gmra.mxu0 %v352
    %v392 = vpop.f32.mrf.mxu0
    %v393 = vadd.f32 %v331, %v392
    %394 = vmatmul.f32.gmra.mxu0 %v355
    %v395 = vpop.f32.mrf.mxu0
    %v396 = vadd.f32 %v334, %v395
    %397 = vmatmul.f32.gmra.mxu0 %v358
    %v398 = vpop.f32.mrf.mxu0
    %v399 = vadd.f32 %v337, %v398
    %400 = vmatmul.f32.gmra.mxu0 %v361
    %v401 = vpop.f32.mrf.mxu0
    %v402 = vadd.f32 %v340, %v401
    %403 = vmatmul.f32.gmra.mxu0 %v364
    %v404 = vpop.f32.mrf.mxu0
    %v405 = vadd.f32 %v343, %v404
    %406 = vmatmul.f32.gmra.mxu0 %v367
    %v407 = vpop.f32.mrf.mxu0
    %v408 = vadd.f32 %v346, %v407
    %409 = vmatmul.f32.gmra.mxu0 %v370
    %v410 = vpop.f32.mrf.mxu0
    %v411 = vadd.f32 %v349, %v410
    %412 = vdwg.mxu0
    %v413 = vld [vmem:[#allocation6 + $0xe0] sm:$0xff]
    %v414 = vld [vmem:[#allocation6 + $0xe8] sm:$0xff]
    %v415 = vld [vmem:[#allocation6 + $0xf0] sm:$0xff]
    %v416 = vld [vmem:[#allocation6 + $0xf8] sm:$0xff]
    %v417 = vld [vmem:[#allocation6 + $0x100] sm:$0xff]
    %v418 = vld [vmem:[#allocation6 + $0x108] sm:$0xff]
    %v419 = vld [vmem:[#allocation6 + $0x110] sm:$0xff]
    %v420 = vld [vmem:[#allocation6 + $0x118] sm:$0xff]
    %v421 = vld [vmem:[#allocation6 + $0x120] sm:$0xff]
    %v422 = vld [vmem:[#allocation6 + $0x128] sm:$0xff]
    %v423 = vld [vmem:[#allocation6 + $0x130] sm:$0xff]
    %v424 = vld [vmem:[#allocation6 + $0x138] sm:$0xff]
    %v425 = vld [vmem:[#allocation6 + $0x140] sm:$0xff]
    %v426 = vld [vmem:[#allocation6 + $0x148] sm:$0xff]
    %427 = vst [vmem:[#allocation1] ss:$2 sm:$0xff] %v92
    %v428 = vld.sshfl [vmem:[#allocation1] sm:$0xff pattern:$0x75316420]
    %v429 = vld.sshfl [vmem:[#allocation1 + $0x8] sm:$0xff pattern:$0x75316420]
    %432 = vmatpush.xpose.msra.mxu0 0.0
    %433 = vmatpush.xpose.msra.mxu0 0.0
    %434 = vmatpush.xpose.msra.mxu0 0.0
    %435 = vmatpush.xpose.msra.mxu0 0.0
    %436 = vmatpush.xpose.msra.mxu0 0.0
    %437 = vmatpush.xpose.msra.mxu0 0.0
    %438 = vmatpush.xpose.msra.mxu0 0.0
    %439 = vmatpush.xpose.msra.mxu0 0.0
    %440 = vmatpush.xpose.msra.mxu0 0.0
    %441 = vmatpush.xpose.msra.mxu0 0.0
    %442 = vmatpush.xpose.msra.mxu0 0.0
    %443 = vmatpush.xpose.msra.mxu0 0.0
    %444 = vmatpush.xpose.msra.mxu0 0.0
    %445 = vmatpush.xpose.msra.mxu0 0.0
    %446 = vmatpush.xpose.msra.mxu0 0.0
    %447 = vmatpush.xpose.msra.mxu0 %v428
    %448 = vmatmul.f32.gmra.mxu0 %v413
    %v449 = vpop.f32.mrf.mxu0
    %v450 = vadd.f32 0.0, %v449
    %451 = vmatmul.f32.gmra.mxu0 %v415
    %v452 = vpop.f32.mrf.mxu0
    %v453 = vadd.f32 0.0, %v452
    %454 = vmatmul.f32.gmra.mxu0 %v417
    %v455 = vpop.f32.mrf.mxu0
    %v456 = vadd.f32 0.0, %v455
    %457 = vmatmul.f32.gmra.mxu0 %v419
    %v458 = vpop.f32.mrf.mxu0
    %v459 = vadd.f32 0.0, %v458
    %460 = vmatmul.f32.gmra.mxu0 %v421
    %v461 = vpop.f32.mrf.mxu0
    %v462 = vadd.f32 0.0, %v461
    %463 = vmatmul.f32.gmra.mxu0 %v423
    %v464 = vpop.f32.mrf.mxu0
    %v465 = vadd.f32 0.0, %v464
    %466 = vmatmul.f32.gmra.mxu0 %v425
    %v467 = vpop.f32.mrf.mxu0
    %v468 = vadd.f32 0.0, %v467
    %469 = vdwg.mxu0
    %470 = vmatpush.xpose.msra.mxu0 0.0
    %471 = vmatpush.xpose.msra.mxu0 0.0
    %472 = vmatpush.xpose.msra.mxu0 0.0
    %473 = vmatpush.xpose.msra.mxu0 0.0
    %474 = vmatpush.xpose.msra.mxu0 0.0
    %475 = vmatpush.xpose.msra.mxu0 0.0
    %476 = vmatpush.xpose.msra.mxu0 0.0
    %477 = vmatpush.xpose.msra.mxu0 0.0
    %478 = vmatpush.xpose.msra.mxu0 0.0
    %479 = vmatpush.xpose.msra.mxu0 0.0
    %480 = vmatpush.xpose.msra.mxu0 0.0
    %481 = vmatpush.xpose.msra.mxu0 0.0
    %482 = vmatpush.xpose.msra.mxu0 0.0
    %483 = vmatpush.xpose.msra.mxu0 0.0
    %484 = vmatpush.xpose.msra.mxu0 0.0
    %485 = vmatpush.xpose.msra.mxu0 %v429
    %486 = vmatmul.f32.gmra.mxu0 %v414
    %v487 = vpop.f32.mrf.mxu0
    %v488 = vadd.f32 %v450, %v487
    %489 = vmatmul.f32.gmra.mxu0 %v416
    %v490 = vpop.f32.mrf.mxu0
    %v491 = vadd.f32 %v453, %v490
    %492 = vmatmul.f32.gmra.mxu0 %v418
    %v493 = vpop.f32.mrf.mxu0
    %v494 = vadd.f32 %v456, %v493
    %495 = vmatmul.f32.gmra.mxu0 %v420
    %v496 = vpop.f32.mrf.mxu0
    %v497 = vadd.f32 %v459, %v496
    %498 = vmatmul.f32.gmra.mxu0 %v422
    %v499 = vpop.f32.mrf.mxu0
    %v500 = vadd.f32 %v462, %v499
    %501 = vmatmul.f32.gmra.mxu0 %v424
    %v502 = vpop.f32.mrf.mxu0
    %v503 = vadd.f32 %v465, %v502
    %504 = vmatmul.f32.gmra.mxu0 %v426
    %v505 = vpop.f32.mrf.mxu0
    %v506 = vadd.f32 %v468, %v505
    %507 = vdwg.mxu0
    %s508 = scalar_lea.vmem %s5, 8
    %v509 = vld [vmem:[%s508] sm:$0x7]
    %v511 = vsel %vm287, %v488, 0
    %v514 = vsel %vm287, %v491, 0
    %v517 = vsel %vm287, %v494, 0
    %v520 = vsel %vm287, %v497, 0
    %v523 = vsel %vm287, %v500, 0
    %v526 = vsel %vm287, %v503, 0
    %v529 = vsel %vm287, %v506, 0
    %v532 = vsel %vm309, %v509, 0
    %534 = vmatpush.msra.mxu0 0.0
    %535 = vmatpush.msra.mxu0 0.0
    %536 = vmatpush.msra.mxu0 0.0
    %537 = vmatpush.msra.mxu0 0.0
    %538 = vmatpush.msra.mxu0 0.0
    %539 = vmatpush.msra.mxu0 0.0
    %540 = vmatpush.msra.mxu0 0.0
    %541 = vmatpush.msra.mxu0 0.0
    %542 = vmatpush.msra.mxu0 0.0
    %543 = vmatpush.msra.mxu0 0.0
    %544 = vmatpush.msra.mxu0 0.0
    %545 = vmatpush.msra.mxu0 0.0
    %546 = vmatpush.msra.mxu0 0.0
    %547 = vmatpush.msra.mxu0 0.0
    %548 = vmatpush.msra.mxu0 0.0
    %549 = vmatpush.msra.mxu0 %v532
    %550 = vmatmul.f32.gmra.mxu0 %v511
    %v551 = vpop.f32.mrf.mxu0
    %v552 = vadd.f32 0.0, %v551
    %553 = vmatmul.f32.gmra.mxu0 %v514
    %v554 = vpop.f32.mrf.mxu0
    %v555 = vadd.f32 0.0, %v554
    %556 = vmatmul.f32.gmra.mxu0 %v517
    %v557 = vpop.f32.mrf.mxu0
    %v558 = vadd.f32 0.0, %v557
    %559 = vmatmul.f32.gmra.mxu0 %v520
    %v560 = vpop.f32.mrf.mxu0
    %v561 = vadd.f32 0.0, %v560
    %562 = vmatmul.f32.gmra.mxu0 %v523
    %v563 = vpop.f32.mrf.mxu0
    %v564 = vadd.f32 0.0, %v563
    %565 = vmatmul.f32.gmra.mxu0 %v526
    %v566 = vpop.f32.mrf.mxu0
    %v567 = vadd.f32 0.0, %v566
    %568 = vmatmul.f32.gmra.mxu0 %v529
    %v569 = vpop.f32.mrf.mxu0
    %v570 = vadd.f32 0.0, %v569
    %571 = vdwg.mxu0
    %v572 = vadd.f32 %v393, %v552
    %v573 = vadd.f32 %v396, %v555
    %v574 = vadd.f32 %v399, %v558
    %v575 = vadd.f32 %v402, %v561
    %v576 = vadd.f32 %v405, %v564
    %v577 = vadd.f32 %v408, %v567
    %v578 = vadd.f32 %v411, %v570
    %v579 = vld [vmem:[#allocation6 + $0x150] sm:$0xff]
    %v580 = vld [vmem:[#allocation6 + $0x158] sm:$0xff]
    %v581 = vld [vmem:[#allocation6 + $0x160] sm:$0xff]
    %v582 = vld [vmem:[#allocation6 + $0x168] sm:$0xff]
    %v583 = vld [vmem:[#allocation6 + $0x170] sm:$0xff]
    %v584 = vld [vmem:[#allocation6 + $0x178] sm:$0xff]
    %v585 = vld [vmem:[#allocation6 + $0x180] sm:$0xff]
    %v586 = vld [vmem:[#allocation6 + $0x188] sm:$0xff]
    %v587 = vld [vmem:[#allocation6 + $0x190] sm:$0xff]
    %v588 = vld [vmem:[#allocation6 + $0x198] sm:$0xff]
    %v589 = vld [vmem:[#allocation6 + $0x1a0] sm:$0xff]
    %v590 = vld [vmem:[#allocation6 + $0x1a8] sm:$0xff]
    %v591 = vld [vmem:[#allocation6 + $0x1b0] sm:$0xff]
    %v592 = vld [vmem:[#allocation6 + $0x1b8] sm:$0xff]
    %593 = vst [vmem:[#allocation1] ss:$2 sm:$0xff] %v92
    %v594 = vld.sshfl [vmem:[#allocation1] sm:$0xff pattern:$0x75316420]
    %v595 = vld.sshfl [vmem:[#allocation1 + $0x8] sm:$0xff pattern:$0x75316420]
    %598 = vmatpush.xpose.msra.mxu0 0.0
    %599 = vmatpush.xpose.msra.mxu0 0.0
    %600 = vmatpush.xpose.msra.mxu0 0.0
    %601 = vmatpush.xpose.msra.mxu0 0.0
    %602 = vmatpush.xpose.msra.mxu0 0.0
    %603 = vmatpush.xpose.msra.mxu0 0.0
    %604 = vmatpush.xpose.msra.mxu0 0.0
    %605 = vmatpush.xpose.msra.mxu0 0.0
    %606 = vmatpush.xpose.msra.mxu0 0.0
    %607 = vmatpush.xpose.msra.mxu0 0.0
    %608 = vmatpush.xpose.msra.mxu0 0.0
    %609 = vmatpush.xpose.msra.mxu0 0.0
    %610 = vmatpush.xpose.msra.mxu0 0.0
    %611 = vmatpush.xpose.msra.mxu0 0.0
    %612 = vmatpush.xpose.msra.mxu0 0.0
    %613 = vmatpush.xpose.msra.mxu0 %v594
    %614 = vmatmul.f32.gmra.mxu0 %v579
    %v615 = vpop.f32.mrf.mxu0
    %v616 = vadd.f32 0.0, %v615
    %617 = vmatmul.f32.gmra.mxu0 %v581
    %v618 = vpop.f32.mrf.mxu0
    %v619 = vadd.f32 0.0, %v618
    %620 = vmatmul.f32.gmra.mxu0 %v583
    %v621 = vpop.f32.mrf.mxu0
    %v622 = vadd.f32 0.0, %v621
    %623 = vmatmul.f32.gmra.mxu0 %v585
    %v624 = vpop.f32.mrf.mxu0
    %v625 = vadd.f32 0.0, %v624
    %626 = vmatmul.f32.gmra.mxu0 %v587
    %v627 = vpop.f32.mrf.mxu0
    %v628 = vadd.f32 0.0, %v627
    %629 = vmatmul.f32.gmra.mxu0 %v589
    %v630 = vpop.f32.mrf.mxu0
    %v631 = vadd.f32 0.0, %v630
    %632 = vmatmul.f32.gmra.mxu0 %v591
    %v633 = vpop.f32.mrf.mxu0
    %v634 = vadd.f32 0.0, %v633
    %635 = vdwg.mxu0
    %636 = vmatpush.xpose.msra.mxu0 0.0
    %637 = vmatpush.xpose.msra.mxu0 0.0
    %638 = vmatpush.xpose.msra.mxu0 0.0
    %639 = vmatpush.xpose.msra.mxu0 0.0
    %640 = vmatpush.xpose.msra.mxu0 0.0
    %641 = vmatpush.xpose.msra.mxu0 0.0
    %642 = vmatpush.xpose.msra.mxu0 0.0
    %643 = vmatpush.xpose.msra.mxu0 0.0
    %644 = vmatpush.xpose.msra.mxu0 0.0
    %645 = vmatpush.xpose.msra.mxu0 0.0
    %646 = vmatpush.xpose.msra.mxu0 0.0
    %647 = vmatpush.xpose.msra.mxu0 0.0
    %648 = vmatpush.xpose.msra.mxu0 0.0
    %649 = vmatpush.xpose.msra.mxu0 0.0
    %650 = vmatpush.xpose.msra.mxu0 0.0
    %651 = vmatpush.xpose.msra.mxu0 %v595
    %652 = vmatmul.f32.gmra.mxu0 %v580
    %v653 = vpop.f32.mrf.mxu0
    %v654 = vadd.f32 %v616, %v653
    %655 = vmatmul.f32.gmra.mxu0 %v582
    %v656 = vpop.f32.mrf.mxu0
    %v657 = vadd.f32 %v619, %v656
    %658 = vmatmul.f32.gmra.mxu0 %v584
    %v659 = vpop.f32.mrf.mxu0
    %v660 = vadd.f32 %v622, %v659
    %661 = vmatmul.f32.gmra.mxu0 %v586
    %v662 = vpop.f32.mrf.mxu0
    %v663 = vadd.f32 %v625, %v662
    %664 = vmatmul.f32.gmra.mxu0 %v588
    %v665 = vpop.f32.mrf.mxu0
    %v666 = vadd.f32 %v628, %v665
    %667 = vmatmul.f32.gmra.mxu0 %v590
    %v668 = vpop.f32.mrf.mxu0
    %v669 = vadd.f32 %v631, %v668
    %670 = vmatmul.f32.gmra.mxu0 %v592
    %v671 = vpop.f32.mrf.mxu0
    %v672 = vadd.f32 %v634, %v671
    %673 = vdwg.mxu0
    %s674 = scalar_lea.vmem %s5, 12
    %v675 = vld [vmem:[%s674] sm:$0x7]
    %v677 = vsel %vm287, %v654, 0
    %v680 = vsel %vm287, %v657, 0
    %v683 = vsel %vm287, %v660, 0
    %v686 = vsel %vm287, %v663, 0
    %v689 = vsel %vm287, %v666, 0
    %v692 = vsel %vm287, %v669, 0
    %v695 = vsel %vm287, %v672, 0
    %v698 = vsel %vm309, %v675, 0
    %700 = vmatpush.msra.mxu0 0.0
    %701 = vmatpush.msra.mxu0 0.0
    %702 = vmatpush.msra.mxu0 0.0
    %703 = vmatpush.msra.mxu0 0.0
    %704 = vmatpush.msra.mxu0 0.0
    %705 = vmatpush.msra.mxu0 0.0
    %706 = vmatpush.msra.mxu0 0.0
    %707 = vmatpush.msra.mxu0 0.0
    %708 = vmatpush.msra.mxu0 0.0
    %709 = vmatpush.msra.mxu0 0.0
    %710 = vmatpush.msra.mxu0 0.0
    %711 = vmatpush.msra.mxu0 0.0
    %712 = vmatpush.msra.mxu0 0.0
    %713 = vmatpush.msra.mxu0 0.0
    %714 = vmatpush.msra.mxu0 0.0
    %715 = vmatpush.msra.mxu0 %v698
    %716 = vmatmul.f32.gmra.mxu0 %v677
    %v717 = vpop.f32.mrf.mxu0
    %v718 = vadd.f32 0.0, %v717
    %719 = vmatmul.f32.gmra.mxu0 %v680
    %v720 = vpop.f32.mrf.mxu0
    %v721 = vadd.f32 0.0, %v720
    %722 = vmatmul.f32.gmra.mxu0 %v683
    %v723 = vpop.f32.mrf.mxu0
    %v724 = vadd.f32 0.0, %v723
    %725 = vmatmul.f32.gmra.mxu0 %v686
    %v726 = vpop.f32.mrf.mxu0
    %v727 = vadd.f32 0.0, %v726
    %728 = vmatmul.f32.gmra.mxu0 %v689
    %v729 = vpop.f32.mrf.mxu0
    %v730 = vadd.f32 0.0, %v729
    %731 = vmatmul.f32.gmra.mxu0 %v692
    %v732 = vpop.f32.mrf.mxu0
    %v733 = vadd.f32 0.0, %v732
    %734 = vmatmul.f32.gmra.mxu0 %v695
    %v735 = vpop.f32.mrf.mxu0
    %v736 = vadd.f32 0.0, %v735
    %737 = vdwg.mxu0
    %v738 = vadd.f32 %v572, %v718
    %v739 = vadd.f32 %v573, %v721
    %v740 = vadd.f32 %v574, %v724
    %v741 = vadd.f32 %v575, %v727
    %v742 = vadd.f32 %v576, %v730
    %v743 = vadd.f32 %v577, %v733
    %v744 = vadd.f32 %v578, %v736
    %v745 = vld [vmem:[#allocation6 + $0x1c0] sm:$0xff]
    %v746 = vld [vmem:[#allocation6 + $0x1c8] sm:$0xff]
    %v747 = vld [vmem:[#allocation6 + $0x1d0] sm:$0xff]
    %v748 = vld [vmem:[#allocation6 + $0x1d8] sm:$0xff]
    %v749 = vld [vmem:[#allocation6 + $0x1e0] sm:$0xff]
    %v750 = vld [vmem:[#allocation6 + $0x1e8] sm:$0xff]
    %v751 = vld [vmem:[#allocation6 + $0x1f0] sm:$0xff]
    %v752 = vld [vmem:[#allocation6 + $0x1f8] sm:$0xff]
    %v753 = vld [vmem:[#allocation6 + $0x200] sm:$0xff]
    %v754 = vld [vmem:[#allocation6 + $0x208] sm:$0xff]
    %v755 = vld [vmem:[#allocation6 + $0x210] sm:$0xff]
    %v756 = vld [vmem:[#allocation6 + $0x218] sm:$0xff]
    %v757 = vld [vmem:[#allocation6 + $0x220] sm:$0xff]
    %v758 = vld [vmem:[#allocation6 + $0x228] sm:$0xff]
    %759 = vst [vmem:[#allocation1] ss:$2 sm:$0xff] %v92
    %v760 = vld.sshfl [vmem:[#allocation1] sm:$0xff pattern:$0x75316420]
    %v761 = vld.sshfl [vmem:[#allocation1 + $0x8] sm:$0xff pattern:$0x75316420]
    %764 = vmatpush.xpose.msra.mxu0 0.0
    %765 = vmatpush.xpose.msra.mxu0 0.0
    %766 = vmatpush.xpose.msra.mxu0 0.0
    %767 = vmatpush.xpose.msra.mxu0 0.0
    %768 = vmatpush.xpose.msra.mxu0 0.0
    %769 = vmatpush.xpose.msra.mxu0 0.0
    %770 = vmatpush.xpose.msra.mxu0 0.0
    %771 = vmatpush.xpose.msra.mxu0 0.0
    %772 = vmatpush.xpose.msra.mxu0 0.0
    %773 = vmatpush.xpose.msra.mxu0 0.0
    %774 = vmatpush.xpose.msra.mxu0 0.0
    %775 = vmatpush.xpose.msra.mxu0 0.0
    %776 = vmatpush.xpose.msra.mxu0 0.0
    %777 = vmatpush.xpose.msra.mxu0 0.0
    %778 = vmatpush.xpose.msra.mxu0 0.0
    %779 = vmatpush.xpose.msra.mxu0 %v760
    %780 = vmatmul.f32.gmra.mxu0 %v745
    %v781 = vpop.f32.mrf.mxu0
    %v782 = vadd.f32 0.0, %v781
    %783 = vmatmul.f32.gmra.mxu0 %v747
    %v784 = vpop.f32.mrf.mxu0
    %v785 = vadd.f32 0.0, %v784
    %786 = vmatmul.f32.gmra.mxu0 %v749
    %v787 = vpop.f32.mrf.mxu0
    %v788 = vadd.f32 0.0, %v787
    %789 = vmatmul.f32.gmra.mxu0 %v751
    %v790 = vpop.f32.mrf.mxu0
    %v791 = vadd.f32 0.0, %v790
    %792 = vmatmul.f32.gmra.mxu0 %v753
    %v793 = vpop.f32.mrf.mxu0
    %v794 = vadd.f32 0.0, %v793
    %795 = vmatmul.f32.gmra.mxu0 %v755
    %v796 = vpop.f32.mrf.mxu0
    %v797 = vadd.f32 0.0, %v796
    %798 = vmatmul.f32.gmra.mxu0 %v757
    %v799 = vpop.f32.mrf.mxu0
    %v800 = vadd.f32 0.0, %v799
    %801 = vdwg.mxu0
    %802 = vmatpush.xpose.msra.mxu0 0.0
    %803 = vmatpush.xpose.msra.mxu0 0.0
    %804 = vmatpush.xpose.msra.mxu0 0.0
    %805 = vmatpush.xpose.msra.mxu0 0.0
    %806 = vmatpush.xpose.msra.mxu0 0.0
    %807 = vmatpush.xpose.msra.mxu0 0.0
    %808 = vmatpush.xpose.msra.mxu0 0.0
    %809 = vmatpush.xpose.msra.mxu0 0.0
    %810 = vmatpush.xpose.msra.mxu0 0.0
    %811 = vmatpush.xpose.msra.mxu0 0.0
    %812 = vmatpush.xpose.msra.mxu0 0.0
    %813 = vmatpush.xpose.msra.mxu0 0.0
    %814 = vmatpush.xpose.msra.mxu0 0.0
    %815 = vmatpush.xpose.msra.mxu0 0.0
    %816 = vmatpush.xpose.msra.mxu0 0.0
    %817 = vmatpush.xpose.msra.mxu0 %v761
    %818 = vmatmul.f32.gmra.mxu0 %v746
    %v819 = vpop.f32.mrf.mxu0
    %v820 = vadd.f32 %v782, %v819
    %821 = vmatmul.f32.gmra.mxu0 %v748
    %v822 = vpop.f32.mrf.mxu0
    %v823 = vadd.f32 %v785, %v822
    %824 = vmatmul.f32.gmra.mxu0 %v750
    %v825 = vpop.f32.mrf.mxu0
    %v826 = vadd.f32 %v788, %v825
    %827 = vmatmul.f32.gmra.mxu0 %v752
    %v828 = vpop.f32.mrf.mxu0
    %v829 = vadd.f32 %v791, %v828
    %830 = vmatmul.f32.gmra.mxu0 %v754
    %v831 = vpop.f32.mrf.mxu0
    %v832 = vadd.f32 %v794, %v831
    %833 = vmatmul.f32.gmra.mxu0 %v756
    %v834 = vpop.f32.mrf.mxu0
    %v835 = vadd.f32 %v797, %v834
    %836 = vmatmul.f32.gmra.mxu0 %v758
    %v837 = vpop.f32.mrf.mxu0
    %v838 = vadd.f32 %v800, %v837
    %839 = vdwg.mxu0
    %s840 = scalar_lea.vmem %s5, 16
    %v841 = vld [vmem:[%s840] sm:$0x7]
    %v843 = vsel %vm287, %v820, 0
    %v846 = vsel %vm287, %v823, 0
    %v849 = vsel %vm287, %v826, 0
    %v852 = vsel %vm287, %v829, 0
    %v855 = vsel %vm287, %v832, 0
    %v858 = vsel %vm287, %v835, 0
    %v861 = vsel %vm287, %v838, 0
    %v864 = vsel %vm309, %v841, 0
    %866 = vmatpush.msra.mxu0 0.0
    %867 = vmatpush.msra.mxu0 0.0
    %868 = vmatpush.msra.mxu0 0.0
    %869 = vmatpush.msra.mxu0 0.0
    %870 = vmatpush.msra.mxu0 0.0
    %871 = vmatpush.msra.mxu0 0.0
    %872 = vmatpush.msra.mxu0 0.0
    %873 = vmatpush.msra.mxu0 0.0
    %874 = vmatpush.msra.mxu0 0.0
    %875 = vmatpush.msra.mxu0 0.0
    %876 = vmatpush.msra.mxu0 0.0
    %877 = vmatpush.msra.mxu0 0.0
    %878 = vmatpush.msra.mxu0 0.0
    %879 = vmatpush.msra.mxu0 0.0
    %880 = vmatpush.msra.mxu0 0.0
    %881 = vmatpush.msra.mxu0 %v864
    %882 = vmatmul.f32.gmra.mxu0 %v843
    %v883 = vpop.f32.mrf.mxu0
    %v884 = vadd.f32 0.0, %v883
    %885 = vmatmul.f32.gmra.mxu0 %v846
    %v886 = vpop.f32.mrf.mxu0
    %v887 = vadd.f32 0.0, %v886
    %888 = vmatmul.f32.gmra.mxu0 %v849
    %v889 = vpop.f32.mrf.mxu0
    %v890 = vadd.f32 0.0, %v889
    %891 = vmatmul.f32.gmra.mxu0 %v852
    %v892 = vpop.f32.mrf.mxu0
    %v893 = vadd.f32 0.0, %v892
    %894 = vmatmul.f32.gmra.mxu0 %v855
    %v895 = vpop.f32.mrf.mxu0
    %v896 = vadd.f32 0.0, %v895
    %897 = vmatmul.f32.gmra.mxu0 %v858
    %v898 = vpop.f32.mrf.mxu0
    %v899 = vadd.f32 0.0, %v898
    %900 = vmatmul.f32.gmra.mxu0 %v861
    %v901 = vpop.f32.mrf.mxu0
    %v902 = vadd.f32 0.0, %v901
    %903 = vdwg.mxu0
    %v904 = vadd.f32 %v738, %v884
    %v905 = vadd.f32 %v739, %v887
    %v906 = vadd.f32 %v740, %v890
    %v907 = vadd.f32 %v741, %v893
    %v908 = vadd.f32 %v742, %v896
    %v909 = vadd.f32 %v743, %v899
    %v910 = vadd.f32 %v744, %v902
    %v911 = vld [vmem:[#allocation6 + $0x230] sm:$0xff]
    %v912 = vld [vmem:[#allocation6 + $0x238] sm:$0xff]
    %v913 = vld [vmem:[#allocation6 + $0x240] sm:$0xff]
    %v914 = vld [vmem:[#allocation6 + $0x248] sm:$0xff]
    %v915 = vld [vmem:[#allocation6 + $0x250] sm:$0xff]
    %v916 = vld [vmem:[#allocation6 + $0x258] sm:$0xff]
    %v917 = vld [vmem:[#allocation6 + $0x260] sm:$0xff]
    %v918 = vld [vmem:[#allocation6 + $0x268] sm:$0xff]
    %v919 = vld [vmem:[#allocation6 + $0x270] sm:$0xff]
    %v920 = vld [vmem:[#allocation6 + $0x278] sm:$0xff]
    %v921 = vld [vmem:[#allocation6 + $0x280] sm:$0xff]
    %v922 = vld [vmem:[#allocation6 + $0x288] sm:$0xff]
    %v923 = vld [vmem:[#allocation6 + $0x290] sm:$0xff]
    %v924 = vld [vmem:[#allocation6 + $0x298] sm:$0xff]
    %925 = vst [vmem:[#allocation1] ss:$2 sm:$0xff] %v92
    %v926 = vld.sshfl [vmem:[#allocation1] sm:$0xff pattern:$0x75316420]
    %v927 = vld.sshfl [vmem:[#allocation1 + $0x8] sm:$0xff pattern:$0x75316420]
    %930 = vmatpush.xpose.msra.mxu0 0.0
    %931 = vmatpush.xpose.msra.mxu0 0.0
    %932 = vmatpush.xpose.msra.mxu0 0.0
    %933 = vmatpush.xpose.msra.mxu0 0.0
    %934 = vmatpush.xpose.msra.mxu0 0.0
    %935 = vmatpush.xpose.msra.mxu0 0.0
    %936 = vmatpush.xpose.msra.mxu0 0.0
    %937 = vmatpush.xpose.msra.mxu0 0.0
    %938 = vmatpush.xpose.msra.mxu0 0.0
    %939 = vmatpush.xpose.msra.mxu0 0.0
    %940 = vmatpush.xpose.msra.mxu0 0.0
    %941 = vmatpush.xpose.msra.mxu0 0.0
    %942 = vmatpush.xpose.msra.mxu0 0.0
    %943 = vmatpush.xpose.msra.mxu0 0.0
    %944 = vmatpush.xpose.msra.mxu0 0.0
    %945 = vmatpush.xpose.msra.mxu0 %v926
    %946 = vmatmul.f32.gmra.mxu0 %v911
    %v947 = vpop.f32.mrf.mxu0
    %v948 = vadd.f32 0.0, %v947
    %949 = vmatmul.f32.gmra.mxu0 %v913
    %v950 = vpop.f32.mrf.mxu0
    %v951 = vadd.f32 0.0, %v950
    %952 = vmatmul.f32.gmra.mxu0 %v915
    %v953 = vpop.f32.mrf.mxu0
    %v954 = vadd.f32 0.0, %v953
    %955 = vmatmul.f32.gmra.mxu0 %v917
    %v956 = vpop.f32.mrf.mxu0
    %v957 = vadd.f32 0.0, %v956
    %958 = vmatmul.f32.gmra.mxu0 %v919
    %v959 = vpop.f32.mrf.mxu0
    %v960 = vadd.f32 0.0, %v959
    %961 = vmatmul.f32.gmra.mxu0 %v921
    %v962 = vpop.f32.mrf.mxu0
    %v963 = vadd.f32 0.0, %v962
    %964 = vmatmul.f32.gmra.mxu0 %v923
    %v965 = vpop.f32.mrf.mxu0
    %v966 = vadd.f32 0.0, %v965
    %967 = vdwg.mxu0
    %968 = vmatpush.xpose.msra.mxu0 0.0
    %969 = vmatpush.xpose.msra.mxu0 0.0
    %970 = vmatpush.xpose.msra.mxu0 0.0
    %971 = vmatpush.xpose.msra.mxu0 0.0
    %972 = vmatpush.xpose.msra.mxu0 0.0
    %973 = vmatpush.xpose.msra.mxu0 0.0
    %974 = vmatpush.xpose.msra.mxu0 0.0
    %975 = vmatpush.xpose.msra.mxu0 0.0
    %976 = vmatpush.xpose.msra.mxu0 0.0
    %977 = vmatpush.xpose.msra.mxu0 0.0
    %978 = vmatpush.xpose.msra.mxu0 0.0
    %979 = vmatpush.xpose.msra.mxu0 0.0
    %980 = vmatpush.xpose.msra.mxu0 0.0
    %981 = vmatpush.xpose.msra.mxu0 0.0
    %982 = vmatpush.xpose.msra.mxu0 0.0
    %983 = vmatpush.xpose.msra.mxu0 %v927
    %984 = vmatmul.f32.gmra.mxu0 %v912
    %v985 = vpop.f32.mrf.mxu0
    %v986 = vadd.f32 %v948, %v985
    %987 = vmatmul.f32.gmra.mxu0 %v914
    %v988 = vpop.f32.mrf.mxu0
    %v989 = vadd.f32 %v951, %v988
    %990 = vmatmul.f32.gmra.mxu0 %v916
    %v991 = vpop.f32.mrf.mxu0
    %v992 = vadd.f32 %v954, %v991
    %993 = vmatmul.f32.gmra.mxu0 %v918
    %v994 = vpop.f32.mrf.mxu0
    %v995 = vadd.f32 %v957, %v994
    %996 = vmatmul.f32.gmra.mxu0 %v920
    %v997 = vpop.f32.mrf.mxu0
    %v998 = vadd.f32 %v960, %v997
    %999 = vmatmul.f32.gmra.mxu0 %v922
    %v1000 = vpop.f32.mrf.mxu0
    %v1001 = vadd.f32 %v963, %v1000
    %1002 = vmatmul.f32.gmra.mxu0 %v924
    %v1003 = vpop.f32.mrf.mxu0
    %v1004 = vadd.f32 %v966, %v1003
    %1005 = vdwg.mxu0
    %s1006 = scalar_lea.vmem %s5, 20
    %v1007 = vld [vmem:[%s1006] sm:$0x7]
    %v1009 = vsel %vm287, %v986, 0
    %v1012 = vsel %vm287, %v989, 0
    %v1015 = vsel %vm287, %v992, 0
    %v1018 = vsel %vm287, %v995, 0
    %v1021 = vsel %vm287, %v998, 0
    %v1024 = vsel %vm287, %v1001, 0
    %v1027 = vsel %vm287, %v1004, 0
    %v1030 = vsel %vm309, %v1007, 0
    %1032 = vmatpush.msra.mxu0 0.0
    %1033 = vmatpush.msra.mxu0 0.0
    %1034 = vmatpush.msra.mxu0 0.0
    %1035 = vmatpush.msra.mxu0 0.0
    %1036 = vmatpush.msra.mxu0 0.0
    %1037 = vmatpush.msra.mxu0 0.0
    %1038 = vmatpush.msra.mxu0 0.0
    %1039 = vmatpush.msra.mxu0 0.0
    %1040 = vmatpush.msra.mxu0 0.0
    %1041 = vmatpush.msra.mxu0 0.0
    %1042 = vmatpush.msra.mxu0 0.0
    %1043 = vmatpush.msra.mxu0 0.0
    %1044 = vmatpush.msra.mxu0 0.0
    %1045 = vmatpush.msra.mxu0 0.0
    %1046 = vmatpush.msra.mxu0 0.0
    %1047 = vmatpush.msra.mxu0 %v1030
    %1048 = vmatmul.f32.gmra.mxu0 %v1009
    %v1049 = vpop.f32.mrf.mxu0
    %v1050 = vadd.f32 0.0, %v1049
    %1051 = vmatmul.f32.gmra.mxu0 %v1012
    %v1052 = vpop.f32.mrf.mxu0
    %v1053 = vadd.f32 0.0, %v1052
    %1054 = vmatmul.f32.gmra.mxu0 %v1015
    %v1055 = vpop.f32.mrf.mxu0
    %v1056 = vadd.f32 0.0, %v1055
    %1057 = vmatmul.f32.gmra.mxu0 %v1018
    %v1058 = vpop.f32.mrf.mxu0
    %v1059 = vadd.f32 0.0, %v1058
    %1060 = vmatmul.f32.gmra.mxu0 %v1021
    %v1061 = vpop.f32.mrf.mxu0
    %v1062 = vadd.f32 0.0, %v1061
    %1063 = vmatmul.f32.gmra.mxu0 %v1024
    %v1064 = vpop.f32.mrf.mxu0
    %v1065 = vadd.f32 0.0, %v1064
    %1066 = vmatmul.f32.gmra.mxu0 %v1027
    %v1067 = vpop.f32.mrf.mxu0
    %v1068 = vadd.f32 0.0, %v1067
    %1069 = vdwg.mxu0
    %v1070 = vadd.f32 %v904, %v1050
    %v1071 = vadd.f32 %v905, %v1053
    %v1072 = vadd.f32 %v906, %v1056
    %v1073 = vadd.f32 %v907, %v1059
    %v1074 = vadd.f32 %v908, %v1062
    %v1075 = vadd.f32 %v909, %v1065
    %v1076 = vadd.f32 %v910, %v1068
    %v1077 = vld [vmem:[#allocation6 + $0x2a0] sm:$0xff]
    %v1078 = vld [vmem:[#allocation6 + $0x2a8] sm:$0xff]
    %v1079 = vld [vmem:[#allocation6 + $0x2b0] sm:$0xff]
    %v1080 = vld [vmem:[#allocation6 + $0x2b8] sm:$0xff]
    %v1081 = vld [vmem:[#allocation6 + $0x2c0] sm:$0xff]
    %v1082 = vld [vmem:[#allocation6 + $0x2c8] sm:$0xff]
    %v1083 = vld [vmem:[#allocation6 + $0x2d0] sm:$0xff]
    %v1084 = vld [vmem:[#allocation6 + $0x2d8] sm:$0xff]
    %v1085 = vld [vmem:[#allocation6 + $0x2e0] sm:$0xff]
    %v1086 = vld [vmem:[#allocation6 + $0x2e8] sm:$0xff]
    %v1087 = vld [vmem:[#allocation6 + $0x2f0] sm:$0xff]
    %v1088 = vld [vmem:[#allocation6 + $0x2f8] sm:$0xff]
    %v1089 = vld [vmem:[#allocation6 + $0x300] sm:$0xff]
    %v1090 = vld [vmem:[#allocation6 + $0x308] sm:$0xff]
    %1091 = vst [vmem:[#allocation1] ss:$2 sm:$0xff] %v92
    %v1092 = vld.sshfl [vmem:[#allocation1] sm:$0xff pattern:$0x75316420]
    %v1093 = vld.sshfl [vmem:[#allocation1 + $0x8] sm:$0xff pattern:$0x75316420]
    %1096 = vmatpush.xpose.msra.mxu0 0.0
    %1097 = vmatpush.xpose.msra.mxu0 0.0
    %1098 = vmatpush.xpose.msra.mxu0 0.0
    %1099 = vmatpush.xpose.msra.mxu0 0.0
    %1100 = vmatpush.xpose.msra.mxu0 0.0
    %1101 = vmatpush.xpose.msra.mxu0 0.0
    %1102 = vmatpush.xpose.msra.mxu0 0.0
    %1103 = vmatpush.xpose.msra.mxu0 0.0
    %1104 = vmatpush.xpose.msra.mxu0 0.0
    %1105 = vmatpush.xpose.msra.mxu0 0.0
    %1106 = vmatpush.xpose.msra.mxu0 0.0
    %1107 = vmatpush.xpose.msra.mxu0 0.0
    %1108 = vmatpush.xpose.msra.mxu0 0.0
    %1109 = vmatpush.xpose.msra.mxu0 0.0
    %1110 = vmatpush.xpose.msra.mxu0 0.0
    %1111 = vmatpush.xpose.msra.mxu0 %v1092
    %1112 = vmatmul.f32.gmra.mxu0 %v1077
    %v1113 = vpop.f32.mrf.mxu0
    %v1114 = vadd.f32 0.0, %v1113
    %1115 = vmatmul.f32.gmra.mxu0 %v1079
    %v1116 = vpop.f32.mrf.mxu0
    %v1117 = vadd.f32 0.0, %v1116
    %1118 = vmatmul.f32.gmra.mxu0 %v1081
    %v1119 = vpop.f32.mrf.mxu0
    %v1120 = vadd.f32 0.0, %v1119
    %1121 = vmatmul.f32.gmra.mxu0 %v1083
    %v1122 = vpop.f32.mrf.mxu0
    %v1123 = vadd.f32 0.0, %v1122
    %1124 = vmatmul.f32.gmra.mxu0 %v1085
    %v1125 = vpop.f32.mrf.mxu0
    %v1126 = vadd.f32 0.0, %v1125
    %1127 = vmatmul.f32.gmra.mxu0 %v1087
    %v1128 = vpop.f32.mrf.mxu0
    %v1129 = vadd.f32 0.0, %v1128
    %1130 = vmatmul.f32.gmra.mxu0 %v1089
    %v1131 = vpop.f32.mrf.mxu0
    %v1132 = vadd.f32 0.0, %v1131
    %1133 = vdwg.mxu0
    %1134 = vmatpush.xpose.msra.mxu0 0.0
    %1135 = vmatpush.xpose.msra.mxu0 0.0
    %1136 = vmatpush.xpose.msra.mxu0 0.0
    %1137 = vmatpush.xpose.msra.mxu0 0.0
    %1138 = vmatpush.xpose.msra.mxu0 0.0
    %1139 = vmatpush.xpose.msra.mxu0 0.0
    %1140 = vmatpush.xpose.msra.mxu0 0.0
    %1141 = vmatpush.xpose.msra.mxu0 0.0
    %1142 = vmatpush.xpose.msra.mxu0 0.0
    %1143 = vmatpush.xpose.msra.mxu0 0.0
    %1144 = vmatpush.xpose.msra.mxu0 0.0
    %1145 = vmatpush.xpose.msra.mxu0 0.0
    %1146 = vmatpush.xpose.msra.mxu0 0.0
    %1147 = vmatpush.xpose.msra.mxu0 0.0
    %1148 = vmatpush.xpose.msra.mxu0 0.0
    %1149 = vmatpush.xpose.msra.mxu0 %v1093
    %1150 = vmatmul.f32.gmra.mxu0 %v1078
    %v1151 = vpop.f32.mrf.mxu0
    %v1152 = vadd.f32 %v1114, %v1151
    %1153 = vmatmul.f32.gmra.mxu0 %v1080
    %v1154 = vpop.f32.mrf.mxu0
    %v1155 = vadd.f32 %v1117, %v1154
    %1156 = vmatmul.f32.gmra.mxu0 %v1082
    %v1157 = vpop.f32.mrf.mxu0
    %v1158 = vadd.f32 %v1120, %v1157
    %1159 = vmatmul.f32.gmra.mxu0 %v1084
    %v1160 = vpop.f32.mrf.mxu0
    %v1161 = vadd.f32 %v1123, %v1160
    %1162 = vmatmul.f32.gmra.mxu0 %v1086
    %v1163 = vpop.f32.mrf.mxu0
    %v1164 = vadd.f32 %v1126, %v1163
    %1165 = vmatmul.f32.gmra.mxu0 %v1088
    %v1166 = vpop.f32.mrf.mxu0
    %v1167 = vadd.f32 %v1129, %v1166
    %1168 = vmatmul.f32.gmra.mxu0 %v1090
    %v1169 = vpop.f32.mrf.mxu0
    %v1170 = vadd.f32 %v1132, %v1169
    %1171 = vdwg.mxu0
    %s1172 = scalar_lea.vmem %s5, 24
    %v1173 = vld [vmem:[%s1172] sm:$0x7]
    %v1175 = vsel %vm287, %v1152, 0
    %v1178 = vsel %vm287, %v1155, 0
    %v1181 = vsel %vm287, %v1158, 0
    %v1184 = vsel %vm287, %v1161, 0
    %v1187 = vsel %vm287, %v1164, 0
    %v1190 = vsel %vm287, %v1167, 0
    %v1193 = vsel %vm287, %v1170, 0
    %v1196 = vsel %vm309, %v1173, 0
    %1198 = vmatpush.msra.mxu0 0.0
    %1199 = vmatpush.msra.mxu0 0.0
    %1200 = vmatpush.msra.mxu0 0.0
    %1201 = vmatpush.msra.mxu0 0.0
    %1202 = vmatpush.msra.mxu0 0.0
    %1203 = vmatpush.msra.mxu0 0.0
    %1204 = vmatpush.msra.mxu0 0.0
    %1205 = vmatpush.msra.mxu0 0.0
    %1206 = vmatpush.msra.mxu0 0.0
    %1207 = vmatpush.msra.mxu0 0.0
    %1208 = vmatpush.msra.mxu0 0.0
    %1209 = vmatpush.msra.mxu0 0.0
    %1210 = vmatpush.msra.mxu0 0.0
    %1211 = vmatpush.msra.mxu0 0.0
    %1212 = vmatpush.msra.mxu0 0.0
    %1213 = vmatpush.msra.mxu0 %v1196
    %1214 = vmatmul.f32.gmra.mxu0 %v1175
    %v1215 = vpop.f32.mrf.mxu0
    %v1216 = vadd.f32 0.0, %v1215
    %1217 = vmatmul.f32.gmra.mxu0 %v1178
    %v1218 = vpop.f32.mrf.mxu0
    %v1219 = vadd.f32 0.0, %v1218
    %1220 = vmatmul.f32.gmra.mxu0 %v1181
    %v1221 = vpop.f32.mrf.mxu0
    %v1222 = vadd.f32 0.0, %v1221
    %1223 = vmatmul.f32.gmra.mxu0 %v1184
    %v1224 = vpop.f32.mrf.mxu0
    %v1225 = vadd.f32 0.0, %v1224
    %1226 = vmatmul.f32.gmra.mxu0 %v1187
    %v1227 = vpop.f32.mrf.mxu0
    %v1228 = vadd.f32 0.0, %v1227
    %1229 = vmatmul.f32.gmra.mxu0 %v1190
    %v1230 = vpop.f32.mrf.mxu0
    %v1231 = vadd.f32 0.0, %v1230
    %1232 = vmatmul.f32.gmra.mxu0 %v1193
    %v1233 = vpop.f32.mrf.mxu0
    %v1234 = vadd.f32 0.0, %v1233
    %1235 = vdwg.mxu0
    %v1236 = vadd.f32 %v1070, %v1216
    %v1237 = vadd.f32 %v1071, %v1219
    %v1238 = vadd.f32 %v1072, %v1222
    %v1239 = vadd.f32 %v1073, %v1225
    %v1240 = vadd.f32 %v1074, %v1228
    %v1241 = vadd.f32 %v1075, %v1231
    %v1242 = vadd.f32 %v1076, %v1234
    %v1243 = vld [vmem:[#allocation6 + $0x310] sm:$0xff]
    %v1244 = vld [vmem:[#allocation6 + $0x318] sm:$0xff]
    %v1245 = vld [vmem:[#allocation6 + $0x320] sm:$0xff]
    %v1246 = vld [vmem:[#allocation6 + $0x328] sm:$0xff]
    %v1247 = vld [vmem:[#allocation6 + $0x330] sm:$0xff]
    %v1248 = vld [vmem:[#allocation6 + $0x338] sm:$0xff]
    %v1249 = vld [vmem:[#allocation6 + $0x340] sm:$0xff]
    %v1250 = vld [vmem:[#allocation6 + $0x348] sm:$0xff]
    %v1251 = vld [vmem:[#allocation6 + $0x350] sm:$0xff]
    %v1252 = vld [vmem:[#allocation6 + $0x358] sm:$0xff]
    %v1253 = vld [vmem:[#allocation6 + $0x360] sm:$0xff]
    %v1254 = vld [vmem:[#allocation6 + $0x368] sm:$0xff]
    %v1255 = vld [vmem:[#allocation6 + $0x370] sm:$0xff]
    %v1256 = vld [vmem:[#allocation6 + $0x378] sm:$0xff]
    %1257 = vst [vmem:[#allocation1] ss:$2 sm:$0xff] %v92
    %v1258 = vld.sshfl [vmem:[#allocation1] sm:$0xff pattern:$0x75316420]
    %v1259 = vld.sshfl [vmem:[#allocation1 + $0x8] sm:$0xff pattern:$0x75316420]
    %1262 = vmatpush.xpose.msra.mxu0 0.0
    %1263 = vmatpush.xpose.msra.mxu0 0.0
    %1264 = vmatpush.xpose.msra.mxu0 0.0
    %1265 = vmatpush.xpose.msra.mxu0 0.0
    %1266 = vmatpush.xpose.msra.mxu0 0.0
    %1267 = vmatpush.xpose.msra.mxu0 0.0
    %1268 = vmatpush.xpose.msra.mxu0 0.0
    %1269 = vmatpush.xpose.msra.mxu0 0.0
    %1270 = vmatpush.xpose.msra.mxu0 0.0
    %1271 = vmatpush.xpose.msra.mxu0 0.0
    %1272 = vmatpush.xpose.msra.mxu0 0.0
    %1273 = vmatpush.xpose.msra.mxu0 0.0
    %1274 = vmatpush.xpose.msra.mxu0 0.0
    %1275 = vmatpush.xpose.msra.mxu0 0.0
    %1276 = vmatpush.xpose.msra.mxu0 0.0
    %1277 = vmatpush.xpose.msra.mxu0 %v1258
    %1278 = vmatmul.f32.gmra.mxu0 %v1243
    %v1279 = vpop.f32.mrf.mxu0
    %v1280 = vadd.f32 0.0, %v1279
    %1281 = vmatmul.f32.gmra.mxu0 %v1245
    %v1282 = vpop.f32.mrf.mxu0
    %v1283 = vadd.f32 0.0, %v1282
    %1284 = vmatmul.f32.gmra.mxu0 %v1247
    %v1285 = vpop.f32.mrf.mxu0
    %v1286 = vadd.f32 0.0, %v1285
    %1287 = vmatmul.f32.gmra.mxu0 %v1249
    %v1288 = vpop.f32.mrf.mxu0
    %v1289 = vadd.f32 0.0, %v1288
    %1290 = vmatmul.f32.gmra.mxu0 %v1251
    %v1291 = vpop.f32.mrf.mxu0
    %v1292 = vadd.f32 0.0, %v1291
    %1293 = vmatmul.f32.gmra.mxu0 %v1253
    %v1294 = vpop.f32.mrf.mxu0
    %v1295 = vadd.f32 0.0, %v1294
    %1296 = vmatmul.f32.gmra.mxu0 %v1255
    %v1297 = vpop.f32.mrf.mxu0
    %v1298 = vadd.f32 0.0, %v1297
    %1299 = vdwg.mxu0
    %1300 = vmatpush.xpose.msra.mxu0 0.0
    %1301 = vmatpush.xpose.msra.mxu0 0.0
    %1302 = vmatpush.xpose.msra.mxu0 0.0
    %1303 = vmatpush.xpose.msra.mxu0 0.0
    %1304 = vmatpush.xpose.msra.mxu0 0.0
    %1305 = vmatpush.xpose.msra.mxu0 0.0
    %1306 = vmatpush.xpose.msra.mxu0 0.0
    %1307 = vmatpush.xpose.msra.mxu0 0.0
    %1308 = vmatpush.xpose.msra.mxu0 0.0
    %1309 = vmatpush.xpose.msra.mxu0 0.0
    %1310 = vmatpush.xpose.msra.mxu0 0.0
    %1311 = vmatpush.xpose.msra.mxu0 0.0
    %1312 = vmatpush.xpose.msra.mxu0 0.0
    %1313 = vmatpush.xpose.msra.mxu0 0.0
    %1314 = vmatpush.xpose.msra.mxu0 0.0
    %1315 = vmatpush.xpose.msra.mxu0 %v1259
    %1316 = vmatmul.f32.gmra.mxu0 %v1244
    %v1317 = vpop.f32.mrf.mxu0
    %v1318 = vadd.f32 %v1280, %v1317
    %1319 = vmatmul.f32.gmra.mxu0 %v1246
    %v1320 = vpop.f32.mrf.mxu0
    %v1321 = vadd.f32 %v1283, %v1320
    %1322 = vmatmul.f32.gmra.mxu0 %v1248
    %v1323 = vpop.f32.mrf.mxu0
    %v1324 = vadd.f32 %v1286, %v1323
    %1325 = vmatmul.f32.gmra.mxu0 %v1250
    %v1326 = vpop.f32.mrf.mxu0
    %v1327 = vadd.f32 %v1289, %v1326
    %1328 = vmatmul.f32.gmra.mxu0 %v1252
    %v1329 = vpop.f32.mrf.mxu0
    %v1330 = vadd.f32 %v1292, %v1329
    %1331 = vmatmul.f32.gmra.mxu0 %v1254
    %v1332 = vpop.f32.mrf.mxu0
    %v1333 = vadd.f32 %v1295, %v1332
    %1334 = vmatmul.f32.gmra.mxu0 %v1256
    %v1335 = vpop.f32.mrf.mxu0
    %v1336 = vadd.f32 %v1298, %v1335
    %1337 = vdwg.mxu0
    %s1338 = scalar_lea.vmem %s5, 28
    %v1339 = vld [vmem:[%s1338] sm:$0x7]
    %v1341 = vsel %vm287, %v1318, 0
    %v1344 = vsel %vm287, %v1321, 0
    %v1347 = vsel %vm287, %v1324, 0
    %v1350 = vsel %vm287, %v1327, 0
    %v1353 = vsel %vm287, %v1330, 0
    %v1356 = vsel %vm287, %v1333, 0
    %v1359 = vsel %vm287, %v1336, 0
    %v1362 = vsel %vm309, %v1339, 0
    %1364 = vmatpush.msra.mxu0 0.0
    %1365 = vmatpush.msra.mxu0 0.0
    %1366 = vmatpush.msra.mxu0 0.0
    %1367 = vmatpush.msra.mxu0 0.0
    %1368 = vmatpush.msra.mxu0 0.0
    %1369 = vmatpush.msra.mxu0 0.0
    %1370 = vmatpush.msra.mxu0 0.0
    %1371 = vmatpush.msra.mxu0 0.0
    %1372 = vmatpush.msra.mxu0 0.0
    %1373 = vmatpush.msra.mxu0 0.0
    %1374 = vmatpush.msra.mxu0 0.0
    %1375 = vmatpush.msra.mxu0 0.0
    %1376 = vmatpush.msra.mxu0 0.0
    %1377 = vmatpush.msra.mxu0 0.0
    %1378 = vmatpush.msra.mxu0 0.0
    %1379 = vmatpush.msra.mxu0 %v1362
    %1380 = vmatmul.f32.gmra.mxu0 %v1341
    %v1381 = vpop.f32.mrf.mxu0
    %v1382 = vadd.f32 0.0, %v1381
    %1383 = vmatmul.f32.gmra.mxu0 %v1344
    %v1384 = vpop.f32.mrf.mxu0
    %v1385 = vadd.f32 0.0, %v1384
    %1386 = vmatmul.f32.gmra.mxu0 %v1347
    %v1387 = vpop.f32.mrf.mxu0
    %v1388 = vadd.f32 0.0, %v1387
    %1389 = vmatmul.f32.gmra.mxu0 %v1350
    %v1390 = vpop.f32.mrf.mxu0
    %v1391 = vadd.f32 0.0, %v1390
    %1392 = vmatmul.f32.gmra.mxu0 %v1353
    %v1393 = vpop.f32.mrf.mxu0
    %v1394 = vadd.f32 0.0, %v1393
    %1395 = vmatmul.f32.gmra.mxu0 %v1356
    %v1396 = vpop.f32.mrf.mxu0
    %v1397 = vadd.f32 0.0, %v1396
    %1398 = vmatmul.f32.gmra.mxu0 %v1359
    %v1399 = vpop.f32.mrf.mxu0
    %v1400 = vadd.f32 0.0, %v1399
    %1401 = vdwg.mxu0
    %v1402 = vadd.f32 %v1236, %v1382
    %v1403 = vadd.f32 %v1237, %v1385
    %v1404 = vadd.f32 %v1238, %v1388
    %v1405 = vadd.f32 %v1239, %v1391
    %v1406 = vadd.f32 %v1240, %v1394
    %v1407 = vadd.f32 %v1241, %v1397
    %v1408 = vadd.f32 %v1242, %v1400
    %v1409 = vld [vmem:[#allocation6 + $0x380] sm:$0xff]
    %v1410 = vld [vmem:[#allocation6 + $0x388] sm:$0xff]
    %v1411 = vld [vmem:[#allocation6 + $0x390] sm:$0xff]
    %v1412 = vld [vmem:[#allocation6 + $0x398] sm:$0xff]
    %v1413 = vld [vmem:[#allocation6 + $0x3a0] sm:$0xff]
    %v1414 = vld [vmem:[#allocation6 + $0x3a8] sm:$0xff]
    %v1415 = vld [vmem:[#allocation6 + $0x3b0] sm:$0xff]
    %v1416 = vld [vmem:[#allocation6 + $0x3b8] sm:$0xff]
    %v1417 = vld [vmem:[#allocation6 + $0x3c0] sm:$0xff]
    %v1418 = vld [vmem:[#allocation6 + $0x3c8] sm:$0xff]
    %v1419 = vld [vmem:[#allocation6 + $0x3d0] sm:$0xff]
    %v1420 = vld [vmem:[#allocation6 + $0x3d8] sm:$0xff]
    %v1421 = vld [vmem:[#allocation6 + $0x3e0] sm:$0xff]
    %v1422 = vld [vmem:[#allocation6 + $0x3e8] sm:$0xff]
    %1423 = vst [vmem:[#allocation1] ss:$2 sm:$0xff] %v92
    %v1424 = vld.sshfl [vmem:[#allocation1] sm:$0xff pattern:$0x75316420]
    %v1425 = vld.sshfl [vmem:[#allocation1 + $0x8] sm:$0xff pattern:$0x75316420]
    %1428 = vmatpush.xpose.msra.mxu0 0.0
    %1429 = vmatpush.xpose.msra.mxu0 0.0
    %1430 = vmatpush.xpose.msra.mxu0 0.0
    %1431 = vmatpush.xpose.msra.mxu0 0.0
    %1432 = vmatpush.xpose.msra.mxu0 0.0
    %1433 = vmatpush.xpose.msra.mxu0 0.0
    %1434 = vmatpush.xpose.msra.mxu0 0.0
    %1435 = vmatpush.xpose.msra.mxu0 0.0
    %1436 = vmatpush.xpose.msra.mxu0 0.0
    %1437 = vmatpush.xpose.msra.mxu0 0.0
    %1438 = vmatpush.xpose.msra.mxu0 0.0
    %1439 = vmatpush.xpose.msra.mxu0 0.0
    %1440 = vmatpush.xpose.msra.mxu0 0.0
    %1441 = vmatpush.xpose.msra.mxu0 0.0
    %1442 = vmatpush.xpose.msra.mxu0 0.0
    %1443 = vmatpush.xpose.msra.mxu0 %v1424
    %1444 = vmatmul.f32.gmra.mxu0 %v1409
    %v1445 = vpop.f32.mrf.mxu0
    %v1446 = vadd.f32 0.0, %v1445
    %1447 = vmatmul.f32.gmra.mxu0 %v1411
    %v1448 = vpop.f32.mrf.mxu0
    %v1449 = vadd.f32 0.0, %v1448
    %1450 = vmatmul.f32.gmra.mxu0 %v1413
    %v1451 = vpop.f32.mrf.mxu0
    %v1452 = vadd.f32 0.0, %v1451
    %1453 = vmatmul.f32.gmra.mxu0 %v1415
    %v1454 = vpop.f32.mrf.mxu0
    %v1455 = vadd.f32 0.0, %v1454
    %1456 = vmatmul.f32.gmra.mxu0 %v1417
    %v1457 = vpop.f32.mrf.mxu0
    %v1458 = vadd.f32 0.0, %v1457
    %1459 = vmatmul.f32.gmra.mxu0 %v1419
    %v1460 = vpop.f32.mrf.mxu0
    %v1461 = vadd.f32 0.0, %v1460
    %1462 = vmatmul.f32.gmra.mxu0 %v1421
    %v1463 = vpop.f32.mrf.mxu0
    %v1464 = vadd.f32 0.0, %v1463
    %1465 = vdwg.mxu0
    %1466 = vmatpush.xpose.msra.mxu0 0.0
    %1467 = vmatpush.xpose.msra.mxu0 0.0
    %1468 = vmatpush.xpose.msra.mxu0 0.0
    %1469 = vmatpush.xpose.msra.mxu0 0.0
    %1470 = vmatpush.xpose.msra.mxu0 0.0
    %1471 = vmatpush.xpose.msra.mxu0 0.0
    %1472 = vmatpush.xpose.msra.mxu0 0.0
    %1473 = vmatpush.xpose.msra.mxu0 0.0
    %1474 = vmatpush.xpose.msra.mxu0 0.0
    %1475 = vmatpush.xpose.msra.mxu0 0.0
    %1476 = vmatpush.xpose.msra.mxu0 0.0
    %1477 = vmatpush.xpose.msra.mxu0 0.0
    %1478 = vmatpush.xpose.msra.mxu0 0.0
    %1479 = vmatpush.xpose.msra.mxu0 0.0
    %1480 = vmatpush.xpose.msra.mxu0 0.0
    %1481 = vmatpush.xpose.msra.mxu0 %v1425
    %1482 = vmatmul.f32.gmra.mxu0 %v1410
    %v1483 = vpop.f32.mrf.mxu0
    %v1484 = vadd.f32 %v1446, %v1483
    %1485 = vmatmul.f32.gmra.mxu0 %v1412
    %v1486 = vpop.f32.mrf.mxu0
    %v1487 = vadd.f32 %v1449, %v1486
    %1488 = vmatmul.f32.gmra.mxu0 %v1414
    %v1489 = vpop.f32.mrf.mxu0
    %v1490 = vadd.f32 %v1452, %v1489
    %1491 = vmatmul.f32.gmra.mxu0 %v1416
    %v1492 = vpop.f32.mrf.mxu0
    %v1493 = vadd.f32 %v1455, %v1492
    %1494 = vmatmul.f32.gmra.mxu0 %v1418
    %v1495 = vpop.f32.mrf.mxu0
    %v1496 = vadd.f32 %v1458, %v1495
    %1497 = vmatmul.f32.gmra.mxu0 %v1420
    %v1498 = vpop.f32.mrf.mxu0
    %v1499 = vadd.f32 %v1461, %v1498
    %1500 = vmatmul.f32.gmra.mxu0 %v1422
    %v1501 = vpop.f32.mrf.mxu0
    %v1502 = vadd.f32 %v1464, %v1501
    %1503 = vdwg.mxu0
    %s1504 = scalar_lea.vmem %s5, 32
    %v1505 = vld [vmem:[%s1504] sm:$0x7]
    %v1507 = vsel %vm287, %v1484, 0
    %v1510 = vsel %vm287, %v1487, 0
    %v1513 = vsel %vm287, %v1490, 0
    %v1516 = vsel %vm287, %v1493, 0
    %v1519 = vsel %vm287, %v1496, 0
    %v1522 = vsel %vm287, %v1499, 0
    %v1525 = vsel %vm287, %v1502, 0
    %v1528 = vsel %vm309, %v1505, 0
    %1530 = vmatpush.msra.mxu0 0.0
    %1531 = vmatpush.msra.mxu0 0.0
    %1532 = vmatpush.msra.mxu0 0.0
    %1533 = vmatpush.msra.mxu0 0.0
    %1534 = vmatpush.msra.mxu0 0.0
    %1535 = vmatpush.msra.mxu0 0.0
    %1536 = vmatpush.msra.mxu0 0.0
    %1537 = vmatpush.msra.mxu0 0.0
    %1538 = vmatpush.msra.mxu0 0.0
    %1539 = vmatpush.msra.mxu0 0.0
    %1540 = vmatpush.msra.mxu0 0.0
    %1541 = vmatpush.msra.mxu0 0.0
    %1542 = vmatpush.msra.mxu0 0.0
    %1543 = vmatpush.msra.mxu0 0.0
    %1544 = vmatpush.msra.mxu0 0.0
    %1545 = vmatpush.msra.mxu0 %v1528
    %1546 = vmatmul.f32.gmra.mxu0 %v1507
    %v1547 = vpop.f32.mrf.mxu0
    %v1548 = vadd.f32 0.0, %v1547
    %1549 = vmatmul.f32.gmra.mxu0 %v1510
    %v1550 = vpop.f32.mrf.mxu0
    %v1551 = vadd.f32 0.0, %v1550
    %1552 = vmatmul.f32.gmra.mxu0 %v1513
    %v1553 = vpop.f32.mrf.mxu0
    %v1554 = vadd.f32 0.0, %v1553
    %1555 = vmatmul.f32.gmra.mxu0 %v1516
    %v1556 = vpop.f32.mrf.mxu0
    %v1557 = vadd.f32 0.0, %v1556
    %1558 = vmatmul.f32.gmra.mxu0 %v1519
    %v1559 = vpop.f32.mrf.mxu0
    %v1560 = vadd.f32 0.0, %v1559
    %1561 = vmatmul.f32.gmra.mxu0 %v1522
    %v1562 = vpop.f32.mrf.mxu0
    %v1563 = vadd.f32 0.0, %v1562
    %1564 = vmatmul.f32.gmra.mxu0 %v1525
    %v1565 = vpop.f32.mrf.mxu0
    %v1566 = vadd.f32 0.0, %v1565
    %1567 = vdwg.mxu0
    %v1568 = vadd.f32 %v1402, %v1548
    %v1569 = vadd.f32 %v1403, %v1551
    %v1570 = vadd.f32 %v1404, %v1554
    %v1571 = vadd.f32 %v1405, %v1557
    %v1572 = vadd.f32 %v1406, %v1560
    %v1573 = vadd.f32 %v1407, %v1563
    %v1574 = vadd.f32 %v1408, %v1566
    %v1576 = vperm.slane %v91, 0
    %v1578 = vadd.f32 %v1568, %v1576
    %v1579 = vadd.f32 %v1569, %v1576
    %v1580 = vadd.f32 %v1570, %v1576
    %v1581 = vadd.f32 %v1571, %v1576
    %v1582 = vadd.f32 %v1572, %v1576
    %v1583 = vadd.f32 %v1573, %v1576
    %v1584 = vadd.f32 %v1574, %v1576
    %v1585 = vmax.f32 %v1578, 0.0
    %v1586 = vmax.f32 %v1579, 0.0
    %v1587 = vmax.f32 %v1580, 0.0
    %v1588 = vmax.f32 %v1581, 0.0
    %v1589 = vmax.f32 %v1582, 0.0
    %v1590 = vmax.f32 %v1583, 0.0
    %v1591 = vmax.f32 %v1584, 0.0
    %vm1592 = vcmask 64512
    %1593 = vst.msk [vmem:[#allocation2] sm:$0xff] %vm1592, %v1585
    %1594 = vst.msk [vmem:[#allocation2 + $0x8] sm:$0xff] %vm1592, %v1586
    %1595 = vst.msk [vmem:[#allocation2 + $0x10] sm:$0xff] %vm1592, %v1587
    %1596 = vst.msk [vmem:[#allocation2 + $0x18] sm:$0xff] %vm1592, %v1588
    %1597 = vst.msk [vmem:[#allocation2 + $0x20] sm:$0xff] %vm1592, %v1589
    %1598 = vst.msk [vmem:[#allocation2 + $0x28] sm:$0xff] %vm1592, %v1590
    %1599 = vst.msk [vmem:[#allocation2 + $0x30] sm:$0xff] %vm1592, %v1591
    %s1600 = scalar_lea.vmem %s0, 8
    %v1601 = vld [vmem:[%s1600] sm:$0x77]
    %v1602 = vld [vmem:[#allocation6] sm:$0xff]
    %v1603 = vld [vmem:[#allocation6 + $0x8] sm:$0xff]
    %v1604 = vld [vmem:[#allocation6 + $0x10] sm:$0xff]
    %v1605 = vld [vmem:[#allocation6 + $0x18] sm:$0xff]
    %v1606 = vld [vmem:[#allocation6 + $0x20] sm:$0xff]
    %v1607 = vld [vmem:[#allocation6 + $0x28] sm:$0xff]
    %v1608 = vld [vmem:[#allocation6 + $0x30] sm:$0xff]
    %v1609 = vld [vmem:[#allocation6 + $0x38] sm:$0xff]
    %v1610 = vld [vmem:[#allocation6 + $0x40] sm:$0xff]
    %v1611 = vld [vmem:[#allocation6 + $0x48] sm:$0xff]
    %v1612 = vld [vmem:[#allocation6 + $0x50] sm:$0xff]
    %v1613 = vld [vmem:[#allocation6 + $0x58] sm:$0xff]
    %v1614 = vld [vmem:[#allocation6 + $0x60] sm:$0xff]
    %v1615 = vld [vmem:[#allocation6 + $0x68] sm:$0xff]
    %1617 = vst [vmem:[#allocation1] ss:$2 sm:$0xff] %v1601
    %v1618 = vld.sshfl [vmem:[#allocation1] sm:$0xff pattern:$0x75316420]
    %v1619 = vld.sshfl [vmem:[#allocation1 + $0x8] sm:$0xff pattern:$0x75316420]
    %1622 = vmatpush.xpose.msra.mxu0 0.0
    %1623 = vmatpush.xpose.msra.mxu0 0.0
    %1624 = vmatpush.xpose.msra.mxu0 0.0
    %1625 = vmatpush.xpose.msra.mxu0 0.0
    %1626 = vmatpush.xpose.msra.mxu0 0.0
    %1627 = vmatpush.xpose.msra.mxu0 0.0
    %1628 = vmatpush.xpose.msra.mxu0 0.0
    %1629 = vmatpush.xpose.msra.mxu0 0.0
    %1630 = vmatpush.xpose.msra.mxu0 0.0
    %1631 = vmatpush.xpose.msra.mxu0 0.0
    %1632 = vmatpush.xpose.msra.mxu0 0.0
    %1633 = vmatpush.xpose.msra.mxu0 0.0
    %1634 = vmatpush.xpose.msra.mxu0 0.0
    %1635 = vmatpush.xpose.msra.mxu0 0.0
    %1636 = vmatpush.xpose.msra.mxu0 0.0
    %1637 = vmatpush.xpose.msra.mxu0 %v1618
    %1638 = vmatmul.f32.gmra.mxu0 %v1602
    %v1639 = vpop.f32.mrf.mxu0
    %v1640 = vadd.f32 0.0, %v1639
    %1641 = vmatmul.f32.gmra.mxu0 %v1604
    %v1642 = vpop.f32.mrf.mxu0
    %v1643 = vadd.f32 0.0, %v1642
    %1644 = vmatmul.f32.gmra.mxu0 %v1606
    %v1645 = vpop.f32.mrf.mxu0
    %v1646 = vadd.f32 0.0, %v1645
    %1647 = vmatmul.f32.gmra.mxu0 %v1608
    %v1648 = vpop.f32.mrf.mxu0
    %v1649 = vadd.f32 0.0, %v1648
    %1650 = vmatmul.f32.gmra.mxu0 %v1610
    %v1651 = vpop.f32.mrf.mxu0
    %v1652 = vadd.f32 0.0, %v1651
    %1653 = vmatmul.f32.gmra.mxu0 %v1612
    %v1654 = vpop.f32.mrf.mxu0
    %v1655 = vadd.f32 0.0, %v1654
    %1656 = vmatmul.f32.gmra.mxu0 %v1614
    %v1657 = vpop.f32.mrf.mxu0
    %v1658 = vadd.f32 0.0, %v1657
    %1659 = vdwg.mxu0
    %1660 = vmatpush.xpose.msra.mxu0 0.0
    %1661 = vmatpush.xpose.msra.mxu0 0.0
    %1662 = vmatpush.xpose.msra.mxu0 0.0
    %1663 = vmatpush.xpose.msra.mxu0 0.0
    %1664 = vmatpush.xpose.msra.mxu0 0.0
    %1665 = vmatpush.xpose.msra.mxu0 0.0
    %1666 = vmatpush.xpose.msra.mxu0 0.0
    %1667 = vmatpush.xpose.msra.mxu0 0.0
    %1668 = vmatpush.xpose.msra.mxu0 0.0
    %1669 = vmatpush.xpose.msra.mxu0 0.0
    %1670 = vmatpush.xpose.msra.mxu0 0.0
    %1671 = vmatpush.xpose.msra.mxu0 0.0
    %1672 = vmatpush.xpose.msra.mxu0 0.0
    %1673 = vmatpush.xpose.msra.mxu0 0.0
    %1674 = vmatpush.xpose.msra.mxu0 0.0
    %1675 = vmatpush.xpose.msra.mxu0 %v1619
    %1676 = vmatmul.f32.gmra.mxu0 %v1603
    %v1677 = vpop.f32.mrf.mxu0
    %v1678 = vadd.f32 %v1640, %v1677
    %1679 = vmatmul.f32.gmra.mxu0 %v1605
    %v1680 = vpop.f32.mrf.mxu0
    %v1681 = vadd.f32 %v1643, %v1680
    %1682 = vmatmul.f32.gmra.mxu0 %v1607
    %v1683 = vpop.f32.mrf.mxu0
    %v1684 = vadd.f32 %v1646, %v1683
    %1685 = vmatmul.f32.gmra.mxu0 %v1609
    %v1686 = vpop.f32.mrf.mxu0
    %v1687 = vadd.f32 %v1649, %v1686
    %1688 = vmatmul.f32.gmra.mxu0 %v1611
    %v1689 = vpop.f32.mrf.mxu0
    %v1690 = vadd.f32 %v1652, %v1689
    %1691 = vmatmul.f32.gmra.mxu0 %v1613
    %v1692 = vpop.f32.mrf.mxu0
    %v1693 = vadd.f32 %v1655, %v1692
    %1694 = vmatmul.f32.gmra.mxu0 %v1615
    %v1695 = vpop.f32.mrf.mxu0
    %v1696 = vadd.f32 %v1658, %v1695
    %1697 = vdwg.mxu0
    %v1698 = vld [vmem:[%s5] sm:$0x7]
    %v1699 = vld [vmem:[#allocation6 + $0x70] sm:$0xff]
    %v1700 = vld [vmem:[#allocation6 + $0x78] sm:$0xff]
    %v1701 = vld [vmem:[#allocation6 + $0x80] sm:$0xff]
    %v1702 = vld [vmem:[#allocation6 + $0x88] sm:$0xff]
    %v1703 = vld [vmem:[#allocation6 + $0x90] sm:$0xff]
    %v1704 = vld [vmem:[#allocation6 + $0x98] sm:$0xff]
    %v1705 = vld [vmem:[#allocation6 + $0xa0] sm:$0xff]
    %v1706 = vld [vmem:[#allocation6 + $0xa8] sm:$0xff]
    %v1707 = vld [vmem:[#allocation6 + $0xb0] sm:$0xff]
    %v1708 = vld [vmem:[#allocation6 + $0xb8] sm:$0xff]
    %v1709 = vld [vmem:[#allocation6 + $0xc0] sm:$0xff]
    %v1710 = vld [vmem:[#allocation6 + $0xc8] sm:$0xff]
    %v1711 = vld [vmem:[#allocation6 + $0xd0] sm:$0xff]
    %v1712 = vld [vmem:[#allocation6 + $0xd8] sm:$0xff]
    %1713 = vst [vmem:[#allocation1] ss:$2 sm:$0xff] %v1601
    %v1714 = vld.sshfl [vmem:[#allocation1] sm:$0xff pattern:$0x75316420]
    %v1715 = vld.sshfl [vmem:[#allocation1 + $0x8] sm:$0xff pattern:$0x75316420]
    %1718 = vmatpush.xpose.msra.mxu0 0.0
    %1719 = vmatpush.xpose.msra.mxu0 0.0
    %1720 = vmatpush.xpose.msra.mxu0 0.0
    %1721 = vmatpush.xpose.msra.mxu0 0.0
    %1722 = vmatpush.xpose.msra.mxu0 0.0
    %1723 = vmatpush.xpose.msra.mxu0 0.0
    %1724 = vmatpush.xpose.msra.mxu0 0.0
    %1725 = vmatpush.xpose.msra.mxu0 0.0
    %1726 = vmatpush.xpose.msra.mxu0 0.0
    %1727 = vmatpush.xpose.msra.mxu0 0.0
    %1728 = vmatpush.xpose.msra.mxu0 0.0
    %1729 = vmatpush.xpose.msra.mxu0 0.0
    %1730 = vmatpush.xpose.msra.mxu0 0.0
    %1731 = vmatpush.xpose.msra.mxu0 0.0
    %1732 = vmatpush.xpose.msra.mxu0 0.0
    %1733 = vmatpush.xpose.msra.mxu0 %v1714
    %1734 = vmatmul.f32.gmra.mxu0 %v1699
    %v1735 = vpop.f32.mrf.mxu0
    %v1736 = vadd.f32 0.0, %v1735
    %1737 = vmatmul.f32.gmra.mxu0 %v1701
    %v1738 = vpop.f32.mrf.mxu0
    %v1739 = vadd.f32 0.0, %v1738
    %1740 = vmatmul.f32.gmra.mxu0 %v1703
    %v1741 = vpop.f32.mrf.mxu0
    %v1742 = vadd.f32 0.0, %v1741
    %1743 = vmatmul.f32.gmra.mxu0 %v1705
    %v1744 = vpop.f32.mrf.mxu0
    %v1745 = vadd.f32 0.0, %v1744
    %1746 = vmatmul.f32.gmra.mxu0 %v1707
    %v1747 = vpop.f32.mrf.mxu0
    %v1748 = vadd.f32 0.0, %v1747
    %1749 = vmatmul.f32.gmra.mxu0 %v1709
    %v1750 = vpop.f32.mrf.mxu0
    %v1751 = vadd.f32 0.0, %v1750
    %1752 = vmatmul.f32.gmra.mxu0 %v1711
    %v1753 = vpop.f32.mrf.mxu0
    %v1754 = vadd.f32 0.0, %v1753
    %1755 = vdwg.mxu0
    %1756 = vmatpush.xpose.msra.mxu0 0.0
    %1757 = vmatpush.xpose.msra.mxu0 0.0
    %1758 = vmatpush.xpose.msra.mxu0 0.0
    %1759 = vmatpush.xpose.msra.mxu0 0.0
    %1760 = vmatpush.xpose.msra.mxu0 0.0
    %1761 = vmatpush.xpose.msra.mxu0 0.0
    %1762 = vmatpush.xpose.msra.mxu0 0.0
    %1763 = vmatpush.xpose.msra.mxu0 0.0
    %1764 = vmatpush.xpose.msra.mxu0 0.0
    %1765 = vmatpush.xpose.msra.mxu0 0.0
    %1766 = vmatpush.xpose.msra.mxu0 0.0
    %1767 = vmatpush.xpose.msra.mxu0 0.0
    %1768 = vmatpush.xpose.msra.mxu0 0.0
    %1769 = vmatpush.xpose.msra.mxu0 0.0
    %1770 = vmatpush.xpose.msra.mxu0 0.0
    %1771 = vmatpush.xpose.msra.mxu0 %v1715
    %1772 = vmatmul.f32.gmra.mxu0 %v1700
    %v1773 = vpop.f32.mrf.mxu0
    %v1774 = vadd.f32 %v1736, %v1773
    %1775 = vmatmul.f32.gmra.mxu0 %v1702
    %v1776 = vpop.f32.mrf.mxu0
    %v1777 = vadd.f32 %v1739, %v1776
    %1778 = vmatmul.f32.gmra.mxu0 %v1704
    %v1779 = vpop.f32.mrf.mxu0
    %v1780 = vadd.f32 %v1742, %v1779
    %1781 = vmatmul.f32.gmra.mxu0 %v1706
    %v1782 = vpop.f32.mrf.mxu0
    %v1783 = vadd.f32 %v1745, %v1782
    %1784 = vmatmul.f32.gmra.mxu0 %v1708
    %v1785 = vpop.f32.mrf.mxu0
    %v1786 = vadd.f32 %v1748, %v1785
    %1787 = vmatmul.f32.gmra.mxu0 %v1710
    %v1788 = vpop.f32.mrf.mxu0
    %v1789 = vadd.f32 %v1751, %v1788
    %1790 = vmatmul.f32.gmra.mxu0 %v1712
    %v1791 = vpop.f32.mrf.mxu0
    %v1792 = vadd.f32 %v1754, %v1791
    %1793 = vdwg.mxu0
    %v1794 = vld [vmem:[%s285] sm:$0x7]
    %v1796 = vsel %vm287, %v1774, 0
    %v1799 = vsel %vm287, %v1777, 0
    %v1802 = vsel %vm287, %v1780, 0
    %v1805 = vsel %vm287, %v1783, 0
    %v1808 = vsel %vm287, %v1786, 0
    %v1811 = vsel %vm287, %v1789, 0
    %v1814 = vsel %vm287, %v1792, 0
    %v1817 = vsel %vm309, %v1794, 0
    %1819 = vmatpush.msra.mxu0 0.0
    %1820 = vmatpush.msra.mxu0 0.0
    %1821 = vmatpush.msra.mxu0 0.0
    %1822 = vmatpush.msra.mxu0 0.0
    %1823 = vmatpush.msra.mxu0 0.0
    %1824 = vmatpush.msra.mxu0 0.0
    %1825 = vmatpush.msra.mxu0 0.0
    %1826 = vmatpush.msra.mxu0 0.0
    %1827 = vmatpush.msra.mxu0 0.0
    %1828 = vmatpush.msra.mxu0 0.0
    %1829 = vmatpush.msra.mxu0 0.0
    %1830 = vmatpush.msra.mxu0 0.0
    %1831 = vmatpush.msra.mxu0 0.0
    %1832 = vmatpush.msra.mxu0 0.0
    %1833 = vmatpush.msra.mxu0 0.0
    %1834 = vmatpush.msra.mxu0 %v1817
    %1835 = vmatmul.f32.gmra.mxu0 %v1796
    %v1836 = vpop.f32.mrf.mxu0
    %v1837 = vadd.f32 0.0, %v1836
    %1838 = vmatmul.f32.gmra.mxu0 %v1799
    %v1839 = vpop.f32.mrf.mxu0
    %v1840 = vadd.f32 0.0, %v1839
    %1841 = vmatmul.f32.gmra.mxu0 %v1802
    %v1842 = vpop.f32.mrf.mxu0
    %v1843 = vadd.f32 0.0, %v1842
    %1844 = vmatmul.f32.gmra.mxu0 %v1805
    %v1845 = vpop.f32.mrf.mxu0
    %v1846 = vadd.f32 0.0, %v1845
    %1847 = vmatmul.f32.gmra.mxu0 %v1808
    %v1848 = vpop.f32.mrf.mxu0
    %v1849 = vadd.f32 0.0, %v1848
    %1850 = vmatmul.f32.gmra.mxu0 %v1811
    %v1851 = vpop.f32.mrf.mxu0
    %v1852 = vadd.f32 0.0, %v1851
    %1853 = vmatmul.f32.gmra.mxu0 %v1814
    %v1854 = vpop.f32.mrf.mxu0
    %v1855 = vadd.f32 0.0, %v1854
    %1856 = vdwg.mxu0
    %v1858 = vsel %vm287, %v1678, 0
    %v1861 = vsel %vm287, %v1681, 0
    %v1864 = vsel %vm287, %v1684, 0
    %v1867 = vsel %vm287, %v1687, 0
    %v1870 = vsel %vm287, %v1690, 0
    %v1873 = vsel %vm287, %v1693, 0
    %v1876 = vsel %vm287, %v1696, 0
    %v1879 = vsel %vm309, %v1698, 0
    %1881 = vmatpush.msra.mxu0 0.0
    %1882 = vmatpush.msra.mxu0 0.0
    %1883 = vmatpush.msra.mxu0 0.0
    %1884 = vmatpush.msra.mxu0 0.0
    %1885 = vmatpush.msra.mxu0 0.0
    %1886 = vmatpush.msra.mxu0 0.0
    %1887 = vmatpush.msra.mxu0 0.0
    %1888 = vmatpush.msra.mxu0 0.0
    %1889 = vmatpush.msra.mxu0 0.0
    %1890 = vmatpush.msra.mxu0 0.0
    %1891 = vmatpush.msra.mxu0 0.0
    %1892 = vmatpush.msra.mxu0 0.0
    %1893 = vmatpush.msra.mxu0 0.0
    %1894 = vmatpush.msra.mxu0 0.0
    %1895 = vmatpush.msra.mxu0 0.0
    %1896 = vmatpush.msra.mxu0 %v1879
    %1897 = vmatmul.f32.gmra.mxu0 %v1858
    %v1898 = vpop.f32.mrf.mxu0
    %v1899 = vadd.f32 %v1837, %v1898
    %1900 = vmatmul.f32.gmra.mxu0 %v1861
    %v1901 = vpop.f32.mrf.mxu0
    %v1902 = vadd.f32 %v1840, %v1901
    %1903 = vmatmul.f32.gmra.mxu0 %v1864
    %v1904 = vpop.f32.mrf.mxu0
    %v1905 = vadd.f32 %v1843, %v1904
    %1906 = vmatmul.f32.gmra.mxu0 %v1867
    %v1907 = vpop.f32.mrf.mxu0
    %v1908 = vadd.f32 %v1846, %v1907
    %1909 = vmatmul.f32.gmra.mxu0 %v1870
    %v1910 = vpop.f32.mrf.mxu0
    %v1911 = vadd.f32 %v1849, %v1910
    %1912 = vmatmul.f32.gmra.mxu0 %v1873
    %v1913 = vpop.f32.mrf.mxu0
    %v1914 = vadd.f32 %v1852, %v1913
    %1915 = vmatmul.f32.gmra.mxu0 %v1876
    %v1916 = vpop.f32.mrf.mxu0
    %v1917 = vadd.f32 %v1855, %v1916
    %1918 = vdwg.mxu0
    %v1919 = vld [vmem:[#allocation6 + $0xe0] sm:$0xff]
    %v1920 = vld [vmem:[#allocation6 + $0xe8] sm:$0xff]
    %v1921 = vld [vmem:[#allocation6 + $0xf0] sm:$0xff]
    %v1922 = vld [vmem:[#allocation6 + $0xf8] sm:$0xff]
    %v1923 = vld [vmem:[#allocation6 + $0x100] sm:$0xff]
    %v1924 = vld [vmem:[#allocation6 + $0x108] sm:$0xff]
    %v1925 = vld [vmem:[#allocation6 + $0x110] sm:$0xff]
    %v1926 = vld [vmem:[#allocation6 + $0x118] sm:$0xff]
    %v1927 = vld [vmem:[#allocation6 + $0x120] sm:$0xff]
    %v1928 = vld [vmem:[#allocation6 + $0x128] sm:$0xff]
    %v1929 = vld [vmem:[#allocation6 + $0x130] sm:$0xff]
    %v1930 = vld [vmem:[#allocation6 + $0x138] sm:$0xff]
    %v1931 = vld [vmem:[#allocation6 + $0x140] sm:$0xff]
    %v1932 = vld [vmem:[#allocation6 + $0x148] sm:$0xff]
    %1933 = vst [vmem:[#allocation1] ss:$2 sm:$0xff] %v1601
    %v1934 = vld.sshfl [vmem:[#allocation1] sm:$0xff pattern:$0x75316420]
    %v1935 = vld.sshfl [vmem:[#allocation1 + $0x8] sm:$0xff pattern:$0x75316420]
    %1938 = vmatpush.xpose.msra.mxu0 0.0
    %1939 = vmatpush.xpose.msra.mxu0 0.0
    %1940 = vmatpush.xpose.msra.mxu0 0.0
    %1941 = vmatpush.xpose.msra.mxu0 0.0
    %1942 = vmatpush.xpose.msra.mxu0 0.0
    %1943 = vmatpush.xpose.msra.mxu0 0.0
    %1944 = vmatpush.xpose.msra.mxu0 0.0
    %1945 = vmatpush.xpose.msra.mxu0 0.0
    %1946 = vmatpush.xpose.msra.mxu0 0.0
    %1947 = vmatpush.xpose.msra.mxu0 0.0
    %1948 = vmatpush.xpose.msra.mxu0 0.0
    %1949 = vmatpush.xpose.msra.mxu0 0.0
    %1950 = vmatpush.xpose.msra.mxu0 0.0
    %1951 = vmatpush.xpose.msra.mxu0 0.0
    %1952 = vmatpush.xpose.msra.mxu0 0.0
    %1953 = vmatpush.xpose.msra.mxu0 %v1934
    %1954 = vmatmul.f32.gmra.mxu0 %v1919
    %v1955 = vpop.f32.mrf.mxu0
    %v1956 = vadd.f32 0.0, %v1955
    %1957 = vmatmul.f32.gmra.mxu0 %v1921
    %v1958 = vpop.f32.mrf.mxu0
    %v1959 = vadd.f32 0.0, %v1958
    %1960 = vmatmul.f32.gmra.mxu0 %v1923
    %v1961 = vpop.f32.mrf.mxu0
    %v1962 = vadd.f32 0.0, %v1961
    %1963 = vmatmul.f32.gmra.mxu0 %v1925
    %v1964 = vpop.f32.mrf.mxu0
    %v1965 = vadd.f32 0.0, %v1964
    %1966 = vmatmul.f32.gmra.mxu0 %v1927
    %v1967 = vpop.f32.mrf.mxu0
    %v1968 = vadd.f32 0.0, %v1967
    %1969 = vmatmul.f32.gmra.mxu0 %v1929
    %v1970 = vpop.f32.mrf.mxu0
    %v1971 = vadd.f32 0.0, %v1970
    %1972 = vmatmul.f32.gmra.mxu0 %v1931
    %v1973 = vpop.f32.mrf.mxu0
    %v1974 = vadd.f32 0.0, %v1973
    %1975 = vdwg.mxu0
    %1976 = vmatpush.xpose.msra.mxu0 0.0
    %1977 = vmatpush.xpose.msra.mxu0 0.0
    %1978 = vmatpush.xpose.msra.mxu0 0.0
    %1979 = vmatpush.xpose.msra.mxu0 0.0
    %1980 = vmatpush.xpose.msra.mxu0 0.0
    %1981 = vmatpush.xpose.msra.mxu0 0.0
    %1982 = vmatpush.xpose.msra.mxu0 0.0
    %1983 = vmatpush.xpose.msra.mxu0 0.0
    %1984 = vmatpush.xpose.msra.mxu0 0.0
    %1985 = vmatpush.xpose.msra.mxu0 0.0
    %1986 = vmatpush.xpose.msra.mxu0 0.0
    %1987 = vmatpush.xpose.msra.mxu0 0.0
    %1988 = vmatpush.xpose.msra.mxu0 0.0
    %1989 = vmatpush.xpose.msra.mxu0 0.0
    %1990 = vmatpush.xpose.msra.mxu0 0.0
    %1991 = vmatpush.xpose.msra.mxu0 %v1935
    %1992 = vmatmul.f32.gmra.mxu0 %v1920
    %v1993 = vpop.f32.mrf.mxu0
    %v1994 = vadd.f32 %v1956, %v1993
    %1995 = vmatmul.f32.gmra.mxu0 %v1922
    %v1996 = vpop.f32.mrf.mxu0
    %v1997 = vadd.f32 %v1959, %v1996
    %1998 = vmatmul.f32.gmra.mxu0 %v1924
    %v1999 = vpop.f32.mrf.mxu0
    %v2000 = vadd.f32 %v1962, %v1999
    %2001 = vmatmul.f32.gmra.mxu0 %v1926
    %v2002 = vpop.f32.mrf.mxu0
    %v2003 = vadd.f32 %v1965, %v2002
    %2004 = vmatmul.f32.gmra.mxu0 %v1928
    %v2005 = vpop.f32.mrf.mxu0
    %v2006 = vadd.f32 %v1968, %v2005
    %2007 = vmatmul.f32.gmra.mxu0 %v1930
    %v2008 = vpop.f32.mrf.mxu0
    %v2009 = vadd.f32 %v1971, %v2008
    %2010 = vmatmul.f32.gmra.mxu0 %v1932
    %v2011 = vpop.f32.mrf.mxu0
    %v2012 = vadd.f32 %v1974, %v2011
    %2013 = vdwg.mxu0
    %v2014 = vld [vmem:[%s508] sm:$0x7]
    %v2016 = vsel %vm287, %v1994, 0
    %v2019 = vsel %vm287, %v1997, 0
    %v2022 = vsel %vm287, %v2000, 0
    %v2025 = vsel %vm287, %v2003, 0
    %v2028 = vsel %vm287, %v2006, 0
    %v2031 = vsel %vm287, %v2009, 0
    %v2034 = vsel %vm287, %v2012, 0
    %v2037 = vsel %vm309, %v2014, 0
    %2039 = vmatpush.msra.mxu0 0.0
    %2040 = vmatpush.msra.mxu0 0.0
    %2041 = vmatpush.msra.mxu0 0.0
    %2042 = vmatpush.msra.mxu0 0.0
    %2043 = vmatpush.msra.mxu0 0.0
    %2044 = vmatpush.msra.mxu0 0.0
    %2045 = vmatpush.msra.mxu0 0.0
    %2046 = vmatpush.msra.mxu0 0.0
    %2047 = vmatpush.msra.mxu0 0.0
    %2048 = vmatpush.msra.mxu0 0.0
    %2049 = vmatpush.msra.mxu0 0.0
    %2050 = vmatpush.msra.mxu0 0.0
    %2051 = vmatpush.msra.mxu0 0.0
    %2052 = vmatpush.msra.mxu0 0.0
    %2053 = vmatpush.msra.mxu0 0.0
    %2054 = vmatpush.msra.mxu0 %v2037
    %2055 = vmatmul.f32.gmra.mxu0 %v2016
    %v2056 = vpop.f32.mrf.mxu0
    %v2057 = vadd.f32 0.0, %v2056
    %2058 = vmatmul.f32.gmra.mxu0 %v2019
    %v2059 = vpop.f32.mrf.mxu0
    %v2060 = vadd.f32 0.0, %v2059
    %2061 = vmatmul.f32.gmra.mxu0 %v2022
    %v2062 = vpop.f32.mrf.mxu0
    %v2063 = vadd.f32 0.0, %v2062
    %2064 = vmatmul.f32.gmra.mxu0 %v2025
    %v2065 = vpop.f32.mrf.mxu0
    %v2066 = vadd.f32 0.0, %v2065
    %2067 = vmatmul.f32.gmra.mxu0 %v2028
    %v2068 = vpop.f32.mrf.mxu0
    %v2069 = vadd.f32 0.0, %v2068
    %2070 = vmatmul.f32.gmra.mxu0 %v2031
    %v2071 = vpop.f32.mrf.mxu0
    %v2072 = vadd.f32 0.0, %v2071
    %2073 = vmatmul.f32.gmra.mxu0 %v2034
    %v2074 = vpop.f32.mrf.mxu0
    %v2075 = vadd.f32 0.0, %v2074
    %2076 = vdwg.mxu0
    %v2077 = vadd.f32 %v1899, %v2057
    %v2078 = vadd.f32 %v1902, %v2060
    %v2079 = vadd.f32 %v1905, %v2063
    %v2080 = vadd.f32 %v1908, %v2066
    %v2081 = vadd.f32 %v1911, %v2069
    %v2082 = vadd.f32 %v1914, %v2072
    %v2083 = vadd.f32 %v1917, %v2075
    %v2084 = vld [vmem:[#allocation6 + $0x150] sm:$0xff]
    %v2085 = vld [vmem:[#allocation6 + $0x158] sm:$0xff]
    %v2086 = vld [vmem:[#allocation6 + $0x160] sm:$0xff]
    %v2087 = vld [vmem:[#allocation6 + $0x168] sm:$0xff]
    %v2088 = vld [vmem:[#allocation6 + $0x170] sm:$0xff]
    %v2089 = vld [vmem:[#allocation6 + $0x178] sm:$0xff]
    %v2090 = vld [vmem:[#allocation6 + $0x180] sm:$0xff]
    %v2091 = vld [vmem:[#allocation6 + $0x188] sm:$0xff]
    %v2092 = vld [vmem:[#allocation6 + $0x190] sm:$0xff]
    %v2093 = vld [vmem:[#allocation6 + $0x198] sm:$0xff]
    %v2094 = vld [vmem:[#allocation6 + $0x1a0] sm:$0xff]
    %v2095 = vld [vmem:[#allocation6 + $0x1a8] sm:$0xff]
    %v2096 = vld [vmem:[#allocation6 + $0x1b0] sm:$0xff]
    %v2097 = vld [vmem:[#allocation6 + $0x1b8] sm:$0xff]
    %2098 = vst [vmem:[#allocation1] ss:$2 sm:$0xff] %v1601
    %v2099 = vld.sshfl [vmem:[#allocation1] sm:$0xff pattern:$0x75316420]
    %v2100 = vld.sshfl [vmem:[#allocation1 + $0x8] sm:$0xff pattern:$0x75316420]
    %2103 = vmatpush.xpose.msra.mxu0 0.0
    %2104 = vmatpush.xpose.msra.mxu0 0.0
    %2105 = vmatpush.xpose.msra.mxu0 0.0
    %2106 = vmatpush.xpose.msra.mxu0 0.0
    %2107 = vmatpush.xpose.msra.mxu0 0.0
    %2108 = vmatpush.xpose.msra.mxu0 0.0
    %2109 = vmatpush.xpose.msra.mxu0 0.0
    %2110 = vmatpush.xpose.msra.mxu0 0.0
    %2111 = vmatpush.xpose.msra.mxu0 0.0
    %2112 = vmatpush.xpose.msra.mxu0 0.0
    %2113 = vmatpush.xpose.msra.mxu0 0.0
    %2114 = vmatpush.xpose.msra.mxu0 0.0
    %2115 = vmatpush.xpose.msra.mxu0 0.0
    %2116 = vmatpush.xpose.msra.mxu0 0.0
    %2117 = vmatpush.xpose.msra.mxu0 0.0
    %2118 = vmatpush.xpose.msra.mxu0 %v2099
    %2119 = vmatmul.f32.gmra.mxu0 %v2084
    %v2120 = vpop.f32.mrf.mxu0
    %v2121 = vadd.f32 0.0, %v2120
    %2122 = vmatmul.f32.gmra.mxu0 %v2086
    %v2123 = vpop.f32.mrf.mxu0
    %v2124 = vadd.f32 0.0, %v2123
    %2125 = vmatmul.f32.gmra.mxu0 %v2088
    %v2126 = vpop.f32.mrf.mxu0
    %v2127 = vadd.f32 0.0, %v2126
    %2128 = vmatmul.f32.gmra.mxu0 %v2090
    %v2129 = vpop.f32.mrf.mxu0
    %v2130 = vadd.f32 0.0, %v2129
    %2131 = vmatmul.f32.gmra.mxu0 %v2092
    %v2132 = vpop.f32.mrf.mxu0
    %v2133 = vadd.f32 0.0, %v2132
    %2134 = vmatmul.f32.gmra.mxu0 %v2094
    %v2135 = vpop.f32.mrf.mxu0
    %v2136 = vadd.f32 0.0, %v2135
    %2137 = vmatmul.f32.gmra.mxu0 %v2096
    %v2138 = vpop.f32.mrf.mxu0
    %v2139 = vadd.f32 0.0, %v2138
    %2140 = vdwg.mxu0
    %2141 = vmatpush.xpose.msra.mxu0 0.0
    %2142 = vmatpush.xpose.msra.mxu0 0.0
    %2143 = vmatpush.xpose.msra.mxu0 0.0
    %2144 = vmatpush.xpose.msra.mxu0 0.0
    %2145 = vmatpush.xpose.msra.mxu0 0.0
    %2146 = vmatpush.xpose.msra.mxu0 0.0
    %2147 = vmatpush.xpose.msra.mxu0 0.0
    %2148 = vmatpush.xpose.msra.mxu0 0.0
    %2149 = vmatpush.xpose.msra.mxu0 0.0
    %2150 = vmatpush.xpose.msra.mxu0 0.0
    %2151 = vmatpush.xpose.msra.mxu0 0.0
    %2152 = vmatpush.xpose.msra.mxu0 0.0
    %2153 = vmatpush.xpose.msra.mxu0 0.0
    %2154 = vmatpush.xpose.msra.mxu0 0.0
    %2155 = vmatpush.xpose.msra.mxu0 0.0
    %2156 = vmatpush.xpose.msra.mxu0 %v2100
    %2157 = vmatmul.f32.gmra.mxu0 %v2085
    %v2158 = vpop.f32.mrf.mxu0
    %v2159 = vadd.f32 %v2121, %v2158
    %2160 = vmatmul.f32.gmra.mxu0 %v2087
    %v2161 = vpop.f32.mrf.mxu0
    %v2162 = vadd.f32 %v2124, %v2161
    %2163 = vmatmul.f32.gmra.mxu0 %v2089
    %v2164 = vpop.f32.mrf.mxu0
    %v2165 = vadd.f32 %v2127, %v2164
    %2166 = vmatmul.f32.gmra.mxu0 %v2091
    %v2167 = vpop.f32.mrf.mxu0
    %v2168 = vadd.f32 %v2130, %v2167
    %2169 = vmatmul.f32.gmra.mxu0 %v2093
    %v2170 = vpop.f32.mrf.mxu0
    %v2171 = vadd.f32 %v2133, %v2170
    %2172 = vmatmul.f32.gmra.mxu0 %v2095
    %v2173 = vpop.f32.mrf.mxu0
    %v2174 = vadd.f32 %v2136, %v2173
    %2175 = vmatmul.f32.gmra.mxu0 %v2097
    %v2176 = vpop.f32.mrf.mxu0
    %v2177 = vadd.f32 %v2139, %v2176
    %2178 = vdwg.mxu0
    %v2179 = vld [vmem:[%s674] sm:$0x7]
    %v2181 = vsel %vm287, %v2159, 0
    %v2184 = vsel %vm287, %v2162, 0
    %v2187 = vsel %vm287, %v2165, 0
    %v2190 = vsel %vm287, %v2168, 0
    %v2193 = vsel %vm287, %v2171, 0
    %v2196 = vsel %vm287, %v2174, 0
    %v2199 = vsel %vm287, %v2177, 0
    %v2202 = vsel %vm309, %v2179, 0
    %2204 = vmatpush.msra.mxu0 0.0
    %2205 = vmatpush.msra.mxu0 0.0
    %2206 = vmatpush.msra.mxu0 0.0
    %2207 = vmatpush.msra.mxu0 0.0
    %2208 = vmatpush.msra.mxu0 0.0
    %2209 = vmatpush.msra.mxu0 0.0
    %2210 = vmatpush.msra.mxu0 0.0
    %2211 = vmatpush.msra.mxu0 0.0
    %2212 = vmatpush.msra.mxu0 0.0
    %2213 = vmatpush.msra.mxu0 0.0
    %2214 = vmatpush.msra.mxu0 0.0
    %2215 = vmatpush.msra.mxu0 0.0
    %2216 = vmatpush.msra.mxu0 0.0
    %2217 = vmatpush.msra.mxu0 0.0
    %2218 = vmatpush.msra.mxu0 0.0
    %2219 = vmatpush.msra.mxu0 %v2202
    %2220 = vmatmul.f32.gmra.mxu0 %v2181
    %v2221 = vpop.f32.mrf.mxu0
    %v2222 = vadd.f32 0.0, %v2221
    %2223 = vmatmul.f32.gmra.mxu0 %v2184
    %v2224 = vpop.f32.mrf.mxu0
    %v2225 = vadd.f32 0.0, %v2224
    %2226 = vmatmul.f32.gmra.mxu0 %v2187
    %v2227 = vpop.f32.mrf.mxu0
    %v2228 = vadd.f32 0.0, %v2227
    %2229 = vmatmul.f32.gmra.mxu0 %v2190
    %v2230 = vpop.f32.mrf.mxu0
    %v2231 = vadd.f32 0.0, %v2230
    %2232 = vmatmul.f32.gmra.mxu0 %v2193
    %v2233 = vpop.f32.mrf.mxu0
    %v2234 = vadd.f32 0.0, %v2233
    %2235 = vmatmul.f32.gmra.mxu0 %v2196
    %v2236 = vpop.f32.mrf.mxu0
    %v2237 = vadd.f32 0.0, %v2236
    %2238 = vmatmul.f32.gmra.mxu0 %v2199
    %v2239 = vpop.f32.mrf.mxu0
    %v2240 = vadd.f32 0.0, %v2239
    %2241 = vdwg.mxu0
    %v2242 = vadd.f32 %v2077, %v2222
    %v2243 = vadd.f32 %v2078, %v2225
    %v2244 = vadd.f32 %v2079, %v2228
    %v2245 = vadd.f32 %v2080, %v2231
    %v2246 = vadd.f32 %v2081, %v2234
    %v2247 = vadd.f32 %v2082, %v2237
    %v2248 = vadd.f32 %v2083, %v2240
    %v2249 = vld [vmem:[#allocation6 + $0x1c0] sm:$0xff]
    %v2250 = vld [vmem:[#allocation6 + $0x1c8] sm:$0xff]
    %v2251 = vld [vmem:[#allocation6 + $0x1d0] sm:$0xff]
    %v2252 = vld [vmem:[#allocation6 + $0x1d8] sm:$0xff]
    %v2253 = vld [vmem:[#allocation6 + $0x1e0] sm:$0xff]
    %v2254 = vld [vmem:[#allocation6 + $0x1e8] sm:$0xff]
    %v2255 = vld [vmem:[#allocation6 + $0x1f0] sm:$0xff]
    %v2256 = vld [vmem:[#allocation6 + $0x1f8] sm:$0xff]
    %v2257 = vld [vmem:[#allocation6 + $0x200] sm:$0xff]
    %v2258 = vld [vmem:[#allocation6 + $0x208] sm:$0xff]
    %v2259 = vld [vmem:[#allocation6 + $0x210] sm:$0xff]
    %v2260 = vld [vmem:[#allocation6 + $0x218] sm:$0xff]
    %v2261 = vld [vmem:[#allocation6 + $0x220] sm:$0xff]
    %v2262 = vld [vmem:[#allocation6 + $0x228] sm:$0xff]
    %2263 = vst [vmem:[#allocation1] ss:$2 sm:$0xff] %v1601
    %v2264 = vld.sshfl [vmem:[#allocation1] sm:$0xff pattern:$0x75316420]
    %v2265 = vld.sshfl [vmem:[#allocation1 + $0x8] sm:$0xff pattern:$0x75316420]
    %2268 = vmatpush.xpose.msra.mxu0 0.0
    %2269 = vmatpush.xpose.msra.mxu0 0.0
    %2270 = vmatpush.xpose.msra.mxu0 0.0
    %2271 = vmatpush.xpose.msra.mxu0 0.0
    %2272 = vmatpush.xpose.msra.mxu0 0.0
    %2273 = vmatpush.xpose.msra.mxu0 0.0
    %2274 = vmatpush.xpose.msra.mxu0 0.0
    %2275 = vmatpush.xpose.msra.mxu0 0.0
    %2276 = vmatpush.xpose.msra.mxu0 0.0
    %2277 = vmatpush.xpose.msra.mxu0 0.0
    %2278 = vmatpush.xpose.msra.mxu0 0.0
    %2279 = vmatpush.xpose.msra.mxu0 0.0
    %2280 = vmatpush.xpose.msra.mxu0 0.0
    %2281 = vmatpush.xpose.msra.mxu0 0.0
    %2282 = vmatpush.xpose.msra.mxu0 0.0
    %2283 = vmatpush.xpose.msra.mxu0 %v2264
    %2284 = vmatmul.f32.gmra.mxu0 %v2249
    %v2285 = vpop.f32.mrf.mxu0
    %v2286 = vadd.f32 0.0, %v2285
    %2287 = vmatmul.f32.gmra.mxu0 %v2251
    %v2288 = vpop.f32.mrf.mxu0
    %v2289 = vadd.f32 0.0, %v2288
    %2290 = vmatmul.f32.gmra.mxu0 %v2253
    %v2291 = vpop.f32.mrf.mxu0
    %v2292 = vadd.f32 0.0, %v2291
    %2293 = vmatmul.f32.gmra.mxu0 %v2255
    %v2294 = vpop.f32.mrf.mxu0
    %v2295 = vadd.f32 0.0, %v2294
    %2296 = vmatmul.f32.gmra.mxu0 %v2257
    %v2297 = vpop.f32.mrf.mxu0
    %v2298 = vadd.f32 0.0, %v2297
    %2299 = vmatmul.f32.gmra.mxu0 %v2259
    %v2300 = vpop.f32.mrf.mxu0
    %v2301 = vadd.f32 0.0, %v2300
    %2302 = vmatmul.f32.gmra.mxu0 %v2261
    %v2303 = vpop.f32.mrf.mxu0
    %v2304 = vadd.f32 0.0, %v2303
    %2305 = vdwg.mxu0
    %2306 = vmatpush.xpose.msra.mxu0 0.0
    %2307 = vmatpush.xpose.msra.mxu0 0.0
    %2308 = vmatpush.xpose.msra.mxu0 0.0
    %2309 = vmatpush.xpose.msra.mxu0 0.0
    %2310 = vmatpush.xpose.msra.mxu0 0.0
    %2311 = vmatpush.xpose.msra.mxu0 0.0
    %2312 = vmatpush.xpose.msra.mxu0 0.0
    %2313 = vmatpush.xpose.msra.mxu0 0.0
    %2314 = vmatpush.xpose.msra.mxu0 0.0
    %2315 = vmatpush.xpose.msra.mxu0 0.0
    %2316 = vmatpush.xpose.msra.mxu0 0.0
    %2317 = vmatpush.xpose.msra.mxu0 0.0
    %2318 = vmatpush.xpose.msra.mxu0 0.0
    %2319 = vmatpush.xpose.msra.mxu0 0.0
    %2320 = vmatpush.xpose.msra.mxu0 0.0
    %2321 = vmatpush.xpose.msra.mxu0 %v2265
    %2322 = vmatmul.f32.gmra.mxu0 %v2250
    %v2323 = vpop.f32.mrf.mxu0
    %v2324 = vadd.f32 %v2286, %v2323
    %2325 = vmatmul.f32.gmra.mxu0 %v2252
    %v2326 = vpop.f32.mrf.mxu0
    %v2327 = vadd.f32 %v2289, %v2326
    %2328 = vmatmul.f32.gmra.mxu0 %v2254
    %v2329 = vpop.f32.mrf.mxu0
    %v2330 = vadd.f32 %v2292, %v2329
    %2331 = vmatmul.f32.gmra.mxu0 %v2256
    %v2332 = vpop.f32.mrf.mxu0
    %v2333 = vadd.f32 %v2295, %v2332
    %2334 = vmatmul.f32.gmra.mxu0 %v2258
    %v2335 = vpop.f32.mrf.mxu0
    %v2336 = vadd.f32 %v2298, %v2335
    %2337 = vmatmul.f32.gmra.mxu0 %v2260
    %v2338 = vpop.f32.mrf.mxu0
    %v2339 = vadd.f32 %v2301, %v2338
    %2340 = vmatmul.f32.gmra.mxu0 %v2262
    %v2341 = vpop.f32.mrf.mxu0
    %v2342 = vadd.f32 %v2304, %v2341
    %2343 = vdwg.mxu0
    %v2344 = vld [vmem:[%s840] sm:$0x7]
    %v2346 = vsel %vm287, %v2324, 0
    %v2349 = vsel %vm287, %v2327, 0
    %v2352 = vsel %vm287, %v2330, 0
    %v2355 = vsel %vm287, %v2333, 0
    %v2358 = vsel %vm287, %v2336, 0
    %v2361 = vsel %vm287, %v2339, 0
    %v2364 = vsel %vm287, %v2342, 0
    %v2367 = vsel %vm309, %v2344, 0
    %2369 = vmatpush.msra.mxu0 0.0
    %2370 = vmatpush.msra.mxu0 0.0
    %2371 = vmatpush.msra.mxu0 0.0
    %2372 = vmatpush.msra.mxu0 0.0
    %2373 = vmatpush.msra.mxu0 0.0
    %2374 = vmatpush.msra.mxu0 0.0
    %2375 = vmatpush.msra.mxu0 0.0
    %2376 = vmatpush.msra.mxu0 0.0
    %2377 = vmatpush.msra.mxu0 0.0
    %2378 = vmatpush.msra.mxu0 0.0
    %2379 = vmatpush.msra.mxu0 0.0
    %2380 = vmatpush.msra.mxu0 0.0
    %2381 = vmatpush.msra.mxu0 0.0
    %2382 = vmatpush.msra.mxu0 0.0
    %2383 = vmatpush.msra.mxu0 0.0
    %2384 = vmatpush.msra.mxu0 %v2367
    %2385 = vmatmul.f32.gmra.mxu0 %v2346
    %v2386 = vpop.f32.mrf.mxu0
    %v2387 = vadd.f32 0.0, %v2386
    %2388 = vmatmul.f32.gmra.mxu0 %v2349
    %v2389 = vpop.f32.mrf.mxu0
    %v2390 = vadd.f32 0.0, %v2389
    %2391 = vmatmul.f32.gmra.mxu0 %v2352
    %v2392 = vpop.f32.mrf.mxu0
    %v2393 = vadd.f32 0.0, %v2392
    %2394 = vmatmul.f32.gmra.mxu0 %v2355
    %v2395 = vpop.f32.mrf.mxu0
    %v2396 = vadd.f32 0.0, %v2395
    %2397 = vmatmul.f32.gmra.mxu0 %v2358
    %v2398 = vpop.f32.mrf.mxu0
    %v2399 = vadd.f32 0.0, %v2398
    %2400 = vmatmul.f32.gmra.mxu0 %v2361
    %v2401 = vpop.f32.mrf.mxu0
    %v2402 = vadd.f32 0.0, %v2401
    %2403 = vmatmul.f32.gmra.mxu0 %v2364
    %v2404 = vpop.f32.mrf.mxu0
    %v2405 = vadd.f32 0.0, %v2404
    %2406 = vdwg.mxu0
    %v2407 = vadd.f32 %v2242, %v2387
    %v2408 = vadd.f32 %v2243, %v2390
    %v2409 = vadd.f32 %v2244, %v2393
    %v2410 = vadd.f32 %v2245, %v2396
    %v2411 = vadd.f32 %v2246, %v2399
    %v2412 = vadd.f32 %v2247, %v2402
    %v2413 = vadd.f32 %v2248, %v2405
    %v2414 = vld [vmem:[#allocation6 + $0x230] sm:$0xff]
    %v2415 = vld [vmem:[#allocation6 + $0x238] sm:$0xff]
    %v2416 = vld [vmem:[#allocation6 + $0x240] sm:$0xff]
    %v2417 = vld [vmem:[#allocation6 + $0x248] sm:$0xff]
    %v2418 = vld [vmem:[#allocation6 + $0x250] sm:$0xff]
    %v2419 = vld [vmem:[#allocation6 + $0x258] sm:$0xff]
    %v2420 = vld [vmem:[#allocation6 + $0x260] sm:$0xff]
    %v2421 = vld [vmem:[#allocation6 + $0x268] sm:$0xff]
    %v2422 = vld [vmem:[#allocation6 + $0x270] sm:$0xff]
    %v2423 = vld [vmem:[#allocation6 + $0x278] sm:$0xff]
    %v2424 = vld [vmem:[#allocation6 + $0x280] sm:$0xff]
    %v2425 = vld [vmem:[#allocation6 + $0x288] sm:$0xff]
    %v2426 = vld [vmem:[#allocation6 + $0x290] sm:$0xff]
    %v2427 = vld [vmem:[#allocation6 + $0x298] sm:$0xff]
    %2428 = vst [vmem:[#allocation1] ss:$2 sm:$0xff] %v1601
    %v2429 = vld.sshfl [vmem:[#allocation1] sm:$0xff pattern:$0x75316420]
    %v2430 = vld.sshfl [vmem:[#allocation1 + $0x8] sm:$0xff pattern:$0x75316420]
    %2433 = vmatpush.xpose.msra.mxu0 0.0
    %2434 = vmatpush.xpose.msra.mxu0 0.0
    %2435 = vmatpush.xpose.msra.mxu0 0.0
    %2436 = vmatpush.xpose.msra.mxu0 0.0
    %2437 = vmatpush.xpose.msra.mxu0 0.0
    %2438 = vmatpush.xpose.msra.mxu0 0.0
    %2439 = vmatpush.xpose.msra.mxu0 0.0
    %2440 = vmatpush.xpose.msra.mxu0 0.0
    %2441 = vmatpush.xpose.msra.mxu0 0.0
    %2442 = vmatpush.xpose.msra.mxu0 0.0
    %2443 = vmatpush.xpose.msra.mxu0 0.0
    %2444 = vmatpush.xpose.msra.mxu0 0.0
    %2445 = vmatpush.xpose.msra.mxu0 0.0
    %2446 = vmatpush.xpose.msra.mxu0 0.0
    %2447 = vmatpush.xpose.msra.mxu0 0.0
    %2448 = vmatpush.xpose.msra.mxu0 %v2429
    %2449 = vmatmul.f32.gmra.mxu0 %v2414
    %v2450 = vpop.f32.mrf.mxu0
    %v2451 = vadd.f32 0.0, %v2450
    %2452 = vmatmul.f32.gmra.mxu0 %v2416
    %v2453 = vpop.f32.mrf.mxu0
    %v2454 = vadd.f32 0.0, %v2453
    %2455 = vmatmul.f32.gmra.mxu0 %v2418
    %v2456 = vpop.f32.mrf.mxu0
    %v2457 = vadd.f32 0.0, %v2456
    %2458 = vmatmul.f32.gmra.mxu0 %v2420
    %v2459 = vpop.f32.mrf.mxu0
    %v2460 = vadd.f32 0.0, %v2459
    %2461 = vmatmul.f32.gmra.mxu0 %v2422
    %v2462 = vpop.f32.mrf.mxu0
    %v2463 = vadd.f32 0.0, %v2462
    %2464 = vmatmul.f32.gmra.mxu0 %v2424
    %v2465 = vpop.f32.mrf.mxu0
    %v2466 = vadd.f32 0.0, %v2465
    %2467 = vmatmul.f32.gmra.mxu0 %v2426
    %v2468 = vpop.f32.mrf.mxu0
    %v2469 = vadd.f32 0.0, %v2468
    %2470 = vdwg.mxu0
    %2471 = vmatpush.xpose.msra.mxu0 0.0
    %2472 = vmatpush.xpose.msra.mxu0 0.0
    %2473 = vmatpush.xpose.msra.mxu0 0.0
    %2474 = vmatpush.xpose.msra.mxu0 0.0
    %2475 = vmatpush.xpose.msra.mxu0 0.0
    %2476 = vmatpush.xpose.msra.mxu0 0.0
    %2477 = vmatpush.xpose.msra.mxu0 0.0
    %2478 = vmatpush.xpose.msra.mxu0 0.0
    %2479 = vmatpush.xpose.msra.mxu0 0.0
    %2480 = vmatpush.xpose.msra.mxu0 0.0
    %2481 = vmatpush.xpose.msra.mxu0 0.0
    %2482 = vmatpush.xpose.msra.mxu0 0.0
    %2483 = vmatpush.xpose.msra.mxu0 0.0
    %2484 = vmatpush.xpose.msra.mxu0 0.0
    %2485 = vmatpush.xpose.msra.mxu0 0.0
    %2486 = vmatpush.xpose.msra.mxu0 %v2430
    %2487 = vmatmul.f32.gmra.mxu0 %v2415
    %v2488 = vpop.f32.mrf.mxu0
    %v2489 = vadd.f32 %v2451, %v2488
    %2490 = vmatmul.f32.gmra.mxu0 %v2417
    %v2491 = vpop.f32.mrf.mxu0
    %v2492 = vadd.f32 %v2454, %v2491
    %2493 = vmatmul.f32.gmra.mxu0 %v2419
    %v2494 = vpop.f32.mrf.mxu0
    %v2495 = vadd.f32 %v2457, %v2494
    %2496 = vmatmul.f32.gmra.mxu0 %v2421
    %v2497 = vpop.f32.mrf.mxu0
    %v2498 = vadd.f32 %v2460, %v2497
    %2499 = vmatmul.f32.gmra.mxu0 %v2423
    %v2500 = vpop.f32.mrf.mxu0
    %v2501 = vadd.f32 %v2463, %v2500
    %2502 = vmatmul.f32.gmra.mxu0 %v2425
    %v2503 = vpop.f32.mrf.mxu0
    %v2504 = vadd.f32 %v2466, %v2503
    %2505 = vmatmul.f32.gmra.mxu0 %v2427
    %v2506 = vpop.f32.mrf.mxu0
    %v2507 = vadd.f32 %v2469, %v2506
    %2508 = vdwg.mxu0
    %v2509 = vld [vmem:[%s1006] sm:$0x7]
    %v2511 = vsel %vm287, %v2489, 0
    %v2514 = vsel %vm287, %v2492, 0
    %v2517 = vsel %vm287, %v2495, 0
    %v2520 = vsel %vm287, %v2498, 0
    %v2523 = vsel %vm287, %v2501, 0
    %v2526 = vsel %vm287, %v2504, 0
    %v2529 = vsel %vm287, %v2507, 0
    %v2532 = vsel %vm309, %v2509, 0
    %2534 = vmatpush.msra.mxu0 0.0
    %2535 = vmatpush.msra.mxu0 0.0
    %2536 = vmatpush.msra.mxu0 0.0
    %2537 = vmatpush.msra.mxu0 0.0
    %2538 = vmatpush.msra.mxu0 0.0
    %2539 = vmatpush.msra.mxu0 0.0
    %2540 = vmatpush.msra.mxu0 0.0
    %2541 = vmatpush.msra.mxu0 0.0
    %2542 = vmatpush.msra.mxu0 0.0
    %2543 = vmatpush.msra.mxu0 0.0
    %2544 = vmatpush.msra.mxu0 0.0
    %2545 = vmatpush.msra.mxu0 0.0
    %2546 = vmatpush.msra.mxu0 0.0
    %2547 = vmatpush.msra.mxu0 0.0
    %2548 = vmatpush.msra.mxu0 0.0
    %2549 = vmatpush.msra.mxu0 %v2532
    %2550 = vmatmul.f32.gmra.mxu0 %v2511
    %v2551 = vpop.f32.mrf.mxu0
    %v2552 = vadd.f32 0.0, %v2551
    %2553 = vmatmul.f32.gmra.mxu0 %v2514
    %v2554 = vpop.f32.mrf.mxu0
    %v2555 = vadd.f32 0.0, %v2554
    %2556 = vmatmul.f32.gmra.mxu0 %v2517
    %v2557 = vpop.f32.mrf.mxu0
    %v2558 = vadd.f32 0.0, %v2557
    %2559 = vmatmul.f32.gmra.mxu0 %v2520
    %v2560 = vpop.f32.mrf.mxu0
    %v2561 = vadd.f32 0.0, %v2560
    %2562 = vmatmul.f32.gmra.mxu0 %v2523
    %v2563 = vpop.f32.mrf.mxu0
    %v2564 = vadd.f32 0.0, %v2563
    %2565 = vmatmul.f32.gmra.mxu0 %v2526
    %v2566 = vpop.f32.mrf.mxu0
    %v2567 = vadd.f32 0.0, %v2566
    %2568 = vmatmul.f32.gmra.mxu0 %v2529
    %v2569 = vpop.f32.mrf.mxu0
    %v2570 = vadd.f32 0.0, %v2569
    %2571 = vdwg.mxu0
    %v2572 = vadd.f32 %v2407, %v2552
    %v2573 = vadd.f32 %v2408, %v2555
    %v2574 = vadd.f32 %v2409, %v2558
    %v2575 = vadd.f32 %v2410, %v2561
    %v2576 = vadd.f32 %v2411, %v2564
    %v2577 = vadd.f32 %v2412, %v2567
    %v2578 = vadd.f32 %v2413, %v2570
    %v2579 = vld [vmem:[#allocation6 + $0x2a0] sm:$0xff]
    %v2580 = vld [vmem:[#allocation6 + $0x2a8] sm:$0xff]
    %v2581 = vld [vmem:[#allocation6 + $0x2b0] sm:$0xff]
    %v2582 = vld [vmem:[#allocation6 + $0x2b8] sm:$0xff]
    %v2583 = vld [vmem:[#allocation6 + $0x2c0] sm:$0xff]
    %v2584 = vld [vmem:[#allocation6 + $0x2c8] sm:$0xff]
    %v2585 = vld [vmem:[#allocation6 + $0x2d0] sm:$0xff]
    %v2586 = vld [vmem:[#allocation6 + $0x2d8] sm:$0xff]
    %v2587 = vld [vmem:[#allocation6 + $0x2e0] sm:$0xff]
    %v2588 = vld [vmem:[#allocation6 + $0x2e8] sm:$0xff]
    %v2589 = vld [vmem:[#allocation6 + $0x2f0] sm:$0xff]
    %v2590 = vld [vmem:[#allocation6 + $0x2f8] sm:$0xff]
    %v2591 = vld [vmem:[#allocation6 + $0x300] sm:$0xff]
    %v2592 = vld [vmem:[#allocation6 + $0x308] sm:$0xff]
    %2593 = vst [vmem:[#allocation1] ss:$2 sm:$0xff] %v1601
    %v2594 = vld.sshfl [vmem:[#allocation1] sm:$0xff pattern:$0x75316420]
    %v2595 = vld.sshfl [vmem:[#allocation1 + $0x8] sm:$0xff pattern:$0x75316420]
    %2598 = vmatpush.xpose.msra.mxu0 0.0
    %2599 = vmatpush.xpose.msra.mxu0 0.0
    %2600 = vmatpush.xpose.msra.mxu0 0.0
    %2601 = vmatpush.xpose.msra.mxu0 0.0
    %2602 = vmatpush.xpose.msra.mxu0 0.0
    %2603 = vmatpush.xpose.msra.mxu0 0.0
    %2604 = vmatpush.xpose.msra.mxu0 0.0
    %2605 = vmatpush.xpose.msra.mxu0 0.0
    %2606 = vmatpush.xpose.msra.mxu0 0.0
    %2607 = vmatpush.xpose.msra.mxu0 0.0
    %2608 = vmatpush.xpose.msra.mxu0 0.0
    %2609 = vmatpush.xpose.msra.mxu0 0.0
    %2610 = vmatpush.xpose.msra.mxu0 0.0
    %2611 = vmatpush.xpose.msra.mxu0 0.0
    %2612 = vmatpush.xpose.msra.mxu0 0.0
    %2613 = vmatpush.xpose.msra.mxu0 %v2594
    %2614 = vmatmul.f32.gmra.mxu0 %v2579
    %v2615 = vpop.f32.mrf.mxu0
    %v2616 = vadd.f32 0.0, %v2615
    %2617 = vmatmul.f32.gmra.mxu0 %v2581
    %v2618 = vpop.f32.mrf.mxu0
    %v2619 = vadd.f32 0.0, %v2618
    %2620 = vmatmul.f32.gmra.mxu0 %v2583
    %v2621 = vpop.f32.mrf.mxu0
    %v2622 = vadd.f32 0.0, %v2621
    %2623 = vmatmul.f32.gmra.mxu0 %v2585
    %v2624 = vpop.f32.mrf.mxu0
    %v2625 = vadd.f32 0.0, %v2624
    %2626 = vmatmul.f32.gmra.mxu0 %v2587
    %v2627 = vpop.f32.mrf.mxu0
    %v2628 = vadd.f32 0.0, %v2627
    %2629 = vmatmul.f32.gmra.mxu0 %v2589
    %v2630 = vpop.f32.mrf.mxu0
    %v2631 = vadd.f32 0.0, %v2630
    %2632 = vmatmul.f32.gmra.mxu0 %v2591
    %v2633 = vpop.f32.mrf.mxu0
    %v2634 = vadd.f32 0.0, %v2633
    %2635 = vdwg.mxu0
    %2636 = vmatpush.xpose.msra.mxu0 0.0
    %2637 = vmatpush.xpose.msra.mxu0 0.0
    %2638 = vmatpush.xpose.msra.mxu0 0.0
    %2639 = vmatpush.xpose.msra.mxu0 0.0
    %2640 = vmatpush.xpose.msra.mxu0 0.0
    %2641 = vmatpush.xpose.msra.mxu0 0.0
    %2642 = vmatpush.xpose.msra.mxu0 0.0
    %2643 = vmatpush.xpose.msra.mxu0 0.0
    %2644 = vmatpush.xpose.msra.mxu0 0.0
    %2645 = vmatpush.xpose.msra.mxu0 0.0
    %2646 = vmatpush.xpose.msra.mxu0 0.0
    %2647 = vmatpush.xpose.msra.mxu0 0.0
    %2648 = vmatpush.xpose.msra.mxu0 0.0
    %2649 = vmatpush.xpose.msra.mxu0 0.0
    %2650 = vmatpush.xpose.msra.mxu0 0.0
    %2651 = vmatpush.xpose.msra.mxu0 %v2595
    %2652 = vmatmul.f32.gmra.mxu0 %v2580
    %v2653 = vpop.f32.mrf.mxu0
    %v2654 = vadd.f32 %v2616, %v2653
    %2655 = vmatmul.f32.gmra.mxu0 %v2582
    %v2656 = vpop.f32.mrf.mxu0
    %v2657 = vadd.f32 %v2619, %v2656
    %2658 = vmatmul.f32.gmra.mxu0 %v2584
    %v2659 = vpop.f32.mrf.mxu0
    %v2660 = vadd.f32 %v2622, %v2659
    %2661 = vmatmul.f32.gmra.mxu0 %v2586
    %v2662 = vpop.f32.mrf.mxu0
    %v2663 = vadd.f32 %v2625, %v2662
    %2664 = vmatmul.f32.gmra.mxu0 %v2588
    %v2665 = vpop.f32.mrf.mxu0
    %v2666 = vadd.f32 %v2628, %v2665
    %2667 = vmatmul.f32.gmra.mxu0 %v2590
    %v2668 = vpop.f32.mrf.mxu0
    %v2669 = vadd.f32 %v2631, %v2668
    %2670 = vmatmul.f32.gmra.mxu0 %v2592
    %v2671 = vpop.f32.mrf.mxu0
    %v2672 = vadd.f32 %v2634, %v2671
    %2673 = vdwg.mxu0
    %v2674 = vld [vmem:[%s1172] sm:$0x7]
    %v2676 = vsel %vm287, %v2654, 0
    %v2679 = vsel %vm287, %v2657, 0
    %v2682 = vsel %vm287, %v2660, 0
    %v2685 = vsel %vm287, %v2663, 0
    %v2688 = vsel %vm287, %v2666, 0
    %v2691 = vsel %vm287, %v2669, 0
    %v2694 = vsel %vm287, %v2672, 0
    %v2697 = vsel %vm309, %v2674, 0
    %2699 = vmatpush.msra.mxu0 0.0
    %2700 = vmatpush.msra.mxu0 0.0
    %2701 = vmatpush.msra.mxu0 0.0
    %2702 = vmatpush.msra.mxu0 0.0
    %2703 = vmatpush.msra.mxu0 0.0
    %2704 = vmatpush.msra.mxu0 0.0
    %2705 = vmatpush.msra.mxu0 0.0
    %2706 = vmatpush.msra.mxu0 0.0
    %2707 = vmatpush.msra.mxu0 0.0
    %2708 = vmatpush.msra.mxu0 0.0
    %2709 = vmatpush.msra.mxu0 0.0
    %2710 = vmatpush.msra.mxu0 0.0
    %2711 = vmatpush.msra.mxu0 0.0
    %2712 = vmatpush.msra.mxu0 0.0
    %2713 = vmatpush.msra.mxu0 0.0
    %2714 = vmatpush.msra.mxu0 %v2697
    %2715 = vmatmul.f32.gmra.mxu0 %v2676
    %v2716 = vpop.f32.mrf.mxu0
    %v2717 = vadd.f32 0.0, %v2716
    %2718 = vmatmul.f32.gmra.mxu0 %v2679
    %v2719 = vpop.f32.mrf.mxu0
    %v2720 = vadd.f32 0.0, %v2719
    %2721 = vmatmul.f32.gmra.mxu0 %v2682
    %v2722 = vpop.f32.mrf.mxu0
    %v2723 = vadd.f32 0.0, %v2722
    %2724 = vmatmul.f32.gmra.mxu0 %v2685
    %v2725 = vpop.f32.mrf.mxu0
    %v2726 = vadd.f32 0.0, %v2725
    %2727 = vmatmul.f32.gmra.mxu0 %v2688
    %v2728 = vpop.f32.mrf.mxu0
    %v2729 = vadd.f32 0.0, %v2728
    %2730 = vmatmul.f32.gmra.mxu0 %v2691
    %v2731 = vpop.f32.mrf.mxu0
    %v2732 = vadd.f32 0.0, %v2731
    %2733 = vmatmul.f32.gmra.mxu0 %v2694
    %v2734 = vpop.f32.mrf.mxu0
    %v2735 = vadd.f32 0.0, %v2734
    %2736 = vdwg.mxu0
    %v2737 = vadd.f32 %v2572, %v2717
    %v2738 = vadd.f32 %v2573, %v2720
    %v2739 = vadd.f32 %v2574, %v2723
    %v2740 = vadd.f32 %v2575, %v2726
    %v2741 = vadd.f32 %v2576, %v2729
    %v2742 = vadd.f32 %v2577, %v2732
    %v2743 = vadd.f32 %v2578, %v2735
    %v2744 = vld [vmem:[#allocation6 + $0x310] sm:$0xff]
    %v2745 = vld [vmem:[#allocation6 + $0x318] sm:$0xff]
    %v2746 = vld [vmem:[#allocation6 + $0x320] sm:$0xff]
    %v2747 = vld [vmem:[#allocation6 + $0x328] sm:$0xff]
    %v2748 = vld [vmem:[#allocation6 + $0x330] sm:$0xff]
    %v2749 = vld [vmem:[#allocation6 + $0x338] sm:$0xff]
    %v2750 = vld [vmem:[#allocation6 + $0x340] sm:$0xff]
    %v2751 = vld [vmem:[#allocation6 + $0x348] sm:$0xff]
    %v2752 = vld [vmem:[#allocation6 + $0x350] sm:$0xff]
    %v2753 = vld [vmem:[#allocation6 + $0x358] sm:$0xff]
    %v2754 = vld [vmem:[#allocation6 + $0x360] sm:$0xff]
    %v2755 = vld [vmem:[#allocation6 + $0x368] sm:$0xff]
    %v2756 = vld [vmem:[#allocation6 + $0x370] sm:$0xff]
    %v2757 = vld [vmem:[#allocation6 + $0x378] sm:$0xff]
    %2758 = vst [vmem:[#allocation1] ss:$2 sm:$0xff] %v1601
    %v2759 = vld.sshfl [vmem:[#allocation1] sm:$0xff pattern:$0x75316420]
    %v2760 = vld.sshfl [vmem:[#allocation1 + $0x8] sm:$0xff pattern:$0x75316420]
    %2763 = vmatpush.xpose.msra.mxu0 0.0
    %2764 = vmatpush.xpose.msra.mxu0 0.0
    %2765 = vmatpush.xpose.msra.mxu0 0.0
    %2766 = vmatpush.xpose.msra.mxu0 0.0
    %2767 = vmatpush.xpose.msra.mxu0 0.0
    %2768 = vmatpush.xpose.msra.mxu0 0.0
    %2769 = vmatpush.xpose.msra.mxu0 0.0
    %2770 = vmatpush.xpose.msra.mxu0 0.0
    %2771 = vmatpush.xpose.msra.mxu0 0.0
    %2772 = vmatpush.xpose.msra.mxu0 0.0
    %2773 = vmatpush.xpose.msra.mxu0 0.0
    %2774 = vmatpush.xpose.msra.mxu0 0.0
    %2775 = vmatpush.xpose.msra.mxu0 0.0
    %2776 = vmatpush.xpose.msra.mxu0 0.0
    %2777 = vmatpush.xpose.msra.mxu0 0.0
    %2778 = vmatpush.xpose.msra.mxu0 %v2759
    %2779 = vmatmul.f32.gmra.mxu0 %v2744
    %v2780 = vpop.f32.mrf.mxu0
    %v2781 = vadd.f32 0.0, %v2780
    %2782 = vmatmul.f32.gmra.mxu0 %v2746
    %v2783 = vpop.f32.mrf.mxu0
    %v2784 = vadd.f32 0.0, %v2783
    %2785 = vmatmul.f32.gmra.mxu0 %v2748
    %v2786 = vpop.f32.mrf.mxu0
    %v2787 = vadd.f32 0.0, %v2786
    %2788 = vmatmul.f32.gmra.mxu0 %v2750
    %v2789 = vpop.f32.mrf.mxu0
    %v2790 = vadd.f32 0.0, %v2789
    %2791 = vmatmul.f32.gmra.mxu0 %v2752
    %v2792 = vpop.f32.mrf.mxu0
    %v2793 = vadd.f32 0.0, %v2792
    %2794 = vmatmul.f32.gmra.mxu0 %v2754
    %v2795 = vpop.f32.mrf.mxu0
    %v2796 = vadd.f32 0.0, %v2795
    %2797 = vmatmul.f32.gmra.mxu0 %v2756
    %v2798 = vpop.f32.mrf.mxu0
    %v2799 = vadd.f32 0.0, %v2798
    %2800 = vdwg.mxu0
    %2801 = vmatpush.xpose.msra.mxu0 0.0
    %2802 = vmatpush.xpose.msra.mxu0 0.0
    %2803 = vmatpush.xpose.msra.mxu0 0.0
    %2804 = vmatpush.xpose.msra.mxu0 0.0
    %2805 = vmatpush.xpose.msra.mxu0 0.0
    %2806 = vmatpush.xpose.msra.mxu0 0.0
    %2807 = vmatpush.xpose.msra.mxu0 0.0
    %2808 = vmatpush.xpose.msra.mxu0 0.0
    %2809 = vmatpush.xpose.msra.mxu0 0.0
    %2810 = vmatpush.xpose.msra.mxu0 0.0
    %2811 = vmatpush.xpose.msra.mxu0 0.0
    %2812 = vmatpush.xpose.msra.mxu0 0.0
    %2813 = vmatpush.xpose.msra.mxu0 0.0
    %2814 = vmatpush.xpose.msra.mxu0 0.0
    %2815 = vmatpush.xpose.msra.mxu0 0.0
    %2816 = vmatpush.xpose.msra.mxu0 %v2760
    %2817 = vmatmul.f32.gmra.mxu0 %v2745
    %v2818 = vpop.f32.mrf.mxu0
    %v2819 = vadd.f32 %v2781, %v2818
    %2820 = vmatmul.f32.gmra.mxu0 %v2747
    %v2821 = vpop.f32.mrf.mxu0
    %v2822 = vadd.f32 %v2784, %v2821
    %2823 = vmatmul.f32.gmra.mxu0 %v2749
    %v2824 = vpop.f32.mrf.mxu0
    %v2825 = vadd.f32 %v2787, %v2824
    %2826 = vmatmul.f32.gmra.mxu0 %v2751
    %v2827 = vpop.f32.mrf.mxu0
    %v2828 = vadd.f32 %v2790, %v2827
    %2829 = vmatmul.f32.gmra.mxu0 %v2753
    %v2830 = vpop.f32.mrf.mxu0
    %v2831 = vadd.f32 %v2793, %v2830
    %2832 = vmatmul.f32.gmra.mxu0 %v2755
    %v2833 = vpop.f32.mrf.mxu0
    %v2834 = vadd.f32 %v2796, %v2833
    %2835 = vmatmul.f32.gmra.mxu0 %v2757
    %v2836 = vpop.f32.mrf.mxu0
    %v2837 = vadd.f32 %v2799, %v2836
    %2838 = vdwg.mxu0
    %v2839 = vld [vmem:[%s1338] sm:$0x7]
    %v2841 = vsel %vm287, %v2819, 0
    %v2844 = vsel %vm287, %v2822, 0
    %v2847 = vsel %vm287, %v2825, 0
    %v2850 = vsel %vm287, %v2828, 0
    %v2853 = vsel %vm287, %v2831, 0
    %v2856 = vsel %vm287, %v2834, 0
    %v2859 = vsel %vm287, %v2837, 0
    %v2862 = vsel %vm309, %v2839, 0
    %2864 = vmatpush.msra.mxu0 0.0
    %2865 = vmatpush.msra.mxu0 0.0
    %2866 = vmatpush.msra.mxu0 0.0
    %2867 = vmatpush.msra.mxu0 0.0
    %2868 = vmatpush.msra.mxu0 0.0
    %2869 = vmatpush.msra.mxu0 0.0
    %2870 = vmatpush.msra.mxu0 0.0
    %2871 = vmatpush.msra.mxu0 0.0
    %2872 = vmatpush.msra.mxu0 0.0
    %2873 = vmatpush.msra.mxu0 0.0
    %2874 = vmatpush.msra.mxu0 0.0
    %2875 = vmatpush.msra.mxu0 0.0
    %2876 = vmatpush.msra.mxu0 0.0
    %2877 = vmatpush.msra.mxu0 0.0
    %2878 = vmatpush.msra.mxu0 0.0
    %2879 = vmatpush.msra.mxu0 %v2862
    %2880 = vmatmul.f32.gmra.mxu0 %v2841
    %v2881 = vpop.f32.mrf.mxu0
    %v2882 = vadd.f32 0.0, %v2881
    %2883 = vmatmul.f32.gmra.mxu0 %v2844
    %v2884 = vpop.f32.mrf.mxu0
    %v2885 = vadd.f32 0.0, %v2884
    %2886 = vmatmul.f32.gmra.mxu0 %v2847
    %v2887 = vpop.f32.mrf.mxu0
    %v2888 = vadd.f32 0.0, %v2887
    %2889 = vmatmul.f32.gmra.mxu0 %v2850
    %v2890 = vpop.f32.mrf.mxu0
    %v2891 = vadd.f32 0.0, %v2890
    %2892 = vmatmul.f32.gmra.mxu0 %v2853
    %v2893 = vpop.f32.mrf.mxu0
    %v2894 = vadd.f32 0.0, %v2893
    %2895 = vmatmul.f32.gmra.mxu0 %v2856
    %v2896 = vpop.f32.mrf.mxu0
    %v2897 = vadd.f32 0.0, %v2896
    %2898 = vmatmul.f32.gmra.mxu0 %v2859
    %v2899 = vpop.f32.mrf.mxu0
    %v2900 = vadd.f32 0.0, %v2899
    %2901 = vdwg.mxu0
    %v2902 = vadd.f32 %v2737, %v2882
    %v2903 = vadd.f32 %v2738, %v2885
    %v2904 = vadd.f32 %v2739, %v2888
    %v2905 = vadd.f32 %v2740, %v2891
    %v2906 = vadd.f32 %v2741, %v2894
    %v2907 = vadd.f32 %v2742, %v2897
    %v2908 = vadd.f32 %v2743, %v2900
    %v2909 = vld [vmem:[#allocation6 + $0x380] sm:$0xff]
    %v2910 = vld [vmem:[#allocation6 + $0x388] sm:$0xff]
    %v2911 = vld [vmem:[#allocation6 + $0x390] sm:$0xff]
    %v2912 = vld [vmem:[#allocation6 + $0x398] sm:$0xff]
    %v2913 = vld [vmem:[#allocation6 + $0x3a0] sm:$0xff]
    %v2914 = vld [vmem:[#allocation6 + $0x3a8] sm:$0xff]
    %v2915 = vld [vmem:[#allocation6 + $0x3b0] sm:$0xff]
    %v2916 = vld [vmem:[#allocation6 + $0x3b8] sm:$0xff]
    %v2917 = vld [vmem:[#allocation6 + $0x3c0] sm:$0xff]
    %v2918 = vld [vmem:[#allocation6 + $0x3c8] sm:$0xff]
    %v2919 = vld [vmem:[#allocation6 + $0x3d0] sm:$0xff]
    %v2920 = vld [vmem:[#allocation6 + $0x3d8] sm:$0xff]
    %v2921 = vld [vmem:[#allocation6 + $0x3e0] sm:$0xff]
    %v2922 = vld [vmem:[#allocation6 + $0x3e8] sm:$0xff]
    %2923 = vst [vmem:[#allocation1] ss:$2 sm:$0xff] %v1601
    %v2924 = vld.sshfl [vmem:[#allocation1] sm:$0xff pattern:$0x75316420]
    %v2925 = vld.sshfl [vmem:[#allocation1 + $0x8] sm:$0xff pattern:$0x75316420]
    %2928 = vmatpush.xpose.msra.mxu0 0.0
    %2929 = vmatpush.xpose.msra.mxu0 0.0
    %2930 = vmatpush.xpose.msra.mxu0 0.0
    %2931 = vmatpush.xpose.msra.mxu0 0.0
    %2932 = vmatpush.xpose.msra.mxu0 0.0
    %2933 = vmatpush.xpose.msra.mxu0 0.0
    %2934 = vmatpush.xpose.msra.mxu0 0.0
    %2935 = vmatpush.xpose.msra.mxu0 0.0
    %2936 = vmatpush.xpose.msra.mxu0 0.0
    %2937 = vmatpush.xpose.msra.mxu0 0.0
    %2938 = vmatpush.xpose.msra.mxu0 0.0
    %2939 = vmatpush.xpose.msra.mxu0 0.0
    %2940 = vmatpush.xpose.msra.mxu0 0.0
    %2941 = vmatpush.xpose.msra.mxu0 0.0
    %2942 = vmatpush.xpose.msra.mxu0 0.0
    %2943 = vmatpush.xpose.msra.mxu0 %v2924
    %2944 = vmatmul.f32.gmra.mxu0 %v2909
    %v2945 = vpop.f32.mrf.mxu0
    %v2946 = vadd.f32 0.0, %v2945
    %2947 = vmatmul.f32.gmra.mxu0 %v2911
    %v2948 = vpop.f32.mrf.mxu0
    %v2949 = vadd.f32 0.0, %v2948
    %2950 = vmatmul.f32.gmra.mxu0 %v2913
    %v2951 = vpop.f32.mrf.mxu0
    %v2952 = vadd.f32 0.0, %v2951
    %2953 = vmatmul.f32.gmra.mxu0 %v2915
    %v2954 = vpop.f32.mrf.mxu0
    %v2955 = vadd.f32 0.0, %v2954
    %2956 = vmatmul.f32.gmra.mxu0 %v2917
    %v2957 = vpop.f32.mrf.mxu0
    %v2958 = vadd.f32 0.0, %v2957
    %2959 = vmatmul.f32.gmra.mxu0 %v2919
    %v2960 = vpop.f32.mrf.mxu0
    %v2961 = vadd.f32 0.0, %v2960
    %2962 = vmatmul.f32.gmra.mxu0 %v2921
    %v2963 = vpop.f32.mrf.mxu0
    %v2964 = vadd.f32 0.0, %v2963
    %2965 = vdwg.mxu0
    %2966 = vmatpush.xpose.msra.mxu0 0.0
    %2967 = vmatpush.xpose.msra.mxu0 0.0
    %2968 = vmatpush.xpose.msra.mxu0 0.0
    %2969 = vmatpush.xpose.msra.mxu0 0.0
    %2970 = vmatpush.xpose.msra.mxu0 0.0
    %2971 = vmatpush.xpose.msra.mxu0 0.0
    %2972 = vmatpush.xpose.msra.mxu0 0.0
    %2973 = vmatpush.xpose.msra.mxu0 0.0
    %2974 = vmatpush.xpose.msra.mxu0 0.0
    %2975 = vmatpush.xpose.msra.mxu0 0.0
    %2976 = vmatpush.xpose.msra.mxu0 0.0
    %2977 = vmatpush.xpose.msra.mxu0 0.0
    %2978 = vmatpush.xpose.msra.mxu0 0.0
    %2979 = vmatpush.xpose.msra.mxu0 0.0
    %2980 = vmatpush.xpose.msra.mxu0 0.0
    %2981 = vmatpush.xpose.msra.mxu0 %v2925
    %2982 = vmatmul.f32.gmra.mxu0 %v2910
    %v2983 = vpop.f32.mrf.mxu0
    %v2984 = vadd.f32 %v2946, %v2983
    %2985 = vmatmul.f32.gmra.mxu0 %v2912
    %v2986 = vpop.f32.mrf.mxu0
    %v2987 = vadd.f32 %v2949, %v2986
    %2988 = vmatmul.f32.gmra.mxu0 %v2914
    %v2989 = vpop.f32.mrf.mxu0
    %v2990 = vadd.f32 %v2952, %v2989
    %2991 = vmatmul.f32.gmra.mxu0 %v2916
    %v2992 = vpop.f32.mrf.mxu0
    %v2993 = vadd.f32 %v2955, %v2992
    %2994 = vmatmul.f32.gmra.mxu0 %v2918
    %v2995 = vpop.f32.mrf.mxu0
    %v2996 = vadd.f32 %v2958, %v2995
    %2997 = vmatmul.f32.gmra.mxu0 %v2920
    %v2998 = vpop.f32.mrf.mxu0
    %v2999 = vadd.f32 %v2961, %v2998
    %3000 = vmatmul.f32.gmra.mxu0 %v2922
    %v3001 = vpop.f32.mrf.mxu0
    %v3002 = vadd.f32 %v2964, %v3001
    %3003 = vdwg.mxu0
    %v3004 = vld [vmem:[%s1504] sm:$0x7]
    %v3006 = vsel %vm287, %v2984, 0
    %v3009 = vsel %vm287, %v2987, 0
    %v3012 = vsel %vm287, %v2990, 0
    %v3015 = vsel %vm287, %v2993, 0
    %v3018 = vsel %vm287, %v2996, 0
    %v3021 = vsel %vm287, %v2999, 0
    %v3024 = vsel %vm287, %v3002, 0
    %v3027 = vsel %vm309, %v3004, 0
    %3029 = vmatpush.msra.mxu0 0.0
    %3030 = vmatpush.msra.mxu0 0.0
    %3031 = vmatpush.msra.mxu0 0.0
    %3032 = vmatpush.msra.mxu0 0.0
    %3033 = vmatpush.msra.mxu0 0.0
    %3034 = vmatpush.msra.mxu0 0.0
    %3035 = vmatpush.msra.mxu0 0.0
    %3036 = vmatpush.msra.mxu0 0.0
    %3037 = vmatpush.msra.mxu0 0.0
    %3038 = vmatpush.msra.mxu0 0.0
    %3039 = vmatpush.msra.mxu0 0.0
    %3040 = vmatpush.msra.mxu0 0.0
    %3041 = vmatpush.msra.mxu0 0.0
    %3042 = vmatpush.msra.mxu0 0.0
    %3043 = vmatpush.msra.mxu0 0.0
    %3044 = vmatpush.msra.mxu0 %v3027
    %3045 = vmatmul.f32.gmra.mxu0 %v3006
    %v3046 = vpop.f32.mrf.mxu0
    %v3047 = vadd.f32 0.0, %v3046
    %3048 = vmatmul.f32.gmra.mxu0 %v3009
    %v3049 = vpop.f32.mrf.mxu0
    %v3050 = vadd.f32 0.0, %v3049
    %3051 = vmatmul.f32.gmra.mxu0 %v3012
    %v3052 = vpop.f32.mrf.mxu0
    %v3053 = vadd.f32 0.0, %v3052
    %3054 = vmatmul.f32.gmra.mxu0 %v3015
    %v3055 = vpop.f32.mrf.mxu0
    %v3056 = vadd.f32 0.0, %v3055
    %3057 = vmatmul.f32.gmra.mxu0 %v3018
    %v3058 = vpop.f32.mrf.mxu0
    %v3059 = vadd.f32 0.0, %v3058
    %3060 = vmatmul.f32.gmra.mxu0 %v3021
    %v3061 = vpop.f32.mrf.mxu0
    %v3062 = vadd.f32 0.0, %v3061
    %3063 = vmatmul.f32.gmra.mxu0 %v3024
    %v3064 = vpop.f32.mrf.mxu0
    %v3065 = vadd.f32 0.0, %v3064
    %3066 = vdwg.mxu0
    %v3067 = vadd.f32 %v2902, %v3047
    %v3068 = vadd.f32 %v2903, %v3050
    %v3069 = vadd.f32 %v2904, %v3053
    %v3070 = vadd.f32 %v2905, %v3056
    %v3071 = vadd.f32 %v2906, %v3059
    %v3072 = vadd.f32 %v2907, %v3062
    %v3073 = vadd.f32 %v2908, %v3065
    %v3074 = vadd.f32 %v3067, %v1576
    %v3075 = vadd.f32 %v3068, %v1576
    %v3076 = vadd.f32 %v3069, %v1576
    %v3077 = vadd.f32 %v3070, %v1576
    %v3078 = vadd.f32 %v3071, %v1576
    %v3079 = vadd.f32 %v3072, %v1576
    %v3080 = vadd.f32 %v3073, %v1576
    %v3081 = vmax.f32 %v3074, 0.0
    %v3082 = vmax.f32 %v3075, 0.0
    %v3083 = vmax.f32 %v3076, 0.0
    %v3084 = vmax.f32 %v3077, 0.0
    %v3085 = vmax.f32 %v3078, 0.0
    %v3086 = vmax.f32 %v3079, 0.0
    %v3087 = vmax.f32 %v3080, 0.0
    %3088 = vst.msk [vmem:[#allocation2 + $0x38] sm:$0xff] %vm1592, %v3081
    %3089 = vst.msk [vmem:[#allocation2 + $0x40] sm:$0xff] %vm1592, %v3082
    %3090 = vst.msk [vmem:[#allocation2 + $0x48] sm:$0xff] %vm1592, %v3083
    %3091 = vst.msk [vmem:[#allocation2 + $0x50] sm:$0xff] %vm1592, %v3084
    %3092 = vst.msk [vmem:[#allocation2 + $0x58] sm:$0xff] %vm1592, %v3085
    %3093 = vst.msk [vmem:[#allocation2 + $0x60] sm:$0xff] %vm1592, %v3086
    %3094 = vst.msk [vmem:[#allocation2 + $0x68] sm:$0xff] %vm1592, %v3087
    %v3095 = vld [vmem:[%s8] sm:$0x1]
    %v3096 = vld [vmem:[#allocation2] sm:$0xff]
    %v3097 = vld [vmem:[#allocation2 + $0x8] sm:$0xff]
    %v3098 = vld [vmem:[#allocation2 + $0x10] sm:$0xff]
    %v3099 = vld [vmem:[#allocation2 + $0x18] sm:$0xff]
    %v3100 = vld [vmem:[#allocation2 + $0x20] sm:$0xff]
    %v3101 = vld [vmem:[#allocation2 + $0x28] sm:$0xff]
    %v3102 = vld [vmem:[#allocation2 + $0x30] sm:$0xff]
    %v3103 = vld [vmem:[%s2] sm:$0xff]
    %v3104 = vld [vmem:[%s2 + $0x8] sm:$0xff]
    %v3105 = vld [vmem:[%s2 + $0x10] sm:$0xff]
    %v3106 = vld [vmem:[%s2 + $0x18] sm:$0xff]
    %vm3107 = vcmask 457728
    %v3109 = vsel %vm3107, %v3103, 0
    %v3112 = vsel %vm3107, %v3104, 0
    %v3115 = vsel %vm3107, %v3105, 0
    %v3118 = vsel %vm3107, %v3106, 0
    %3120 = vmatpush.msra.mxu0 0.0
    %3121 = vmatpush.msra.mxu0 0.0
    %3122 = vmatpush.msra.mxu0 0.0
    %3123 = vmatpush.msra.mxu0 0.0
    %3124 = vmatpush.msra.mxu0 0.0
    %3125 = vmatpush.msra.mxu0 0.0
    %3126 = vmatpush.msra.mxu0 0.0
    %3127 = vmatpush.msra.mxu0 0.0
    %3128 = vmatpush.msra.mxu0 0.0
    %3129 = vmatpush.msra.mxu0 %v3102
    %3130 = vmatpush.msra.mxu0 %v3101
    %3131 = vmatpush.msra.mxu0 %v3100
    %3132 = vmatpush.msra.mxu0 %v3099
    %3133 = vmatpush.msra.mxu0 %v3098
    %3134 = vmatpush.msra.mxu0 %v3097
    %3135 = vmatpush.msra.mxu0 %v3096
    %3136 = vmatmul.f32.gmra.mxu0 %v3109
    %v3137 = vpop.f32.mrf.mxu0
    %v3138 = vadd.f32 0.0, %v3137
    %3139 = vmatmul.f32.gmra.mxu0 %v3112
    %v3140 = vpop.f32.mrf.mxu0
    %v3141 = vadd.f32 0.0, %v3140
    %3142 = vmatmul.f32.gmra.mxu0 %v3115
    %v3143 = vpop.f32.mrf.mxu0
    %v3144 = vadd.f32 0.0, %v3143
    %3145 = vmatmul.f32.gmra.mxu0 %v3118
    %v3146 = vpop.f32.mrf.mxu0
    %v3147 = vadd.f32 0.0, %v3146
    %3148 = vdwg.mxu0
    %v3149 = vld [vmem:[%s7] sm:$0xff]
    %v3150 = vld [vmem:[%s2 + $0x20] sm:$0xff]
    %v3151 = vld [vmem:[%s2 + $0x28] sm:$0xff]
    %v3152 = vld [vmem:[%s2 + $0x30] sm:$0xff]
    %v3153 = vld [vmem:[%s2 + $0x38] sm:$0xff]
    %v3155 = vsel %vm3107, %v3150, 0
    %v3158 = vsel %vm3107, %v3151, 0
    %v3161 = vsel %vm3107, %v3152, 0
    %v3164 = vsel %vm3107, %v3153, 0
    %3166 = vmatpush.msra.mxu0 0.0
    %3167 = vmatpush.msra.mxu0 0.0
    %3168 = vmatpush.msra.mxu0 0.0
    %3169 = vmatpush.msra.mxu0 0.0
    %3170 = vmatpush.msra.mxu0 0.0
    %3171 = vmatpush.msra.mxu0 0.0
    %3172 = vmatpush.msra.mxu0 0.0
    %3173 = vmatpush.msra.mxu0 0.0
    %3174 = vmatpush.msra.mxu0 0.0
    %3175 = vmatpush.msra.mxu0 %v3102
    %3176 = vmatpush.msra.mxu0 %v3101
    %3177 = vmatpush.msra.mxu0 %v3100
    %3178 = vmatpush.msra.mxu0 %v3099
    %3179 = vmatpush.msra.mxu0 %v3098
    %3180 = vmatpush.msra.mxu0 %v3097
    %3181 = vmatpush.msra.mxu0 %v3096
    %3182 = vmatmul.f32.gmra.mxu0 %v3155
    %v3183 = vpop.f32.mrf.mxu0
    %v3184 = vadd.f32 0.0, %v3183
    %3185 = vmatmul.f32.gmra.mxu0 %v3158
    %v3186 = vpop.f32.mrf.mxu0
    %v3187 = vadd.f32 0.0, %v3186
    %3188 = vmatmul.f32.gmra.mxu0 %v3161
    %v3189 = vpop.f32.mrf.mxu0
    %v3190 = vadd.f32 0.0, %v3189
    %3191 = vmatmul.f32.gmra.mxu0 %v3164
    %v3192 = vpop.f32.mrf.mxu0
    %v3193 = vadd.f32 0.0, %v3192
    %3194 = vdwg.mxu0
    %s3195 = scalar_lea.vmem %s7, 8
    %v3196 = vld [vmem:[%s3195] sm:$0xff]
    %v3198 = vsel %vm1592, %v3184, 0
    %v3201 = vsel %vm1592, %v3187, 0
    %v3204 = vsel %vm1592, %v3190, 0
    %v3207 = vsel %vm1592, %v3193, 0
    %3209 = vmatpush.msra.mxu0 0.0
    %3210 = vmatpush.msra.mxu0 0.0
    %3211 = vmatpush.msra.mxu0 0.0
    %3212 = vmatpush.msra.mxu0 0.0
    %3213 = vmatpush.msra.mxu0 0.0
    %3214 = vmatpush.msra.mxu0 0.0
    %3215 = vmatpush.msra.mxu0 0.0
    %3216 = vmatpush.msra.mxu0 0.0
    %3217 = vmatpush.msra.mxu0 0.0
    %3218 = vmatpush.msra.mxu0 0.0
    %3219 = vmatpush.msra.mxu0 0.0
    %3220 = vmatpush.msra.mxu0 0.0
    %3221 = vmatpush.msra.mxu0 0.0
    %3222 = vmatpush.msra.mxu0 0.0
    %3223 = vmatpush.msra.mxu0 0.0
    %3224 = vmatpush.msra.mxu0 %v3196
    %3225 = vmatmul.f32.gmra.mxu0 %v3198
    %v3226 = vpop.f32.mrf.mxu0
    %v3227 = vadd.f32 0.0, %v3226
    %3228 = vmatmul.f32.gmra.mxu0 %v3201
    %v3229 = vpop.f32.mrf.mxu0
    %v3230 = vadd.f32 0.0, %v3229
    %3231 = vmatmul.f32.gmra.mxu0 %v3204
    %v3232 = vpop.f32.mrf.mxu0
    %v3233 = vadd.f32 0.0, %v3232
    %3234 = vmatmul.f32.gmra.mxu0 %v3207
    %v3235 = vpop.f32.mrf.mxu0
    %v3236 = vadd.f32 0.0, %v3235
    %3237 = vdwg.mxu0
    %v3239 = vsel %vm1592, %v3138, 0
    %v3242 = vsel %vm1592, %v3141, 0
    %v3245 = vsel %vm1592, %v3144, 0
    %v3248 = vsel %vm1592, %v3147, 0
    %3250 = vmatpush.msra.mxu0 0.0
    %3251 = vmatpush.msra.mxu0 0.0
    %3252 = vmatpush.msra.mxu0 0.0
    %3253 = vmatpush.msra.mxu0 0.0
    %3254 = vmatpush.msra.mxu0 0.0
    %3255 = vmatpush.msra.mxu0 0.0
    %3256 = vmatpush.msra.mxu0 0.0
    %3257 = vmatpush.msra.mxu0 0.0
    %3258 = vmatpush.msra.mxu0 0.0
    %3259 = vmatpush.msra.mxu0 0.0
    %3260 = vmatpush.msra.mxu0 0.0
    %3261 = vmatpush.msra.mxu0 0.0
    %3262 = vmatpush.msra.mxu0 0.0
    %3263 = vmatpush.msra.mxu0 0.0
    %3264 = vmatpush.msra.mxu0 0.0
    %3265 = vmatpush.msra.mxu0 %v3149
    %3266 = vmatmul.f32.gmra.mxu0 %v3239
    %v3267 = vpop.f32.mrf.mxu0
    %v3268 = vadd.f32 %v3227, %v3267
    %3269 = vmatmul.f32.gmra.mxu0 %v3242
    %v3270 = vpop.f32.mrf.mxu0
    %v3271 = vadd.f32 %v3230, %v3270
    %3272 = vmatmul.f32.gmra.mxu0 %v3245
    %v3273 = vpop.f32.mrf.mxu0
    %v3274 = vadd.f32 %v3233, %v3273
    %3275 = vmatmul.f32.gmra.mxu0 %v3248
    %v3276 = vpop.f32.mrf.mxu0
    %v3277 = vadd.f32 %v3236, %v3276
    %3278 = vdwg.mxu0
    %v3279 = vld [vmem:[%s2 + $0x40] sm:$0xff]
    %v3280 = vld [vmem:[%s2 + $0x48] sm:$0xff]
    %v3281 = vld [vmem:[%s2 + $0x50] sm:$0xff]
    %v3282 = vld [vmem:[%s2 + $0x58] sm:$0xff]
    %v3284 = vsel %vm3107, %v3279, 0
    %v3287 = vsel %vm3107, %v3280, 0
    %v3290 = vsel %vm3107, %v3281, 0
    %v3293 = vsel %vm3107, %v3282, 0
    %3295 = vmatpush.msra.mxu0 0.0
    %3296 = vmatpush.msra.mxu0 0.0
    %3297 = vmatpush.msra.mxu0 0.0
    %3298 = vmatpush.msra.mxu0 0.0
    %3299 = vmatpush.msra.mxu0 0.0
    %3300 = vmatpush.msra.mxu0 0.0
    %3301 = vmatpush.msra.mxu0 0.0
    %3302 = vmatpush.msra.mxu0 0.0
    %3303 = vmatpush.msra.mxu0 0.0
    %3304 = vmatpush.msra.mxu0 %v3102
    %3305 = vmatpush.msra.mxu0 %v3101
    %3306 = vmatpush.msra.mxu0 %v3100
    %3307 = vmatpush.msra.mxu0 %v3099
    %3308 = vmatpush.msra.mxu0 %v3098
    %3309 = vmatpush.msra.mxu0 %v3097
    %3310 = vmatpush.msra.mxu0 %v3096
    %3311 = vmatmul.f32.gmra.mxu0 %v3284
    %v3312 = vpop.f32.mrf.mxu0
    %v3313 = vadd.f32 0.0, %v3312
    %3314 = vmatmul.f32.gmra.mxu0 %v3287
    %v3315 = vpop.f32.mrf.mxu0
    %v3316 = vadd.f32 0.0, %v3315
    %3317 = vmatmul.f32.gmra.mxu0 %v3290
    %v3318 = vpop.f32.mrf.mxu0
    %v3319 = vadd.f32 0.0, %v3318
    %3320 = vmatmul.f32.gmra.mxu0 %v3293
    %v3321 = vpop.f32.mrf.mxu0
    %v3322 = vadd.f32 0.0, %v3321
    %3323 = vdwg.mxu0
    %s3324 = scalar_lea.vmem %s7, 16
    %v3325 = vld [vmem:[%s3324] sm:$0xff]
    %v3327 = vsel %vm1592, %v3313, 0
    %v3330 = vsel %vm1592, %v3316, 0
    %v3333 = vsel %vm1592, %v3319, 0
    %v3336 = vsel %vm1592, %v3322, 0
    %3338 = vmatpush.msra.mxu0 0.0
    %3339 = vmatpush.msra.mxu0 0.0
    %3340 = vmatpush.msra.mxu0 0.0
    %3341 = vmatpush.msra.mxu0 0.0
    %3342 = vmatpush.msra.mxu0 0.0
    %3343 = vmatpush.msra.mxu0 0.0
    %3344 = vmatpush.msra.mxu0 0.0
    %3345 = vmatpush.msra.mxu0 0.0
    %3346 = vmatpush.msra.mxu0 0.0
    %3347 = vmatpush.msra.mxu0 0.0
    %3348 = vmatpush.msra.mxu0 0.0
    %3349 = vmatpush.msra.mxu0 0.0
    %3350 = vmatpush.msra.mxu0 0.0
    %3351 = vmatpush.msra.mxu0 0.0
    %3352 = vmatpush.msra.mxu0 0.0
    %3353 = vmatpush.msra.mxu0 %v3325
    %3354 = vmatmul.f32.gmra.mxu0 %v3327
    %v3355 = vpop.f32.mrf.mxu0
    %v3356 = vadd.f32 0.0, %v3355
    %3357 = vmatmul.f32.gmra.mxu0 %v3330
    %v3358 = vpop.f32.mrf.mxu0
    %v3359 = vadd.f32 0.0, %v3358
    %3360 = vmatmul.f32.gmra.mxu0 %v3333
    %v3361 = vpop.f32.mrf.mxu0
    %v3362 = vadd.f32 0.0, %v3361
    %3363 = vmatmul.f32.gmra.mxu0 %v3336
    %v3364 = vpop.f32.mrf.mxu0
    %v3365 = vadd.f32 0.0, %v3364
    %3366 = vdwg.mxu0
    %v3367 = vadd.f32 %v3268, %v3356
    %v3368 = vadd.f32 %v3271, %v3359
    %v3369 = vadd.f32 %v3274, %v3362
    %v3370 = vadd.f32 %v3277, %v3365
    %v3371 = vld [vmem:[%s2 + $0x60] sm:$0xff]
    %v3372 = vld [vmem:[%s2 + $0x68] sm:$0xff]
    %v3373 = vld [vmem:[%s2 + $0x70] sm:$0xff]
    %v3374 = vld [vmem:[%s2 + $0x78] sm:$0xff]
    %v3376 = vsel %vm3107, %v3371, 0
    %v3379 = vsel %vm3107, %v3372, 0
    %v3382 = vsel %vm3107, %v3373, 0
    %v3385 = vsel %vm3107, %v3374, 0
    %3387 = vmatpush.msra.mxu0 0.0
    %3388 = vmatpush.msra.mxu0 0.0
    %3389 = vmatpush.msra.mxu0 0.0
    %3390 = vmatpush.msra.mxu0 0.0
    %3391 = vmatpush.msra.mxu0 0.0
    %3392 = vmatpush.msra.mxu0 0.0
    %3393 = vmatpush.msra.mxu0 0.0
    %3394 = vmatpush.msra.mxu0 0.0
    %3395 = vmatpush.msra.mxu0 0.0
    %3396 = vmatpush.msra.mxu0 %v3102
    %3397 = vmatpush.msra.mxu0 %v3101
    %3398 = vmatpush.msra.mxu0 %v3100
    %3399 = vmatpush.msra.mxu0 %v3099
    %3400 = vmatpush.msra.mxu0 %v3098
    %3401 = vmatpush.msra.mxu0 %v3097
    %3402 = vmatpush.msra.mxu0 %v3096
    %3403 = vmatmul.f32.gmra.mxu0 %v3376
    %v3404 = vpop.f32.mrf.mxu0
    %v3405 = vadd.f32 0.0, %v3404
    %3406 = vmatmul.f32.gmra.mxu0 %v3379
    %v3407 = vpop.f32.mrf.mxu0
    %v3408 = vadd.f32 0.0, %v3407
    %3409 = vmatmul.f32.gmra.mxu0 %v3382
    %v3410 = vpop.f32.mrf.mxu0
    %v3411 = vadd.f32 0.0, %v3410
    %3412 = vmatmul.f32.gmra.mxu0 %v3385
    %v3413 = vpop.f32.mrf.mxu0
    %v3414 = vadd.f32 0.0, %v3413
    %3415 = vdwg.mxu0
    %s3416 = scalar_lea.vmem %s7, 24
    %v3417 = vld [vmem:[%s3416] sm:$0xff]
    %v3419 = vsel %vm1592, %v3405, 0
    %v3422 = vsel %vm1592, %v3408, 0
    %v3425 = vsel %vm1592, %v3411, 0
    %v3428 = vsel %vm1592, %v3414, 0
    %3430 = vmatpush.msra.mxu0 0.0
    %3431 = vmatpush.msra.mxu0 0.0
    %3432 = vmatpush.msra.mxu0 0.0
    %3433 = vmatpush.msra.mxu0 0.0
    %3434 = vmatpush.msra.mxu0 0.0
    %3435 = vmatpush.msra.mxu0 0.0
    %3436 = vmatpush.msra.mxu0 0.0
    %3437 = vmatpush.msra.mxu0 0.0
    %3438 = vmatpush.msra.mxu0 0.0
    %3439 = vmatpush.msra.mxu0 0.0
    %3440 = vmatpush.msra.mxu0 0.0
    %3441 = vmatpush.msra.mxu0 0.0
    %3442 = vmatpush.msra.mxu0 0.0
    %3443 = vmatpush.msra.mxu0 0.0
    %3444 = vmatpush.msra.mxu0 0.0
    %3445 = vmatpush.msra.mxu0 %v3417
    %3446 = vmatmul.f32.gmra.mxu0 %v3419
    %v3447 = vpop.f32.mrf.mxu0
    %v3448 = vadd.f32 0.0, %v3447
    %3449 = vmatmul.f32.gmra.mxu0 %v3422
    %v3450 = vpop.f32.mrf.mxu0
    %v3451 = vadd.f32 0.0, %v3450
    %3452 = vmatmul.f32.gmra.mxu0 %v3425
    %v3453 = vpop.f32.mrf.mxu0
    %v3454 = vadd.f32 0.0, %v3453
    %3455 = vmatmul.f32.gmra.mxu0 %v3428
    %v3456 = vpop.f32.mrf.mxu0
    %v3457 = vadd.f32 0.0, %v3456
    %3458 = vdwg.mxu0
    %v3459 = vadd.f32 %v3367, %v3448
    %v3460 = vadd.f32 %v3368, %v3451
    %v3461 = vadd.f32 %v3369, %v3454
    %v3462 = vadd.f32 %v3370, %v3457
    %v3463 = vld [vmem:[%s2 + $0x80] sm:$0xff]
    %v3464 = vld [vmem:[%s2 + $0x88] sm:$0xff]
    %v3465 = vld [vmem:[%s2 + $0x90] sm:$0xff]
    %v3466 = vld [vmem:[%s2 + $0x98] sm:$0xff]
    %v3468 = vsel %vm3107, %v3463, 0
    %v3471 = vsel %vm3107, %v3464, 0
    %v3474 = vsel %vm3107, %v3465, 0
    %v3477 = vsel %vm3107, %v3466, 0
    %3479 = vmatpush.msra.mxu0 0.0
    %3480 = vmatpush.msra.mxu0 0.0
    %3481 = vmatpush.msra.mxu0 0.0
    %3482 = vmatpush.msra.mxu0 0.0
    %3483 = vmatpush.msra.mxu0 0.0
    %3484 = vmatpush.msra.mxu0 0.0
    %3485 = vmatpush.msra.mxu0 0.0
    %3486 = vmatpush.msra.mxu0 0.0
    %3487 = vmatpush.msra.mxu0 0.0
    %3488 = vmatpush.msra.mxu0 %v3102
    %3489 = vmatpush.msra.mxu0 %v3101
    %3490 = vmatpush.msra.mxu0 %v3100
    %3491 = vmatpush.msra.mxu0 %v3099
    %3492 = vmatpush.msra.mxu0 %v3098
    %3493 = vmatpush.msra.mxu0 %v3097
    %3494 = vmatpush.msra.mxu0 %v3096
    %3495 = vmatmul.f32.gmra.mxu0 %v3468
    %v3496 = vpop.f32.mrf.mxu0
    %v3497 = vadd.f32 0.0, %v3496
    %3498 = vmatmul.f32.gmra.mxu0 %v3471
    %v3499 = vpop.f32.mrf.mxu0
    %v3500 = vadd.f32 0.0, %v3499
    %3501 = vmatmul.f32.gmra.mxu0 %v3474
    %v3502 = vpop.f32.mrf.mxu0
    %v3503 = vadd.f32 0.0, %v3502
    %3504 = vmatmul.f32.gmra.mxu0 %v3477
    %v3505 = vpop.f32.mrf.mxu0
    %v3506 = vadd.f32 0.0, %v3505
    %3507 = vdwg.mxu0
    %s3508 = scalar_lea.vmem %s7, 32
    %v3509 = vld [vmem:[%s3508] sm:$0xff]
    %v3511 = vsel %vm1592, %v3497, 0
    %v3514 = vsel %vm1592, %v3500, 0
    %v3517 = vsel %vm1592, %v3503, 0
    %v3520 = vsel %vm1592, %v3506, 0
    %3522 = vmatpush.msra.mxu0 0.0
    %3523 = vmatpush.msra.mxu0 0.0
    %3524 = vmatpush.msra.mxu0 0.0
    %3525 = vmatpush.msra.mxu0 0.0
    %3526 = vmatpush.msra.mxu0 0.0
    %3527 = vmatpush.msra.mxu0 0.0
    %3528 = vmatpush.msra.mxu0 0.0
    %3529 = vmatpush.msra.mxu0 0.0
    %3530 = vmatpush.msra.mxu0 0.0
    %3531 = vmatpush.msra.mxu0 0.0
    %3532 = vmatpush.msra.mxu0 0.0
    %3533 = vmatpush.msra.mxu0 0.0
    %3534 = vmatpush.msra.mxu0 0.0
    %3535 = vmatpush.msra.mxu0 0.0
    %3536 = vmatpush.msra.mxu0 0.0
    %3537 = vmatpush.msra.mxu0 %v3509
    %3538 = vmatmul.f32.gmra.mxu0 %v3511
    %v3539 = vpop.f32.mrf.mxu0
    %v3540 = vadd.f32 0.0, %v3539
    %3541 = vmatmul.f32.gmra.mxu0 %v3514
    %v3542 = vpop.f32.mrf.mxu0
    %v3543 = vadd.f32 0.0, %v3542
    %3544 = vmatmul.f32.gmra.mxu0 %v3517
    %v3545 = vpop.f32.mrf.mxu0
    %v3546 = vadd.f32 0.0, %v3545
    %3547 = vmatmul.f32.gmra.mxu0 %v3520
    %v3548 = vpop.f32.mrf.mxu0
    %v3549 = vadd.f32 0.0, %v3548
    %3550 = vdwg.mxu0
    %v3551 = vadd.f32 %v3459, %v3540
    %v3552 = vadd.f32 %v3460, %v3543
    %v3553 = vadd.f32 %v3461, %v3546
    %v3554 = vadd.f32 %v3462, %v3549
    %v3555 = vld [vmem:[%s2 + $0xa0] sm:$0xff]
    %v3556 = vld [vmem:[%s2 + $0xa8] sm:$0xff]
    %v3557 = vld [vmem:[%s2 + $0xb0] sm:$0xff]
    %v3558 = vld [vmem:[%s2 + $0xb8] sm:$0xff]
    %v3560 = vsel %vm3107, %v3555, 0
    %v3563 = vsel %vm3107, %v3556, 0
    %v3566 = vsel %vm3107, %v3557, 0
    %v3569 = vsel %vm3107, %v3558, 0
    %3571 = vmatpush.msra.mxu0 0.0
    %3572 = vmatpush.msra.mxu0 0.0
    %3573 = vmatpush.msra.mxu0 0.0
    %3574 = vmatpush.msra.mxu0 0.0
    %3575 = vmatpush.msra.mxu0 0.0
    %3576 = vmatpush.msra.mxu0 0.0
    %3577 = vmatpush.msra.mxu0 0.0
    %3578 = vmatpush.msra.mxu0 0.0
    %3579 = vmatpush.msra.mxu0 0.0
    %3580 = vmatpush.msra.mxu0 %v3102
    %3581 = vmatpush.msra.mxu0 %v3101
    %3582 = vmatpush.msra.mxu0 %v3100
    %3583 = vmatpush.msra.mxu0 %v3099
    %3584 = vmatpush.msra.mxu0 %v3098
    %3585 = vmatpush.msra.mxu0 %v3097
    %3586 = vmatpush.msra.mxu0 %v3096
    %3587 = vmatmul.f32.gmra.mxu0 %v3560
    %v3588 = vpop.f32.mrf.mxu0
    %v3589 = vadd.f32 0.0, %v3588
    %3590 = vmatmul.f32.gmra.mxu0 %v3563
    %v3591 = vpop.f32.mrf.mxu0
    %v3592 = vadd.f32 0.0, %v3591
    %3593 = vmatmul.f32.gmra.mxu0 %v3566
    %v3594 = vpop.f32.mrf.mxu0
    %v3595 = vadd.f32 0.0, %v3594
    %3596 = vmatmul.f32.gmra.mxu0 %v3569
    %v3597 = vpop.f32.mrf.mxu0
    %v3598 = vadd.f32 0.0, %v3597
    %3599 = vdwg.mxu0
    %s3600 = scalar_lea.vmem %s7, 40
    %v3601 = vld [vmem:[%s3600] sm:$0xff]
    %v3603 = vsel %vm1592, %v3589, 0
    %v3606 = vsel %vm1592, %v3592, 0
    %v3609 = vsel %vm1592, %v3595, 0
    %v3612 = vsel %vm1592, %v3598, 0
    %3614 = vmatpush.msra.mxu0 0.0
    %3615 = vmatpush.msra.mxu0 0.0
    %3616 = vmatpush.msra.mxu0 0.0
    %3617 = vmatpush.msra.mxu0 0.0
    %3618 = vmatpush.msra.mxu0 0.0
    %3619 = vmatpush.msra.mxu0 0.0
    %3620 = vmatpush.msra.mxu0 0.0
    %3621 = vmatpush.msra.mxu0 0.0
    %3622 = vmatpush.msra.mxu0 0.0
    %3623 = vmatpush.msra.mxu0 0.0
    %3624 = vmatpush.msra.mxu0 0.0
    %3625 = vmatpush.msra.mxu0 0.0
    %3626 = vmatpush.msra.mxu0 0.0
    %3627 = vmatpush.msra.mxu0 0.0
    %3628 = vmatpush.msra.mxu0 0.0
    %3629 = vmatpush.msra.mxu0 %v3601
    %3630 = vmatmul.f32.gmra.mxu0 %v3603
    %v3631 = vpop.f32.mrf.mxu0
    %v3632 = vadd.f32 0.0, %v3631
    %3633 = vmatmul.f32.gmra.mxu0 %v3606
    %v3634 = vpop.f32.mrf.mxu0
    %v3635 = vadd.f32 0.0, %v3634
    %3636 = vmatmul.f32.gmra.mxu0 %v3609
    %v3637 = vpop.f32.mrf.mxu0
    %v3638 = vadd.f32 0.0, %v3637
    %3639 = vmatmul.f32.gmra.mxu0 %v3612
    %v3640 = vpop.f32.mrf.mxu0
    %v3641 = vadd.f32 0.0, %v3640
    %3642 = vdwg.mxu0
    %v3643 = vadd.f32 %v3551, %v3632
    %v3644 = vadd.f32 %v3552, %v3635
    %v3645 = vadd.f32 %v3553, %v3638
    %v3646 = vadd.f32 %v3554, %v3641
    %v3647 = vld [vmem:[%s2 + $0xc0] sm:$0xff]
    %v3648 = vld [vmem:[%s2 + $0xc8] sm:$0xff]
    %v3649 = vld [vmem:[%s2 + $0xd0] sm:$0xff]
    %v3650 = vld [vmem:[%s2 + $0xd8] sm:$0xff]
    %v3652 = vsel %vm3107, %v3647, 0
    %v3655 = vsel %vm3107, %v3648, 0
    %v3658 = vsel %vm3107, %v3649, 0
    %v3661 = vsel %vm3107, %v3650, 0
    %3663 = vmatpush.msra.mxu0 0.0
    %3664 = vmatpush.msra.mxu0 0.0
    %3665 = vmatpush.msra.mxu0 0.0
    %3666 = vmatpush.msra.mxu0 0.0
    %3667 = vmatpush.msra.mxu0 0.0
    %3668 = vmatpush.msra.mxu0 0.0
    %3669 = vmatpush.msra.mxu0 0.0
    %3670 = vmatpush.msra.mxu0 0.0
    %3671 = vmatpush.msra.mxu0 0.0
    %3672 = vmatpush.msra.mxu0 %v3102
    %3673 = vmatpush.msra.mxu0 %v3101
    %3674 = vmatpush.msra.mxu0 %v3100
    %3675 = vmatpush.msra.mxu0 %v3099
    %3676 = vmatpush.msra.mxu0 %v3098
    %3677 = vmatpush.msra.mxu0 %v3097
    %3678 = vmatpush.msra.mxu0 %v3096
    %3679 = vmatmul.f32.gmra.mxu0 %v3652
    %v3680 = vpop.f32.mrf.mxu0
    %v3681 = vadd.f32 0.0, %v3680
    %3682 = vmatmul.f32.gmra.mxu0 %v3655
    %v3683 = vpop.f32.mrf.mxu0
    %v3684 = vadd.f32 0.0, %v3683
    %3685 = vmatmul.f32.gmra.mxu0 %v3658
    %v3686 = vpop.f32.mrf.mxu0
    %v3687 = vadd.f32 0.0, %v3686
    %3688 = vmatmul.f32.gmra.mxu0 %v3661
    %v3689 = vpop.f32.mrf.mxu0
    %v3690 = vadd.f32 0.0, %v3689
    %3691 = vdwg.mxu0
    %s3692 = scalar_lea.vmem %s7, 48
    %v3693 = vld [vmem:[%s3692] sm:$0xff]
    %v3695 = vsel %vm1592, %v3681, 0
    %v3698 = vsel %vm1592, %v3684, 0
    %v3701 = vsel %vm1592, %v3687, 0
    %v3704 = vsel %vm1592, %v3690, 0
    %3706 = vmatpush.msra.mxu0 0.0
    %3707 = vmatpush.msra.mxu0 0.0
    %3708 = vmatpush.msra.mxu0 0.0
    %3709 = vmatpush.msra.mxu0 0.0
    %3710 = vmatpush.msra.mxu0 0.0
    %3711 = vmatpush.msra.mxu0 0.0
    %3712 = vmatpush.msra.mxu0 0.0
    %3713 = vmatpush.msra.mxu0 0.0
    %3714 = vmatpush.msra.mxu0 0.0
    %3715 = vmatpush.msra.mxu0 0.0
    %3716 = vmatpush.msra.mxu0 0.0
    %3717 = vmatpush.msra.mxu0 0.0
    %3718 = vmatpush.msra.mxu0 0.0
    %3719 = vmatpush.msra.mxu0 0.0
    %3720 = vmatpush.msra.mxu0 0.0
    %3721 = vmatpush.msra.mxu0 %v3693
    %3722 = vmatmul.f32.gmra.mxu0 %v3695
    %v3723 = vpop.f32.mrf.mxu0
    %v3724 = vadd.f32 0.0, %v3723
    %3725 = vmatmul.f32.gmra.mxu0 %v3698
    %v3726 = vpop.f32.mrf.mxu0
    %v3727 = vadd.f32 0.0, %v3726
    %3728 = vmatmul.f32.gmra.mxu0 %v3701
    %v3729 = vpop.f32.mrf.mxu0
    %v3730 = vadd.f32 0.0, %v3729
    %3731 = vmatmul.f32.gmra.mxu0 %v3704
    %v3732 = vpop.f32.mrf.mxu0
    %v3733 = vadd.f32 0.0, %v3732
    %3734 = vdwg.mxu0
    %v3735 = vadd.f32 %v3643, %v3724
    %v3736 = vadd.f32 %v3644, %v3727
    %v3737 = vadd.f32 %v3645, %v3730
    %v3738 = vadd.f32 %v3646, %v3733
    %v3739 = vld [vmem:[%s2 + $0xe0] sm:$0xff]
    %v3740 = vld [vmem:[%s2 + $0xe8] sm:$0xff]
    %v3741 = vld [vmem:[%s2 + $0xf0] sm:$0xff]
    %v3742 = vld [vmem:[%s2 + $0xf8] sm:$0xff]
    %v3744 = vsel %vm3107, %v3739, 0
    %v3747 = vsel %vm3107, %v3740, 0
    %v3750 = vsel %vm3107, %v3741, 0
    %v3753 = vsel %vm3107, %v3742, 0
    %3755 = vmatpush.msra.mxu0 0.0
    %3756 = vmatpush.msra.mxu0 0.0
    %3757 = vmatpush.msra.mxu0 0.0
    %3758 = vmatpush.msra.mxu0 0.0
    %3759 = vmatpush.msra.mxu0 0.0
    %3760 = vmatpush.msra.mxu0 0.0
    %3761 = vmatpush.msra.mxu0 0.0
    %3762 = vmatpush.msra.mxu0 0.0
    %3763 = vmatpush.msra.mxu0 0.0
    %3764 = vmatpush.msra.mxu0 %v3102
    %3765 = vmatpush.msra.mxu0 %v3101
    %3766 = vmatpush.msra.mxu0 %v3100
    %3767 = vmatpush.msra.mxu0 %v3099
    %3768 = vmatpush.msra.mxu0 %v3098
    %3769 = vmatpush.msra.mxu0 %v3097
    %3770 = vmatpush.msra.mxu0 %v3096
    %3771 = vmatmul.f32.gmra.mxu0 %v3744
    %v3772 = vpop.f32.mrf.mxu0
    %v3773 = vadd.f32 0.0, %v3772
    %3774 = vmatmul.f32.gmra.mxu0 %v3747
    %v3775 = vpop.f32.mrf.mxu0
    %v3776 = vadd.f32 0.0, %v3775
    %3777 = vmatmul.f32.gmra.mxu0 %v3750
    %v3778 = vpop.f32.mrf.mxu0
    %v3779 = vadd.f32 0.0, %v3778
    %3780 = vmatmul.f32.gmra.mxu0 %v3753
    %v3781 = vpop.f32.mrf.mxu0
    %v3782 = vadd.f32 0.0, %v3781
    %3783 = vdwg.mxu0
    %s3784 = scalar_lea.vmem %s7, 56
    %v3785 = vld [vmem:[%s3784] sm:$0xff]
    %v3787 = vsel %vm1592, %v3773, 0
    %v3790 = vsel %vm1592, %v3776, 0
    %v3793 = vsel %vm1592, %v3779, 0
    %v3796 = vsel %vm1592, %v3782, 0
    %3798 = vmatpush.msra.mxu0 0.0
    %3799 = vmatpush.msra.mxu0 0.0
    %3800 = vmatpush.msra.mxu0 0.0
    %3801 = vmatpush.msra.mxu0 0.0
    %3802 = vmatpush.msra.mxu0 0.0
    %3803 = vmatpush.msra.mxu0 0.0
    %3804 = vmatpush.msra.mxu0 0.0
    %3805 = vmatpush.msra.mxu0 0.0
    %3806 = vmatpush.msra.mxu0 0.0
    %3807 = vmatpush.msra.mxu0 0.0
    %3808 = vmatpush.msra.mxu0 0.0
    %3809 = vmatpush.msra.mxu0 0.0
    %3810 = vmatpush.msra.mxu0 0.0
    %3811 = vmatpush.msra.mxu0 0.0
    %3812 = vmatpush.msra.mxu0 0.0
    %3813 = vmatpush.msra.mxu0 %v3785
    %3814 = vmatmul.f32.gmra.mxu0 %v3787
    %v3815 = vpop.f32.mrf.mxu0
    %v3816 = vadd.f32 0.0, %v3815
    %3817 = vmatmul.f32.gmra.mxu0 %v3790
    %v3818 = vpop.f32.mrf.mxu0
    %v3819 = vadd.f32 0.0, %v3818
    %3820 = vmatmul.f32.gmra.mxu0 %v3793
    %v3821 = vpop.f32.mrf.mxu0
    %v3822 = vadd.f32 0.0, %v3821
    %3823 = vmatmul.f32.gmra.mxu0 %v3796
    %v3824 = vpop.f32.mrf.mxu0
    %v3825 = vadd.f32 0.0, %v3824
    %3826 = vdwg.mxu0
    %v3827 = vadd.f32 %v3735, %v3816
    %v3828 = vadd.f32 %v3736, %v3819
    %v3829 = vadd.f32 %v3737, %v3822
    %v3830 = vadd.f32 %v3738, %v3825
    %v3831 = vld [vmem:[%s2 + $0x100] sm:$0xff]
    %v3832 = vld [vmem:[%s2 + $0x108] sm:$0xff]
    %v3833 = vld [vmem:[%s2 + $0x110] sm:$0xff]
    %v3834 = vld [vmem:[%s2 + $0x118] sm:$0xff]
    %v3836 = vsel %vm3107, %v3831, 0
    %v3839 = vsel %vm3107, %v3832, 0
    %v3842 = vsel %vm3107, %v3833, 0
    %v3845 = vsel %vm3107, %v3834, 0
    %3847 = vmatpush.msra.mxu0 0.0
    %3848 = vmatpush.msra.mxu0 0.0
    %3849 = vmatpush.msra.mxu0 0.0
    %3850 = vmatpush.msra.mxu0 0.0
    %3851 = vmatpush.msra.mxu0 0.0
    %3852 = vmatpush.msra.mxu0 0.0
    %3853 = vmatpush.msra.mxu0 0.0
    %3854 = vmatpush.msra.mxu0 0.0
    %3855 = vmatpush.msra.mxu0 0.0
    %3856 = vmatpush.msra.mxu0 %v3102
    %3857 = vmatpush.msra.mxu0 %v3101
    %3858 = vmatpush.msra.mxu0 %v3100
    %3859 = vmatpush.msra.mxu0 %v3099
    %3860 = vmatpush.msra.mxu0 %v3098
    %3861 = vmatpush.msra.mxu0 %v3097
    %3862 = vmatpush.msra.mxu0 %v3096
    %3863 = vmatmul.f32.gmra.mxu0 %v3836
    %v3864 = vpop.f32.mrf.mxu0
    %v3865 = vadd.f32 0.0, %v3864
    %3866 = vmatmul.f32.gmra.mxu0 %v3839
    %v3867 = vpop.f32.mrf.mxu0
    %v3868 = vadd.f32 0.0, %v3867
    %3869 = vmatmul.f32.gmra.mxu0 %v3842
    %v3870 = vpop.f32.mrf.mxu0
    %v3871 = vadd.f32 0.0, %v3870
    %3872 = vmatmul.f32.gmra.mxu0 %v3845
    %v3873 = vpop.f32.mrf.mxu0
    %v3874 = vadd.f32 0.0, %v3873
    %3875 = vdwg.mxu0
    %s3876 = scalar_lea.vmem %s7, 64
    %v3877 = vld [vmem:[%s3876] sm:$0xff]
    %v3879 = vsel %vm1592, %v3865, 0
    %v3882 = vsel %vm1592, %v3868, 0
    %v3885 = vsel %vm1592, %v3871, 0
    %v3888 = vsel %vm1592, %v3874, 0
    %3890 = vmatpush.msra.mxu0 0.0
    %3891 = vmatpush.msra.mxu0 0.0
    %3892 = vmatpush.msra.mxu0 0.0
    %3893 = vmatpush.msra.mxu0 0.0
    %3894 = vmatpush.msra.mxu0 0.0
    %3895 = vmatpush.msra.mxu0 0.0
    %3896 = vmatpush.msra.mxu0 0.0
    %3897 = vmatpush.msra.mxu0 0.0
    %3898 = vmatpush.msra.mxu0 0.0
    %3899 = vmatpush.msra.mxu0 0.0
    %3900 = vmatpush.msra.mxu0 0.0
    %3901 = vmatpush.msra.mxu0 0.0
    %3902 = vmatpush.msra.mxu0 0.0
    %3903 = vmatpush.msra.mxu0 0.0
    %3904 = vmatpush.msra.mxu0 0.0
    %3905 = vmatpush.msra.mxu0 %v3877
    %3906 = vmatmul.f32.gmra.mxu0 %v3879
    %v3907 = vpop.f32.mrf.mxu0
    %v3908 = vadd.f32 0.0, %v3907
    %3909 = vmatmul.f32.gmra.mxu0 %v3882
    %v3910 = vpop.f32.mrf.mxu0
    %v3911 = vadd.f32 0.0, %v3910
    %3912 = vmatmul.f32.gmra.mxu0 %v3885
    %v3913 = vpop.f32.mrf.mxu0
    %v3914 = vadd.f32 0.0, %v3913
    %3915 = vmatmul.f32.gmra.mxu0 %v3888
    %v3916 = vpop.f32.mrf.mxu0
    %v3917 = vadd.f32 0.0, %v3916
    %3918 = vdwg.mxu0
    %v3919 = vadd.f32 %v3827, %v3908
    %v3920 = vadd.f32 %v3828, %v3911
    %v3921 = vadd.f32 %v3829, %v3914
    %v3922 = vadd.f32 %v3830, %v3917
    %v3924 = vperm.slane %v3095, 0
    %v3926 = vadd.f32 %v3919, %v3924
    %v3927 = vadd.f32 %v3920, %v3924
    %v3928 = vadd.f32 %v3921, %v3924
    %v3929 = vadd.f32 %v3922, %v3924
    %v3930 = vmax.f32 %v3926, 0.0
    %v3931 = vmax.f32 %v3927, 0.0
    %v3932 = vmax.f32 %v3928, 0.0
    %v3933 = vmax.f32 %v3929, 0.0
    %3934 = vst.msk [vmem:[#allocation3] sm:$0xff] %vm1592, %v3930
    %3935 = vst.msk [vmem:[#allocation3 + $0x8] sm:$0xff] %vm1592, %v3931
    %3936 = vst.msk [vmem:[#allocation3 + $0x10] sm:$0xff] %vm1592, %v3932
    %3937 = vst.msk [vmem:[#allocation3 + $0x18] sm:$0xff] %vm1592, %v3933
    %v3938 = vld [vmem:[#allocation2 + $0x38] sm:$0xff]
    %v3939 = vld [vmem:[#allocation2 + $0x40] sm:$0xff]
    %v3940 = vld [vmem:[#allocation2 + $0x48] sm:$0xff]
    %v3941 = vld [vmem:[#allocation2 + $0x50] sm:$0xff]
    %v3942 = vld [vmem:[#allocation2 + $0x58] sm:$0xff]
    %v3943 = vld [vmem:[#allocation2 + $0x60] sm:$0xff]
    %v3944 = vld [vmem:[#allocation2 + $0x68] sm:$0xff]
    %v3945 = vld [vmem:[%s2] sm:$0xff]
    %v3946 = vld [vmem:[%s2 + $0x8] sm:$0xff]
    %v3947 = vld [vmem:[%s2 + $0x10] sm:$0xff]
    %v3948 = vld [vmem:[%s2 + $0x18] sm:$0xff]
    %v3950 = vsel %vm3107, %v3945, 0
    %v3953 = vsel %vm3107, %v3946, 0
    %v3956 = vsel %vm3107, %v3947, 0
    %v3959 = vsel %vm3107, %v3948, 0
    %3961 = vmatpush.msra.mxu0 0.0
    %3962 = vmatpush.msra.mxu0 0.0
    %3963 = vmatpush.msra.mxu0 0.0
    %3964 = vmatpush.msra.mxu0 0.0
    %3965 = vmatpush.msra.mxu0 0.0
    %3966 = vmatpush.msra.mxu0 0.0
    %3967 = vmatpush.msra.mxu0 0.0
    %3968 = vmatpush.msra.mxu0 0.0
    %3969 = vmatpush.msra.mxu0 0.0
    %3970 = vmatpush.msra.mxu0 %v3944
    %3971 = vmatpush.msra.mxu0 %v3943
    %3972 = vmatpush.msra.mxu0 %v3942
    %3973 = vmatpush.msra.mxu0 %v3941
    %3974 = vmatpush.msra.mxu0 %v3940
    %3975 = vmatpush.msra.mxu0 %v3939
    %3976 = vmatpush.msra.mxu0 %v3938
    %3977 = vmatmul.f32.gmra.mxu0 %v3950
    %v3978 = vpop.f32.mrf.mxu0
    %v3979 = vadd.f32 0.0, %v3978
    %3980 = vmatmul.f32.gmra.mxu0 %v3953
    %v3981 = vpop.f32.mrf.mxu0
    %v3982 = vadd.f32 0.0, %v3981
    %3983 = vmatmul.f32.gmra.mxu0 %v3956
    %v3984 = vpop.f32.mrf.mxu0
    %v3985 = vadd.f32 0.0, %v3984
    %3986 = vmatmul.f32.gmra.mxu0 %v3959
    %v3987 = vpop.f32.mrf.mxu0
    %v3988 = vadd.f32 0.0, %v3987
    %3989 = vdwg.mxu0
    %v3990 = vld [vmem:[%s7] sm:$0xff]
    %v3991 = vld [vmem:[%s2 + $0x20] sm:$0xff]
    %v3992 = vld [vmem:[%s2 + $0x28] sm:$0xff]
    %v3993 = vld [vmem:[%s2 + $0x30] sm:$0xff]
    %v3994 = vld [vmem:[%s2 + $0x38] sm:$0xff]
    %v3996 = vsel %vm3107, %v3991, 0
    %v3999 = vsel %vm3107, %v3992, 0
    %v4002 = vsel %vm3107, %v3993, 0
    %v4005 = vsel %vm3107, %v3994, 0
    %4007 = vmatpush.msra.mxu0 0.0
    %4008 = vmatpush.msra.mxu0 0.0
    %4009 = vmatpush.msra.mxu0 0.0
    %4010 = vmatpush.msra.mxu0 0.0
    %4011 = vmatpush.msra.mxu0 0.0
    %4012 = vmatpush.msra.mxu0 0.0
    %4013 = vmatpush.msra.mxu0 0.0
    %4014 = vmatpush.msra.mxu0 0.0
    %4015 = vmatpush.msra.mxu0 0.0
    %4016 = vmatpush.msra.mxu0 %v3944
    %4017 = vmatpush.msra.mxu0 %v3943
    %4018 = vmatpush.msra.mxu0 %v3942
    %4019 = vmatpush.msra.mxu0 %v3941
    %4020 = vmatpush.msra.mxu0 %v3940
    %4021 = vmatpush.msra.mxu0 %v3939
    %4022 = vmatpush.msra.mxu0 %v3938
    %4023 = vmatmul.f32.gmra.mxu0 %v3996
    %v4024 = vpop.f32.mrf.mxu0
    %v4025 = vadd.f32 0.0, %v4024
    %4026 = vmatmul.f32.gmra.mxu0 %v3999
    %v4027 = vpop.f32.mrf.mxu0
    %v4028 = vadd.f32 0.0, %v4027
    %4029 = vmatmul.f32.gmra.mxu0 %v4002
    %v4030 = vpop.f32.mrf.mxu0
    %v4031 = vadd.f32 0.0, %v4030
    %4032 = vmatmul.f32.gmra.mxu0 %v4005
    %v4033 = vpop.f32.mrf.mxu0
    %v4034 = vadd.f32 0.0, %v4033
    %4035 = vdwg.mxu0
    %v4036 = vld [vmem:[%s3195] sm:$0xff]
    %v4038 = vsel %vm1592, %v4025, 0
    %v4041 = vsel %vm1592, %v4028, 0
    %v4044 = vsel %vm1592, %v4031, 0
    %v4047 = vsel %vm1592, %v4034, 0
    %4049 = vmatpush.msra.mxu0 0.0
    %4050 = vmatpush.msra.mxu0 0.0
    %4051 = vmatpush.msra.mxu0 0.0
    %4052 = vmatpush.msra.mxu0 0.0
    %4053 = vmatpush.msra.mxu0 0.0
    %4054 = vmatpush.msra.mxu0 0.0
    %4055 = vmatpush.msra.mxu0 0.0
    %4056 = vmatpush.msra.mxu0 0.0
    %4057 = vmatpush.msra.mxu0 0.0
    %4058 = vmatpush.msra.mxu0 0.0
    %4059 = vmatpush.msra.mxu0 0.0
    %4060 = vmatpush.msra.mxu0 0.0
    %4061 = vmatpush.msra.mxu0 0.0
    %4062 = vmatpush.msra.mxu0 0.0
    %4063 = vmatpush.msra.mxu0 0.0
    %4064 = vmatpush.msra.mxu0 %v4036
    %4065 = vmatmul.f32.gmra.mxu0 %v4038
    %v4066 = vpop.f32.mrf.mxu0
    %v4067 = vadd.f32 0.0, %v4066
    %4068 = vmatmul.f32.gmra.mxu0 %v4041
    %v4069 = vpop.f32.mrf.mxu0
    %v4070 = vadd.f32 0.0, %v4069
    %4071 = vmatmul.f32.gmra.mxu0 %v4044
    %v4072 = vpop.f32.mrf.mxu0
    %v4073 = vadd.f32 0.0, %v4072
    %4074 = vmatmul.f32.gmra.mxu0 %v4047
    %v4075 = vpop.f32.mrf.mxu0
    %v4076 = vadd.f32 0.0, %v4075
    %4077 = vdwg.mxu0
    %v4079 = vsel %vm1592, %v3979, 0
    %v4082 = vsel %vm1592, %v3982, 0
    %v4085 = vsel %vm1592, %v3985, 0
    %v4088 = vsel %vm1592, %v3988, 0
    %4090 = vmatpush.msra.mxu0 0.0
    %4091 = vmatpush.msra.mxu0 0.0
    %4092 = vmatpush.msra.mxu0 0.0
    %4093 = vmatpush.msra.mxu0 0.0
    %4094 = vmatpush.msra.mxu0 0.0
    %4095 = vmatpush.msra.mxu0 0.0
    %4096 = vmatpush.msra.mxu0 0.0
    %4097 = vmatpush.msra.mxu0 0.0
    %4098 = vmatpush.msra.mxu0 0.0
    %4099 = vmatpush.msra.mxu0 0.0
    %4100 = vmatpush.msra.mxu0 0.0
    %4101 = vmatpush.msra.mxu0 0.0
    %4102 = vmatpush.msra.mxu0 0.0
    %4103 = vmatpush.msra.mxu0 0.0
    %4104 = vmatpush.msra.mxu0 0.0
    %4105 = vmatpush.msra.mxu0 %v3990
    %4106 = vmatmul.f32.gmra.mxu0 %v4079
    %v4107 = vpop.f32.mrf.mxu0
    %v4108 = vadd.f32 %v4067, %v4107
    %4109 = vmatmul.f32.gmra.mxu0 %v4082
    %v4110 = vpop.f32.mrf.mxu0
    %v4111 = vadd.f32 %v4070, %v4110
    %4112 = vmatmul.f32.gmra.mxu0 %v4085
    %v4113 = vpop.f32.mrf.mxu0
    %v4114 = vadd.f32 %v4073, %v4113
    %4115 = vmatmul.f32.gmra.mxu0 %v4088
    %v4116 = vpop.f32.mrf.mxu0
    %v4117 = vadd.f32 %v4076, %v4116
    %4118 = vdwg.mxu0
    %v4119 = vld [vmem:[%s2 + $0x40] sm:$0xff]
    %v4120 = vld [vmem:[%s2 + $0x48] sm:$0xff]
    %v4121 = vld [vmem:[%s2 + $0x50] sm:$0xff]
    %v4122 = vld [vmem:[%s2 + $0x58] sm:$0xff]
    %v4124 = vsel %vm3107, %v4119, 0
    %v4127 = vsel %vm3107, %v4120, 0
    %v4130 = vsel %vm3107, %v4121, 0
    %v4133 = vsel %vm3107, %v4122, 0
    %4135 = vmatpush.msra.mxu0 0.0
    %4136 = vmatpush.msra.mxu0 0.0
    %4137 = vmatpush.msra.mxu0 0.0
    %4138 = vmatpush.msra.mxu0 0.0
    %4139 = vmatpush.msra.mxu0 0.0
    %4140 = vmatpush.msra.mxu0 0.0
    %4141 = vmatpush.msra.mxu0 0.0
    %4142 = vmatpush.msra.mxu0 0.0
    %4143 = vmatpush.msra.mxu0 0.0
    %4144 = vmatpush.msra.mxu0 %v3944
    %4145 = vmatpush.msra.mxu0 %v3943
    %4146 = vmatpush.msra.mxu0 %v3942
    %4147 = vmatpush.msra.mxu0 %v3941
    %4148 = vmatpush.msra.mxu0 %v3940
    %4149 = vmatpush.msra.mxu0 %v3939
    %4150 = vmatpush.msra.mxu0 %v3938
    %4151 = vmatmul.f32.gmra.mxu0 %v4124
    %v4152 = vpop.f32.mrf.mxu0
    %v4153 = vadd.f32 0.0, %v4152
    %4154 = vmatmul.f32.gmra.mxu0 %v4127
    %v4155 = vpop.f32.mrf.mxu0
    %v4156 = vadd.f32 0.0, %v4155
    %4157 = vmatmul.f32.gmra.mxu0 %v4130
    %v4158 = vpop.f32.mrf.mxu0
    %v4159 = vadd.f32 0.0, %v4158
    %4160 = vmatmul.f32.gmra.mxu0 %v4133
    %v4161 = vpop.f32.mrf.mxu0
    %v4162 = vadd.f32 0.0, %v4161
    %4163 = vdwg.mxu0
    %v4164 = vld [vmem:[%s3324] sm:$0xff]
    %v4166 = vsel %vm1592, %v4153, 0
    %v4169 = vsel %vm1592, %v4156, 0
    %v4172 = vsel %vm1592, %v4159, 0
    %v4175 = vsel %vm1592, %v4162, 0
    %4177 = vmatpush.msra.mxu0 0.0
    %4178 = vmatpush.msra.mxu0 0.0
    %4179 = vmatpush.msra.mxu0 0.0
    %4180 = vmatpush.msra.mxu0 0.0
    %4181 = vmatpush.msra.mxu0 0.0
    %4182 = vmatpush.msra.mxu0 0.0
    %4183 = vmatpush.msra.mxu0 0.0
    %4184 = vmatpush.msra.mxu0 0.0
    %4185 = vmatpush.msra.mxu0 0.0
    %4186 = vmatpush.msra.mxu0 0.0
    %4187 = vmatpush.msra.mxu0 0.0
    %4188 = vmatpush.msra.mxu0 0.0
    %4189 = vmatpush.msra.mxu0 0.0
    %4190 = vmatpush.msra.mxu0 0.0
    %4191 = vmatpush.msra.mxu0 0.0
    %4192 = vmatpush.msra.mxu0 %v4164
    %4193 = vmatmul.f32.gmra.mxu0 %v4166
    %v4194 = vpop.f32.mrf.mxu0
    %v4195 = vadd.f32 0.0, %v4194
    %4196 = vmatmul.f32.gmra.mxu0 %v4169
    %v4197 = vpop.f32.mrf.mxu0
    %v4198 = vadd.f32 0.0, %v4197
    %4199 = vmatmul.f32.gmra.mxu0 %v4172
    %v4200 = vpop.f32.mrf.mxu0
    %v4201 = vadd.f32 0.0, %v4200
    %4202 = vmatmul.f32.gmra.mxu0 %v4175
    %v4203 = vpop.f32.mrf.mxu0
    %v4204 = vadd.f32 0.0, %v4203
    %4205 = vdwg.mxu0
    %v4206 = vadd.f32 %v4108, %v4195
    %v4207 = vadd.f32 %v4111, %v4198
    %v4208 = vadd.f32 %v4114, %v4201
    %v4209 = vadd.f32 %v4117, %v4204
    %v4210 = vld [vmem:[%s2 + $0x60] sm:$0xff]
    %v4211 = vld [vmem:[%s2 + $0x68] sm:$0xff]
    %v4212 = vld [vmem:[%s2 + $0x70] sm:$0xff]
    %v4213 = vld [vmem:[%s2 + $0x78] sm:$0xff]
    %v4215 = vsel %vm3107, %v4210, 0
    %v4218 = vsel %vm3107, %v4211, 0
    %v4221 = vsel %vm3107, %v4212, 0
    %v4224 = vsel %vm3107, %v4213, 0
    %4226 = vmatpush.msra.mxu0 0.0
    %4227 = vmatpush.msra.mxu0 0.0
    %4228 = vmatpush.msra.mxu0 0.0
    %4229 = vmatpush.msra.mxu0 0.0
    %4230 = vmatpush.msra.mxu0 0.0
    %4231 = vmatpush.msra.mxu0 0.0
    %4232 = vmatpush.msra.mxu0 0.0
    %4233 = vmatpush.msra.mxu0 0.0
    %4234 = vmatpush.msra.mxu0 0.0
    %4235 = vmatpush.msra.mxu0 %v3944
    %4236 = vmatpush.msra.mxu0 %v3943
    %4237 = vmatpush.msra.mxu0 %v3942
    %4238 = vmatpush.msra.mxu0 %v3941
    %4239 = vmatpush.msra.mxu0 %v3940
    %4240 = vmatpush.msra.mxu0 %v3939
    %4241 = vmatpush.msra.mxu0 %v3938
    %4242 = vmatmul.f32.gmra.mxu0 %v4215
    %v4243 = vpop.f32.mrf.mxu0
    %v4244 = vadd.f32 0.0, %v4243
    %4245 = vmatmul.f32.gmra.mxu0 %v4218
    %v4246 = vpop.f32.mrf.mxu0
    %v4247 = vadd.f32 0.0, %v4246
    %4248 = vmatmul.f32.gmra.mxu0 %v4221
    %v4249 = vpop.f32.mrf.mxu0
    %v4250 = vadd.f32 0.0, %v4249
    %4251 = vmatmul.f32.gmra.mxu0 %v4224
    %v4252 = vpop.f32.mrf.mxu0
    %v4253 = vadd.f32 0.0, %v4252
    %4254 = vdwg.mxu0
    %v4255 = vld [vmem:[%s3416] sm:$0xff]
    %v4257 = vsel %vm1592, %v4244, 0
    %v4260 = vsel %vm1592, %v4247, 0
    %v4263 = vsel %vm1592, %v4250, 0
    %v4266 = vsel %vm1592, %v4253, 0
    %4268 = vmatpush.msra.mxu0 0.0
    %4269 = vmatpush.msra.mxu0 0.0
    %4270 = vmatpush.msra.mxu0 0.0
    %4271 = vmatpush.msra.mxu0 0.0
    %4272 = vmatpush.msra.mxu0 0.0
    %4273 = vmatpush.msra.mxu0 0.0
    %4274 = vmatpush.msra.mxu0 0.0
    %4275 = vmatpush.msra.mxu0 0.0
    %4276 = vmatpush.msra.mxu0 0.0
    %4277 = vmatpush.msra.mxu0 0.0
    %4278 = vmatpush.msra.mxu0 0.0
    %4279 = vmatpush.msra.mxu0 0.0
    %4280 = vmatpush.msra.mxu0 0.0
    %4281 = vmatpush.msra.mxu0 0.0
    %4282 = vmatpush.msra.mxu0 0.0
    %4283 = vmatpush.msra.mxu0 %v4255
    %4284 = vmatmul.f32.gmra.mxu0 %v4257
    %v4285 = vpop.f32.mrf.mxu0
    %v4286 = vadd.f32 0.0, %v4285
    %4287 = vmatmul.f32.gmra.mxu0 %v4260
    %v4288 = vpop.f32.mrf.mxu0
    %v4289 = vadd.f32 0.0, %v4288
    %4290 = vmatmul.f32.gmra.mxu0 %v4263
    %v4291 = vpop.f32.mrf.mxu0
    %v4292 = vadd.f32 0.0, %v4291
    %4293 = vmatmul.f32.gmra.mxu0 %v4266
    %v4294 = vpop.f32.mrf.mxu0
    %v4295 = vadd.f32 0.0, %v4294
    %4296 = vdwg.mxu0
    %v4297 = vadd.f32 %v4206, %v4286
    %v4298 = vadd.f32 %v4207, %v4289
    %v4299 = vadd.f32 %v4208, %v4292
    %v4300 = vadd.f32 %v4209, %v4295
    %v4301 = vld [vmem:[%s2 + $0x80] sm:$0xff]
    %v4302 = vld [vmem:[%s2 + $0x88] sm:$0xff]
    %v4303 = vld [vmem:[%s2 + $0x90] sm:$0xff]
    %v4304 = vld [vmem:[%s2 + $0x98] sm:$0xff]
    %v4306 = vsel %vm3107, %v4301, 0
    %v4309 = vsel %vm3107, %v4302, 0
    %v4312 = vsel %vm3107, %v4303, 0
    %v4315 = vsel %vm3107, %v4304, 0
    %4317 = vmatpush.msra.mxu0 0.0
    %4318 = vmatpush.msra.mxu0 0.0
    %4319 = vmatpush.msra.mxu0 0.0
    %4320 = vmatpush.msra.mxu0 0.0
    %4321 = vmatpush.msra.mxu0 0.0
    %4322 = vmatpush.msra.mxu0 0.0
    %4323 = vmatpush.msra.mxu0 0.0
    %4324 = vmatpush.msra.mxu0 0.0
    %4325 = vmatpush.msra.mxu0 0.0
    %4326 = vmatpush.msra.mxu0 %v3944
    %4327 = vmatpush.msra.mxu0 %v3943
    %4328 = vmatpush.msra.mxu0 %v3942
    %4329 = vmatpush.msra.mxu0 %v3941
    %4330 = vmatpush.msra.mxu0 %v3940
    %4331 = vmatpush.msra.mxu0 %v3939
    %4332 = vmatpush.msra.mxu0 %v3938
    %4333 = vmatmul.f32.gmra.mxu0 %v4306
    %v4334 = vpop.f32.mrf.mxu0
    %v4335 = vadd.f32 0.0, %v4334
    %4336 = vmatmul.f32.gmra.mxu0 %v4309
    %v4337 = vpop.f32.mrf.mxu0
    %v4338 = vadd.f32 0.0, %v4337
    %4339 = vmatmul.f32.gmra.mxu0 %v4312
    %v4340 = vpop.f32.mrf.mxu0
    %v4341 = vadd.f32 0.0, %v4340
    %4342 = vmatmul.f32.gmra.mxu0 %v4315
    %v4343 = vpop.f32.mrf.mxu0
    %v4344 = vadd.f32 0.0, %v4343
    %4345 = vdwg.mxu0
    %v4346 = vld [vmem:[%s3508] sm:$0xff]
    %v4348 = vsel %vm1592, %v4335, 0
    %v4351 = vsel %vm1592, %v4338, 0
    %v4354 = vsel %vm1592, %v4341, 0
    %v4357 = vsel %vm1592, %v4344, 0
    %4359 = vmatpush.msra.mxu0 0.0
    %4360 = vmatpush.msra.mxu0 0.0
    %4361 = vmatpush.msra.mxu0 0.0
    %4362 = vmatpush.msra.mxu0 0.0
    %4363 = vmatpush.msra.mxu0 0.0
    %4364 = vmatpush.msra.mxu0 0.0
    %4365 = vmatpush.msra.mxu0 0.0
    %4366 = vmatpush.msra.mxu0 0.0
    %4367 = vmatpush.msra.mxu0 0.0
    %4368 = vmatpush.msra.mxu0 0.0
    %4369 = vmatpush.msra.mxu0 0.0
    %4370 = vmatpush.msra.mxu0 0.0
    %4371 = vmatpush.msra.mxu0 0.0
    %4372 = vmatpush.msra.mxu0 0.0
    %4373 = vmatpush.msra.mxu0 0.0
    %4374 = vmatpush.msra.mxu0 %v4346
    %4375 = vmatmul.f32.gmra.mxu0 %v4348
    %v4376 = vpop.f32.mrf.mxu0
    %v4377 = vadd.f32 0.0, %v4376
    %4378 = vmatmul.f32.gmra.mxu0 %v4351
    %v4379 = vpop.f32.mrf.mxu0
    %v4380 = vadd.f32 0.0, %v4379
    %4381 = vmatmul.f32.gmra.mxu0 %v4354
    %v4382 = vpop.f32.mrf.mxu0
    %v4383 = vadd.f32 0.0, %v4382
    %4384 = vmatmul.f32.gmra.mxu0 %v4357
    %v4385 = vpop.f32.mrf.mxu0
    %v4386 = vadd.f32 0.0, %v4385
    %4387 = vdwg.mxu0
    %v4388 = vadd.f32 %v4297, %v4377
    %v4389 = vadd.f32 %v4298, %v4380
    %v4390 = vadd.f32 %v4299, %v4383
    %v4391 = vadd.f32 %v4300, %v4386
    %v4392 = vld [vmem:[%s2 + $0xa0] sm:$0xff]
    %v4393 = vld [vmem:[%s2 + $0xa8] sm:$0xff]
    %v4394 = vld [vmem:[%s2 + $0xb0] sm:$0xff]
    %v4395 = vld [vmem:[%s2 + $0xb8] sm:$0xff]
    %v4397 = vsel %vm3107, %v4392, 0
    %v4400 = vsel %vm3107, %v4393, 0
    %v4403 = vsel %vm3107, %v4394, 0
    %v4406 = vsel %vm3107, %v4395, 0
    %4408 = vmatpush.msra.mxu0 0.0
    %4409 = vmatpush.msra.mxu0 0.0
    %4410 = vmatpush.msra.mxu0 0.0
    %4411 = vmatpush.msra.mxu0 0.0
    %4412 = vmatpush.msra.mxu0 0.0
    %4413 = vmatpush.msra.mxu0 0.0
    %4414 = vmatpush.msra.mxu0 0.0
    %4415 = vmatpush.msra.mxu0 0.0
    %4416 = vmatpush.msra.mxu0 0.0
    %4417 = vmatpush.msra.mxu0 %v3944
    %4418 = vmatpush.msra.mxu0 %v3943
    %4419 = vmatpush.msra.mxu0 %v3942
    %4420 = vmatpush.msra.mxu0 %v3941
    %4421 = vmatpush.msra.mxu0 %v3940
    %4422 = vmatpush.msra.mxu0 %v3939
    %4423 = vmatpush.msra.mxu0 %v3938
    %4424 = vmatmul.f32.gmra.mxu0 %v4397
    %v4425 = vpop.f32.mrf.mxu0
    %v4426 = vadd.f32 0.0, %v4425
    %4427 = vmatmul.f32.gmra.mxu0 %v4400
    %v4428 = vpop.f32.mrf.mxu0
    %v4429 = vadd.f32 0.0, %v4428
    %4430 = vmatmul.f32.gmra.mxu0 %v4403
    %v4431 = vpop.f32.mrf.mxu0
    %v4432 = vadd.f32 0.0, %v4431
    %4433 = vmatmul.f32.gmra.mxu0 %v4406
    %v4434 = vpop.f32.mrf.mxu0
    %v4435 = vadd.f32 0.0, %v4434
    %4436 = vdwg.mxu0
    %v4437 = vld [vmem:[%s3600] sm:$0xff]
    %v4439 = vsel %vm1592, %v4426, 0
    %v4442 = vsel %vm1592, %v4429, 0
    %v4445 = vsel %vm1592, %v4432, 0
    %v4448 = vsel %vm1592, %v4435, 0
    %4450 = vmatpush.msra.mxu0 0.0
    %4451 = vmatpush.msra.mxu0 0.0
    %4452 = vmatpush.msra.mxu0 0.0
    %4453 = vmatpush.msra.mxu0 0.0
    %4454 = vmatpush.msra.mxu0 0.0
    %4455 = vmatpush.msra.mxu0 0.0
    %4456 = vmatpush.msra.mxu0 0.0
    %4457 = vmatpush.msra.mxu0 0.0
    %4458 = vmatpush.msra.mxu0 0.0
    %4459 = vmatpush.msra.mxu0 0.0
    %4460 = vmatpush.msra.mxu0 0.0
    %4461 = vmatpush.msra.mxu0 0.0
    %4462 = vmatpush.msra.mxu0 0.0
    %4463 = vmatpush.msra.mxu0 0.0
    %4464 = vmatpush.msra.mxu0 0.0
    %4465 = vmatpush.msra.mxu0 %v4437
    %4466 = vmatmul.f32.gmra.mxu0 %v4439
    %v4467 = vpop.f32.mrf.mxu0
    %v4468 = vadd.f32 0.0, %v4467
    %4469 = vmatmul.f32.gmra.mxu0 %v4442
    %v4470 = vpop.f32.mrf.mxu0
    %v4471 = vadd.f32 0.0, %v4470
    %4472 = vmatmul.f32.gmra.mxu0 %v4445
    %v4473 = vpop.f32.mrf.mxu0
    %v4474 = vadd.f32 0.0, %v4473
    %4475 = vmatmul.f32.gmra.mxu0 %v4448
    %v4476 = vpop.f32.mrf.mxu0
    %v4477 = vadd.f32 0.0, %v4476
    %4478 = vdwg.mxu0
    %v4479 = vadd.f32 %v4388, %v4468
    %v4480 = vadd.f32 %v4389, %v4471
    %v4481 = vadd.f32 %v4390, %v4474
    %v4482 = vadd.f32 %v4391, %v4477
    %v4483 = vld [vmem:[%s2 + $0xc0] sm:$0xff]
    %v4484 = vld [vmem:[%s2 + $0xc8] sm:$0xff]
    %v4485 = vld [vmem:[%s2 + $0xd0] sm:$0xff]
    %v4486 = vld [vmem:[%s2 + $0xd8] sm:$0xff]
    %v4488 = vsel %vm3107, %v4483, 0
    %v4491 = vsel %vm3107, %v4484, 0
    %v4494 = vsel %vm3107, %v4485, 0
    %v4497 = vsel %vm3107, %v4486, 0
    %4499 = vmatpush.msra.mxu0 0.0
    %4500 = vmatpush.msra.mxu0 0.0
    %4501 = vmatpush.msra.mxu0 0.0
    %4502 = vmatpush.msra.mxu0 0.0
    %4503 = vmatpush.msra.mxu0 0.0
    %4504 = vmatpush.msra.mxu0 0.0
    %4505 = vmatpush.msra.mxu0 0.0
    %4506 = vmatpush.msra.mxu0 0.0
    %4507 = vmatpush.msra.mxu0 0.0
    %4508 = vmatpush.msra.mxu0 %v3944
    %4509 = vmatpush.msra.mxu0 %v3943
    %4510 = vmatpush.msra.mxu0 %v3942
    %4511 = vmatpush.msra.mxu0 %v3941
    %4512 = vmatpush.msra.mxu0 %v3940
    %4513 = vmatpush.msra.mxu0 %v3939
    %4514 = vmatpush.msra.mxu0 %v3938
    %4515 = vmatmul.f32.gmra.mxu0 %v4488
    %v4516 = vpop.f32.mrf.mxu0
    %v4517 = vadd.f32 0.0, %v4516
    %4518 = vmatmul.f32.gmra.mxu0 %v4491
    %v4519 = vpop.f32.mrf.mxu0
    %v4520 = vadd.f32 0.0, %v4519
    %4521 = vmatmul.f32.gmra.mxu0 %v4494
    %v4522 = vpop.f32.mrf.mxu0
    %v4523 = vadd.f32 0.0, %v4522
    %4524 = vmatmul.f32.gmra.mxu0 %v4497
    %v4525 = vpop.f32.mrf.mxu0
    %v4526 = vadd.f32 0.0, %v4525
    %4527 = vdwg.mxu0
    %v4528 = vld [vmem:[%s3692] sm:$0xff]
    %v4530 = vsel %vm1592, %v4517, 0
    %v4533 = vsel %vm1592, %v4520, 0
    %v4536 = vsel %vm1592, %v4523, 0
    %v4539 = vsel %vm1592, %v4526, 0
    %4541 = vmatpush.msra.mxu0 0.0
    %4542 = vmatpush.msra.mxu0 0.0
    %4543 = vmatpush.msra.mxu0 0.0
    %4544 = vmatpush.msra.mxu0 0.0
    %4545 = vmatpush.msra.mxu0 0.0
    %4546 = vmatpush.msra.mxu0 0.0
    %4547 = vmatpush.msra.mxu0 0.0
    %4548 = vmatpush.msra.mxu0 0.0
    %4549 = vmatpush.msra.mxu0 0.0
    %4550 = vmatpush.msra.mxu0 0.0
    %4551 = vmatpush.msra.mxu0 0.0
    %4552 = vmatpush.msra.mxu0 0.0
    %4553 = vmatpush.msra.mxu0 0.0
    %4554 = vmatpush.msra.mxu0 0.0
    %4555 = vmatpush.msra.mxu0 0.0
    %4556 = vmatpush.msra.mxu0 %v4528
    %4557 = vmatmul.f32.gmra.mxu0 %v4530
    %v4558 = vpop.f32.mrf.mxu0
    %v4559 = vadd.f32 0.0, %v4558
    %4560 = vmatmul.f32.gmra.mxu0 %v4533
    %v4561 = vpop.f32.mrf.mxu0
    %v4562 = vadd.f32 0.0, %v4561
    %4563 = vmatmul.f32.gmra.mxu0 %v4536
    %v4564 = vpop.f32.mrf.mxu0
    %v4565 = vadd.f32 0.0, %v4564
    %4566 = vmatmul.f32.gmra.mxu0 %v4539
    %v4567 = vpop.f32.mrf.mxu0
    %v4568 = vadd.f32 0.0, %v4567
    %4569 = vdwg.mxu0
    %v4570 = vadd.f32 %v4479, %v4559
    %v4571 = vadd.f32 %v4480, %v4562
    %v4572 = vadd.f32 %v4481, %v4565
    %v4573 = vadd.f32 %v4482, %v4568
    %v4574 = vld [vmem:[%s2 + $0xe0] sm:$0xff]
    %v4575 = vld [vmem:[%s2 + $0xe8] sm:$0xff]
    %v4576 = vld [vmem:[%s2 + $0xf0] sm:$0xff]
    %v4577 = vld [vmem:[%s2 + $0xf8] sm:$0xff]
    %v4579 = vsel %vm3107, %v4574, 0
    %v4582 = vsel %vm3107, %v4575, 0
    %v4585 = vsel %vm3107, %v4576, 0
    %v4588 = vsel %vm3107, %v4577, 0
    %4590 = vmatpush.msra.mxu0 0.0
    %4591 = vmatpush.msra.mxu0 0.0
    %4592 = vmatpush.msra.mxu0 0.0
    %4593 = vmatpush.msra.mxu0 0.0
    %4594 = vmatpush.msra.mxu0 0.0
    %4595 = vmatpush.msra.mxu0 0.0
    %4596 = vmatpush.msra.mxu0 0.0
    %4597 = vmatpush.msra.mxu0 0.0
    %4598 = vmatpush.msra.mxu0 0.0
    %4599 = vmatpush.msra.mxu0 %v3944
    %4600 = vmatpush.msra.mxu0 %v3943
    %4601 = vmatpush.msra.mxu0 %v3942
    %4602 = vmatpush.msra.mxu0 %v3941
    %4603 = vmatpush.msra.mxu0 %v3940
    %4604 = vmatpush.msra.mxu0 %v3939
    %4605 = vmatpush.msra.mxu0 %v3938
    %4606 = vmatmul.f32.gmra.mxu0 %v4579
    %v4607 = vpop.f32.mrf.mxu0
    %v4608 = vadd.f32 0.0, %v4607
    %4609 = vmatmul.f32.gmra.mxu0 %v4582
    %v4610 = vpop.f32.mrf.mxu0
    %v4611 = vadd.f32 0.0, %v4610
    %4612 = vmatmul.f32.gmra.mxu0 %v4585
    %v4613 = vpop.f32.mrf.mxu0
    %v4614 = vadd.f32 0.0, %v4613
    %4615 = vmatmul.f32.gmra.mxu0 %v4588
    %v4616 = vpop.f32.mrf.mxu0
    %v4617 = vadd.f32 0.0, %v4616
    %4618 = vdwg.mxu0
    %v4619 = vld [vmem:[%s3784] sm:$0xff]
    %v4621 = vsel %vm1592, %v4608, 0
    %v4624 = vsel %vm1592, %v4611, 0
    %v4627 = vsel %vm1592, %v4614, 0
    %v4630 = vsel %vm1592, %v4617, 0
    %4632 = vmatpush.msra.mxu0 0.0
    %4633 = vmatpush.msra.mxu0 0.0
    %4634 = vmatpush.msra.mxu0 0.0
    %4635 = vmatpush.msra.mxu0 0.0
    %4636 = vmatpush.msra.mxu0 0.0
    %4637 = vmatpush.msra.mxu0 0.0
    %4638 = vmatpush.msra.mxu0 0.0
    %4639 = vmatpush.msra.mxu0 0.0
    %4640 = vmatpush.msra.mxu0 0.0
    %4641 = vmatpush.msra.mxu0 0.0
    %4642 = vmatpush.msra.mxu0 0.0
    %4643 = vmatpush.msra.mxu0 0.0
    %4644 = vmatpush.msra.mxu0 0.0
    %4645 = vmatpush.msra.mxu0 0.0
    %4646 = vmatpush.msra.mxu0 0.0
    %4647 = vmatpush.msra.mxu0 %v4619
    %4648 = vmatmul.f32.gmra.mxu0 %v4621
    %v4649 = vpop.f32.mrf.mxu0
    %v4650 = vadd.f32 0.0, %v4649
    %4651 = vmatmul.f32.gmra.mxu0 %v4624
    %v4652 = vpop.f32.mrf.mxu0
    %v4653 = vadd.f32 0.0, %v4652
    %4654 = vmatmul.f32.gmra.mxu0 %v4627
    %v4655 = vpop.f32.mrf.mxu0
    %v4656 = vadd.f32 0.0, %v4655
    %4657 = vmatmul.f32.gmra.mxu0 %v4630
    %v4658 = vpop.f32.mrf.mxu0
    %v4659 = vadd.f32 0.0, %v4658
    %4660 = vdwg.mxu0
    %v4661 = vadd.f32 %v4570, %v4650
    %v4662 = vadd.f32 %v4571, %v4653
    %v4663 = vadd.f32 %v4572, %v4656
    %v4664 = vadd.f32 %v4573, %v4659
    %v4665 = vld [vmem:[%s2 + $0x100] sm:$0xff]
    %v4666 = vld [vmem:[%s2 + $0x108] sm:$0xff]
    %v4667 = vld [vmem:[%s2 + $0x110] sm:$0xff]
    %v4668 = vld [vmem:[%s2 + $0x118] sm:$0xff]
    %v4670 = vsel %vm3107, %v4665, 0
    %v4673 = vsel %vm3107, %v4666, 0
    %v4676 = vsel %vm3107, %v4667, 0
    %v4679 = vsel %vm3107, %v4668, 0
    %4681 = vmatpush.msra.mxu0 0.0
    %4682 = vmatpush.msra.mxu0 0.0
    %4683 = vmatpush.msra.mxu0 0.0
    %4684 = vmatpush.msra.mxu0 0.0
    %4685 = vmatpush.msra.mxu0 0.0
    %4686 = vmatpush.msra.mxu0 0.0
    %4687 = vmatpush.msra.mxu0 0.0
    %4688 = vmatpush.msra.mxu0 0.0
    %4689 = vmatpush.msra.mxu0 0.0
    %4690 = vmatpush.msra.mxu0 %v3944
    %4691 = vmatpush.msra.mxu0 %v3943
    %4692 = vmatpush.msra.mxu0 %v3942
    %4693 = vmatpush.msra.mxu0 %v3941
    %4694 = vmatpush.msra.mxu0 %v3940
    %4695 = vmatpush.msra.mxu0 %v3939
    %4696 = vmatpush.msra.mxu0 %v3938
    %4697 = vmatmul.f32.gmra.mxu0 %v4670
    %v4698 = vpop.f32.mrf.mxu0
    %v4699 = vadd.f32 0.0, %v4698
    %4700 = vmatmul.f32.gmra.mxu0 %v4673
    %v4701 = vpop.f32.mrf.mxu0
    %v4702 = vadd.f32 0.0, %v4701
    %4703 = vmatmul.f32.gmra.mxu0 %v4676
    %v4704 = vpop.f32.mrf.mxu0
    %v4705 = vadd.f32 0.0, %v4704
    %4706 = vmatmul.f32.gmra.mxu0 %v4679
    %v4707 = vpop.f32.mrf.mxu0
    %v4708 = vadd.f32 0.0, %v4707
    %4709 = vdwg.mxu0
    %v4710 = vld [vmem:[%s3876] sm:$0xff]
    %v4712 = vsel %vm1592, %v4699, 0
    %v4715 = vsel %vm1592, %v4702, 0
    %v4718 = vsel %vm1592, %v4705, 0
    %v4721 = vsel %vm1592, %v4708, 0
    %4723 = vmatpush.msra.mxu0 0.0
    %4724 = vmatpush.msra.mxu0 0.0
    %4725 = vmatpush.msra.mxu0 0.0
    %4726 = vmatpush.msra.mxu0 0.0
    %4727 = vmatpush.msra.mxu0 0.0
    %4728 = vmatpush.msra.mxu0 0.0
    %4729 = vmatpush.msra.mxu0 0.0
    %4730 = vmatpush.msra.mxu0 0.0
    %4731 = vmatpush.msra.mxu0 0.0
    %4732 = vmatpush.msra.mxu0 0.0
    %4733 = vmatpush.msra.mxu0 0.0
    %4734 = vmatpush.msra.mxu0 0.0
    %4735 = vmatpush.msra.mxu0 0.0
    %4736 = vmatpush.msra.mxu0 0.0
    %4737 = vmatpush.msra.mxu0 0.0
    %4738 = vmatpush.msra.mxu0 %v4710
    %4739 = vmatmul.f32.gmra.mxu0 %v4712
    %v4740 = vpop.f32.mrf.mxu0
    %v4741 = vadd.f32 0.0, %v4740
    %4742 = vmatmul.f32.gmra.mxu0 %v4715
    %v4743 = vpop.f32.mrf.mxu0
    %v4744 = vadd.f32 0.0, %v4743
    %4745 = vmatmul.f32.gmra.mxu0 %v4718
    %v4746 = vpop.f32.mrf.mxu0
    %v4747 = vadd.f32 0.0, %v4746
    %4748 = vmatmul.f32.gmra.mxu0 %v4721
    %v4749 = vpop.f32.mrf.mxu0
    %v4750 = vadd.f32 0.0, %v4749
    %4751 = vdwg.mxu0
    %v4752 = vadd.f32 %v4661, %v4741
    %v4753 = vadd.f32 %v4662, %v4744
    %v4754 = vadd.f32 %v4663, %v4747
    %v4755 = vadd.f32 %v4664, %v4750
    %v4756 = vadd.f32 %v4752, %v3924
    %v4757 = vadd.f32 %v4753, %v3924
    %v4758 = vadd.f32 %v4754, %v3924
    %v4759 = vadd.f32 %v4755, %v3924
    %v4760 = vmax.f32 %v4756, 0.0
    %v4761 = vmax.f32 %v4757, 0.0
    %v4762 = vmax.f32 %v4758, 0.0
    %v4763 = vmax.f32 %v4759, 0.0
    %4764 = vst.msk [vmem:[#allocation3 + $0x20] sm:$0xff] %vm1592, %v4760
    %4765 = vst.msk [vmem:[#allocation3 + $0x28] sm:$0xff] %vm1592, %v4761
    %4766 = vst.msk [vmem:[#allocation3 + $0x30] sm:$0xff] %vm1592, %v4762
    %4767 = vst.msk [vmem:[#allocation3 + $0x38] sm:$0xff] %vm1592, %v4763
    %v4768 = vld [vmem:[%s10] sm:$0x1]
    %v4769 = vld [vmem:[#allocation3] sm:$0xff]
    %v4770 = vld [vmem:[#allocation3 + $0x8] sm:$0xff]
    %v4771 = vld [vmem:[#allocation3 + $0x10] sm:$0xff]
    %v4772 = vld [vmem:[#allocation3 + $0x18] sm:$0xff]
    %v4773 = vld [vmem:[%s3] sm:$0xff]
    %v4774 = vld [vmem:[%s3 + $0x8] sm:$0xff]
    %vm4775 = vcmask 261120
    %v4777 = vsel %vm4775, %v4773, 0
    %v4780 = vsel %vm4775, %v4774, 0
    %4782 = vmatpush.msra.mxu0 0.0
    %4783 = vmatpush.msra.mxu0 0.0
    %4784 = vmatpush.msra.mxu0 0.0
    %4785 = vmatpush.msra.mxu0 0.0
    %4786 = vmatpush.msra.mxu0 0.0
    %4787 = vmatpush.msra.mxu0 0.0
    %4788 = vmatpush.msra.mxu0 0.0
    %4789 = vmatpush.msra.mxu0 0.0
    %4790 = vmatpush.msra.mxu0 0.0
    %4791 = vmatpush.msra.mxu0 0.0
    %4792 = vmatpush.msra.mxu0 0.0
    %4793 = vmatpush.msra.mxu0 0.0
    %4794 = vmatpush.msra.mxu0 %v4772
    %4795 = vmatpush.msra.mxu0 %v4771
    %4796 = vmatpush.msra.mxu0 %v4770
    %4797 = vmatpush.msra.mxu0 %v4769
    %4798 = vmatmul.f32.gmra.mxu0 %v4777
    %v4799 = vpop.f32.mrf.mxu0
    %v4800 = vadd.f32 0.0, %v4799
    %4801 = vmatmul.f32.gmra.mxu0 %v4780
    %v4802 = vpop.f32.mrf.mxu0
    %v4803 = vadd.f32 0.0, %v4802
    %4804 = vdwg.mxu0
    %v4805 = vld [vmem:[%s9] sm:$0xff]
    %v4806 = vld [vmem:[%s3 + $0x10] sm:$0xff]
    %v4807 = vld [vmem:[%s3 + $0x18] sm:$0xff]
    %v4809 = vsel %vm4775, %v4806, 0
    %v4812 = vsel %vm4775, %v4807, 0
    %4814 = vmatpush.msra.mxu0 0.0
    %4815 = vmatpush.msra.mxu0 0.0
    %4816 = vmatpush.msra.mxu0 0.0
    %4817 = vmatpush.msra.mxu0 0.0
    %4818 = vmatpush.msra.mxu0 0.0
    %4819 = vmatpush.msra.mxu0 0.0
    %4820 = vmatpush.msra.mxu0 0.0
    %4821 = vmatpush.msra.mxu0 0.0
    %4822 = vmatpush.msra.mxu0 0.0
    %4823 = vmatpush.msra.mxu0 0.0
    %4824 = vmatpush.msra.mxu0 0.0
    %4825 = vmatpush.msra.mxu0 0.0
    %4826 = vmatpush.msra.mxu0 %v4772
    %4827 = vmatpush.msra.mxu0 %v4771
    %4828 = vmatpush.msra.mxu0 %v4770
    %4829 = vmatpush.msra.mxu0 %v4769
    %4830 = vmatmul.f32.gmra.mxu0 %v4809
    %v4831 = vpop.f32.mrf.mxu0
    %v4832 = vadd.f32 0.0, %v4831
    %4833 = vmatmul.f32.gmra.mxu0 %v4812
    %v4834 = vpop.f32.mrf.mxu0
    %v4835 = vadd.f32 0.0, %v4834
    %4836 = vdwg.mxu0
    %s4837 = scalar_lea.vmem %s9, 8
    %v4838 = vld [vmem:[%s4837] sm:$0xff]
    %v4840 = vsel %vm1592, %v4832, 0
    %v4843 = vsel %vm1592, %v4835, 0
    %4845 = vmatpush.msra.mxu0 0.0
    %4846 = vmatpush.msra.mxu0 0.0
    %4847 = vmatpush.msra.mxu0 0.0
    %4848 = vmatpush.msra.mxu0 0.0
    %4849 = vmatpush.msra.mxu0 0.0
    %4850 = vmatpush.msra.mxu0 0.0
    %4851 = vmatpush.msra.mxu0 0.0
    %4852 = vmatpush.msra.mxu0 0.0
    %4853 = vmatpush.msra.mxu0 0.0
    %4854 = vmatpush.msra.mxu0 0.0
    %4855 = vmatpush.msra.mxu0 0.0
    %4856 = vmatpush.msra.mxu0 0.0
    %4857 = vmatpush.msra.mxu0 0.0
    %4858 = vmatpush.msra.mxu0 0.0
    %4859 = vmatpush.msra.mxu0 0.0
    %4860 = vmatpush.msra.mxu0 %v4838
    %4861 = vmatmul.f32.gmra.mxu0 %v4840
    %v4862 = vpop.f32.mrf.mxu0
    %v4863 = vadd.f32 0.0, %v4862
    %4864 = vmatmul.f32.gmra.mxu0 %v4843
    %v4865 = vpop.f32.mrf.mxu0
    %v4866 = vadd.f32 0.0, %v4865
    %4867 = vdwg.mxu0
    %v4869 = vsel %vm1592, %v4800, 0
    %v4872 = vsel %vm1592, %v4803, 0
    %4874 = vmatpush.msra.mxu0 0.0
    %4875 = vmatpush.msra.mxu0 0.0
    %4876 = vmatpush.msra.mxu0 0.0
    %4877 = vmatpush.msra.mxu0 0.0
    %4878 = vmatpush.msra.mxu0 0.0
    %4879 = vmatpush.msra.mxu0 0.0
    %4880 = vmatpush.msra.mxu0 0.0
    %4881 = vmatpush.msra.mxu0 0.0
    %4882 = vmatpush.msra.mxu0 0.0
    %4883 = vmatpush.msra.mxu0 0.0
    %4884 = vmatpush.msra.mxu0 0.0
    %4885 = vmatpush.msra.mxu0 0.0
    %4886 = vmatpush.msra.mxu0 0.0
    %4887 = vmatpush.msra.mxu0 0.0
    %4888 = vmatpush.msra.mxu0 0.0
    %4889 = vmatpush.msra.mxu0 %v4805
    %4890 = vmatmul.f32.gmra.mxu0 %v4869
    %v4891 = vpop.f32.mrf.mxu0
    %v4892 = vadd.f32 %v4863, %v4891
    %4893 = vmatmul.f32.gmra.mxu0 %v4872
    %v4894 = vpop.f32.mrf.mxu0
    %v4895 = vadd.f32 %v4866, %v4894
    %4896 = vdwg.mxu0
    %v4897 = vld [vmem:[%s3 + $0x20] sm:$0xff]
    %v4898 = vld [vmem:[%s3 + $0x28] sm:$0xff]
    %v4900 = vsel %vm4775, %v4897, 0
    %v4903 = vsel %vm4775, %v4898, 0
    %4905 = vmatpush.msra.mxu0 0.0
    %4906 = vmatpush.msra.mxu0 0.0
    %4907 = vmatpush.msra.mxu0 0.0
    %4908 = vmatpush.msra.mxu0 0.0
    %4909 = vmatpush.msra.mxu0 0.0
    %4910 = vmatpush.msra.mxu0 0.0
    %4911 = vmatpush.msra.mxu0 0.0
    %4912 = vmatpush.msra.mxu0 0.0
    %4913 = vmatpush.msra.mxu0 0.0
    %4914 = vmatpush.msra.mxu0 0.0
    %4915 = vmatpush.msra.mxu0 0.0
    %4916 = vmatpush.msra.mxu0 0.0
    %4917 = vmatpush.msra.mxu0 %v4772
    %4918 = vmatpush.msra.mxu0 %v4771
    %4919 = vmatpush.msra.mxu0 %v4770
    %4920 = vmatpush.msra.mxu0 %v4769
    %4921 = vmatmul.f32.gmra.mxu0 %v4900
    %v4922 = vpop.f32.mrf.mxu0
    %v4923 = vadd.f32 0.0, %v4922
    %4924 = vmatmul.f32.gmra.mxu0 %v4903
    %v4925 = vpop.f32.mrf.mxu0
    %v4926 = vadd.f32 0.0, %v4925
    %4927 = vdwg.mxu0
    %s4928 = scalar_lea.vmem %s9, 16
    %v4929 = vld [vmem:[%s4928] sm:$0xff]
    %v4931 = vsel %vm1592, %v4923, 0
    %v4934 = vsel %vm1592, %v4926, 0
    %4936 = vmatpush.msra.mxu0 0.0
    %4937 = vmatpush.msra.mxu0 0.0
    %4938 = vmatpush.msra.mxu0 0.0
    %4939 = vmatpush.msra.mxu0 0.0
    %4940 = vmatpush.msra.mxu0 0.0
    %4941 = vmatpush.msra.mxu0 0.0
    %4942 = vmatpush.msra.mxu0 0.0
    %4943 = vmatpush.msra.mxu0 0.0
    %4944 = vmatpush.msra.mxu0 0.0
    %4945 = vmatpush.msra.mxu0 0.0
    %4946 = vmatpush.msra.mxu0 0.0
    %4947 = vmatpush.msra.mxu0 0.0
    %4948 = vmatpush.msra.mxu0 0.0
    %4949 = vmatpush.msra.mxu0 0.0
    %4950 = vmatpush.msra.mxu0 0.0
    %4951 = vmatpush.msra.mxu0 %v4929
    %4952 = vmatmul.f32.gmra.mxu0 %v4931
    %v4953 = vpop.f32.mrf.mxu0
    %v4954 = vadd.f32 0.0, %v4953
    %4955 = vmatmul.f32.gmra.mxu0 %v4934
    %v4956 = vpop.f32.mrf.mxu0
    %v4957 = vadd.f32 0.0, %v4956
    %4958 = vdwg.mxu0
    %v4959 = vadd.f32 %v4892, %v4954
    %v4960 = vadd.f32 %v4895, %v4957
    %v4961 = vld [vmem:[%s3 + $0x30] sm:$0xff]
    %v4962 = vld [vmem:[%s3 + $0x38] sm:$0xff]
    %v4964 = vsel %vm4775, %v4961, 0
    %v4967 = vsel %vm4775, %v4962, 0
    %4969 = vmatpush.msra.mxu0 0.0
    %4970 = vmatpush.msra.mxu0 0.0
    %4971 = vmatpush.msra.mxu0 0.0
    %4972 = vmatpush.msra.mxu0 0.0
    %4973 = vmatpush.msra.mxu0 0.0
    %4974 = vmatpush.msra.mxu0 0.0
    %4975 = vmatpush.msra.mxu0 0.0
    %4976 = vmatpush.msra.mxu0 0.0
    %4977 = vmatpush.msra.mxu0 0.0
    %4978 = vmatpush.msra.mxu0 0.0
    %4979 = vmatpush.msra.mxu0 0.0
    %4980 = vmatpush.msra.mxu0 0.0
    %4981 = vmatpush.msra.mxu0 %v4772
    %4982 = vmatpush.msra.mxu0 %v4771
    %4983 = vmatpush.msra.mxu0 %v4770
    %4984 = vmatpush.msra.mxu0 %v4769
    %4985 = vmatmul.f32.gmra.mxu0 %v4964
    %v4986 = vpop.f32.mrf.mxu0
    %v4987 = vadd.f32 0.0, %v4986
    %4988 = vmatmul.f32.gmra.mxu0 %v4967
    %v4989 = vpop.f32.mrf.mxu0
    %v4990 = vadd.f32 0.0, %v4989
    %4991 = vdwg.mxu0
    %s4992 = scalar_lea.vmem %s9, 24
    %v4993 = vld [vmem:[%s4992] sm:$0xff]
    %v4995 = vsel %vm1592, %v4987, 0
    %v4998 = vsel %vm1592, %v4990, 0
    %5000 = vmatpush.msra.mxu0 0.0
    %5001 = vmatpush.msra.mxu0 0.0
    %5002 = vmatpush.msra.mxu0 0.0
    %5003 = vmatpush.msra.mxu0 0.0
    %5004 = vmatpush.msra.mxu0 0.0
    %5005 = vmatpush.msra.mxu0 0.0
    %5006 = vmatpush.msra.mxu0 0.0
    %5007 = vmatpush.msra.mxu0 0.0
    %5008 = vmatpush.msra.mxu0 0.0
    %5009 = vmatpush.msra.mxu0 0.0
    %5010 = vmatpush.msra.mxu0 0.0
    %5011 = vmatpush.msra.mxu0 0.0
    %5012 = vmatpush.msra.mxu0 0.0
    %5013 = vmatpush.msra.mxu0 0.0
    %5014 = vmatpush.msra.mxu0 0.0
    %5015 = vmatpush.msra.mxu0 %v4993
    %5016 = vmatmul.f32.gmra.mxu0 %v4995
    %v5017 = vpop.f32.mrf.mxu0
    %v5018 = vadd.f32 0.0, %v5017
    %5019 = vmatmul.f32.gmra.mxu0 %v4998
    %v5020 = vpop.f32.mrf.mxu0
    %v5021 = vadd.f32 0.0, %v5020
    %5022 = vdwg.mxu0
    %v5023 = vadd.f32 %v4959, %v5018
    %v5024 = vadd.f32 %v4960, %v5021
    %v5025 = vld [vmem:[%s3 + $0x40] sm:$0xff]
    %v5026 = vld [vmem:[%s3 + $0x48] sm:$0xff]
    %v5028 = vsel %vm4775, %v5025, 0
    %v5031 = vsel %vm4775, %v5026, 0
    %5033 = vmatpush.msra.mxu0 0.0
    %5034 = vmatpush.msra.mxu0 0.0
    %5035 = vmatpush.msra.mxu0 0.0
    %5036 = vmatpush.msra.mxu0 0.0
    %5037 = vmatpush.msra.mxu0 0.0
    %5038 = vmatpush.msra.mxu0 0.0
    %5039 = vmatpush.msra.mxu0 0.0
    %5040 = vmatpush.msra.mxu0 0.0
    %5041 = vmatpush.msra.mxu0 0.0
    %5042 = vmatpush.msra.mxu0 0.0
    %5043 = vmatpush.msra.mxu0 0.0
    %5044 = vmatpush.msra.mxu0 0.0
    %5045 = vmatpush.msra.mxu0 %v4772
    %5046 = vmatpush.msra.mxu0 %v4771
    %5047 = vmatpush.msra.mxu0 %v4770
    %5048 = vmatpush.msra.mxu0 %v4769
    %5049 = vmatmul.f32.gmra.mxu0 %v5028
    %v5050 = vpop.f32.mrf.mxu0
    %v5051 = vadd.f32 0.0, %v5050
    %5052 = vmatmul.f32.gmra.mxu0 %v5031
    %v5053 = vpop.f32.mrf.mxu0
    %v5054 = vadd.f32 0.0, %v5053
    %5055 = vdwg.mxu0
    %s5056 = scalar_lea.vmem %s9, 32
    %v5057 = vld [vmem:[%s5056] sm:$0xff]
    %v5059 = vsel %vm1592, %v5051, 0
    %v5062 = vsel %vm1592, %v5054, 0
    %5064 = vmatpush.msra.mxu0 0.0
    %5065 = vmatpush.msra.mxu0 0.0
    %5066 = vmatpush.msra.mxu0 0.0
    %5067 = vmatpush.msra.mxu0 0.0
    %5068 = vmatpush.msra.mxu0 0.0
    %5069 = vmatpush.msra.mxu0 0.0
    %5070 = vmatpush.msra.mxu0 0.0
    %5071 = vmatpush.msra.mxu0 0.0
    %5072 = vmatpush.msra.mxu0 0.0
    %5073 = vmatpush.msra.mxu0 0.0
    %5074 = vmatpush.msra.mxu0 0.0
    %5075 = vmatpush.msra.mxu0 0.0
    %5076 = vmatpush.msra.mxu0 0.0
    %5077 = vmatpush.msra.mxu0 0.0
    %5078 = vmatpush.msra.mxu0 0.0
    %5079 = vmatpush.msra.mxu0 %v5057
    %5080 = vmatmul.f32.gmra.mxu0 %v5059
    %v5081 = vpop.f32.mrf.mxu0
    %v5082 = vadd.f32 0.0, %v5081
    %5083 = vmatmul.f32.gmra.mxu0 %v5062
    %v5084 = vpop.f32.mrf.mxu0
    %v5085 = vadd.f32 0.0, %v5084
    %5086 = vdwg.mxu0
    %v5087 = vadd.f32 %v5023, %v5082
    %v5088 = vadd.f32 %v5024, %v5085
    %v5089 = vld [vmem:[%s3 + $0x50] sm:$0xff]
    %v5090 = vld [vmem:[%s3 + $0x58] sm:$0xff]
    %v5092 = vsel %vm4775, %v5089, 0
    %v5095 = vsel %vm4775, %v5090, 0
    %5097 = vmatpush.msra.mxu0 0.0
    %5098 = vmatpush.msra.mxu0 0.0
    %5099 = vmatpush.msra.mxu0 0.0
    %5100 = vmatpush.msra.mxu0 0.0
    %5101 = vmatpush.msra.mxu0 0.0
    %5102 = vmatpush.msra.mxu0 0.0
    %5103 = vmatpush.msra.mxu0 0.0
    %5104 = vmatpush.msra.mxu0 0.0
    %5105 = vmatpush.msra.mxu0 0.0
    %5106 = vmatpush.msra.mxu0 0.0
    %5107 = vmatpush.msra.mxu0 0.0
    %5108 = vmatpush.msra.mxu0 0.0
    %5109 = vmatpush.msra.mxu0 %v4772
    %5110 = vmatpush.msra.mxu0 %v4771
    %5111 = vmatpush.msra.mxu0 %v4770
    %5112 = vmatpush.msra.mxu0 %v4769
    %5113 = vmatmul.f32.gmra.mxu0 %v5092
    %v5114 = vpop.f32.mrf.mxu0
    %v5115 = vadd.f32 0.0, %v5114
    %5116 = vmatmul.f32.gmra.mxu0 %v5095
    %v5117 = vpop.f32.mrf.mxu0
    %v5118 = vadd.f32 0.0, %v5117
    %5119 = vdwg.mxu0
    %s5120 = scalar_lea.vmem %s9, 40
    %v5121 = vld [vmem:[%s5120] sm:$0xff]
    %v5123 = vsel %vm1592, %v5115, 0
    %v5126 = vsel %vm1592, %v5118, 0
    %5128 = vmatpush.msra.mxu0 0.0
    %5129 = vmatpush.msra.mxu0 0.0
    %5130 = vmatpush.msra.mxu0 0.0
    %5131 = vmatpush.msra.mxu0 0.0
    %5132 = vmatpush.msra.mxu0 0.0
    %5133 = vmatpush.msra.mxu0 0.0
    %5134 = vmatpush.msra.mxu0 0.0
    %5135 = vmatpush.msra.mxu0 0.0
    %5136 = vmatpush.msra.mxu0 0.0
    %5137 = vmatpush.msra.mxu0 0.0
    %5138 = vmatpush.msra.mxu0 0.0
    %5139 = vmatpush.msra.mxu0 0.0
    %5140 = vmatpush.msra.mxu0 0.0
    %5141 = vmatpush.msra.mxu0 0.0
    %5142 = vmatpush.msra.mxu0 0.0
    %5143 = vmatpush.msra.mxu0 %v5121
    %5144 = vmatmul.f32.gmra.mxu0 %v5123
    %v5145 = vpop.f32.mrf.mxu0
    %v5146 = vadd.f32 0.0, %v5145
    %5147 = vmatmul.f32.gmra.mxu0 %v5126
    %v5148 = vpop.f32.mrf.mxu0
    %v5149 = vadd.f32 0.0, %v5148
    %5150 = vdwg.mxu0
    %v5151 = vadd.f32 %v5087, %v5146
    %v5152 = vadd.f32 %v5088, %v5149
    %v5153 = vld [vmem:[%s3 + $0x60] sm:$0xff]
    %v5154 = vld [vmem:[%s3 + $0x68] sm:$0xff]
    %v5156 = vsel %vm4775, %v5153, 0
    %v5159 = vsel %vm4775, %v5154, 0
    %5161 = vmatpush.msra.mxu0 0.0
    %5162 = vmatpush.msra.mxu0 0.0
    %5163 = vmatpush.msra.mxu0 0.0
    %5164 = vmatpush.msra.mxu0 0.0
    %5165 = vmatpush.msra.mxu0 0.0
    %5166 = vmatpush.msra.mxu0 0.0
    %5167 = vmatpush.msra.mxu0 0.0
    %5168 = vmatpush.msra.mxu0 0.0
    %5169 = vmatpush.msra.mxu0 0.0
    %5170 = vmatpush.msra.mxu0 0.0
    %5171 = vmatpush.msra.mxu0 0.0
    %5172 = vmatpush.msra.mxu0 0.0
    %5173 = vmatpush.msra.mxu0 %v4772
    %5174 = vmatpush.msra.mxu0 %v4771
    %5175 = vmatpush.msra.mxu0 %v4770
    %5176 = vmatpush.msra.mxu0 %v4769
    %5177 = vmatmul.f32.gmra.mxu0 %v5156
    %v5178 = vpop.f32.mrf.mxu0
    %v5179 = vadd.f32 0.0, %v5178
    %5180 = vmatmul.f32.gmra.mxu0 %v5159
    %v5181 = vpop.f32.mrf.mxu0
    %v5182 = vadd.f32 0.0, %v5181
    %5183 = vdwg.mxu0
    %s5184 = scalar_lea.vmem %s9, 48
    %v5185 = vld [vmem:[%s5184] sm:$0xff]
    %v5187 = vsel %vm1592, %v5179, 0
    %v5190 = vsel %vm1592, %v5182, 0
    %5192 = vmatpush.msra.mxu0 0.0
    %5193 = vmatpush.msra.mxu0 0.0
    %5194 = vmatpush.msra.mxu0 0.0
    %5195 = vmatpush.msra.mxu0 0.0
    %5196 = vmatpush.msra.mxu0 0.0
    %5197 = vmatpush.msra.mxu0 0.0
    %5198 = vmatpush.msra.mxu0 0.0
    %5199 = vmatpush.msra.mxu0 0.0
    %5200 = vmatpush.msra.mxu0 0.0
    %5201 = vmatpush.msra.mxu0 0.0
    %5202 = vmatpush.msra.mxu0 0.0
    %5203 = vmatpush.msra.mxu0 0.0
    %5204 = vmatpush.msra.mxu0 0.0
    %5205 = vmatpush.msra.mxu0 0.0
    %5206 = vmatpush.msra.mxu0 0.0
    %5207 = vmatpush.msra.mxu0 %v5185
    %5208 = vmatmul.f32.gmra.mxu0 %v5187
    %v5209 = vpop.f32.mrf.mxu0
    %v5210 = vadd.f32 0.0, %v5209
    %5211 = vmatmul.f32.gmra.mxu0 %v5190
    %v5212 = vpop.f32.mrf.mxu0
    %v5213 = vadd.f32 0.0, %v5212
    %5214 = vdwg.mxu0
    %v5215 = vadd.f32 %v5151, %v5210
    %v5216 = vadd.f32 %v5152, %v5213
    %v5217 = vld [vmem:[%s3 + $0x70] sm:$0xff]
    %v5218 = vld [vmem:[%s3 + $0x78] sm:$0xff]
    %v5220 = vsel %vm4775, %v5217, 0
    %v5223 = vsel %vm4775, %v5218, 0
    %5225 = vmatpush.msra.mxu0 0.0
    %5226 = vmatpush.msra.mxu0 0.0
    %5227 = vmatpush.msra.mxu0 0.0
    %5228 = vmatpush.msra.mxu0 0.0
    %5229 = vmatpush.msra.mxu0 0.0
    %5230 = vmatpush.msra.mxu0 0.0
    %5231 = vmatpush.msra.mxu0 0.0
    %5232 = vmatpush.msra.mxu0 0.0
    %5233 = vmatpush.msra.mxu0 0.0
    %5234 = vmatpush.msra.mxu0 0.0
    %5235 = vmatpush.msra.mxu0 0.0
    %5236 = vmatpush.msra.mxu0 0.0
    %5237 = vmatpush.msra.mxu0 %v4772
    %5238 = vmatpush.msra.mxu0 %v4771
    %5239 = vmatpush.msra.mxu0 %v4770
    %5240 = vmatpush.msra.mxu0 %v4769
    %5241 = vmatmul.f32.gmra.mxu0 %v5220
    %v5242 = vpop.f32.mrf.mxu0
    %v5243 = vadd.f32 0.0, %v5242
    %5244 = vmatmul.f32.gmra.mxu0 %v5223
    %v5245 = vpop.f32.mrf.mxu0
    %v5246 = vadd.f32 0.0, %v5245
    %5247 = vdwg.mxu0
    %s5248 = scalar_lea.vmem %s9, 56
    %v5249 = vld [vmem:[%s5248] sm:$0xff]
    %v5251 = vsel %vm1592, %v5243, 0
    %v5254 = vsel %vm1592, %v5246, 0
    %5256 = vmatpush.msra.mxu0 0.0
    %5257 = vmatpush.msra.mxu0 0.0
    %5258 = vmatpush.msra.mxu0 0.0
    %5259 = vmatpush.msra.mxu0 0.0
    %5260 = vmatpush.msra.mxu0 0.0
    %5261 = vmatpush.msra.mxu0 0.0
    %5262 = vmatpush.msra.mxu0 0.0
    %5263 = vmatpush.msra.mxu0 0.0
    %5264 = vmatpush.msra.mxu0 0.0
    %5265 = vmatpush.msra.mxu0 0.0
    %5266 = vmatpush.msra.mxu0 0.0
    %5267 = vmatpush.msra.mxu0 0.0
    %5268 = vmatpush.msra.mxu0 0.0
    %5269 = vmatpush.msra.mxu0 0.0
    %5270 = vmatpush.msra.mxu0 0.0
    %5271 = vmatpush.msra.mxu0 %v5249
    %5272 = vmatmul.f32.gmra.mxu0 %v5251
    %v5273 = vpop.f32.mrf.mxu0
    %v5274 = vadd.f32 0.0, %v5273
    %5275 = vmatmul.f32.gmra.mxu0 %v5254
    %v5276 = vpop.f32.mrf.mxu0
    %v5277 = vadd.f32 0.0, %v5276
    %5278 = vdwg.mxu0
    %v5279 = vadd.f32 %v5215, %v5274
    %v5280 = vadd.f32 %v5216, %v5277
    %v5281 = vld [vmem:[%s3 + $0x80] sm:$0xff]
    %v5282 = vld [vmem:[%s3 + $0x88] sm:$0xff]
    %v5284 = vsel %vm4775, %v5281, 0
    %v5287 = vsel %vm4775, %v5282, 0
    %5289 = vmatpush.msra.mxu0 0.0
    %5290 = vmatpush.msra.mxu0 0.0
    %5291 = vmatpush.msra.mxu0 0.0
    %5292 = vmatpush.msra.mxu0 0.0
    %5293 = vmatpush.msra.mxu0 0.0
    %5294 = vmatpush.msra.mxu0 0.0
    %5295 = vmatpush.msra.mxu0 0.0
    %5296 = vmatpush.msra.mxu0 0.0
    %5297 = vmatpush.msra.mxu0 0.0
    %5298 = vmatpush.msra.mxu0 0.0
    %5299 = vmatpush.msra.mxu0 0.0
    %5300 = vmatpush.msra.mxu0 0.0
    %5301 = vmatpush.msra.mxu0 %v4772
    %5302 = vmatpush.msra.mxu0 %v4771
    %5303 = vmatpush.msra.mxu0 %v4770
    %5304 = vmatpush.msra.mxu0 %v4769
    %5305 = vmatmul.f32.gmra.mxu0 %v5284
    %v5306 = vpop.f32.mrf.mxu0
    %v5307 = vadd.f32 0.0, %v5306
    %5308 = vmatmul.f32.gmra.mxu0 %v5287
    %v5309 = vpop.f32.mrf.mxu0
    %v5310 = vadd.f32 0.0, %v5309
    %5311 = vdwg.mxu0
    %s5312 = scalar_lea.vmem %s9, 64
    %v5313 = vld [vmem:[%s5312] sm:$0xff]
    %v5315 = vsel %vm1592, %v5307, 0
    %v5318 = vsel %vm1592, %v5310, 0
    %5320 = vmatpush.msra.mxu0 0.0
    %5321 = vmatpush.msra.mxu0 0.0
    %5322 = vmatpush.msra.mxu0 0.0
    %5323 = vmatpush.msra.mxu0 0.0
    %5324 = vmatpush.msra.mxu0 0.0
    %5325 = vmatpush.msra.mxu0 0.0
    %5326 = vmatpush.msra.mxu0 0.0
    %5327 = vmatpush.msra.mxu0 0.0
    %5328 = vmatpush.msra.mxu0 0.0
    %5329 = vmatpush.msra.mxu0 0.0
    %5330 = vmatpush.msra.mxu0 0.0
    %5331 = vmatpush.msra.mxu0 0.0
    %5332 = vmatpush.msra.mxu0 0.0
    %5333 = vmatpush.msra.mxu0 0.0
    %5334 = vmatpush.msra.mxu0 0.0
    %5335 = vmatpush.msra.mxu0 %v5313
    %5336 = vmatmul.f32.gmra.mxu0 %v5315
    %v5337 = vpop.f32.mrf.mxu0
    %v5338 = vadd.f32 0.0, %v5337
    %5339 = vmatmul.f32.gmra.mxu0 %v5318
    %v5340 = vpop.f32.mrf.mxu0
    %v5341 = vadd.f32 0.0, %v5340
    %5342 = vdwg.mxu0
    %v5343 = vadd.f32 %v5279, %v5338
    %v5344 = vadd.f32 %v5280, %v5341
    %v5346 = vperm.slane %v4768, 0
    %v5348 = vadd.f32 %v5343, %v5346
    %v5349 = vadd.f32 %v5344, %v5346
    %v5350 = vmax.f32 %v5348, 0.0
    %v5351 = vmax.f32 %v5349, 0.0
    %5352 = vst.msk [vmem:[#allocation4] sm:$0xff] %vm1592, %v5350
    %5353 = vst.msk [vmem:[#allocation4 + $0x8] sm:$0xff] %vm1592, %v5351
    %v5354 = vld [vmem:[#allocation3 + $0x20] sm:$0xff]
    %v5355 = vld [vmem:[#allocation3 + $0x28] sm:$0xff]
    %v5356 = vld [vmem:[#allocation3 + $0x30] sm:$0xff]
    %v5357 = vld [vmem:[#allocation3 + $0x38] sm:$0xff]
    %v5358 = vld [vmem:[%s3] sm:$0xff]
    %v5359 = vld [vmem:[%s3 + $0x8] sm:$0xff]
    %v5361 = vsel %vm4775, %v5358, 0
    %v5364 = vsel %vm4775, %v5359, 0
    %5366 = vmatpush.msra.mxu0 0.0
    %5367 = vmatpush.msra.mxu0 0.0
    %5368 = vmatpush.msra.mxu0 0.0
    %5369 = vmatpush.msra.mxu0 0.0
    %5370 = vmatpush.msra.mxu0 0.0
    %5371 = vmatpush.msra.mxu0 0.0
    %5372 = vmatpush.msra.mxu0 0.0
    %5373 = vmatpush.msra.mxu0 0.0
    %5374 = vmatpush.msra.mxu0 0.0
    %5375 = vmatpush.msra.mxu0 0.0
    %5376 = vmatpush.msra.mxu0 0.0
    %5377 = vmatpush.msra.mxu0 0.0
    %5378 = vmatpush.msra.mxu0 %v5357
    %5379 = vmatpush.msra.mxu0 %v5356
    %5380 = vmatpush.msra.mxu0 %v5355
    %5381 = vmatpush.msra.mxu0 %v5354
    %5382 = vmatmul.f32.gmra.mxu0 %v5361
    %v5383 = vpop.f32.mrf.mxu0
    %v5384 = vadd.f32 0.0, %v5383
    %5385 = vmatmul.f32.gmra.mxu0 %v5364
    %v5386 = vpop.f32.mrf.mxu0
    %v5387 = vadd.f32 0.0, %v5386
    %5388 = vdwg.mxu0
    %v5389 = vld [vmem:[%s9] sm:$0xff]
    %v5390 = vld [vmem:[%s3 + $0x10] sm:$0xff]
    %v5391 = vld [vmem:[%s3 + $0x18] sm:$0xff]
    %v5393 = vsel %vm4775, %v5390, 0
    %v5396 = vsel %vm4775, %v5391, 0
    %5398 = vmatpush.msra.mxu0 0.0
    %5399 = vmatpush.msra.mxu0 0.0
    %5400 = vmatpush.msra.mxu0 0.0
    %5401 = vmatpush.msra.mxu0 0.0
    %5402 = vmatpush.msra.mxu0 0.0
    %5403 = vmatpush.msra.mxu0 0.0
    %5404 = vmatpush.msra.mxu0 0.0
    %5405 = vmatpush.msra.mxu0 0.0
    %5406 = vmatpush.msra.mxu0 0.0
    %5407 = vmatpush.msra.mxu0 0.0
    %5408 = vmatpush.msra.mxu0 0.0
    %5409 = vmatpush.msra.mxu0 0.0
    %5410 = vmatpush.msra.mxu0 %v5357
    %5411 = vmatpush.msra.mxu0 %v5356
    %5412 = vmatpush.msra.mxu0 %v5355
    %5413 = vmatpush.msra.mxu0 %v5354
    %5414 = vmatmul.f32.gmra.mxu0 %v5393
    %v5415 = vpop.f32.mrf.mxu0
    %v5416 = vadd.f32 0.0, %v5415
    %5417 = vmatmul.f32.gmra.mxu0 %v5396
    %v5418 = vpop.f32.mrf.mxu0
    %v5419 = vadd.f32 0.0, %v5418
    %5420 = vdwg.mxu0
    %v5421 = vld [vmem:[%s4837] sm:$0xff]
    %v5423 = vsel %vm1592, %v5416, 0
    %v5426 = vsel %vm1592, %v5419, 0
    %5428 = vmatpush.msra.mxu0 0.0
    %5429 = vmatpush.msra.mxu0 0.0
    %5430 = vmatpush.msra.mxu0 0.0
    %5431 = vmatpush.msra.mxu0 0.0
    %5432 = vmatpush.msra.mxu0 0.0
    %5433 = vmatpush.msra.mxu0 0.0
    %5434 = vmatpush.msra.mxu0 0.0
    %5435 = vmatpush.msra.mxu0 0.0
    %5436 = vmatpush.msra.mxu0 0.0
    %5437 = vmatpush.msra.mxu0 0.0
    %5438 = vmatpush.msra.mxu0 0.0
    %5439 = vmatpush.msra.mxu0 0.0
    %5440 = vmatpush.msra.mxu0 0.0
    %5441 = vmatpush.msra.mxu0 0.0
    %5442 = vmatpush.msra.mxu0 0.0
    %5443 = vmatpush.msra.mxu0 %v5421
    %5444 = vmatmul.f32.gmra.mxu0 %v5423
    %v5445 = vpop.f32.mrf.mxu0
    %v5446 = vadd.f32 0.0, %v5445
    %5447 = vmatmul.f32.gmra.mxu0 %v5426
    %v5448 = vpop.f32.mrf.mxu0
    %v5449 = vadd.f32 0.0, %v5448
    %5450 = vdwg.mxu0
    %v5452 = vsel %vm1592, %v5384, 0
    %v5455 = vsel %vm1592, %v5387, 0
    %5457 = vmatpush.msra.mxu0 0.0
    %5458 = vmatpush.msra.mxu0 0.0
    %5459 = vmatpush.msra.mxu0 0.0
    %5460 = vmatpush.msra.mxu0 0.0
    %5461 = vmatpush.msra.mxu0 0.0
    %5462 = vmatpush.msra.mxu0 0.0
    %5463 = vmatpush.msra.mxu0 0.0
    %5464 = vmatpush.msra.mxu0 0.0
    %5465 = vmatpush.msra.mxu0 0.0
    %5466 = vmatpush.msra.mxu0 0.0
    %5467 = vmatpush.msra.mxu0 0.0
    %5468 = vmatpush.msra.mxu0 0.0
    %5469 = vmatpush.msra.mxu0 0.0
    %5470 = vmatpush.msra.mxu0 0.0
    %5471 = vmatpush.msra.mxu0 0.0
    %5472 = vmatpush.msra.mxu0 %v5389
    %5473 = vmatmul.f32.gmra.mxu0 %v5452
    %v5474 = vpop.f32.mrf.mxu0
    %v5475 = vadd.f32 %v5446, %v5474
    %5476 = vmatmul.f32.gmra.mxu0 %v5455
    %v5477 = vpop.f32.mrf.mxu0
    %v5478 = vadd.f32 %v5449, %v5477
    %5479 = vdwg.mxu0
    %v5480 = vld [vmem:[%s3 + $0x20] sm:$0xff]
    %v5481 = vld [vmem:[%s3 + $0x28] sm:$0xff]
    %v5483 = vsel %vm4775, %v5480, 0
    %v5486 = vsel %vm4775, %v5481, 0
    %5488 = vmatpush.msra.mxu0 0.0
    %5489 = vmatpush.msra.mxu0 0.0
    %5490 = vmatpush.msra.mxu0 0.0
    %5491 = vmatpush.msra.mxu0 0.0
    %5492 = vmatpush.msra.mxu0 0.0
    %5493 = vmatpush.msra.mxu0 0.0
    %5494 = vmatpush.msra.mxu0 0.0
    %5495 = vmatpush.msra.mxu0 0.0
    %5496 = vmatpush.msra.mxu0 0.0
    %5497 = vmatpush.msra.mxu0 0.0
    %5498 = vmatpush.msra.mxu0 0.0
    %5499 = vmatpush.msra.mxu0 0.0
    %5500 = vmatpush.msra.mxu0 %v5357
    %5501 = vmatpush.msra.mxu0 %v5356
    %5502 = vmatpush.msra.mxu0 %v5355
    %5503 = vmatpush.msra.mxu0 %v5354
    %5504 = vmatmul.f32.gmra.mxu0 %v5483
    %v5505 = vpop.f32.mrf.mxu0
    %v5506 = vadd.f32 0.0, %v5505
    %5507 = vmatmul.f32.gmra.mxu0 %v5486
    %v5508 = vpop.f32.mrf.mxu0
    %v5509 = vadd.f32 0.0, %v5508
    %5510 = vdwg.mxu0
    %v5511 = vld [vmem:[%s4928] sm:$0xff]
    %v5513 = vsel %vm1592, %v5506, 0
    %v5516 = vsel %vm1592, %v5509, 0
    %5518 = vmatpush.msra.mxu0 0.0
    %5519 = vmatpush.msra.mxu0 0.0
    %5520 = vmatpush.msra.mxu0 0.0
    %5521 = vmatpush.msra.mxu0 0.0
    %5522 = vmatpush.msra.mxu0 0.0
    %5523 = vmatpush.msra.mxu0 0.0
    %5524 = vmatpush.msra.mxu0 0.0
    %5525 = vmatpush.msra.mxu0 0.0
    %5526 = vmatpush.msra.mxu0 0.0
    %5527 = vmatpush.msra.mxu0 0.0
    %5528 = vmatpush.msra.mxu0 0.0
    %5529 = vmatpush.msra.mxu0 0.0
    %5530 = vmatpush.msra.mxu0 0.0
    %5531 = vmatpush.msra.mxu0 0.0
    %5532 = vmatpush.msra.mxu0 0.0
    %5533 = vmatpush.msra.mxu0 %v5511
    %5534 = vmatmul.f32.gmra.mxu0 %v5513
    %v5535 = vpop.f32.mrf.mxu0
    %v5536 = vadd.f32 0.0, %v5535
    %5537 = vmatmul.f32.gmra.mxu0 %v5516
    %v5538 = vpop.f32.mrf.mxu0
    %v5539 = vadd.f32 0.0, %v5538
    %5540 = vdwg.mxu0
    %v5541 = vadd.f32 %v5475, %v5536
    %v5542 = vadd.f32 %v5478, %v5539
    %v5543 = vld [vmem:[%s3 + $0x30] sm:$0xff]
    %v5544 = vld [vmem:[%s3 + $0x38] sm:$0xff]
    %v5546 = vsel %vm4775, %v5543, 0
    %v5549 = vsel %vm4775, %v5544, 0
    %5551 = vmatpush.msra.mxu0 0.0
    %5552 = vmatpush.msra.mxu0 0.0
    %5553 = vmatpush.msra.mxu0 0.0
    %5554 = vmatpush.msra.mxu0 0.0
    %5555 = vmatpush.msra.mxu0 0.0
    %5556 = vmatpush.msra.mxu0 0.0
    %5557 = vmatpush.msra.mxu0 0.0
    %5558 = vmatpush.msra.mxu0 0.0
    %5559 = vmatpush.msra.mxu0 0.0
    %5560 = vmatpush.msra.mxu0 0.0
    %5561 = vmatpush.msra.mxu0 0.0
    %5562 = vmatpush.msra.mxu0 0.0
    %5563 = vmatpush.msra.mxu0 %v5357
    %5564 = vmatpush.msra.mxu0 %v5356
    %5565 = vmatpush.msra.mxu0 %v5355
    %5566 = vmatpush.msra.mxu0 %v5354
    %5567 = vmatmul.f32.gmra.mxu0 %v5546
    %v5568 = vpop.f32.mrf.mxu0
    %v5569 = vadd.f32 0.0, %v5568
    %5570 = vmatmul.f32.gmra.mxu0 %v5549
    %v5571 = vpop.f32.mrf.mxu0
    %v5572 = vadd.f32 0.0, %v5571
    %5573 = vdwg.mxu0
    %v5574 = vld [vmem:[%s4992] sm:$0xff]
    %v5576 = vsel %vm1592, %v5569, 0
    %v5579 = vsel %vm1592, %v5572, 0
    %5581 = vmatpush.msra.mxu0 0.0
    %5582 = vmatpush.msra.mxu0 0.0
    %5583 = vmatpush.msra.mxu0 0.0
    %5584 = vmatpush.msra.mxu0 0.0
    %5585 = vmatpush.msra.mxu0 0.0
    %5586 = vmatpush.msra.mxu0 0.0
    %5587 = vmatpush.msra.mxu0 0.0
    %5588 = vmatpush.msra.mxu0 0.0
    %5589 = vmatpush.msra.mxu0 0.0
    %5590 = vmatpush.msra.mxu0 0.0
    %5591 = vmatpush.msra.mxu0 0.0
    %5592 = vmatpush.msra.mxu0 0.0
    %5593 = vmatpush.msra.mxu0 0.0
    %5594 = vmatpush.msra.mxu0 0.0
    %5595 = vmatpush.msra.mxu0 0.0
    %5596 = vmatpush.msra.mxu0 %v5574
    %5597 = vmatmul.f32.gmra.mxu0 %v5576
    %v5598 = vpop.f32.mrf.mxu0
    %v5599 = vadd.f32 0.0, %v5598
    %5600 = vmatmul.f32.gmra.mxu0 %v5579
    %v5601 = vpop.f32.mrf.mxu0
    %v5602 = vadd.f32 0.0, %v5601
    %5603 = vdwg.mxu0
    %v5604 = vadd.f32 %v5541, %v5599
    %v5605 = vadd.f32 %v5542, %v5602
    %v5606 = vld [vmem:[%s3 + $0x40] sm:$0xff]
    %v5607 = vld [vmem:[%s3 + $0x48] sm:$0xff]
    %v5609 = vsel %vm4775, %v5606, 0
    %v5612 = vsel %vm4775, %v5607, 0
    %5614 = vmatpush.msra.mxu0 0.0
    %5615 = vmatpush.msra.mxu0 0.0
    %5616 = vmatpush.msra.mxu0 0.0
    %5617 = vmatpush.msra.mxu0 0.0
    %5618 = vmatpush.msra.mxu0 0.0
    %5619 = vmatpush.msra.mxu0 0.0
    %5620 = vmatpush.msra.mxu0 0.0
    %5621 = vmatpush.msra.mxu0 0.0
    %5622 = vmatpush.msra.mxu0 0.0
    %5623 = vmatpush.msra.mxu0 0.0
    %5624 = vmatpush.msra.mxu0 0.0
    %5625 = vmatpush.msra.mxu0 0.0
    %5626 = vmatpush.msra.mxu0 %v5357
    %5627 = vmatpush.msra.mxu0 %v5356
    %5628 = vmatpush.msra.mxu0 %v5355
    %5629 = vmatpush.msra.mxu0 %v5354
    %5630 = vmatmul.f32.gmra.mxu0 %v5609
    %v5631 = vpop.f32.mrf.mxu0
    %v5632 = vadd.f32 0.0, %v5631
    %5633 = vmatmul.f32.gmra.mxu0 %v5612
    %v5634 = vpop.f32.mrf.mxu0
    %v5635 = vadd.f32 0.0, %v5634
    %5636 = vdwg.mxu0
    %v5637 = vld [vmem:[%s5056] sm:$0xff]
    %v5639 = vsel %vm1592, %v5632, 0
    %v5642 = vsel %vm1592, %v5635, 0
    %5644 = vmatpush.msra.mxu0 0.0
    %5645 = vmatpush.msra.mxu0 0.0
    %5646 = vmatpush.msra.mxu0 0.0
    %5647 = vmatpush.msra.mxu0 0.0
    %5648 = vmatpush.msra.mxu0 0.0
    %5649 = vmatpush.msra.mxu0 0.0
    %5650 = vmatpush.msra.mxu0 0.0
    %5651 = vmatpush.msra.mxu0 0.0
    %5652 = vmatpush.msra.mxu0 0.0
    %5653 = vmatpush.msra.mxu0 0.0
    %5654 = vmatpush.msra.mxu0 0.0
    %5655 = vmatpush.msra.mxu0 0.0
    %5656 = vmatpush.msra.mxu0 0.0
    %5657 = vmatpush.msra.mxu0 0.0
    %5658 = vmatpush.msra.mxu0 0.0
    %5659 = vmatpush.msra.mxu0 %v5637
    %5660 = vmatmul.f32.gmra.mxu0 %v5639
    %v5661 = vpop.f32.mrf.mxu0
    %v5662 = vadd.f32 0.0, %v5661
    %5663 = vmatmul.f32.gmra.mxu0 %v5642
    %v5664 = vpop.f32.mrf.mxu0
    %v5665 = vadd.f32 0.0, %v5664
    %5666 = vdwg.mxu0
    %v5667 = vadd.f32 %v5604, %v5662
    %v5668 = vadd.f32 %v5605, %v5665
    %v5669 = vld [vmem:[%s3 + $0x50] sm:$0xff]
    %v5670 = vld [vmem:[%s3 + $0x58] sm:$0xff]
    %v5672 = vsel %vm4775, %v5669, 0
    %v5675 = vsel %vm4775, %v5670, 0
    %5677 = vmatpush.msra.mxu0 0.0
    %5678 = vmatpush.msra.mxu0 0.0
    %5679 = vmatpush.msra.mxu0 0.0
    %5680 = vmatpush.msra.mxu0 0.0
    %5681 = vmatpush.msra.mxu0 0.0
    %5682 = vmatpush.msra.mxu0 0.0
    %5683 = vmatpush.msra.mxu0 0.0
    %5684 = vmatpush.msra.mxu0 0.0
    %5685 = vmatpush.msra.mxu0 0.0
    %5686 = vmatpush.msra.mxu0 0.0
    %5687 = vmatpush.msra.mxu0 0.0
    %5688 = vmatpush.msra.mxu0 0.0
    %5689 = vmatpush.msra.mxu0 %v5357
    %5690 = vmatpush.msra.mxu0 %v5356
    %5691 = vmatpush.msra.mxu0 %v5355
    %5692 = vmatpush.msra.mxu0 %v5354
    %5693 = vmatmul.f32.gmra.mxu0 %v5672
    %v5694 = vpop.f32.mrf.mxu0
    %v5695 = vadd.f32 0.0, %v5694
    %5696 = vmatmul.f32.gmra.mxu0 %v5675
    %v5697 = vpop.f32.mrf.mxu0
    %v5698 = vadd.f32 0.0, %v5697
    %5699 = vdwg.mxu0
    %v5700 = vld [vmem:[%s5120] sm:$0xff]
    %v5702 = vsel %vm1592, %v5695, 0
    %v5705 = vsel %vm1592, %v5698, 0
    %5707 = vmatpush.msra.mxu0 0.0
    %5708 = vmatpush.msra.mxu0 0.0
    %5709 = vmatpush.msra.mxu0 0.0
    %5710 = vmatpush.msra.mxu0 0.0
    %5711 = vmatpush.msra.mxu0 0.0
    %5712 = vmatpush.msra.mxu0 0.0
    %5713 = vmatpush.msra.mxu0 0.0
    %5714 = vmatpush.msra.mxu0 0.0
    %5715 = vmatpush.msra.mxu0 0.0
    %5716 = vmatpush.msra.mxu0 0.0
    %5717 = vmatpush.msra.mxu0 0.0
    %5718 = vmatpush.msra.mxu0 0.0
    %5719 = vmatpush.msra.mxu0 0.0
    %5720 = vmatpush.msra.mxu0 0.0
    %5721 = vmatpush.msra.mxu0 0.0
    %5722 = vmatpush.msra.mxu0 %v5700
    %5723 = vmatmul.f32.gmra.mxu0 %v5702
    %v5724 = vpop.f32.mrf.mxu0
    %v5725 = vadd.f32 0.0, %v5724
    %5726 = vmatmul.f32.gmra.mxu0 %v5705
    %v5727 = vpop.f32.mrf.mxu0
    %v5728 = vadd.f32 0.0, %v5727
    %5729 = vdwg.mxu0
    %v5730 = vadd.f32 %v5667, %v5725
    %v5731 = vadd.f32 %v5668, %v5728
    %v5732 = vld [vmem:[%s3 + $0x60] sm:$0xff]
    %v5733 = vld [vmem:[%s3 + $0x68] sm:$0xff]
    %v5735 = vsel %vm4775, %v5732, 0
    %v5738 = vsel %vm4775, %v5733, 0
    %5740 = vmatpush.msra.mxu0 0.0
    %5741 = vmatpush.msra.mxu0 0.0
    %5742 = vmatpush.msra.mxu0 0.0
    %5743 = vmatpush.msra.mxu0 0.0
    %5744 = vmatpush.msra.mxu0 0.0
    %5745 = vmatpush.msra.mxu0 0.0
    %5746 = vmatpush.msra.mxu0 0.0
    %5747 = vmatpush.msra.mxu0 0.0
    %5748 = vmatpush.msra.mxu0 0.0
    %5749 = vmatpush.msra.mxu0 0.0
    %5750 = vmatpush.msra.mxu0 0.0
    %5751 = vmatpush.msra.mxu0 0.0
    %5752 = vmatpush.msra.mxu0 %v5357
    %5753 = vmatpush.msra.mxu0 %v5356
    %5754 = vmatpush.msra.mxu0 %v5355
    %5755 = vmatpush.msra.mxu0 %v5354
    %5756 = vmatmul.f32.gmra.mxu0 %v5735
    %v5757 = vpop.f32.mrf.mxu0
    %v5758 = vadd.f32 0.0, %v5757
    %5759 = vmatmul.f32.gmra.mxu0 %v5738
    %v5760 = vpop.f32.mrf.mxu0
    %v5761 = vadd.f32 0.0, %v5760
    %5762 = vdwg.mxu0
    %v5763 = vld [vmem:[%s5184] sm:$0xff]
    %v5765 = vsel %vm1592, %v5758, 0
    %v5768 = vsel %vm1592, %v5761, 0
    %5770 = vmatpush.msra.mxu0 0.0
    %5771 = vmatpush.msra.mxu0 0.0
    %5772 = vmatpush.msra.mxu0 0.0
    %5773 = vmatpush.msra.mxu0 0.0
    %5774 = vmatpush.msra.mxu0 0.0
    %5775 = vmatpush.msra.mxu0 0.0
    %5776 = vmatpush.msra.mxu0 0.0
    %5777 = vmatpush.msra.mxu0 0.0
    %5778 = vmatpush.msra.mxu0 0.0
    %5779 = vmatpush.msra.mxu0 0.0
    %5780 = vmatpush.msra.mxu0 0.0
    %5781 = vmatpush.msra.mxu0 0.0
    %5782 = vmatpush.msra.mxu0 0.0
    %5783 = vmatpush.msra.mxu0 0.0
    %5784 = vmatpush.msra.mxu0 0.0
    %5785 = vmatpush.msra.mxu0 %v5763
    %5786 = vmatmul.f32.gmra.mxu0 %v5765
    %v5787 = vpop.f32.mrf.mxu0
    %v5788 = vadd.f32 0.0, %v5787
    %5789 = vmatmul.f32.gmra.mxu0 %v5768
    %v5790 = vpop.f32.mrf.mxu0
    %v5791 = vadd.f32 0.0, %v5790
    %5792 = vdwg.mxu0
    %v5793 = vadd.f32 %v5730, %v5788
    %v5794 = vadd.f32 %v5731, %v5791
    %v5795 = vld [vmem:[%s3 + $0x70] sm:$0xff]
    %v5796 = vld [vmem:[%s3 + $0x78] sm:$0xff]
    %v5798 = vsel %vm4775, %v5795, 0
    %v5801 = vsel %vm4775, %v5796, 0
    %5803 = vmatpush.msra.mxu0 0.0
    %5804 = vmatpush.msra.mxu0 0.0
    %5805 = vmatpush.msra.mxu0 0.0
    %5806 = vmatpush.msra.mxu0 0.0
    %5807 = vmatpush.msra.mxu0 0.0
    %5808 = vmatpush.msra.mxu0 0.0
    %5809 = vmatpush.msra.mxu0 0.0
    %5810 = vmatpush.msra.mxu0 0.0
    %5811 = vmatpush.msra.mxu0 0.0
    %5812 = vmatpush.msra.mxu0 0.0
    %5813 = vmatpush.msra.mxu0 0.0
    %5814 = vmatpush.msra.mxu0 0.0
    %5815 = vmatpush.msra.mxu0 %v5357
    %5816 = vmatpush.msra.mxu0 %v5356
    %5817 = vmatpush.msra.mxu0 %v5355
    %5818 = vmatpush.msra.mxu0 %v5354
    %5819 = vmatmul.f32.gmra.mxu0 %v5798
    %v5820 = vpop.f32.mrf.mxu0
    %v5821 = vadd.f32 0.0, %v5820
    %5822 = vmatmul.f32.gmra.mxu0 %v5801
    %v5823 = vpop.f32.mrf.mxu0
    %v5824 = vadd.f32 0.0, %v5823
    %5825 = vdwg.mxu0
    %v5826 = vld [vmem:[%s5248] sm:$0xff]
    %v5828 = vsel %vm1592, %v5821, 0
    %v5831 = vsel %vm1592, %v5824, 0
    %5833 = vmatpush.msra.mxu0 0.0
    %5834 = vmatpush.msra.mxu0 0.0
    %5835 = vmatpush.msra.mxu0 0.0
    %5836 = vmatpush.msra.mxu0 0.0
    %5837 = vmatpush.msra.mxu0 0.0
    %5838 = vmatpush.msra.mxu0 0.0
    %5839 = vmatpush.msra.mxu0 0.0
    %5840 = vmatpush.msra.mxu0 0.0
    %5841 = vmatpush.msra.mxu0 0.0
    %5842 = vmatpush.msra.mxu0 0.0
    %5843 = vmatpush.msra.mxu0 0.0
    %5844 = vmatpush.msra.mxu0 0.0
    %5845 = vmatpush.msra.mxu0 0.0
    %5846 = vmatpush.msra.mxu0 0.0
    %5847 = vmatpush.msra.mxu0 0.0
    %5848 = vmatpush.msra.mxu0 %v5826
    %5849 = vmatmul.f32.gmra.mxu0 %v5828
    %v5850 = vpop.f32.mrf.mxu0
    %v5851 = vadd.f32 0.0, %v5850
    %5852 = vmatmul.f32.gmra.mxu0 %v5831
    %v5853 = vpop.f32.mrf.mxu0
    %v5854 = vadd.f32 0.0, %v5853
    %5855 = vdwg.mxu0
    %v5856 = vadd.f32 %v5793, %v5851
    %v5857 = vadd.f32 %v5794, %v5854
    %v5858 = vld [vmem:[%s3 + $0x80] sm:$0xff]
    %v5859 = vld [vmem:[%s3 + $0x88] sm:$0xff]
    %v5861 = vsel %vm4775, %v5858, 0
    %v5864 = vsel %vm4775, %v5859, 0
    %5866 = vmatpush.msra.mxu0 0.0
    %5867 = vmatpush.msra.mxu0 0.0
    %5868 = vmatpush.msra.mxu0 0.0
    %5869 = vmatpush.msra.mxu0 0.0
    %5870 = vmatpush.msra.mxu0 0.0
    %5871 = vmatpush.msra.mxu0 0.0
    %5872 = vmatpush.msra.mxu0 0.0
    %5873 = vmatpush.msra.mxu0 0.0
    %5874 = vmatpush.msra.mxu0 0.0
    %5875 = vmatpush.msra.mxu0 0.0
    %5876 = vmatpush.msra.mxu0 0.0
    %5877 = vmatpush.msra.mxu0 0.0
    %5878 = vmatpush.msra.mxu0 %v5357
    %5879 = vmatpush.msra.mxu0 %v5356
    %5880 = vmatpush.msra.mxu0 %v5355
    %5881 = vmatpush.msra.mxu0 %v5354
    %5882 = vmatmul.f32.gmra.mxu0 %v5861
    %v5883 = vpop.f32.mrf.mxu0
    %v5884 = vadd.f32 0.0, %v5883
    %5885 = vmatmul.f32.gmra.mxu0 %v5864
    %v5886 = vpop.f32.mrf.mxu0
    %v5887 = vadd.f32 0.0, %v5886
    %5888 = vdwg.mxu0
    %v5889 = vld [vmem:[%s5312] sm:$0xff]
    %v5891 = vsel %vm1592, %v5884, 0
    %v5894 = vsel %vm1592, %v5887, 0
    %5896 = vmatpush.msra.mxu0 0.0
    %5897 = vmatpush.msra.mxu0 0.0
    %5898 = vmatpush.msra.mxu0 0.0
    %5899 = vmatpush.msra.mxu0 0.0
    %5900 = vmatpush.msra.mxu0 0.0
    %5901 = vmatpush.msra.mxu0 0.0
    %5902 = vmatpush.msra.mxu0 0.0
    %5903 = vmatpush.msra.mxu0 0.0
    %5904 = vmatpush.msra.mxu0 0.0
    %5905 = vmatpush.msra.mxu0 0.0
    %5906 = vmatpush.msra.mxu0 0.0
    %5907 = vmatpush.msra.mxu0 0.0
    %5908 = vmatpush.msra.mxu0 0.0
    %5909 = vmatpush.msra.mxu0 0.0
    %5910 = vmatpush.msra.mxu0 0.0
    %5911 = vmatpush.msra.mxu0 %v5889
    %5912 = vmatmul.f32.gmra.mxu0 %v5891
    %v5913 = vpop.f32.mrf.mxu0
    %v5914 = vadd.f32 0.0, %v5913
    %5915 = vmatmul.f32.gmra.mxu0 %v5894
    %v5916 = vpop.f32.mrf.mxu0
    %v5917 = vadd.f32 0.0, %v5916
    %5918 = vdwg.mxu0
    %v5919 = vadd.f32 %v5856, %v5914
    %v5920 = vadd.f32 %v5857, %v5917
    %v5921 = vadd.f32 %v5919, %v5346
    %v5922 = vadd.f32 %v5920, %v5346
    %v5923 = vmax.f32 %v5921, 0.0
    %v5924 = vmax.f32 %v5922, 0.0
    %5925 = vst.msk [vmem:[#allocation4 + $0x10] sm:$0xff] %vm1592, %v5923
    %5926 = vst.msk [vmem:[#allocation4 + $0x18] sm:$0xff] %vm1592, %v5924
    %v5927 = vld [vmem:[%s12] sm:$0x1]
    %v5928 = vld [vmem:[#allocation4] sm:$0xff]
    %v5929 = vld [vmem:[#allocation4 + $0x8] sm:$0xff]
    %v5930 = vld [vmem:[%s4] sm:$0xff]
    %vm5931 = vcmask 130048
    %v5933 = vsel %vm5931, %v5930, 0
    %5935 = vmatpush.msra.mxu0 0.0
    %5936 = vmatpush.msra.mxu0 0.0
    %5937 = vmatpush.msra.mxu0 0.0
    %5938 = vmatpush.msra.mxu0 0.0
    %5939 = vmatpush.msra.mxu0 0.0
    %5940 = vmatpush.msra.mxu0 0.0
    %5941 = vmatpush.msra.mxu0 0.0
    %5942 = vmatpush.msra.mxu0 0.0
    %5943 = vmatpush.msra.mxu0 0.0
    %5944 = vmatpush.msra.mxu0 0.0
    %5945 = vmatpush.msra.mxu0 0.0
    %5946 = vmatpush.msra.mxu0 0.0
    %5947 = vmatpush.msra.mxu0 0.0
    %5948 = vmatpush.msra.mxu0 0.0
    %5949 = vmatpush.msra.mxu0 %v5929
    %5950 = vmatpush.msra.mxu0 %v5928
    %5951 = vmatmul.f32.gmra.mxu0 %v5933
    %v5952 = vpop.f32.mrf.mxu0
    %v5953 = vadd.f32 0.0, %v5952
    %5954 = vdwg.mxu0
    %v5955 = vld [vmem:[%s11] sm:$0xff]
    %v5956 = vld [vmem:[%s4 + $0x8] sm:$0xff]
    %v5958 = vsel %vm5931, %v5956, 0
    %5960 = vmatpush.msra.mxu0 0.0
    %5961 = vmatpush.msra.mxu0 0.0
    %5962 = vmatpush.msra.mxu0 0.0
    %5963 = vmatpush.msra.mxu0 0.0
    %5964 = vmatpush.msra.mxu0 0.0
    %5965 = vmatpush.msra.mxu0 0.0
    %5966 = vmatpush.msra.mxu0 0.0
    %5967 = vmatpush.msra.mxu0 0.0
    %5968 = vmatpush.msra.mxu0 0.0
    %5969 = vmatpush.msra.mxu0 0.0
    %5970 = vmatpush.msra.mxu0 0.0
    %5971 = vmatpush.msra.mxu0 0.0
    %5972 = vmatpush.msra.mxu0 0.0
    %5973 = vmatpush.msra.mxu0 0.0
    %5974 = vmatpush.msra.mxu0 %v5929
    %5975 = vmatpush.msra.mxu0 %v5928
    %5976 = vmatmul.f32.gmra.mxu0 %v5958
    %v5977 = vpop.f32.mrf.mxu0
    %v5978 = vadd.f32 0.0, %v5977
    %5979 = vdwg.mxu0
    %s5980 = scalar_lea.vmem %s11, 8
    %v5981 = vld [vmem:[%s5980] sm:$0xff]
    %v5983 = vsel %vm1592, %v5978, 0
    %5985 = vmatpush.msra.mxu0 0.0
    %5986 = vmatpush.msra.mxu0 0.0
    %5987 = vmatpush.msra.mxu0 0.0
    %5988 = vmatpush.msra.mxu0 0.0
    %5989 = vmatpush.msra.mxu0 0.0
    %5990 = vmatpush.msra.mxu0 0.0
    %5991 = vmatpush.msra.mxu0 0.0
    %5992 = vmatpush.msra.mxu0 0.0
    %5993 = vmatpush.msra.mxu0 0.0
    %5994 = vmatpush.msra.mxu0 0.0
    %5995 = vmatpush.msra.mxu0 0.0
    %5996 = vmatpush.msra.mxu0 0.0
    %5997 = vmatpush.msra.mxu0 0.0
    %5998 = vmatpush.msra.mxu0 0.0
    %5999 = vmatpush.msra.mxu0 0.0
    %6000 = vmatpush.msra.mxu0 %v5981
    %6001 = vmatmul.f32.gmra.mxu0 %v5983
    %v6002 = vpop.f32.mrf.mxu0
    %v6003 = vadd.f32 0.0, %v6002
    %6004 = vdwg.mxu0
    %v6006 = vsel %vm1592, %v5953, 0
    %6008 = vmatpush.msra.mxu0 0.0
    %6009 = vmatpush.msra.mxu0 0.0
    %6010 = vmatpush.msra.mxu0 0.0
    %6011 = vmatpush.msra.mxu0 0.0
    %6012 = vmatpush.msra.mxu0 0.0
    %6013 = vmatpush.msra.mxu0 0.0
    %6014 = vmatpush.msra.mxu0 0.0
    %6015 = vmatpush.msra.mxu0 0.0
    %6016 = vmatpush.msra.mxu0 0.0
    %6017 = vmatpush.msra.mxu0 0.0
    %6018 = vmatpush.msra.mxu0 0.0
    %6019 = vmatpush.msra.mxu0 0.0
    %6020 = vmatpush.msra.mxu0 0.0
    %6021 = vmatpush.msra.mxu0 0.0
    %6022 = vmatpush.msra.mxu0 0.0
    %6023 = vmatpush.msra.mxu0 %v5955
    %6024 = vmatmul.f32.gmra.mxu0 %v6006
    %v6025 = vpop.f32.mrf.mxu0
    %v6026 = vadd.f32 %v6003, %v6025
    %6027 = vdwg.mxu0
    %v6028 = vld [vmem:[%s4 + $0x10] sm:$0xff]
    %v6030 = vsel %vm5931, %v6028, 0
    %6032 = vmatpush.msra.mxu0 0.0
    %6033 = vmatpush.msra.mxu0 0.0
    %6034 = vmatpush.msra.mxu0 0.0
    %6035 = vmatpush.msra.mxu0 0.0
    %6036 = vmatpush.msra.mxu0 0.0
    %6037 = vmatpush.msra.mxu0 0.0
    %6038 = vmatpush.msra.mxu0 0.0
    %6039 = vmatpush.msra.mxu0 0.0
    %6040 = vmatpush.msra.mxu0 0.0
    %6041 = vmatpush.msra.mxu0 0.0
    %6042 = vmatpush.msra.mxu0 0.0
    %6043 = vmatpush.msra.mxu0 0.0
    %6044 = vmatpush.msra.mxu0 0.0
    %6045 = vmatpush.msra.mxu0 0.0
    %6046 = vmatpush.msra.mxu0 %v5929
    %6047 = vmatpush.msra.mxu0 %v5928
    %6048 = vmatmul.f32.gmra.mxu0 %v6030
    %v6049 = vpop.f32.mrf.mxu0
    %v6050 = vadd.f32 0.0, %v6049
    %6051 = vdwg.mxu0
    %s6052 = scalar_lea.vmem %s11, 16
    %v6053 = vld [vmem:[%s6052] sm:$0xff]
    %v6055 = vsel %vm1592, %v6050, 0
    %6057 = vmatpush.msra.mxu0 0.0
    %6058 = vmatpush.msra.mxu0 0.0
    %6059 = vmatpush.msra.mxu0 0.0
    %6060 = vmatpush.msra.mxu0 0.0
    %6061 = vmatpush.msra.mxu0 0.0
    %6062 = vmatpush.msra.mxu0 0.0
    %6063 = vmatpush.msra.mxu0 0.0
    %6064 = vmatpush.msra.mxu0 0.0
    %6065 = vmatpush.msra.mxu0 0.0
    %6066 = vmatpush.msra.mxu0 0.0
    %6067 = vmatpush.msra.mxu0 0.0
    %6068 = vmatpush.msra.mxu0 0.0
    %6069 = vmatpush.msra.mxu0 0.0
    %6070 = vmatpush.msra.mxu0 0.0
    %6071 = vmatpush.msra.mxu0 0.0
    %6072 = vmatpush.msra.mxu0 %v6053
    %6073 = vmatmul.f32.gmra.mxu0 %v6055
    %v6074 = vpop.f32.mrf.mxu0
    %v6075 = vadd.f32 0.0, %v6074
    %6076 = vdwg.mxu0
    %v6077 = vadd.f32 %v6026, %v6075
    %v6078 = vld [vmem:[%s4 + $0x18] sm:$0xff]
    %v6080 = vsel %vm5931, %v6078, 0
    %6082 = vmatpush.msra.mxu0 0.0
    %6083 = vmatpush.msra.mxu0 0.0
    %6084 = vmatpush.msra.mxu0 0.0
    %6085 = vmatpush.msra.mxu0 0.0
    %6086 = vmatpush.msra.mxu0 0.0
    %6087 = vmatpush.msra.mxu0 0.0
    %6088 = vmatpush.msra.mxu0 0.0
    %6089 = vmatpush.msra.mxu0 0.0
    %6090 = vmatpush.msra.mxu0 0.0
    %6091 = vmatpush.msra.mxu0 0.0
    %6092 = vmatpush.msra.mxu0 0.0
    %6093 = vmatpush.msra.mxu0 0.0
    %6094 = vmatpush.msra.mxu0 0.0
    %6095 = vmatpush.msra.mxu0 0.0
    %6096 = vmatpush.msra.mxu0 %v5929
    %6097 = vmatpush.msra.mxu0 %v5928
    %6098 = vmatmul.f32.gmra.mxu0 %v6080
    %v6099 = vpop.f32.mrf.mxu0
    %v6100 = vadd.f32 0.0, %v6099
    %6101 = vdwg.mxu0
    %s6102 = scalar_lea.vmem %s11, 24
    %v6103 = vld [vmem:[%s6102] sm:$0xff]
    %v6105 = vsel %vm1592, %v6100, 0
    %6107 = vmatpush.msra.mxu0 0.0
    %6108 = vmatpush.msra.mxu0 0.0
    %6109 = vmatpush.msra.mxu0 0.0
    %6110 = vmatpush.msra.mxu0 0.0
    %6111 = vmatpush.msra.mxu0 0.0
    %6112 = vmatpush.msra.mxu0 0.0
    %6113 = vmatpush.msra.mxu0 0.0
    %6114 = vmatpush.msra.mxu0 0.0
    %6115 = vmatpush.msra.mxu0 0.0
    %6116 = vmatpush.msra.mxu0 0.0
    %6117 = vmatpush.msra.mxu0 0.0
    %6118 = vmatpush.msra.mxu0 0.0
    %6119 = vmatpush.msra.mxu0 0.0
    %6120 = vmatpush.msra.mxu0 0.0
    %6121 = vmatpush.msra.mxu0 0.0
    %6122 = vmatpush.msra.mxu0 %v6103
    %6123 = vmatmul.f32.gmra.mxu0 %v6105
    %v6124 = vpop.f32.mrf.mxu0
    %v6125 = vadd.f32 0.0, %v6124
    %6126 = vdwg.mxu0
    %v6127 = vadd.f32 %v6077, %v6125
    %v6128 = vld [vmem:[%s4 + $0x20] sm:$0xff]
    %v6130 = vsel %vm5931, %v6128, 0
    %6132 = vmatpush.msra.mxu0 0.0
    %6133 = vmatpush.msra.mxu0 0.0
    %6134 = vmatpush.msra.mxu0 0.0
    %6135 = vmatpush.msra.mxu0 0.0
    %6136 = vmatpush.msra.mxu0 0.0
    %6137 = vmatpush.msra.mxu0 0.0
    %6138 = vmatpush.msra.mxu0 0.0
    %6139 = vmatpush.msra.mxu0 0.0
    %6140 = vmatpush.msra.mxu0 0.0
    %6141 = vmatpush.msra.mxu0 0.0
    %6142 = vmatpush.msra.mxu0 0.0
    %6143 = vmatpush.msra.mxu0 0.0
    %6144 = vmatpush.msra.mxu0 0.0
    %6145 = vmatpush.msra.mxu0 0.0
    %6146 = vmatpush.msra.mxu0 %v5929
    %6147 = vmatpush.msra.mxu0 %v5928
    %6148 = vmatmul.f32.gmra.mxu0 %v6130
    %v6149 = vpop.f32.mrf.mxu0
    %v6150 = vadd.f32 0.0, %v6149
    %6151 = vdwg.mxu0
    %s6152 = scalar_lea.vmem %s11, 32
    %v6153 = vld [vmem:[%s6152] sm:$0xff]
    %v6155 = vsel %vm1592, %v6150, 0
    %6157 = vmatpush.msra.mxu0 0.0
    %6158 = vmatpush.msra.mxu0 0.0
    %6159 = vmatpush.msra.mxu0 0.0
    %6160 = vmatpush.msra.mxu0 0.0
    %6161 = vmatpush.msra.mxu0 0.0
    %6162 = vmatpush.msra.mxu0 0.0
    %6163 = vmatpush.msra.mxu0 0.0
    %6164 = vmatpush.msra.mxu0 0.0
    %6165 = vmatpush.msra.mxu0 0.0
    %6166 = vmatpush.msra.mxu0 0.0
    %6167 = vmatpush.msra.mxu0 0.0
    %6168 = vmatpush.msra.mxu0 0.0
    %6169 = vmatpush.msra.mxu0 0.0
    %6170 = vmatpush.msra.mxu0 0.0
    %6171 = vmatpush.msra.mxu0 0.0
    %6172 = vmatpush.msra.mxu0 %v6153
    %6173 = vmatmul.f32.gmra.mxu0 %v6155
    %v6174 = vpop.f32.mrf.mxu0
    %v6175 = vadd.f32 0.0, %v6174
    %6176 = vdwg.mxu0
    %v6177 = vadd.f32 %v6127, %v6175
    %v6178 = vld [vmem:[%s4 + $0x28] sm:$0xff]
    %v6180 = vsel %vm5931, %v6178, 0
    %6182 = vmatpush.msra.mxu0 0.0
    %6183 = vmatpush.msra.mxu0 0.0
    %6184 = vmatpush.msra.mxu0 0.0
    %6185 = vmatpush.msra.mxu0 0.0
    %6186 = vmatpush.msra.mxu0 0.0
    %6187 = vmatpush.msra.mxu0 0.0
    %6188 = vmatpush.msra.mxu0 0.0
    %6189 = vmatpush.msra.mxu0 0.0
    %6190 = vmatpush.msra.mxu0 0.0
    %6191 = vmatpush.msra.mxu0 0.0
    %6192 = vmatpush.msra.mxu0 0.0
    %6193 = vmatpush.msra.mxu0 0.0
    %6194 = vmatpush.msra.mxu0 0.0
    %6195 = vmatpush.msra.mxu0 0.0
    %6196 = vmatpush.msra.mxu0 %v5929
    %6197 = vmatpush.msra.mxu0 %v5928
    %6198 = vmatmul.f32.gmra.mxu0 %v6180
    %v6199 = vpop.f32.mrf.mxu0
    %v6200 = vadd.f32 0.0, %v6199
    %6201 = vdwg.mxu0
    %s6202 = scalar_lea.vmem %s11, 40
    %v6203 = vld [vmem:[%s6202] sm:$0xff]
    %v6205 = vsel %vm1592, %v6200, 0
    %6207 = vmatpush.msra.mxu0 0.0
    %6208 = vmatpush.msra.mxu0 0.0
    %6209 = vmatpush.msra.mxu0 0.0
    %6210 = vmatpush.msra.mxu0 0.0
    %6211 = vmatpush.msra.mxu0 0.0
    %6212 = vmatpush.msra.mxu0 0.0
    %6213 = vmatpush.msra.mxu0 0.0
    %6214 = vmatpush.msra.mxu0 0.0
    %6215 = vmatpush.msra.mxu0 0.0
    %6216 = vmatpush.msra.mxu0 0.0
    %6217 = vmatpush.msra.mxu0 0.0
    %6218 = vmatpush.msra.mxu0 0.0
    %6219 = vmatpush.msra.mxu0 0.0
    %6220 = vmatpush.msra.mxu0 0.0
    %6221 = vmatpush.msra.mxu0 0.0
    %6222 = vmatpush.msra.mxu0 %v6203
    %6223 = vmatmul.f32.gmra.mxu0 %v6205
    %v6224 = vpop.f32.mrf.mxu0
    %v6225 = vadd.f32 0.0, %v6224
    %6226 = vdwg.mxu0
    %v6227 = vadd.f32 %v6177, %v6225
    %v6228 = vld [vmem:[%s4 + $0x30] sm:$0xff]
    %v6230 = vsel %vm5931, %v6228, 0
    %6232 = vmatpush.msra.mxu0 0.0
    %6233 = vmatpush.msra.mxu0 0.0
    %6234 = vmatpush.msra.mxu0 0.0
    %6235 = vmatpush.msra.mxu0 0.0
    %6236 = vmatpush.msra.mxu0 0.0
    %6237 = vmatpush.msra.mxu0 0.0
    %6238 = vmatpush.msra.mxu0 0.0
    %6239 = vmatpush.msra.mxu0 0.0
    %6240 = vmatpush.msra.mxu0 0.0
    %6241 = vmatpush.msra.mxu0 0.0
    %6242 = vmatpush.msra.mxu0 0.0
    %6243 = vmatpush.msra.mxu0 0.0
    %6244 = vmatpush.msra.mxu0 0.0
    %6245 = vmatpush.msra.mxu0 0.0
    %6246 = vmatpush.msra.mxu0 %v5929
    %6247 = vmatpush.msra.mxu0 %v5928
    %6248 = vmatmul.f32.gmra.mxu0 %v6230
    %v6249 = vpop.f32.mrf.mxu0
    %v6250 = vadd.f32 0.0, %v6249
    %6251 = vdwg.mxu0
    %s6252 = scalar_lea.vmem %s11, 48
    %v6253 = vld [vmem:[%s6252] sm:$0xff]
    %v6255 = vsel %vm1592, %v6250, 0
    %6257 = vmatpush.msra.mxu0 0.0
    %6258 = vmatpush.msra.mxu0 0.0
    %6259 = vmatpush.msra.mxu0 0.0
    %6260 = vmatpush.msra.mxu0 0.0
    %6261 = vmatpush.msra.mxu0 0.0
    %6262 = vmatpush.msra.mxu0 0.0
    %6263 = vmatpush.msra.mxu0 0.0
    %6264 = vmatpush.msra.mxu0 0.0
    %6265 = vmatpush.msra.mxu0 0.0
    %6266 = vmatpush.msra.mxu0 0.0
    %6267 = vmatpush.msra.mxu0 0.0
    %6268 = vmatpush.msra.mxu0 0.0
    %6269 = vmatpush.msra.mxu0 0.0
    %6270 = vmatpush.msra.mxu0 0.0
    %6271 = vmatpush.msra.mxu0 0.0
    %6272 = vmatpush.msra.mxu0 %v6253
    %6273 = vmatmul.f32.gmra.mxu0 %v6255
    %v6274 = vpop.f32.mrf.mxu0
    %v6275 = vadd.f32 0.0, %v6274
    %6276 = vdwg.mxu0
    %v6277 = vadd.f32 %v6227, %v6275
    %v6278 = vld [vmem:[%s4 + $0x38] sm:$0xff]
    %v6280 = vsel %vm5931, %v6278, 0
    %6282 = vmatpush.msra.mxu0 0.0
    %6283 = vmatpush.msra.mxu0 0.0
    %6284 = vmatpush.msra.mxu0 0.0
    %6285 = vmatpush.msra.mxu0 0.0
    %6286 = vmatpush.msra.mxu0 0.0
    %6287 = vmatpush.msra.mxu0 0.0
    %6288 = vmatpush.msra.mxu0 0.0
    %6289 = vmatpush.msra.mxu0 0.0
    %6290 = vmatpush.msra.mxu0 0.0
    %6291 = vmatpush.msra.mxu0 0.0
    %6292 = vmatpush.msra.mxu0 0.0
    %6293 = vmatpush.msra.mxu0 0.0
    %6294 = vmatpush.msra.mxu0 0.0
    %6295 = vmatpush.msra.mxu0 0.0
    %6296 = vmatpush.msra.mxu0 %v5929
    %6297 = vmatpush.msra.mxu0 %v5928
    %6298 = vmatmul.f32.gmra.mxu0 %v6280
    %v6299 = vpop.f32.mrf.mxu0
    %v6300 = vadd.f32 0.0, %v6299
    %6301 = vdwg.mxu0
    %s6302 = scalar_lea.vmem %s11, 56
    %v6303 = vld [vmem:[%s6302] sm:$0xff]
    %v6305 = vsel %vm1592, %v6300, 0
    %6307 = vmatpush.msra.mxu0 0.0
    %6308 = vmatpush.msra.mxu0 0.0
    %6309 = vmatpush.msra.mxu0 0.0
    %6310 = vmatpush.msra.mxu0 0.0
    %6311 = vmatpush.msra.mxu0 0.0
    %6312 = vmatpush.msra.mxu0 0.0
    %6313 = vmatpush.msra.mxu0 0.0
    %6314 = vmatpush.msra.mxu0 0.0
    %6315 = vmatpush.msra.mxu0 0.0
    %6316 = vmatpush.msra.mxu0 0.0
    %6317 = vmatpush.msra.mxu0 0.0
    %6318 = vmatpush.msra.mxu0 0.0
    %6319 = vmatpush.msra.mxu0 0.0
    %6320 = vmatpush.msra.mxu0 0.0
    %6321 = vmatpush.msra.mxu0 0.0
    %6322 = vmatpush.msra.mxu0 %v6303
    %6323 = vmatmul.f32.gmra.mxu0 %v6305
    %v6324 = vpop.f32.mrf.mxu0
    %v6325 = vadd.f32 0.0, %v6324
    %6326 = vdwg.mxu0
    %v6327 = vadd.f32 %v6277, %v6325
    %v6328 = vld [vmem:[%s4 + $0x40] sm:$0xff]
    %v6330 = vsel %vm5931, %v6328, 0
    %6332 = vmatpush.msra.mxu0 0.0
    %6333 = vmatpush.msra.mxu0 0.0
    %6334 = vmatpush.msra.mxu0 0.0
    %6335 = vmatpush.msra.mxu0 0.0
    %6336 = vmatpush.msra.mxu0 0.0
    %6337 = vmatpush.msra.mxu0 0.0
    %6338 = vmatpush.msra.mxu0 0.0
    %6339 = vmatpush.msra.mxu0 0.0
    %6340 = vmatpush.msra.mxu0 0.0
    %6341 = vmatpush.msra.mxu0 0.0
    %6342 = vmatpush.msra.mxu0 0.0
    %6343 = vmatpush.msra.mxu0 0.0
    %6344 = vmatpush.msra.mxu0 0.0
    %6345 = vmatpush.msra.mxu0 0.0
    %6346 = vmatpush.msra.mxu0 %v5929
    %6347 = vmatpush.msra.mxu0 %v5928
    %6348 = vmatmul.f32.gmra.mxu0 %v6330
    %v6349 = vpop.f32.mrf.mxu0
    %v6350 = vadd.f32 0.0, %v6349
    %6351 = vdwg.mxu0
    %s6352 = scalar_lea.vmem %s11, 64
    %v6353 = vld [vmem:[%s6352] sm:$0xff]
    %v6355 = vsel %vm1592, %v6350, 0
    %6357 = vmatpush.msra.mxu0 0.0
    %6358 = vmatpush.msra.mxu0 0.0
    %6359 = vmatpush.msra.mxu0 0.0
    %6360 = vmatpush.msra.mxu0 0.0
    %6361 = vmatpush.msra.mxu0 0.0
    %6362 = vmatpush.msra.mxu0 0.0
    %6363 = vmatpush.msra.mxu0 0.0
    %6364 = vmatpush.msra.mxu0 0.0
    %6365 = vmatpush.msra.mxu0 0.0
    %6366 = vmatpush.msra.mxu0 0.0
    %6367 = vmatpush.msra.mxu0 0.0
    %6368 = vmatpush.msra.mxu0 0.0
    %6369 = vmatpush.msra.mxu0 0.0
    %6370 = vmatpush.msra.mxu0 0.0
    %6371 = vmatpush.msra.mxu0 0.0
    %6372 = vmatpush.msra.mxu0 %v6353
    %6373 = vmatmul.f32.gmra.mxu0 %v6355
    %v6374 = vpop.f32.mrf.mxu0
    %v6375 = vadd.f32 0.0, %v6374
    %6376 = vdwg.mxu0
    %v6377 = vadd.f32 %v6327, %v6375
    %v6379 = vperm.slane %v5927, 0
    %v6381 = vadd.f32 %v6377, %v6379
    %v6382 = vmax.f32 %v6381, 0.0
    %6383 = vst.msk [vmem:[#allocation5] sm:$0xff] %vm1592, %v6382
    %v6384 = vld [vmem:[#allocation4 + $0x10] sm:$0xff]
    %v6385 = vld [vmem:[#allocation4 + $0x18] sm:$0xff]
    %v6386 = vld [vmem:[%s4] sm:$0xff]
    %v6388 = vsel %vm5931, %v6386, 0
    %6390 = vmatpush.msra.mxu0 0.0
    %6391 = vmatpush.msra.mxu0 0.0
    %6392 = vmatpush.msra.mxu0 0.0
    %6393 = vmatpush.msra.mxu0 0.0
    %6394 = vmatpush.msra.mxu0 0.0
    %6395 = vmatpush.msra.mxu0 0.0
    %6396 = vmatpush.msra.mxu0 0.0
    %6397 = vmatpush.msra.mxu0 0.0
    %6398 = vmatpush.msra.mxu0 0.0
    %6399 = vmatpush.msra.mxu0 0.0
    %6400 = vmatpush.msra.mxu0 0.0
    %6401 = vmatpush.msra.mxu0 0.0
    %6402 = vmatpush.msra.mxu0 0.0
    %6403 = vmatpush.msra.mxu0 0.0
    %6404 = vmatpush.msra.mxu0 %v6385
    %6405 = vmatpush.msra.mxu0 %v6384
    %6406 = vmatmul.f32.gmra.mxu0 %v6388
    %v6407 = vpop.f32.mrf.mxu0
    %v6408 = vadd.f32 0.0, %v6407
    %6409 = vdwg.mxu0
    %v6410 = vld [vmem:[%s11] sm:$0xff]
    %v6411 = vld [vmem:[%s4 + $0x8] sm:$0xff]
    %v6413 = vsel %vm5931, %v6411, 0
    %6415 = vmatpush.msra.mxu0 0.0
    %6416 = vmatpush.msra.mxu0 0.0
    %6417 = vmatpush.msra.mxu0 0.0
    %6418 = vmatpush.msra.mxu0 0.0
    %6419 = vmatpush.msra.mxu0 0.0
    %6420 = vmatpush.msra.mxu0 0.0
    %6421 = vmatpush.msra.mxu0 0.0
    %6422 = vmatpush.msra.mxu0 0.0
    %6423 = vmatpush.msra.mxu0 0.0
    %6424 = vmatpush.msra.mxu0 0.0
    %6425 = vmatpush.msra.mxu0 0.0
    %6426 = vmatpush.msra.mxu0 0.0
    %6427 = vmatpush.msra.mxu0 0.0
    %6428 = vmatpush.msra.mxu0 0.0
    %6429 = vmatpush.msra.mxu0 %v6385
    %6430 = vmatpush.msra.mxu0 %v6384
    %6431 = vmatmul.f32.gmra.mxu0 %v6413
    %v6432 = vpop.f32.mrf.mxu0
    %v6433 = vadd.f32 0.0, %v6432
    %6434 = vdwg.mxu0
    %v6435 = vld [vmem:[%s5980] sm:$0xff]
    %v6437 = vsel %vm1592, %v6433, 0
    %6439 = vmatpush.msra.mxu0 0.0
    %6440 = vmatpush.msra.mxu0 0.0
    %6441 = vmatpush.msra.mxu0 0.0
    %6442 = vmatpush.msra.mxu0 0.0
    %6443 = vmatpush.msra.mxu0 0.0
    %6444 = vmatpush.msra.mxu0 0.0
    %6445 = vmatpush.msra.mxu0 0.0
    %6446 = vmatpush.msra.mxu0 0.0
    %6447 = vmatpush.msra.mxu0 0.0
    %6448 = vmatpush.msra.mxu0 0.0
    %6449 = vmatpush.msra.mxu0 0.0
    %6450 = vmatpush.msra.mxu0 0.0
    %6451 = vmatpush.msra.mxu0 0.0
    %6452 = vmatpush.msra.mxu0 0.0
    %6453 = vmatpush.msra.mxu0 0.0
    %6454 = vmatpush.msra.mxu0 %v6435
    %6455 = vmatmul.f32.gmra.mxu0 %v6437
    %v6456 = vpop.f32.mrf.mxu0
    %v6457 = vadd.f32 0.0, %v6456
    %6458 = vdwg.mxu0
    %v6460 = vsel %vm1592, %v6408, 0
    %6462 = vmatpush.msra.mxu0 0.0
    %6463 = vmatpush.msra.mxu0 0.0
    %6464 = vmatpush.msra.mxu0 0.0
    %6465 = vmatpush.msra.mxu0 0.0
    %6466 = vmatpush.msra.mxu0 0.0
    %6467 = vmatpush.msra.mxu0 0.0
    %6468 = vmatpush.msra.mxu0 0.0
    %6469 = vmatpush.msra.mxu0 0.0
    %6470 = vmatpush.msra.mxu0 0.0
    %6471 = vmatpush.msra.mxu0 0.0
    %6472 = vmatpush.msra.mxu0 0.0
    %6473 = vmatpush.msra.mxu0 0.0
    %6474 = vmatpush.msra.mxu0 0.0
    %6475 = vmatpush.msra.mxu0 0.0
    %6476 = vmatpush.msra.mxu0 0.0
    %6477 = vmatpush.msra.mxu0 %v6410
    %6478 = vmatmul.f32.gmra.mxu0 %v6460
    %v6479 = vpop.f32.mrf.mxu0
    %v6480 = vadd.f32 %v6457, %v6479
    %6481 = vdwg.mxu0
    %v6482 = vld [vmem:[%s4 + $0x10] sm:$0xff]
    %v6484 = vsel %vm5931, %v6482, 0
    %6486 = vmatpush.msra.mxu0 0.0
    %6487 = vmatpush.msra.mxu0 0.0
    %6488 = vmatpush.msra.mxu0 0.0
    %6489 = vmatpush.msra.mxu0 0.0
    %6490 = vmatpush.msra.mxu0 0.0
    %6491 = vmatpush.msra.mxu0 0.0
    %6492 = vmatpush.msra.mxu0 0.0
    %6493 = vmatpush.msra.mxu0 0.0
    %6494 = vmatpush.msra.mxu0 0.0
    %6495 = vmatpush.msra.mxu0 0.0
    %6496 = vmatpush.msra.mxu0 0.0
    %6497 = vmatpush.msra.mxu0 0.0
    %6498 = vmatpush.msra.mxu0 0.0
    %6499 = vmatpush.msra.mxu0 0.0
    %6500 = vmatpush.msra.mxu0 %v6385
    %6501 = vmatpush.msra.mxu0 %v6384
    %6502 = vmatmul.f32.gmra.mxu0 %v6484
    %v6503 = vpop.f32.mrf.mxu0
    %v6504 = vadd.f32 0.0, %v6503
    %6505 = vdwg.mxu0
    %v6506 = vld [vmem:[%s6052] sm:$0xff]
    %v6508 = vsel %vm1592, %v6504, 0
    %6510 = vmatpush.msra.mxu0 0.0
    %6511 = vmatpush.msra.mxu0 0.0
    %6512 = vmatpush.msra.mxu0 0.0
    %6513 = vmatpush.msra.mxu0 0.0
    %6514 = vmatpush.msra.mxu0 0.0
    %6515 = vmatpush.msra.mxu0 0.0
    %6516 = vmatpush.msra.mxu0 0.0
    %6517 = vmatpush.msra.mxu0 0.0
    %6518 = vmatpush.msra.mxu0 0.0
    %6519 = vmatpush.msra.mxu0 0.0
    %6520 = vmatpush.msra.mxu0 0.0
    %6521 = vmatpush.msra.mxu0 0.0
    %6522 = vmatpush.msra.mxu0 0.0
    %6523 = vmatpush.msra.mxu0 0.0
    %6524 = vmatpush.msra.mxu0 0.0
    %6525 = vmatpush.msra.mxu0 %v6506
    %6526 = vmatmul.f32.gmra.mxu0 %v6508
    %v6527 = vpop.f32.mrf.mxu0
    %v6528 = vadd.f32 0.0, %v6527
    %6529 = vdwg.mxu0
    %v6530 = vadd.f32 %v6480, %v6528
    %v6531 = vld [vmem:[%s4 + $0x18] sm:$0xff]
    %v6533 = vsel %vm5931, %v6531, 0
    %6535 = vmatpush.msra.mxu0 0.0
    %6536 = vmatpush.msra.mxu0 0.0
    %6537 = vmatpush.msra.mxu0 0.0
    %6538 = vmatpush.msra.mxu0 0.0
    %6539 = vmatpush.msra.mxu0 0.0
    %6540 = vmatpush.msra.mxu0 0.0
    %6541 = vmatpush.msra.mxu0 0.0
    %6542 = vmatpush.msra.mxu0 0.0
    %6543 = vmatpush.msra.mxu0 0.0
    %6544 = vmatpush.msra.mxu0 0.0
    %6545 = vmatpush.msra.mxu0 0.0
    %6546 = vmatpush.msra.mxu0 0.0
    %6547 = vmatpush.msra.mxu0 0.0
    %6548 = vmatpush.msra.mxu0 0.0
    %6549 = vmatpush.msra.mxu0 %v6385
    %6550 = vmatpush.msra.mxu0 %v6384
    %6551 = vmatmul.f32.gmra.mxu0 %v6533
    %v6552 = vpop.f32.mrf.mxu0
    %v6553 = vadd.f32 0.0, %v6552
    %6554 = vdwg.mxu0
    %v6555 = vld [vmem:[%s6102] sm:$0xff]
    %v6557 = vsel %vm1592, %v6553, 0
    %6559 = vmatpush.msra.mxu0 0.0
    %6560 = vmatpush.msra.mxu0 0.0
    %6561 = vmatpush.msra.mxu0 0.0
    %6562 = vmatpush.msra.mxu0 0.0
    %6563 = vmatpush.msra.mxu0 0.0
    %6564 = vmatpush.msra.mxu0 0.0
    %6565 = vmatpush.msra.mxu0 0.0
    %6566 = vmatpush.msra.mxu0 0.0
    %6567 = vmatpush.msra.mxu0 0.0
    %6568 = vmatpush.msra.mxu0 0.0
    %6569 = vmatpush.msra.mxu0 0.0
    %6570 = vmatpush.msra.mxu0 0.0
    %6571 = vmatpush.msra.mxu0 0.0
    %6572 = vmatpush.msra.mxu0 0.0
    %6573 = vmatpush.msra.mxu0 0.0
    %6574 = vmatpush.msra.mxu0 %v6555
    %6575 = vmatmul.f32.gmra.mxu0 %v6557
    %v6576 = vpop.f32.mrf.mxu0
    %v6577 = vadd.f32 0.0, %v6576
    %6578 = vdwg.mxu0
    %v6579 = vadd.f32 %v6530, %v6577
    %v6580 = vld [vmem:[%s4 + $0x20] sm:$0xff]
    %v6582 = vsel %vm5931, %v6580, 0
    %6584 = vmatpush.msra.mxu0 0.0
    %6585 = vmatpush.msra.mxu0 0.0
    %6586 = vmatpush.msra.mxu0 0.0
    %6587 = vmatpush.msra.mxu0 0.0
    %6588 = vmatpush.msra.mxu0 0.0
    %6589 = vmatpush.msra.mxu0 0.0
    %6590 = vmatpush.msra.mxu0 0.0
    %6591 = vmatpush.msra.mxu0 0.0
    %6592 = vmatpush.msra.mxu0 0.0
    %6593 = vmatpush.msra.mxu0 0.0
    %6594 = vmatpush.msra.mxu0 0.0
    %6595 = vmatpush.msra.mxu0 0.0
    %6596 = vmatpush.msra.mxu0 0.0
    %6597 = vmatpush.msra.mxu0 0.0
    %6598 = vmatpush.msra.mxu0 %v6385
    %6599 = vmatpush.msra.mxu0 %v6384
    %6600 = vmatmul.f32.gmra.mxu0 %v6582
    %v6601 = vpop.f32.mrf.mxu0
    %v6602 = vadd.f32 0.0, %v6601
    %6603 = vdwg.mxu0
    %v6604 = vld [vmem:[%s6152] sm:$0xff]
    %v6606 = vsel %vm1592, %v6602, 0
    %6608 = vmatpush.msra.mxu0 0.0
    %6609 = vmatpush.msra.mxu0 0.0
    %6610 = vmatpush.msra.mxu0 0.0
    %6611 = vmatpush.msra.mxu0 0.0
    %6612 = vmatpush.msra.mxu0 0.0
    %6613 = vmatpush.msra.mxu0 0.0
    %6614 = vmatpush.msra.mxu0 0.0
    %6615 = vmatpush.msra.mxu0 0.0
    %6616 = vmatpush.msra.mxu0 0.0
    %6617 = vmatpush.msra.mxu0 0.0
    %6618 = vmatpush.msra.mxu0 0.0
    %6619 = vmatpush.msra.mxu0 0.0
    %6620 = vmatpush.msra.mxu0 0.0
    %6621 = vmatpush.msra.mxu0 0.0
    %6622 = vmatpush.msra.mxu0 0.0
    %6623 = vmatpush.msra.mxu0 %v6604
    %6624 = vmatmul.f32.gmra.mxu0 %v6606
    %v6625 = vpop.f32.mrf.mxu0
    %v6626 = vadd.f32 0.0, %v6625
    %6627 = vdwg.mxu0
    %v6628 = vadd.f32 %v6579, %v6626
    %v6629 = vld [vmem:[%s4 + $0x28] sm:$0xff]
    %v6631 = vsel %vm5931, %v6629, 0
    %6633 = vmatpush.msra.mxu0 0.0
    %6634 = vmatpush.msra.mxu0 0.0
    %6635 = vmatpush.msra.mxu0 0.0
    %6636 = vmatpush.msra.mxu0 0.0
    %6637 = vmatpush.msra.mxu0 0.0
    %6638 = vmatpush.msra.mxu0 0.0
    %6639 = vmatpush.msra.mxu0 0.0
    %6640 = vmatpush.msra.mxu0 0.0
    %6641 = vmatpush.msra.mxu0 0.0
    %6642 = vmatpush.msra.mxu0 0.0
    %6643 = vmatpush.msra.mxu0 0.0
    %6644 = vmatpush.msra.mxu0 0.0
    %6645 = vmatpush.msra.mxu0 0.0
    %6646 = vmatpush.msra.mxu0 0.0
    %6647 = vmatpush.msra.mxu0 %v6385
    %6648 = vmatpush.msra.mxu0 %v6384
    %6649 = vmatmul.f32.gmra.mxu0 %v6631
    %v6650 = vpop.f32.mrf.mxu0
    %v6651 = vadd.f32 0.0, %v6650
    %6652 = vdwg.mxu0
    %v6653 = vld [vmem:[%s6202] sm:$0xff]
    %v6655 = vsel %vm1592, %v6651, 0
    %6657 = vmatpush.msra.mxu0 0.0
    %6658 = vmatpush.msra.mxu0 0.0
    %6659 = vmatpush.msra.mxu0 0.0
    %6660 = vmatpush.msra.mxu0 0.0
    %6661 = vmatpush.msra.mxu0 0.0
    %6662 = vmatpush.msra.mxu0 0.0
    %6663 = vmatpush.msra.mxu0 0.0
    %6664 = vmatpush.msra.mxu0 0.0
    %6665 = vmatpush.msra.mxu0 0.0
    %6666 = vmatpush.msra.mxu0 0.0
    %6667 = vmatpush.msra.mxu0 0.0
    %6668 = vmatpush.msra.mxu0 0.0
    %6669 = vmatpush.msra.mxu0 0.0
    %6670 = vmatpush.msra.mxu0 0.0
    %6671 = vmatpush.msra.mxu0 0.0
    %6672 = vmatpush.msra.mxu0 %v6653
    %6673 = vmatmul.f32.gmra.mxu0 %v6655
    %v6674 = vpop.f32.mrf.mxu0
    %v6675 = vadd.f32 0.0, %v6674
    %6676 = vdwg.mxu0
    %v6677 = vadd.f32 %v6628, %v6675
    %v6678 = vld [vmem:[%s4 + $0x30] sm:$0xff]
    %v6680 = vsel %vm5931, %v6678, 0
    %6682 = vmatpush.msra.mxu0 0.0
    %6683 = vmatpush.msra.mxu0 0.0
    %6684 = vmatpush.msra.mxu0 0.0
    %6685 = vmatpush.msra.mxu0 0.0
    %6686 = vmatpush.msra.mxu0 0.0
    %6687 = vmatpush.msra.mxu0 0.0
    %6688 = vmatpush.msra.mxu0 0.0
    %6689 = vmatpush.msra.mxu0 0.0
    %6690 = vmatpush.msra.mxu0 0.0
    %6691 = vmatpush.msra.mxu0 0.0
    %6692 = vmatpush.msra.mxu0 0.0
    %6693 = vmatpush.msra.mxu0 0.0
    %6694 = vmatpush.msra.mxu0 0.0
    %6695 = vmatpush.msra.mxu0 0.0
    %6696 = vmatpush.msra.mxu0 %v6385
    %6697 = vmatpush.msra.mxu0 %v6384
    %6698 = vmatmul.f32.gmra.mxu0 %v6680
    %v6699 = vpop.f32.mrf.mxu0
    %v6700 = vadd.f32 0.0, %v6699
    %6701 = vdwg.mxu0
    %v6702 = vld [vmem:[%s6252] sm:$0xff]
    %v6704 = vsel %vm1592, %v6700, 0
    %6706 = vmatpush.msra.mxu0 0.0
    %6707 = vmatpush.msra.mxu0 0.0
    %6708 = vmatpush.msra.mxu0 0.0
    %6709 = vmatpush.msra.mxu0 0.0
    %6710 = vmatpush.msra.mxu0 0.0
    %6711 = vmatpush.msra.mxu0 0.0
    %6712 = vmatpush.msra.mxu0 0.0
    %6713 = vmatpush.msra.mxu0 0.0
    %6714 = vmatpush.msra.mxu0 0.0
    %6715 = vmatpush.msra.mxu0 0.0
    %6716 = vmatpush.msra.mxu0 0.0
    %6717 = vmatpush.msra.mxu0 0.0
    %6718 = vmatpush.msra.mxu0 0.0
    %6719 = vmatpush.msra.mxu0 0.0
    %6720 = vmatpush.msra.mxu0 0.0
    %6721 = vmatpush.msra.mxu0 %v6702
    %6722 = vmatmul.f32.gmra.mxu0 %v6704
    %v6723 = vpop.f32.mrf.mxu0
    %v6724 = vadd.f32 0.0, %v6723
    %6725 = vdwg.mxu0
    %v6726 = vadd.f32 %v6677, %v6724
    %v6727 = vld [vmem:[%s4 + $0x38] sm:$0xff]
    %v6729 = vsel %vm5931, %v6727, 0
    %6731 = vmatpush.msra.mxu0 0.0
    %6732 = vmatpush.msra.mxu0 0.0
    %6733 = vmatpush.msra.mxu0 0.0
    %6734 = vmatpush.msra.mxu0 0.0
    %6735 = vmatpush.msra.mxu0 0.0
    %6736 = vmatpush.msra.mxu0 0.0
    %6737 = vmatpush.msra.mxu0 0.0
    %6738 = vmatpush.msra.mxu0 0.0
    %6739 = vmatpush.msra.mxu0 0.0
    %6740 = vmatpush.msra.mxu0 0.0
    %6741 = vmatpush.msra.mxu0 0.0
    %6742 = vmatpush.msra.mxu0 0.0
    %6743 = vmatpush.msra.mxu0 0.0
    %6744 = vmatpush.msra.mxu0 0.0
    %6745 = vmatpush.msra.mxu0 %v6385
    %6746 = vmatpush.msra.mxu0 %v6384
    %6747 = vmatmul.f32.gmra.mxu0 %v6729
    %v6748 = vpop.f32.mrf.mxu0
    %v6749 = vadd.f32 0.0, %v6748
    %6750 = vdwg.mxu0
    %v6751 = vld [vmem:[%s6302] sm:$0xff]
    %v6753 = vsel %vm1592, %v6749, 0
    %6755 = vmatpush.msra.mxu0 0.0
    %6756 = vmatpush.msra.mxu0 0.0
    %6757 = vmatpush.msra.mxu0 0.0
    %6758 = vmatpush.msra.mxu0 0.0
    %6759 = vmatpush.msra.mxu0 0.0
    %6760 = vmatpush.msra.mxu0 0.0
    %6761 = vmatpush.msra.mxu0 0.0
    %6762 = vmatpush.msra.mxu0 0.0
    %6763 = vmatpush.msra.mxu0 0.0
    %6764 = vmatpush.msra.mxu0 0.0
    %6765 = vmatpush.msra.mxu0 0.0
    %6766 = vmatpush.msra.mxu0 0.0
    %6767 = vmatpush.msra.mxu0 0.0
    %6768 = vmatpush.msra.mxu0 0.0
    %6769 = vmatpush.msra.mxu0 0.0
    %6770 = vmatpush.msra.mxu0 %v6751
    %6771 = vmatmul.f32.gmra.mxu0 %v6753
    %v6772 = vpop.f32.mrf.mxu0
    %v6773 = vadd.f32 0.0, %v6772
    %6774 = vdwg.mxu0
    %v6775 = vadd.f32 %v6726, %v6773
    %v6776 = vld [vmem:[%s4 + $0x40] sm:$0xff]
    %v6778 = vsel %vm5931, %v6776, 0
    %6780 = vmatpush.msra.mxu0 0.0
    %6781 = vmatpush.msra.mxu0 0.0
    %6782 = vmatpush.msra.mxu0 0.0
    %6783 = vmatpush.msra.mxu0 0.0
    %6784 = vmatpush.msra.mxu0 0.0
    %6785 = vmatpush.msra.mxu0 0.0
    %6786 = vmatpush.msra.mxu0 0.0
    %6787 = vmatpush.msra.mxu0 0.0
    %6788 = vmatpush.msra.mxu0 0.0
    %6789 = vmatpush.msra.mxu0 0.0
    %6790 = vmatpush.msra.mxu0 0.0
    %6791 = vmatpush.msra.mxu0 0.0
    %6792 = vmatpush.msra.mxu0 0.0
    %6793 = vmatpush.msra.mxu0 0.0
    %6794 = vmatpush.msra.mxu0 %v6385
    %6795 = vmatpush.msra.mxu0 %v6384
    %6796 = vmatmul.f32.gmra.mxu0 %v6778
    %v6797 = vpop.f32.mrf.mxu0
    %v6798 = vadd.f32 0.0, %v6797
    %6799 = vdwg.mxu0
    %v6800 = vld [vmem:[%s6352] sm:$0xff]
    %v6802 = vsel %vm1592, %v6798, 0
    %6804 = vmatpush.msra.mxu0 0.0
    %6805 = vmatpush.msra.mxu0 0.0
    %6806 = vmatpush.msra.mxu0 0.0
    %6807 = vmatpush.msra.mxu0 0.0
    %6808 = vmatpush.msra.mxu0 0.0
    %6809 = vmatpush.msra.mxu0 0.0
    %6810 = vmatpush.msra.mxu0 0.0
    %6811 = vmatpush.msra.mxu0 0.0
    %6812 = vmatpush.msra.mxu0 0.0
    %6813 = vmatpush.msra.mxu0 0.0
    %6814 = vmatpush.msra.mxu0 0.0
    %6815 = vmatpush.msra.mxu0 0.0
    %6816 = vmatpush.msra.mxu0 0.0
    %6817 = vmatpush.msra.mxu0 0.0
    %6818 = vmatpush.msra.mxu0 0.0
    %6819 = vmatpush.msra.mxu0 %v6800
    %6820 = vmatmul.f32.gmra.mxu0 %v6802
    %v6821 = vpop.f32.mrf.mxu0
    %v6822 = vadd.f32 0.0, %v6821
    %6823 = vdwg.mxu0
    %v6824 = vadd.f32 %v6775, %v6822
    %v6825 = vadd.f32 %v6824, %v6379
    %v6826 = vmax.f32 %v6825, 0.0
    %6827 = vst.msk [vmem:[#allocation5 + $0x8] sm:$0xff] %vm1592, %v6826
    %v6828 = vld [vmem:[#allocation5] sm:$0xff]
    %v6829 = vld [vmem:[#allocation5 + $0x8] sm:$0xff]
    %v6830 = vld [vmem:[%s13] sm:$0x3]
    %v6832 = vsel %vm5931, %v6830, 0
    %6834 = vmatpush.msra.mxu0 0.0
    %6835 = vmatpush.msra.mxu0 0.0
    %6836 = vmatpush.msra.mxu0 0.0
    %6837 = vmatpush.msra.mxu0 0.0
    %6838 = vmatpush.msra.mxu0 0.0
    %6839 = vmatpush.msra.mxu0 0.0
    %6840 = vmatpush.msra.mxu0 0.0
    %6841 = vmatpush.msra.mxu0 0.0
    %6842 = vmatpush.msra.mxu0 0.0
    %6843 = vmatpush.msra.mxu0 0.0
    %6844 = vmatpush.msra.mxu0 0.0
    %6845 = vmatpush.msra.mxu0 0.0
    %6846 = vmatpush.msra.mxu0 0.0
    %6847 = vmatpush.msra.mxu0 0.0
    %6848 = vmatpush.msra.mxu0 %v6829
    %6849 = vmatpush.msra.mxu0 %v6828
    %6850 = vmatmul.f32.gmra.mxu0 %v6832
    %v6851 = vpop.f32.mrf.mxu0
    %v6852 = vadd.f32 0.0, %v6851
    %6853 = vdwg.mxu0
    %v6854 = vld [vmem:[%s14] sm:$0xff]
    %v6855 = vld [vmem:[%s15] sm:$0x1]
    %v6857 = vperm.slane %v6855, 0
    %v6860 = vsel %vm1592, %v6852, 0
    %6862 = vmatpush.msra.mxu0 0.0
    %6863 = vmatpush.msra.mxu0 0.0
    %6864 = vmatpush.msra.mxu0 0.0
    %6865 = vmatpush.msra.mxu0 0.0
    %6866 = vmatpush.msra.mxu0 0.0
    %6867 = vmatpush.msra.mxu0 0.0
    %6868 = vmatpush.msra.mxu0 0.0
    %6869 = vmatpush.msra.mxu0 0.0
    %6870 = vmatpush.msra.mxu0 0.0
    %6871 = vmatpush.msra.mxu0 0.0
    %6872 = vmatpush.msra.mxu0 0.0
    %6873 = vmatpush.msra.mxu0 0.0
    %6874 = vmatpush.msra.mxu0 0.0
    %6875 = vmatpush.msra.mxu0 0.0
    %6876 = vmatpush.msra.mxu0 0.0
    %6877 = vmatpush.msra.mxu0 %v6854
    %6878 = vmatmul.f32.gmra.mxu0 %v6860
    %v6879 = vpop.f32.mrf.mxu0
    %v6880 = vadd.f32 %v6857, %v6879
    %6881 = vdwg.mxu0
    %vm6882 = vcmask 254976
    %6883 = vst.msk [vmem:[#allocation9] sm:$0x3] %vm6882, %v6880
    %v6884 = vld [vmem:[%s16] sm:$0xff]
    %v6885 = vld [vmem:[%s16 + $0x8] sm:$0xff]
    %v6886 = vld [vmem:[%s16 + $0x10] sm:$0xff]
    %v6887 = vld [vmem:[%s16 + $0x18] sm:$0xff]
    %v6888 = vld [vmem:[%s16 + $0x20] sm:$0xff]
    %v6889 = vld [vmem:[%s16 + $0x28] sm:$0xff]
    %v6890 = vld [vmem:[%s16 + $0x30] sm:$0xff]
    %v6891 = vld [vmem:[%s16 + $0x38] sm:$0xff]
    %v6892 = vld [vmem:[%s17] sm:$0x3]
    %v6894 = vperm.slane %v6892, 0
    %v6895 = vperm.slane %v6892, 1
    %v6899 = vsel %vm4775, %v6880, 0
    %6901 = vmatpush.msra.mxu0 0.0
    %6902 = vmatpush.msra.mxu0 0.0
    %6903 = vmatpush.msra.mxu0 0.0
    %6904 = vmatpush.msra.mxu0 0.0
    %6905 = vmatpush.msra.mxu0 0.0
    %6906 = vmatpush.msra.mxu0 0.0
    %6907 = vmatpush.msra.mxu0 0.0
    %6908 = vmatpush.msra.mxu0 0.0
    %6909 = vmatpush.msra.mxu0 0.0
    %6910 = vmatpush.msra.mxu0 0.0
    %6911 = vmatpush.msra.mxu0 0.0
    %6912 = vmatpush.msra.mxu0 0.0
    %6913 = vmatpush.msra.mxu0 %v6890
    %6914 = vmatpush.msra.mxu0 %v6888
    %6915 = vmatpush.msra.mxu0 %v6886
    %6916 = vmatpush.msra.mxu0 %v6884
    %6917 = vmatmul.f32.gmra.mxu0 %v6899
    %v6918 = vpop.f32.mrf.mxu0
    %v6919 = vadd.f32 %v6894, %v6918
    %6920 = vdwg.mxu0
    %6921 = vmatpush.msra.mxu0 0.0
    %6922 = vmatpush.msra.mxu0 0.0
    %6923 = vmatpush.msra.mxu0 0.0
    %6924 = vmatpush.msra.mxu0 0.0
    %6925 = vmatpush.msra.mxu0 0.0
    %6926 = vmatpush.msra.mxu0 0.0
    %6927 = vmatpush.msra.mxu0 0.0
    %6928 = vmatpush.msra.mxu0 0.0
    %6929 = vmatpush.msra.mxu0 0.0
    %6930 = vmatpush.msra.mxu0 0.0
    %6931 = vmatpush.msra.mxu0 0.0
    %6932 = vmatpush.msra.mxu0 0.0
    %6933 = vmatpush.msra.mxu0 %v6891
    %6934 = vmatpush.msra.mxu0 %v6889
    %6935 = vmatpush.msra.mxu0 %v6887
    %6936 = vmatpush.msra.mxu0 %v6885
    %6937 = vmatmul.f32.gmra.mxu0 %v6899
    %v6938 = vpop.f32.mrf.mxu0
    %v6939 = vadd.f32 %v6895, %v6938
    %6940 = vdwg.mxu0
    %v6941 = vmax.f32 %v6919, 0.0
    %v6942 = vmax.f32 %v6939, 0.0
    %v6943 = vld [vmem:[%s18] sm:$0xff]
    %v6944 = vld [vmem:[%s18 + $0x8] sm:$0xff]
    %v6945 = vld [vmem:[%s18 + $0x10] sm:$0xff]
    %v6946 = vld [vmem:[%s18 + $0x18] sm:$0xff]
    %v6947 = vld [vmem:[%s18 + $0x20] sm:$0xff]
    %v6948 = vld [vmem:[%s18 + $0x28] sm:$0xff]
    %v6949 = vld [vmem:[%s18 + $0x30] sm:$0xff]
    %v6950 = vld [vmem:[%s18 + $0x38] sm:$0xff]
    %v6951 = vld [vmem:[%s18 + $0x40] sm:$0xff]
    %v6952 = vld [vmem:[%s18 + $0x48] sm:$0xff]
    %v6953 = vld [vmem:[%s18 + $0x50] sm:$0xff]
    %v6954 = vld [vmem:[%s18 + $0x58] sm:$0xff]
    %v6955 = vld [vmem:[%s18 + $0x60] sm:$0xff]
    %v6956 = vld [vmem:[%s18 + $0x68] sm:$0xff]
    %v6957 = vld [vmem:[%s18 + $0x70] sm:$0xff]
    %v6958 = vld [vmem:[%s18 + $0x78] sm:$0xff]
    %v6959 = vld [vmem:[%s18 + $0x80] sm:$0xff]
    %v6960 = vld [vmem:[%s18 + $0x88] sm:$0xff]
    %v6961 = vld [vmem:[%s18 + $0x90] sm:$0xff]
    %v6962 = vld [vmem:[%s18 + $0x98] sm:$0xff]
    %v6963 = vld [vmem:[%s18 + $0xa0] sm:$0xff]
    %v6964 = vld [vmem:[%s18 + $0xa8] sm:$0xff]
    %v6965 = vld [vmem:[%s18 + $0xb0] sm:$0xff]
    %v6966 = vld [vmem:[%s18 + $0xb8] sm:$0xff]
    %v6967 = vld [vmem:[%s18 + $0xc0] sm:$0xff]
    %v6968 = vld [vmem:[%s18 + $0xc8] sm:$0xff]
    %v6969 = vld [vmem:[%s18 + $0xd0] sm:$0xff]
    %v6970 = vld [vmem:[%s18 + $0xd8] sm:$0xff]
    %v6971 = vld [vmem:[%s18 + $0xe0] sm:$0xff]
    %v6972 = vld [vmem:[%s18 + $0xe8] sm:$0xff]
    %v6973 = vld [vmem:[%s18 + $0xf0] sm:$0xff]
    %v6974 = vld [vmem:[%s18 + $0xf8] sm:$0xff]
    %v6975 = vld [vmem:[%s18 + $0x100] sm:$0xff]
    %v6976 = vld [vmem:[%s18 + $0x108] sm:$0xff]
    %v6977 = vld [vmem:[%s18 + $0x110] sm:$0xff]
    %v6978 = vld [vmem:[%s18 + $0x118] sm:$0xff]
    %v6979 = vld [vmem:[%s18 + $0x120] sm:$0xff]
    %v6980 = vld [vmem:[%s18 + $0x128] sm:$0xff]
    %v6981 = vld [vmem:[%s18 + $0x130] sm:$0xff]
    %v6982 = vld [vmem:[%s18 + $0x138] sm:$0xff]
    %v6983 = vld [vmem:[%s18 + $0x140] sm:$0xff]
    %v6984 = vld [vmem:[%s18 + $0x148] sm:$0xff]
    %v6985 = vld [vmem:[%s18 + $0x150] sm:$0xff]
    %v6986 = vld [vmem:[%s18 + $0x158] sm:$0xff]
    %v6987 = vld [vmem:[%s18 + $0x160] sm:$0xff]
    %v6988 = vld [vmem:[%s18 + $0x168] sm:$0xff]
    %v6989 = vld [vmem:[%s18 + $0x170] sm:$0xff]
    %v6990 = vld [vmem:[%s18 + $0x178] sm:$0xff]
    %v6991 = vld [vmem:[%s18 + $0x180] sm:$0xff]
    %v6992 = vld [vmem:[%s18 + $0x188] sm:$0xff]
    %v6993 = vld [vmem:[%s18 + $0x190] sm:$0xff]
    %v6994 = vld [vmem:[%s18 + $0x198] sm:$0xff]
    %v6995 = vld [vmem:[%s18 + $0x1a0] sm:$0xff]
    %v6996 = vld [vmem:[%s18 + $0x1a8] sm:$0xff]
    %v6997 = vld [vmem:[%s18 + $0x1b0] sm:$0xff]
    %v6998 = vld [vmem:[%s18 + $0x1b8] sm:$0xff]
    %v6999 = vld [vmem:[%s18 + $0x1c0] sm:$0xff]
    %v7000 = vld [vmem:[%s18 + $0x1c8] sm:$0xff]
    %v7001 = vld [vmem:[%s18 + $0x1d0] sm:$0xff]
    %v7002 = vld [vmem:[%s18 + $0x1d8] sm:$0xff]
    %v7003 = vld [vmem:[%s18 + $0x1e0] sm:$0xff]
    %v7004 = vld [vmem:[%s18 + $0x1e8] sm:$0xff]
    %v7005 = vld [vmem:[%s18 + $0x1f0] sm:$0xff]
    %v7006 = vld [vmem:[%s18 + $0x1f8] sm:$0xff]
    %v7007 = vld [vmem:[%s19] sm:$0x3]
    %v7009 = vperm.slane %v7007, 0
    %v7010 = vperm.slane %v7007, 1
    %7013 = vmatpush.msra.mxu0 %v6973
    %7014 = vmatpush.msra.mxu0 %v6971
    %7015 = vmatpush.msra.mxu0 %v6969
    %7016 = vmatpush.msra.mxu0 %v6967
    %7017 = vmatpush.msra.mxu0 %v6965
    %7018 = vmatpush.msra.mxu0 %v6963
    %7019 = vmatpush.msra.mxu0 %v6961
    %7020 = vmatpush.msra.mxu0 %v6959
    %7021 = vmatpush.msra.mxu0 %v6957
    %7022 = vmatpush.msra.mxu0 %v6955
    %7023 = vmatpush.msra.mxu0 %v6953
    %7024 = vmatpush.msra.mxu0 %v6951
    %7025 = vmatpush.msra.mxu0 %v6949
    %7026 = vmatpush.msra.mxu0 %v6947
    %7027 = vmatpush.msra.mxu0 %v6945
    %7028 = vmatpush.msra.mxu0 %v6943
    %7029 = vmatmul.f32.gmra.mxu0 %v6941
    %v7030 = vpop.f32.mrf.mxu0
    %v7031 = vadd.f32 %v7009, %v7030
    %7032 = vdwg.mxu0
    %7033 = vmatpush.msra.mxu0 %v7005
    %7034 = vmatpush.msra.mxu0 %v7003
    %7035 = vmatpush.msra.mxu0 %v7001
    %7036 = vmatpush.msra.mxu0 %v6999
    %7037 = vmatpush.msra.mxu0 %v6997
    %7038 = vmatpush.msra.mxu0 %v6995
    %7039 = vmatpush.msra.mxu0 %v6993
    %7040 = vmatpush.msra.mxu0 %v6991
    %7041 = vmatpush.msra.mxu0 %v6989
    %7042 = vmatpush.msra.mxu0 %v6987
    %7043 = vmatpush.msra.mxu0 %v6985
    %7044 = vmatpush.msra.mxu0 %v6983
    %7045 = vmatpush.msra.mxu0 %v6981
    %7046 = vmatpush.msra.mxu0 %v6979
    %7047 = vmatpush.msra.mxu0 %v6977
    %7048 = vmatpush.msra.mxu0 %v6975
    %7049 = vmatmul.f32.gmra.mxu0 %v6942
    %v7050 = vpop.f32.mrf.mxu0
    %v7051 = vadd.f32 %v7031, %v7050
    %7052 = vdwg.mxu0
    %7053 = vmatpush.msra.mxu0 %v6974
    %7054 = vmatpush.msra.mxu0 %v6972
    %7055 = vmatpush.msra.mxu0 %v6970
    %7056 = vmatpush.msra.mxu0 %v6968
    %7057 = vmatpush.msra.mxu0 %v6966
    %7058 = vmatpush.msra.mxu0 %v6964
    %7059 = vmatpush.msra.mxu0 %v6962
    %7060 = vmatpush.msra.mxu0 %v6960
    %7061 = vmatpush.msra.mxu0 %v6958
    %7062 = vmatpush.msra.mxu0 %v6956
    %7063 = vmatpush.msra.mxu0 %v6954
    %7064 = vmatpush.msra.mxu0 %v6952
    %7065 = vmatpush.msra.mxu0 %v6950
    %7066 = vmatpush.msra.mxu0 %v6948
    %7067 = vmatpush.msra.mxu0 %v6946
    %7068 = vmatpush.msra.mxu0 %v6944
    %7069 = vmatmul.f32.gmra.mxu0 %v6941
    %v7070 = vpop.f32.mrf.mxu0
    %v7071 = vadd.f32 %v7010, %v7070
    %7072 = vdwg.mxu0
    %7073 = vmatpush.msra.mxu0 %v7006
    %7074 = vmatpush.msra.mxu0 %v7004
    %7075 = vmatpush.msra.mxu0 %v7002
    %7076 = vmatpush.msra.mxu0 %v7000
    %7077 = vmatpush.msra.mxu0 %v6998
    %7078 = vmatpush.msra.mxu0 %v6996
    %7079 = vmatpush.msra.mxu0 %v6994
    %7080 = vmatpush.msra.mxu0 %v6992
    %7081 = vmatpush.msra.mxu0 %v6990
    %7082 = vmatpush.msra.mxu0 %v6988
    %7083 = vmatpush.msra.mxu0 %v6986
    %7084 = vmatpush.msra.mxu0 %v6984
    %7085 = vmatpush.msra.mxu0 %v6982
    %7086 = vmatpush.msra.mxu0 %v6980
    %7087 = vmatpush.msra.mxu0 %v6978
    %7088 = vmatpush.msra.mxu0 %v6976
    %7089 = vmatmul.f32.gmra.mxu0 %v6942
    %v7090 = vpop.f32.mrf.mxu0
    %v7091 = vadd.f32 %v7071, %v7090
    %7092 = vdwg.mxu0
    %v7093 = vmax.f32 %v7051, 0.0
    %v7094 = vmax.f32 %v7091, 0.0
    %v7095 = vld [vmem:[%s20] sm:$0xff]
    %v7096 = vld [vmem:[%s20 + $0x8] sm:$0xff]
    %v7097 = vld [vmem:[%s20 + $0x10] sm:$0xff]
    %v7098 = vld [vmem:[%s20 + $0x18] sm:$0xff]
    %v7099 = vld [vmem:[%s20 + $0x20] sm:$0xff]
    %v7100 = vld [vmem:[%s20 + $0x28] sm:$0xff]
    %v7101 = vld [vmem:[%s20 + $0x30] sm:$0xff]
    %v7102 = vld [vmem:[%s20 + $0x38] sm:$0xff]
    %v7103 = vld [vmem:[%s20 + $0x40] sm:$0xff]
    %v7104 = vld [vmem:[%s20 + $0x48] sm:$0xff]
    %v7105 = vld [vmem:[%s20 + $0x50] sm:$0xff]
    %v7106 = vld [vmem:[%s20 + $0x58] sm:$0xff]
    %v7107 = vld [vmem:[%s20 + $0x60] sm:$0xff]
    %v7108 = vld [vmem:[%s20 + $0x68] sm:$0xff]
    %v7109 = vld [vmem:[%s20 + $0x70] sm:$0xff]
    %v7110 = vld [vmem:[%s20 + $0x78] sm:$0xff]
    %v7111 = vld [vmem:[%s20 + $0x80] sm:$0xff]
    %v7112 = vld [vmem:[%s20 + $0x88] sm:$0xff]
    %v7113 = vld [vmem:[%s20 + $0x90] sm:$0xff]
    %v7114 = vld [vmem:[%s20 + $0x98] sm:$0xff]
    %v7115 = vld [vmem:[%s20 + $0xa0] sm:$0xff]
    %v7116 = vld [vmem:[%s20 + $0xa8] sm:$0xff]
    %v7117 = vld [vmem:[%s20 + $0xb0] sm:$0xff]
    %v7118 = vld [vmem:[%s20 + $0xb8] sm:$0xff]
    %v7119 = vld [vmem:[%s20 + $0xc0] sm:$0xff]
    %v7120 = vld [vmem:[%s20 + $0xc8] sm:$0xff]
    %v7121 = vld [vmem:[%s20 + $0xd0] sm:$0xff]
    %v7122 = vld [vmem:[%s20 + $0xd8] sm:$0xff]
    %v7123 = vld [vmem:[%s20 + $0xe0] sm:$0xff]
    %v7124 = vld [vmem:[%s20 + $0xe8] sm:$0xff]
    %v7125 = vld [vmem:[%s20 + $0xf0] sm:$0xff]
    %v7126 = vld [vmem:[%s20 + $0xf8] sm:$0xff]
    %v7127 = vld [vmem:[%s21] sm:$0x1]
    %v7129 = vperm.slane %v7127, 0
    %7131 = vmatpush.msra.mxu0 %v7110
    %7132 = vmatpush.msra.mxu0 %v7109
    %7133 = vmatpush.msra.mxu0 %v7108
    %7134 = vmatpush.msra.mxu0 %v7107
    %7135 = vmatpush.msra.mxu0 %v7106
    %7136 = vmatpush.msra.mxu0 %v7105
    %7137 = vmatpush.msra.mxu0 %v7104
    %7138 = vmatpush.msra.mxu0 %v7103
    %7139 = vmatpush.msra.mxu0 %v7102
    %7140 = vmatpush.msra.mxu0 %v7101
    %7141 = vmatpush.msra.mxu0 %v7100
    %7142 = vmatpush.msra.mxu0 %v7099
    %7143 = vmatpush.msra.mxu0 %v7098
    %7144 = vmatpush.msra.mxu0 %v7097
    %7145 = vmatpush.msra.mxu0 %v7096
    %7146 = vmatpush.msra.mxu0 %v7095
    %7147 = vmatmul.f32.gmra.mxu0 %v7093
    %v7148 = vpop.f32.mrf.mxu0
    %v7149 = vadd.f32 %v7129, %v7148
    %7150 = vdwg.mxu0
    %7151 = vmatpush.msra.mxu0 %v7126
    %7152 = vmatpush.msra.mxu0 %v7125
    %7153 = vmatpush.msra.mxu0 %v7124
    %7154 = vmatpush.msra.mxu0 %v7123
    %7155 = vmatpush.msra.mxu0 %v7122
    %7156 = vmatpush.msra.mxu0 %v7121
    %7157 = vmatpush.msra.mxu0 %v7120
    %7158 = vmatpush.msra.mxu0 %v7119
    %7159 = vmatpush.msra.mxu0 %v7118
    %7160 = vmatpush.msra.mxu0 %v7117
    %7161 = vmatpush.msra.mxu0 %v7116
    %7162 = vmatpush.msra.mxu0 %v7115
    %7163 = vmatpush.msra.mxu0 %v7114
    %7164 = vmatpush.msra.mxu0 %v7113
    %7165 = vmatpush.msra.mxu0 %v7112
    %7166 = vmatpush.msra.mxu0 %v7111
    %7167 = vmatmul.f32.gmra.mxu0 %v7094
    %v7168 = vpop.f32.mrf.mxu0
    %v7169 = vadd.f32 %v7149, %v7168
    %7170 = vdwg.mxu0
    %vm7171 = vcmask 58368
    %7172 = vst.msk [vmem:[#allocation10] sm:$0x3] %vm7171, %v7169
    // Predicated region
    $region94: #{got_forward.1} parent=1 // pred_check
      _
    $region95: #{got_forward.1} parent=1 // pred_check_branch
      %7174 = sbr.rel (0) target = $region97
    $region96: #{got_forward.1} parent=1 // pred_region
      %7176 = vsyncadd [#allocation8], 0
      %s7178 = sshll.u32 [#allocation9], 4
      %s7179 = int_to_ptr.vmem [resolvable:$true] %s7178
      %s7180 = sshll.u32 %s22, 4
      %s7181 = int_to_ptr.hbm [resolvable:$true] %s7180
      %7183 = dma.vmem_to_hbm [thread:$0]  %s7179, 32, %s7181, [#allocation8]
    $region97: #{got_forward.1} parent=1 // pred_fallthru
      _
    // Predicated region
    $region98: #{got_forward.1} parent=1 // pred_check
      _
    $region99: #{got_forward.1} parent=1 // pred_check_branch
      %7185 = sbr.rel (0) target = $region101
    $region100: #{got_forward.1} parent=1 // pred_region
      %7187 = vsyncadd [#allocation11], 0
      %s7189 = sshll.u32 [#allocation10], 4
      %s7190 = int_to_ptr.vmem [resolvable:$true] %s7189
      %s7191 = sshll.u32 %s23, 4
      %s7192 = int_to_ptr.hbm [resolvable:$true] %s7191
      %7194 = dma.vmem_to_hbm [thread:$0]  %s7190, 32, %s7192, [#allocation11]
    $region101: #{got_forward.1} parent=1 // pred_fallthru
      _
    // Predicated region
    $region102: #{got_forward.1} parent=1 // pred_check
      _
    $region103: #{got_forward.1} parent=1 // pred_check_branch
      %7196 = sbr.rel (0) target = $region105
    $region104: #{got_forward.1} parent=1 // pred_region
      %7198 = dma.done [#allocation8], 32
    $region105: #{got_forward.1} parent=1 // pred_fallthru
      _
    // Predicated region
    $region106: #{got_forward.1} parent=1 // pred_check
      _
    $region107: #{got_forward.1} parent=1 // pred_check_branch
      %7200 = sbr.rel (0) target = $region109
    $region108: #{got_forward.1} parent=1 // pred_region
      %7202 = dma.done [#allocation11], 32
    $region109: #{got_forward.1} parent=1 // pred_fallthru
      _
    %7203 = vsyncpa [#allocation7], 1
    %7204 = vsyncpa [#allocation8], 1
    %7205 = vsyncpa [#allocation11], 1

</llo_original>
